<compile_context>
chip_gen: v7x
topology: tpu7x:2x2x1
jax: 0.10.0
libtpu: 0.0.40
codegen_flags: <defaults>
</compile_context>

<pallas_src>
import jax
import jax.numpy as jnp
from jax import lax
from jax.experimental import pallas as pl
from jax.experimental.pallas import tpu as pltpu


def _pick_block_b(B, cap=8):
    # Largest divisor of B (<= cap sublanes) that still leaves >= 2 grid steps
    # (so v7x's two TensorCores both get work); fall back to all of B.
    for bb in range(min(cap, B), 0, -1):
        if B % bb == 0 and B // bb >= 2:
            return bb
    return B


# ------------------------------ fused kernel (factory) --------------------------------
def _make_fused_kernel(nlay, T, H):
    n_in = 9 + 3 * nlay

    def kernel(*refs):
        x_ref = refs[0]
        conv_w, conv_b, conv2_w, conv2_b = refs[1:5]
        lstm_refs = refs[5:5 + 3 * nlay]
        lin1_w, lin1_b, fin_w, fin_b = refs[5 + 3 * nlay:n_in]
        o_ref = refs[n_in]
        pad_ref = refs[n_in + 1]          # (Bb, T+2, Cmax) zero-padded conv staging
        gx_ref = refs[n_in + 2]           # (Bb, T, 4H) hoisted layer-0 input projection

        Bb = x_ref.shape[0]

        # Zero the time-padded scratch once per invocation; rows 0 and T+1 stay
        # zero and implement the Conv1d padding=1 boundary.
        pad_ref[...] = jnp.zeros(pad_ref.shape, jnp.float32)

        def conv1d_relu(h, w_ref, b_ref):
            # h: (Bb, T, Cin) -> (Bb, T, Cout).  Shifted taps are offset window
            # reads of pad_ref (no concatenate copies, no cross-batch leakage).
            Cin = h.shape[-1]
            Cout = w_ref.shape[2]
            pad_ref[:, 1:T + 1, :Cin] = h
            x_c = h.reshape(Bb * T, Cin)
            x_m1 = pad_ref[:, 0:T, :Cin].reshape(Bb * T, Cin)       # row t -> h[t-1]
            x_p1 = pad_ref[:, 2:T + 2, :Cin].reshape(Bb * T, Cin)   # row t -> h[t+1]
            acc = (jnp.dot(x_m1, w_ref[0], preferred_element_type=jnp.float32)
                   + jnp.dot(x_c, w_ref[1], preferred_element_type=jnp.float32)
                   + jnp.dot(x_p1, w_ref[2], preferred_element_type=jnp.float32))
            acc = acc + b_ref[...]
            return jnp.maximum(acc, 0.0).reshape(Bb, T, Cout)

        # ---- conv stage: conv1 + conv2 applied 4x, all in VMEM/vregs ----
        h = conv1d_relu(x_ref[...], conv_w, conv_b)                  # (Bb, T, 60)
        for _ in range(4):
            h = conv1d_relu(h, conv2_w, conv2_b)                     # (Bb, T, 60)

        # ---- LSTM stack: wavefront schedule across layers & time ----
        wih = [lstm_refs[3 * l][...] for l in range(nlay)]
        whh = [lstm_refs[3 * l + 1][...] for l in range(nlay)]
        bias = [lstm_refs[3 * l + 2][...] for l in range(nlay)]

        # Hoisted layer-0 input projection: one big (Bb*T, C) @ (C, 4H) matmul.
        gx0 = jnp.dot(h.reshape(Bb * T, h.shape[-1]), wih[0],
                      preferred_element_type=jnp.float32) + bias[0]
        gx_ref[...] = gx0.reshape(Bb, T, 4 * H)

        hs = [jnp.zeros((Bb, H), jnp.float32) for _ in range(nlay)]  # h_l[t-1]
        cs = [jnp.zeros((Bb, H), jnp.float32) for _ in range(nlay)]  # c_l[t-1]
        hsum = jnp.zeros((Bb, H), jnp.float32)                       # sum_t h_last[t]

        # Wavefront step s: layer l processes time t = s - l.  Layers are emitted
        # deepest-first so hs[l-1] still holds layer (l-1)'s output at time t.
        for s in range(T + nlay - 1):
            for l in range(nlay - 1, -1, -1):
                t = s - l
                if t < 0 or t >= T:
                    continue
                if l == 0:
                    gates = gx_ref[:, t, :] + jnp.dot(
                        hs[0], whh[0], preferred_element_type=jnp.float32)
                else:
                    gates = (jnp.dot(hs[l - 1], wih[l], preferred_element_type=jnp.float32)
                             + jnp.dot(hs[l], whh[l], preferred_element_type=jnp.float32)
                             + bias[l])
                # 2 EUP pushes on the full (Bb, 4H) gate block, slices afterwards.
                sg = jax.nn.sigmoid(gates)
                tg = jnp.tanh(gates)
                i_g = sg[:, 0 * H:1 * H]
                f_g = sg[:, 1 * H:2 * H]
                g_g = tg[:, 2 * H:3 * H]
                o_g = sg[:, 3 * H:4 * H]
                cs[l] = f_g * cs[l] + i_g * g_g
                hs[l] = o_g * jnp.tanh(cs[l])
                if l == nlay - 1:
                    hsum = hsum + hs[l]

        h_mean = hsum * (1.0 / T)                                    # (Bb, H)

        # ---- head: Linear + ReLU (+Dropout) -> Linear ----
        z = jnp.maximum(
            jnp.dot(h_mean, lin1_w[...], preferred_element_type=jnp.float32) + lin1_b[...],
            0.0)
        # TODO(synk): Dropout is identity at inference (eval mode); a training-mode
        # version would need pltpu.prng_seed / pltpu.prng_random_bits here.
        out = jnp.dot(z, fin_w[...], preferred_element_type=jnp.float32) + fin_b[...]
        o_ref[0] = out.astype(o_ref.dtype)                           # (Bb, nc) slab

    return kernel


# -------------------------------------- wrapper ---------------------------------------
def cnn_lstm_forward(x, params, block_b=None):
    # x: (B, T, idim) -> (B, num_classes)
    B, T, idim = x.shape
    nlay = len(params["lstm"])
    nhu3 = params["conv_w"].shape[2]
    H = params["lstm"][0][1].shape[0]
    nc = params["fin_w"].shape[1]
    if block_b is None:
        block_b = _pick_block_b(B)
    assert B % block_b == 0
    grid = B // block_b

    def full(a):
        return pl.BlockSpec(a.shape, lambda b, _nd=a.ndim: (0,) * _nd)

    inputs = [x, params["conv_w"], params["conv_b"],
              params["conv2_w"], params["conv2_b"]]
    in_specs = [pl.BlockSpec((block_b, T, idim), lambda b: (b, 0, 0))]
    in_specs += [full(a) for a in inputs[1:]]
    for (wih, whh, bb) in params["lstm"]:
        inputs += [wih, whh, bb]
        in_specs += [full(wih), full(whh), full(bb)]
    for name in ("lin1_w", "lin1_b", "fin_w", "fin_b"):
        inputs.append(params[name])
        in_specs.append(full(params[name]))

    out = pl.pallas_call(
        _make_fused_kernel(nlay, T, H),
        out_shape=jax.ShapeDtypeStruct((grid, block_b, nc), x.dtype),
        grid=(grid,),
        in_specs=in_specs,
        out_specs=pl.BlockSpec((1, block_b, nc), lambda b: (b, 0, 0)),
        scratch_shapes=[
            pltpu.VMEM((block_b, T + 2, max(idim, nhu3)), jnp.float32),  # conv pad
            pltpu.VMEM((block_b, T, 4 * H), jnp.float32),                # hoisted gx
        ],
        compiler_params=pltpu.CompilerParams(
            dimension_semantics=("parallel",)),   # v7x: batch blocks across both TCs
    )(*inputs)
    return out.reshape(B, nc)


# ----------------------------------- parameter init -----------------------------------
def init_params(key, idim, nhu, nhu2, nlay, num_classes, nhu3=60):
    keys = jax.random.split(key, 4 + 3 * nlay + 4)

    def u(k, shape, fan_in):
        bound = 1.0 / (fan_in ** 0.5)
        return jax.random.uniform(k, shape, jnp.float32, -bound, bound)

    params = {
        "conv_w": u(keys[0], (3, idim, nhu3), 3 * idim),
        "conv_b": u(keys[1], (1, nhu3), 3 * idim),
        "conv2_w": u(keys[2], (3, nhu3, nhu3), 3 * nhu3),
        "conv2_b": u(keys[3], (1, nhu3), 3 * nhu3),
    }
    lstm = []
    kidx = 4
    for l in range(nlay):
        din = nhu3 if l == 0 else nhu
        wih = u(keys[kidx], (din, 4 * nhu), nhu); kidx += 1
        whh = u(keys[kidx], (nhu, 4 * nhu), nhu); kidx += 1
        b = u(keys[kidx], (1, 4 * nhu), nhu); kidx += 1       # b_ih + b_hh folded
        lstm.append((wih, whh, b))
    params["lstm"] = lstm
    params["lin1_w"] = u(keys[kidx], (nhu, nhu2), nhu); kidx += 1
    params["lin1_b"] = u(keys[kidx], (1, nhu2), nhu); kidx += 1
    params["fin_w"] = u(keys[kidx], (nhu2, num_classes), nhu2); kidx += 1
    params["fin_b"] = u(keys[kidx], (1, num_classes), nhu2)
    return params


# ------------------------------- pure-JAX reference -----------------------------------
def _conv_ref(x, w, b):
    xp = jnp.pad(x, ((0, 0), (1, 1), (0, 0)))
    hp = lax.Precision.HIGHEST
    out = (jnp.einsum("btc,cd->btd", xp[:, :-2], w[0], precision=hp)
           + jnp.einsum("btc,cd->btd", xp[:, 1:-1], w[1], precision=hp)
           + jnp.einsum("btc,cd->btd", xp[:, 2:], w[2], precision=hp)) + b
    return jnp.maximum(out, 0.0)


def _lstm_ref(x_tbd, wih, whh, b):
    T, B, _ = x_tbd.shape
    H = whh.shape[0]
    hp = lax.Precision.HIGHEST

    def step(carry, x_t):
        h, c = carry
        gates = (jnp.dot(x_t, wih, precision=hp)
                 + jnp.dot(h, whh, precision=hp) + b)
        i = jax.nn.sigmoid(gates[:, :H]); f = jax.nn.sigmoid(gates[:, H:2 * H])
        g = jnp.tanh(gates[:, 2 * H:3 * H]); o = jax.nn.sigmoid(gates[:, 3 * H:])
        c = f * c + i * g
        h = o * jnp.tanh(c)
        return (h, c), h

    (_, _), ys = lax.scan(step, (jnp.zeros((B, H)), jnp.zeros((B, H))), x_tbd)
    return ys


def _forward_ref(x, params):
    hp = lax.Precision.HIGHEST
    h = _conv_ref(x, params["conv_w"], params["conv_b"])
    for _ in range(4):
        h = _conv_ref(h, params["conv2_w"], params["conv2_b"])
    h = jnp.transpose(h, (1, 0, 2))
    for (wih, whh, b) in params["lstm"]:
        h = _lstm_ref(h, wih, whh, b)
    y = jnp.mean(h, axis=0)
    z = jnp.maximum(jnp.dot(y, params["lin1_w"], precision=hp) + params["lin1_b"], 0.0)
    return jnp.dot(z, params["fin_w"], precision=hp) + params["fin_b"]


# ---------------------------------------- main ----------------------------------------
if __name__ == "__main__":
    B, T, idim = 8, 16, 8
    nhu, nhu2, nlay, num_classes = 32, 16, 2, 5

    root = jax.random.PRNGKey(0)
    kx, kp = jax.random.split(root)
    x = jax.random.normal(kx, (B, T, idim), jnp.float32)
    params = init_params(kp, idim, nhu, nhu2, nlay, num_classes)

    out = jax.jit(cnn_lstm_forward)(x, params)
    out = jax.block_until_ready(out)
    assert out.shape == (B, num_classes)

    ref = _forward_ref(x, params)
    err = float(jnp.max(jnp.abs(out - ref)))
    assert err < 2e-2, f"mismatch vs reference: {err}"

    print("KERNEL_OK")
</pallas_src>

<mosaic_0001>
module attributes {stable_mosaic.version = 11 : i64} {
  func.func @kernel(%arg0: i32, %arg1: memref<4x16x8xf32, #tpu.memory_space<vmem>>, %arg2: memref<3x8x60xf32, #tpu.memory_space<vmem>>, %arg3: memref<1x60xf32, #tpu.memory_space<vmem>>, %arg4: memref<3x60x60xf32, #tpu.memory_space<vmem>>, %arg5: memref<1x60xf32, #tpu.memory_space<vmem>>, %arg6: memref<60x128xf32, #tpu.memory_space<vmem>>, %arg7: memref<32x128xf32, #tpu.memory_space<vmem>>, %arg8: memref<1x128xf32, #tpu.memory_space<vmem>>, %arg9: memref<32x128xf32, #tpu.memory_space<vmem>>, %arg10: memref<32x128xf32, #tpu.memory_space<vmem>>, %arg11: memref<1x128xf32, #tpu.memory_space<vmem>>, %arg12: memref<32x16xf32, #tpu.memory_space<vmem>>, %arg13: memref<1x16xf32, #tpu.memory_space<vmem>>, %arg14: memref<16x5xf32, #tpu.memory_space<vmem>>, %arg15: memref<1x5xf32, #tpu.memory_space<vmem>>, %arg16: memref<1x4x5xf32, #tpu.memory_space<vmem>>, %arg17: memref<4x18x60xf32, #tpu.memory_space<vmem>>, %arg18: memref<4x16x128xf32, #tpu.memory_space<vmem>>) attributes {dimension_semantics = [#tpu.dimension_semantics<parallel>], iteration_bounds = array<i64: 2>, scalar_prefetch = 0 : i64, scratch_operands = 2 : i64, tpu.core_type = #tpu.core_type<tc>, window_params = [{transform_indices = @transform_0, window_bounds = array<i64: 4, 16, 8>}, {pipeline_mode = #tpu.pipeline_mode<synchronous>, transform_indices = @transform_1, window_bounds = array<i64: 3, 8, 60>}, {pipeline_mode = #tpu.pipeline_mode<synchronous>, transform_indices = @transform_2, window_bounds = array<i64: 1, 60>}, {pipeline_mode = #tpu.pipeline_mode<synchronous>, transform_indices = @transform_3, window_bounds = array<i64: 3, 60, 60>}, {pipeline_mode = #tpu.pipeline_mode<synchronous>, transform_indices = @transform_4, window_bounds = array<i64: 1, 60>}, {pipeline_mode = #tpu.pipeline_mode<synchronous>, transform_indices = @transform_5, window_bounds = array<i64: 60, 128>}, {pipeline_mode = #tpu.pipeline_mode<synchronous>, transform_indices = @transform_6, window_bounds = array<i64: 32, 128>}, {pipeline_mode = #tpu.pipeline_mode<synchronous>, transform_indices = @transform_7, window_bounds = array<i64: 1, 128>}, {pipeline_mode = #tpu.pipeline_mode<synchronous>, transform_indices = @transform_8, window_bounds = array<i64: 32, 128>}, {pipeline_mode = #tpu.pipeline_mode<synchronous>, transform_indices = @transform_9, window_bounds = array<i64: 32, 128>}, {pipeline_mode = #tpu.pipeline_mode<synchronous>, transform_indices = @transform_10, window_bounds = array<i64: 1, 128>}, {pipeline_mode = #tpu.pipeline_mode<synchronous>, transform_indices = @transform_11, window_bounds = array<i64: 32, 16>}, {pipeline_mode = #tpu.pipeline_mode<synchronous>, transform_indices = @transform_12, window_bounds = array<i64: 1, 16>}, {pipeline_mode = #tpu.pipeline_mode<synchronous>, transform_indices = @transform_13, window_bounds = array<i64: 16, 5>}, {pipeline_mode = #tpu.pipeline_mode<synchronous>, transform_indices = @transform_14, window_bounds = array<i64: 1, 5>}, {transform_indices = @transform_15, window_bounds = array<i64: 1, 4, 5>}]} {
    %cst = arith.constant 0.000000e+00 : f32
    %0 = vector.broadcast %cst : f32 to vector<4x18x60xf32>
    %c0 = arith.constant 0 : index
    %c0_0 = arith.constant 0 : index
    %c0_1 = arith.constant 0 : index
    %1 = vector.load %arg17[%c0, %c0_0, %c0_1] : memref<4x18x60xf32, #tpu.memory_space<vmem>>, vector<4x18x60xf32>
    tpu.vector_store %arg17[%c0, %c0_0, %c0_1], %0 {strides = array<i32>} : memref<4x18x60xf32, #tpu.memory_space<vmem>>, vector<4x18x60xf32>,
    %c0_2 = arith.constant 0 : index
    %c0_3 = arith.constant 0 : index
    %c0_4 = arith.constant 0 : index
    %2 = vector.load %arg1[%c0_2, %c0_3, %c0_4] : memref<4x16x8xf32, #tpu.memory_space<vmem>>, vector<4x16x8xf32>
    %c0_5 = arith.constant 0 : index
    %c1 = arith.constant 1 : index
    %c0_6 = arith.constant 0 : index
    %3 = vector.load %arg17[%c0_5, %c1, %c0_6] : memref<4x18x60xf32, #tpu.memory_space<vmem>>, vector<4x16x8xf32>
    tpu.vector_store %arg17[%c0_5, %c1, %c0_6], %2 {strides = array<i32>} : memref<4x18x60xf32, #tpu.memory_space<vmem>>, vector<4x16x8xf32>,
    %4 = vector.shape_cast %2 : vector<4x16x8xf32> to vector<64x8xf32>
    %c0_7 = arith.constant 0 : index
    %c0_8 = arith.constant 0 : index
    %c0_9 = arith.constant 0 : index
    %5 = vector.load %arg17[%c0_7, %c0_8, %c0_9] : memref<4x18x60xf32, #tpu.memory_space<vmem>>, vector<4x16x8xf32>
    %6 = vector.shape_cast %5 : vector<4x16x8xf32> to vector<64x8xf32>
    %c0_10 = arith.constant 0 : index
    %c2 = arith.constant 2 : index
    %c0_11 = arith.constant 0 : index
    %7 = vector.load %arg17[%c0_10, %c2, %c0_11] : memref<4x18x60xf32, #tpu.memory_space<vmem>>, vector<4x16x8xf32>
    %8 = vector.shape_cast %7 : vector<4x16x8xf32> to vector<64x8xf32>
    %c0_12 = arith.constant 0 : index
    %c0_13 = arith.constant 0 : index
    %c0_14 = arith.constant 0 : index
    %9 = vector.load %arg2[%c0_12, %c0_13, %c0_14] : memref<3x8x60xf32, #tpu.memory_space<vmem>>, vector<1x8x60xf32>
    %10 = vector.shape_cast %9 : vector<1x8x60xf32> to vector<8x60xf32>
    %cst_15 = arith.constant dense<0.000000e+00> : vector<64x60xf32>
    %11 = tpu.matmul %6, %10, %cst_15 {dimension_numbers = #tpu.dot_dimension_numbers<[1], [0], [0], [1], [0, 0, 1, 1], [], []>} : vector<64x8xf32>, vector<8x60xf32>, vector<64x60xf32> -> vector<64x60xf32>
    %c1_16 = arith.constant 1 : index
    %c0_17 = arith.constant 0 : index
    %c0_18 = arith.constant 0 : index
    %12 = vector.load %arg2[%c1_16, %c0_17, %c0_18] : memref<3x8x60xf32, #tpu.memory_space<vmem>>, vector<1x8x60xf32>
    %13 = vector.shape_cast %12 : vector<1x8x60xf32> to vector<8x60xf32>
    %cst_19 = arith.constant dense<0.000000e+00> : vector<64x60xf32>
    %14 = tpu.matmul %4, %13, %cst_19 {dimension_numbers = #tpu.dot_dimension_numbers<[1], [0], [0], [1], [0, 0, 1, 1], [], []>} : vector<64x8xf32>, vector<8x60xf32>, vector<64x60xf32> -> vector<64x60xf32>
    %15 = arith.addf %11, %14 : vector<64x60xf32>
    %c2_20 = arith.constant 2 : index
    %c0_21 = arith.constant 0 : index
    %c0_22 = arith.constant 0 : index
    %16 = vector.load %arg2[%c2_20, %c0_21, %c0_22] : memref<3x8x60xf32, #tpu.memory_space<vmem>>, vector<1x8x60xf32>
    %17 = vector.shape_cast %16 : vector<1x8x60xf32> to vector<8x60xf32>
    %cst_23 = arith.constant dense<0.000000e+00> : vector<64x60xf32>
    %18 = tpu.matmul %8, %17, %cst_23 {dimension_numbers = #tpu.dot_dimension_numbers<[1], [0], [0], [1], [0, 0, 1, 1], [], []>} : vector<64x8xf32>, vector<8x60xf32>, vector<64x60xf32> -> vector<64x60xf32>
    %19 = arith.addf %15, %18 : vector<64x60xf32>
    %c0_24 = arith.constant 0 : index
    %c0_25 = arith.constant 0 : index
    %20 = vector.load %arg3[%c0_24, %c0_25] : memref<1x60xf32, #tpu.memory_space<vmem>>, vector<1x60xf32>
    %21 = vector.broadcast %20 : vector<1x60xf32> to vector<64x60xf32>
    %22 = arith.addf %19, %21 : vector<64x60xf32>
    %cst_26 = arith.constant 0.000000e+00 : f32
    %23 = vector.broadcast %cst_26 : f32 to vector<64x60xf32>
    %24 = arith.maximumf %22, %23 : vector<64x60xf32>
    %25 = vector.shape_cast %24 : vector<64x60xf32> to vector<4x16x60xf32>
    %c0_27 = arith.constant 0 : index
    %c1_28 = arith.constant 1 : index
    %c0_29 = arith.constant 0 : index
    %26 = vector.load %arg17[%c0_27, %c1_28, %c0_29] : memref<4x18x60xf32, #tpu.memory_space<vmem>>, vector<4x16x60xf32>
    tpu.vector_store %arg17[%c0_27, %c1_28, %c0_29], %25 {strides = array<i32>} : memref<4x18x60xf32, #tpu.memory_space<vmem>>, vector<4x16x60xf32>,
    %27 = vector.shape_cast %25 : vector<4x16x60xf32> to vector<64x60xf32>
    %c0_30 = arith.constant 0 : index
    %c0_31 = arith.constant 0 : index
    %c0_32 = arith.constant 0 : index
    %28 = vector.load %arg17[%c0_30, %c0_31, %c0_32] : memref<4x18x60xf32, #tpu.memory_space<vmem>>, vector<4x16x60xf32>
    %29 = vector.shape_cast %28 : vector<4x16x60xf32> to vector<64x60xf32>
    %c0_33 = arith.constant 0 : index
    %c2_34 = arith.constant 2 : index
    %c0_35 = arith.constant 0 : index
    %30 = vector.load %arg17[%c0_33, %c2_34, %c0_35] : memref<4x18x60xf32, #tpu.memory_space<vmem>>, vector<4x16x60xf32>
    %31 = vector.shape_cast %30 : vector<4x16x60xf32> to vector<64x60xf32>
    %c0_36 = arith.constant 0 : index
    %c0_37 = arith.constant 0 : index
    %c0_38 = arith.constant 0 : index
    %32 = vector.load %arg4[%c0_36, %c0_37, %c0_38] : memref<3x60x60xf32, #tpu.memory_space<vmem>>, vector<1x60x60xf32>
    %33 = vector.shape_cast %32 : vector<1x60x60xf32> to vector<60x60xf32>
    %cst_39 = arith.constant dense<0.000000e+00> : vector<64x60xf32>
    %34 = tpu.matmul %29, %33, %cst_39 {dimension_numbers = #tpu.dot_dimension_numbers<[1], [0], [0], [1], [0, 0, 1, 1], [], []>} : vector<64x60xf32>, vector<60x60xf32>, vector<64x60xf32> -> vector<64x60xf32>
    %c1_40 = arith.constant 1 : index
    %c0_41 = arith.constant 0 : index
    %c0_42 = arith.constant 0 : index
    %35 = vector.load %arg4[%c1_40, %c0_41, %c0_42] : memref<3x60x60xf32, #tpu.memory_space<vmem>>, vector<1x60x60xf32>
    %36 = vector.shape_cast %35 : vector<1x60x60xf32> to vector<60x60xf32>
    %cst_43 = arith.constant dense<0.000000e+00> : vector<64x60xf32>
    %37 = tpu.matmul %27, %36, %cst_43 {dimension_numbers = #tpu.dot_dimension_numbers<[1], [0], [0], [1], [0, 0, 1, 1], [], []>} : vector<64x60xf32>, vector<60x60xf32>, vector<64x60xf32> -> vector<64x60xf32>
    %38 = arith.addf %34, %37 : vector<64x60xf32>
    %c2_44 = arith.constant 2 : index
    %c0_45 = arith.constant 0 : index
    %c0_46 = arith.constant 0 : index
    %39 = vector.load %arg4[%c2_44, %c0_45, %c0_46] : memref<3x60x60xf32, #tpu.memory_space<vmem>>, vector<1x60x60xf32>
    %40 = vector.shape_cast %39 : vector<1x60x60xf32> to vector<60x60xf32>
    %cst_47 = arith.constant dense<0.000000e+00> : vector<64x60xf32>
    %41 = tpu.matmul %31, %40, %cst_47 {dimension_numbers = #tpu.dot_dimension_numbers<[1], [0], [0], [1], [0, 0, 1, 1], [], []>} : vector<64x60xf32>, vector<60x60xf32>, vector<64x60xf32> -> vector<64x60xf32>
    %42 = arith.addf %38, %41 : vector<64x60xf32>
    %c0_48 = arith.constant 0 : index
    %c0_49 = arith.constant 0 : index
    %43 = vector.load %arg5[%c0_48, %c0_49] : memref<1x60xf32, #tpu.memory_space<vmem>>, vector<1x60xf32>
    %44 = vector.broadcast %43 : vector<1x60xf32> to vector<64x60xf32>
    %45 = arith.addf %42, %44 : vector<64x60xf32>
    %cst_50 = arith.constant 0.000000e+00 : f32
    %46 = vector.broadcast %cst_50 : f32 to vector<64x60xf32>
    %47 = arith.maximumf %45, %46 : vector<64x60xf32>
    %48 = vector.shape_cast %47 : vector<64x60xf32> to vector<4x16x60xf32>
    %c0_51 = arith.constant 0 : index
    %c1_52 = arith.constant 1 : index
    %c0_53 = arith.constant 0 : index
    %49 = vector.load %arg17[%c0_51, %c1_52, %c0_53] : memref<4x18x60xf32, #tpu.memory_space<vmem>>, vector<4x16x60xf32>
    tpu.vector_store %arg17[%c0_51, %c1_52, %c0_53], %48 {strides = array<i32>} : memref<4x18x60xf32, #tpu.memory_space<vmem>>, vector<4x16x60xf32>,
    %50 = vector.shape_cast %48 : vector<4x16x60xf32> to vector<64x60xf32>
    %c0_54 = arith.constant 0 : index
    %c0_55 = arith.constant 0 : index
    %c0_56 = arith.constant 0 : index
    %51 = vector.load %arg17[%c0_54, %c0_55, %c0_56] : memref<4x18x60xf32, #tpu.memory_space<vmem>>, vector<4x16x60xf32>
    %52 = vector.shape_cast %51 : vector<4x16x60xf32> to vector<64x60xf32>
    %c0_57 = arith.constant 0 : index
    %c2_58 = arith.constant 2 : index
    %c0_59 = arith.constant 0 : index
    %53 = vector.load %arg17[%c0_57, %c2_58, %c0_59] : memref<4x18x60xf32, #tpu.memory_space<vmem>>, vector<4x16x60xf32>
    %54 = vector.shape_cast %53 : vector<4x16x60xf32> to vector<64x60xf32>
    %c0_60 = arith.constant 0 : index
    %c0_61 = arith.constant 0 : index
    %c0_62 = arith.constant 0 : index
    %55 = vector.load %arg4[%c0_60, %c0_61, %c0_62] : memref<3x60x60xf32, #tpu.memory_space<vmem>>, vector<1x60x60xf32>
    %56 = vector.shape_cast %55 : vector<1x60x60xf32> to vector<60x60xf32>
    %cst_63 = arith.constant dense<0.000000e+00> : vector<64x60xf32>
    %57 = tpu.matmul %52, %56, %cst_63 {dimension_numbers = #tpu.dot_dimension_numbers<[1], [0], [0], [1], [0, 0, 1, 1], [], []>} : vector<64x60xf32>, vector<60x60xf32>, vector<64x60xf32> -> vector<64x60xf32>
    %c1_64 = arith.constant 1 : index
    %c0_65 = arith.constant 0 : index
    %c0_66 = arith.constant 0 : index
    %58 = vector.load %arg4[%c1_64, %c0_65, %c0_66] : memref<3x60x60xf32, #tpu.memory_space<vmem>>, vector<1x60x60xf32>
    %59 = vector.shape_cast %58 : vector<1x60x60xf32> to vector<60x60xf32>
    %cst_67 = arith.constant dense<0.000000e+00> : vector<64x60xf32>
    %60 = tpu.matmul %50, %59, %cst_67 {dimension_numbers = #tpu.dot_dimension_numbers<[1], [0], [0], [1], [0, 0, 1, 1], [], []>} : vector<64x60xf32>, vector<60x60xf32>, vector<64x60xf32> -> vector<64x60xf32>
    %61 = arith.addf %57, %60 : vector<64x60xf32>
    %c2_68 = arith.constant 2 : index
    %c0_69 = arith.constant 0 : index
    %c0_70 = arith.constant 0 : index
    %62 = vector.load %arg4[%c2_68, %c0_69, %c0_70] : memref<3x60x60xf32, #tpu.memory_space<vmem>>, vector<1x60x60xf32>
    %63 = vector.shape_cast %62 : vector<1x60x60xf32> to vector<60x60xf32>
    %cst_71 = arith.constant dense<0.000000e+00> : vector<64x60xf32>
    %64 = tpu.matmul %54, %63, %cst_71 {dimension_numbers = #tpu.dot_dimension_numbers<[1], [0], [0], [1], [0, 0, 1, 1], [], []>} : vector<64x60xf32>, vector<60x60xf32>, vector<64x60xf32> -> vector<64x60xf32>
    %65 = arith.addf %61, %64 : vector<64x60xf32>
    %c0_72 = arith.constant 0 : index
    %c0_73 = arith.constant 0 : index
    %66 = vector.load %arg5[%c0_72, %c0_73] : memref<1x60xf32, #tpu.memory_space<vmem>>, vector<1x60xf32>
    %67 = vector.broadcast %66 : vector<1x60xf32> to vector<64x60xf32>
    %68 = arith.addf %65, %67 : vector<64x60xf32>
    %cst_74 = arith.constant 0.000000e+00 : f32
    %69 = vector.broadcast %cst_74 : f32 to vector<64x60xf32>
    %70 = arith.maximumf %68, %69 : vector<64x60xf32>
    %71 = vector.shape_cast %70 : vector<64x60xf32> to vector<4x16x60xf32>
    %c0_75 = arith.constant 0 : index
    %c1_76 = arith.constant 1 : index
    %c0_77 = arith.constant 0 : index
    %72 = vector.load %arg17[%c0_75, %c1_76, %c0_77] : memref<4x18x60xf32, #tpu.memory_space<vmem>>, vector<4x16x60xf32>
    tpu.vector_store %arg17[%c0_75, %c1_76, %c0_77], %71 {strides = array<i32>} : memref<4x18x60xf32, #tpu.memory_space<vmem>>, vector<4x16x60xf32>,
    %73 = vector.shape_cast %71 : vector<4x16x60xf32> to vector<64x60xf32>
    %c0_78 = arith.constant 0 : index
    %c0_79 = arith.constant 0 : index
    %c0_80 = arith.constant 0 : index
    %74 = vector.load %arg17[%c0_78, %c0_79, %c0_80] : memref<4x18x60xf32, #tpu.memory_space<vmem>>, vector<4x16x60xf32>
    %75 = vector.shape_cast %74 : vector<4x16x60xf32> to vector<64x60xf32>
    %c0_81 = arith.constant 0 : index
    %c2_82 = arith.constant 2 : index
    %c0_83 = arith.constant 0 : index
    %76 = vector.load %arg17[%c0_81, %c2_82, %c0_83] : memref<4x18x60xf32, #tpu.memory_space<vmem>>, vector<4x16x60xf32>
    %77 = vector.shape_cast %76 : vector<4x16x60xf32> to vector<64x60xf32>
    %c0_84 = arith.constant 0 : index
    %c0_85 = arith.constant 0 : index
    %c0_86 = arith.constant 0 : index
    %78 = vector.load %arg4[%c0_84, %c0_85, %c0_86] : memref<3x60x60xf32, #tpu.memory_space<vmem>>, vector<1x60x60xf32>
    %79 = vector.shape_cast %78 : vector<1x60x60xf32> to vector<60x60xf32>
    %cst_87 = arith.constant dense<0.000000e+00> : vector<64x60xf32>
    %80 = tpu.matmul %75, %79, %cst_87 {dimension_numbers = #tpu.dot_dimension_numbers<[1], [0], [0], [1], [0, 0, 1, 1], [], []>} : vector<64x60xf32>, vector<60x60xf32>, vector<64x60xf32> -> vector<64x60xf32>
    %c1_88 = arith.constant 1 : index
    %c0_89 = arith.constant 0 : index
    %c0_90 = arith.constant 0 : index
    %81 = vector.load %arg4[%c1_88, %c0_89, %c0_90] : memref<3x60x60xf32, #tpu.memory_space<vmem>>, vector<1x60x60xf32>
    %82 = vector.shape_cast %81 : vector<1x60x60xf32> to vector<60x60xf32>
    %cst_91 = arith.constant dense<0.000000e+00> : vector<64x60xf32>
    %83 = tpu.matmul %73, %82, %cst_91 {dimension_numbers = #tpu.dot_dimension_numbers<[1], [0], [0], [1], [0, 0, 1, 1], [], []>} : vector<64x60xf32>, vector<60x60xf32>, vector<64x60xf32> -> vector<64x60xf32>
    %84 = arith.addf %80, %83 : vector<64x60xf32>
    %c2_92 = arith.constant 2 : index
    %c0_93 = arith.constant 0 : index
    %c0_94 = arith.constant 0 : index
    %85 = vector.load %arg4[%c2_92, %c0_93, %c0_94] : memref<3x60x60xf32, #tpu.memory_space<vmem>>, vector<1x60x60xf32>
    %86 = vector.shape_cast %85 : vector<1x60x60xf32> to vector<60x60xf32>
    %cst_95 = arith.constant dense<0.000000e+00> : vector<64x60xf32>
    %87 = tpu.matmul %77, %86, %cst_95 {dimension_numbers = #tpu.dot_dimension_numbers<[1], [0], [0], [1], [0, 0, 1, 1], [], []>} : vector<64x60xf32>, vector<60x60xf32>, vector<64x60xf32> -> vector<64x60xf32>
    %88 = arith.addf %84, %87 : vector<64x60xf32>
    %c0_96 = arith.constant 0 : index
    %c0_97 = arith.constant 0 : index
    %89 = vector.load %arg5[%c0_96, %c0_97] : memref<1x60xf32, #tpu.memory_space<vmem>>, vector<1x60xf32>
    %90 = vector.broadcast %89 : vector<1x60xf32> to vector<64x60xf32>
    %91 = arith.addf %88, %90 : vector<64x60xf32>
    %cst_98 = arith.constant 0.000000e+00 : f32
    %92 = vector.broadcast %cst_98 : f32 to vector<64x60xf32>
    %93 = arith.maximumf %91, %92 : vector<64x60xf32>
    %94 = vector.shape_cast %93 : vector<64x60xf32> to vector<4x16x60xf32>
    %c0_99 = arith.constant 0 : index
    %c1_100 = arith.constant 1 : index
    %c0_101 = arith.constant 0 : index
    %95 = vector.load %arg17[%c0_99, %c1_100, %c0_101] : memref<4x18x60xf32, #tpu.memory_space<vmem>>, vector<4x16x60xf32>
    tpu.vector_store %arg17[%c0_99, %c1_100, %c0_101], %94 {strides = array<i32>} : memref<4x18x60xf32, #tpu.memory_space<vmem>>, vector<4x16x60xf32>,
    %96 = vector.shape_cast %94 : vector<4x16x60xf32> to vector<64x60xf32>
    %c0_102 = arith.constant 0 : index
    %c0_103 = arith.constant 0 : index
    %c0_104 = arith.constant 0 : index
    %97 = vector.load %arg17[%c0_102, %c0_103, %c0_104] : memref<4x18x60xf32, #tpu.memory_space<vmem>>, vector<4x16x60xf32>
    %98 = vector.shape_cast %97 : vector<4x16x60xf32> to vector<64x60xf32>
    %c0_105 = arith.constant 0 : index
    %c2_106 = arith.constant 2 : index
    %c0_107 = arith.constant 0 : index
    %99 = vector.load %arg17[%c0_105, %c2_106, %c0_107] : memref<4x18x60xf32, #tpu.memory_space<vmem>>, vector<4x16x60xf32>
    %100 = vector.shape_cast %99 : vector<4x16x60xf32> to vector<64x60xf32>
    %c0_108 = arith.constant 0 : index
    %c0_109 = arith.constant 0 : index
    %c0_110 = arith.constant 0 : index
    %101 = vector.load %arg4[%c0_108, %c0_109, %c0_110] : memref<3x60x60xf32, #tpu.memory_space<vmem>>, vector<1x60x60xf32>
    %102 = vector.shape_cast %101 : vector<1x60x60xf32> to vector<60x60xf32>
    %cst_111 = arith.constant dense<0.000000e+00> : vector<64x60xf32>
    %103 = tpu.matmul %98, %102, %cst_111 {dimension_numbers = #tpu.dot_dimension_numbers<[1], [0], [0], [1], [0, 0, 1, 1], [], []>} : vector<64x60xf32>, vector<60x60xf32>, vector<64x60xf32> -> vector<64x60xf32>
    %c1_112 = arith.constant 1 : index
    %c0_113 = arith.constant 0 : index
    %c0_114 = arith.constant 0 : index
    %104 = vector.load %arg4[%c1_112, %c0_113, %c0_114] : memref<3x60x60xf32, #tpu.memory_space<vmem>>, vector<1x60x60xf32>
    %105 = vector.shape_cast %104 : vector<1x60x60xf32> to vector<60x60xf32>
    %cst_115 = arith.constant dense<0.000000e+00> : vector<64x60xf32>
    %106 = tpu.matmul %96, %105, %cst_115 {dimension_numbers = #tpu.dot_dimension_numbers<[1], [0], [0], [1], [0, 0, 1, 1], [], []>} : vector<64x60xf32>, vector<60x60xf32>, vector<64x60xf32> -> vector<64x60xf32>
    %107 = arith.addf %103, %106 : vector<64x60xf32>
    %c2_116 = arith.constant 2 : index
    %c0_117 = arith.constant 0 : index
    %c0_118 = arith.constant 0 : index
    %108 = vector.load %arg4[%c2_116, %c0_117, %c0_118] : memref<3x60x60xf32, #tpu.memory_space<vmem>>, vector<1x60x60xf32>
    %109 = vector.shape_cast %108 : vector<1x60x60xf32> to vector<60x60xf32>
    %cst_119 = arith.constant dense<0.000000e+00> : vector<64x60xf32>
    %110 = tpu.matmul %100, %109, %cst_119 {dimension_numbers = #tpu.dot_dimension_numbers<[1], [0], [0], [1], [0, 0, 1, 1], [], []>} : vector<64x60xf32>, vector<60x60xf32>, vector<64x60xf32> -> vector<64x60xf32>
    %111 = arith.addf %107, %110 : vector<64x60xf32>
    %c0_120 = arith.constant 0 : index
    %c0_121 = arith.constant 0 : index
    %112 = vector.load %arg5[%c0_120, %c0_121] : memref<1x60xf32, #tpu.memory_space<vmem>>, vector<1x60xf32>
    %113 = vector.broadcast %112 : vector<1x60xf32> to vector<64x60xf32>
    %114 = arith.addf %111, %113 : vector<64x60xf32>
    %cst_122 = arith.constant 0.000000e+00 : f32
    %115 = vector.broadcast %cst_122 : f32 to vector<64x60xf32>
    %116 = arith.maximumf %114, %115 : vector<64x60xf32>
    %117 = vector.shape_cast %116 : vector<64x60xf32> to vector<4x16x60xf32>
    %c0_123 = arith.constant 0 : index
    %c0_124 = arith.constant 0 : index
    %118 = vector.load %arg6[%c0_123, %c0_124] : memref<60x128xf32, #tpu.memory_space<vmem>>, vector<60x128xf32>
    %c0_125 = arith.constant 0 : index
    %c0_126 = arith.constant 0 : index
    %119 = vector.load %arg9[%c0_125, %c0_126] : memref<32x128xf32, #tpu.memory_space<vmem>>, vector<32x128xf32>
    %c0_127 = arith.constant 0 : index
    %c0_128 = arith.constant 0 : index
    %120 = vector.load %arg7[%c0_127, %c0_128] : memref<32x128xf32, #tpu.memory_space<vmem>>, vector<32x128xf32>
    %c0_129 = arith.constant 0 : index
    %c0_130 = arith.constant 0 : index
    %121 = vector.load %arg10[%c0_129, %c0_130] : memref<32x128xf32, #tpu.memory_space<vmem>>, vector<32x128xf32>
    %c0_131 = arith.constant 0 : index
    %c0_132 = arith.constant 0 : index
    %122 = vector.load %arg8[%c0_131, %c0_132] : memref<1x128xf32, #tpu.memory_space<vmem>>, vector<1x128xf32>
    %c0_133 = arith.constant 0 : index
    %c0_134 = arith.constant 0 : index
    %123 = vector.load %arg11[%c0_133, %c0_134] : memref<1x128xf32, #tpu.memory_space<vmem>>, vector<1x128xf32>
    %124 = vector.shape_cast %117 : vector<4x16x60xf32> to vector<64x60xf32>
    %cst_135 = arith.constant dense<0.000000e+00> : vector<64x128xf32>
    %125 = tpu.matmul %124, %118, %cst_135 {dimension_numbers = #tpu.dot_dimension_numbers<[1], [0], [0], [1], [0, 0, 1, 1], [], []>} : vector<64x60xf32>, vector<60x128xf32>, vector<64x128xf32> -> vector<64x128xf32>
    %126 = vector.broadcast %122 : vector<1x128xf32> to vector<64x128xf32>
    %127 = arith.addf %125, %126 : vector<64x128xf32>
    %128 = vector.shape_cast %127 : vector<64x128xf32> to vector<4x16x128xf32>
    %c0_136 = arith.constant 0 : index
    %c0_137 = arith.constant 0 : index
    %c0_138 = arith.constant 0 : index
    %129 = vector.load %arg18[%c0_136, %c0_137, %c0_138] : memref<4x16x128xf32, #tpu.memory_space<vmem>>, vector<4x16x128xf32>
    tpu.vector_store %arg18[%c0_136, %c0_137, %c0_138], %128 {strides = array<i32>} : memref<4x16x128xf32, #tpu.memory_space<vmem>>, vector<4x16x128xf32>,
    %cst_139 = arith.constant 0.000000e+00 : f32
    %130 = vector.broadcast %cst_139 : f32 to vector<4x32xf32>
    %cst_140 = arith.constant 0.000000e+00 : f32
    %131 = vector.broadcast %cst_140 : f32 to vector<4x32xf32>
    %cst_141 = arith.constant 0.000000e+00 : f32
    %132 = vector.broadcast %cst_141 : f32 to vector<4x32xf32>
    %cst_142 = arith.constant 0.000000e+00 : f32
    %133 = vector.broadcast %cst_142 : f32 to vector<4x32xf32>
    %cst_143 = arith.constant 0.000000e+00 : f32
    %134 = vector.broadcast %cst_143 : f32 to vector<4x32xf32>
    %c0_144 = arith.constant 0 : index
    %c0_145 = arith.constant 0 : index
    %c0_146 = arith.constant 0 : index
    %135 = vector.load %arg18[%c0_144, %c0_145, %c0_146] : memref<4x16x128xf32, #tpu.memory_space<vmem>>, vector<4x1x128xf32>
    %136 = vector.shape_cast %135 : vector<4x1x128xf32> to vector<4x128xf32>
    %cst_147 = arith.constant dense<0.000000e+00> : vector<4x128xf32>
    %137 = tpu.matmul %130, %120, %cst_147 {dimension_numbers = #tpu.dot_dimension_numbers<[1], [0], [0], [1], [0, 0, 1, 1], [], []>} : vector<4x32xf32>, vector<32x128xf32>, vector<4x128xf32> -> vector<4x128xf32>
    %138 = arith.addf %136, %137 : vector<4x128xf32>
    %139 = arith.negf %138 : vector<4x128xf32>
    %140 = math.exp %139 : vector<4x128xf32>
    %cst_148 = arith.constant 1.000000e+00 : f32
    %141 = vector.broadcast %cst_148 : f32 to vector<4x128xf32>
    %142 = arith.addf %141, %140 : vector<4x128xf32>
    %143 = arith.divf %141, %142 : vector<4x128xf32>
    %144 = math.tanh %138 : vector<4x128xf32>
    %145 = vector.extract_strided_slice %143 {offsets = [0, 0], sizes = [4, 32], strides = [1, 1]} : vector<4x128xf32> to vector<4x32xf32>
    %146 = vector.extract_strided_slice %143 {offsets = [0, 32], sizes = [4, 32], strides = [1, 1]} : vector<4x128xf32> to vector<4x32xf32>
    %147 = vector.extract_strided_slice %144 {offsets = [0, 64], sizes = [4, 32], strides = [1, 1]} : vector<4x128xf32> to vector<4x32xf32>
    %148 = vector.extract_strided_slice %143 {offsets = [0, 96], sizes = [4, 32], strides = [1, 1]} : vector<4x128xf32> to vector<4x32xf32>
    %149 = arith.mulf %146, %132 : vector<4x32xf32>
    %150 = arith.mulf %145, %147 : vector<4x32xf32>
    %151 = arith.addf %149, %150 : vector<4x32xf32>
    %152 = math.tanh %151 : vector<4x32xf32>
    %153 = arith.mulf %148, %152 : vector<4x32xf32>
    %cst_149 = arith.constant dense<0.000000e+00> : vector<4x128xf32>
    %154 = tpu.matmul %153, %119, %cst_149 {dimension_numbers = #tpu.dot_dimension_numbers<[1], [0], [0], [1], [0, 0, 1, 1], [], []>} : vector<4x32xf32>, vector<32x128xf32>, vector<4x128xf32> -> vector<4x128xf32>
    %cst_150 = arith.constant dense<0.000000e+00> : vector<4x128xf32>
    %155 = tpu.matmul %131, %121, %cst_150 {dimension_numbers = #tpu.dot_dimension_numbers<[1], [0], [0], [1], [0, 0, 1, 1], [], []>} : vector<4x32xf32>, vector<32x128xf32>, vector<4x128xf32> -> vector<4x128xf32>
    %156 = arith.addf %154, %155 : vector<4x128xf32>
    %157 = vector.broadcast %123 : vector<1x128xf32> to vector<4x128xf32>
    %158 = arith.addf %156, %157 : vector<4x128xf32>
    %159 = arith.negf %158 : vector<4x128xf32>
    %160 = math.exp %159 : vector<4x128xf32>
    %cst_151 = arith.constant 1.000000e+00 : f32
    %161 = vector.broadcast %cst_151 : f32 to vector<4x128xf32>
    %162 = arith.addf %161, %160 : vector<4x128xf32>
    %163 = arith.divf %161, %162 : vector<4x128xf32>
    %164 = math.tanh %158 : vector<4x128xf32>
    %165 = vector.extract_strided_slice %163 {offsets = [0, 0], sizes = [4, 32], strides = [1, 1]} : vector<4x128xf32> to vector<4x32xf32>
    %166 = vector.extract_strided_slice %163 {offsets = [0, 32], sizes = [4, 32], strides = [1, 1]} : vector<4x128xf32> to vector<4x32xf32>
    %167 = vector.extract_strided_slice %164 {offsets = [0, 64], sizes = [4, 32], strides = [1, 1]} : vector<4x128xf32> to vector<4x32xf32>
    %168 = vector.extract_strided_slice %163 {offsets = [0, 96], sizes = [4, 32], strides = [1, 1]} : vector<4x128xf32> to vector<4x32xf32>
    %169 = arith.mulf %166, %133 : vector<4x32xf32>
    %170 = arith.mulf %165, %167 : vector<4x32xf32>
    %171 = arith.addf %169, %170 : vector<4x32xf32>
    %172 = math.tanh %171 : vector<4x32xf32>
    %173 = arith.mulf %168, %172 : vector<4x32xf32>
    %174 = arith.addf %134, %173 : vector<4x32xf32>
    %c0_152 = arith.constant 0 : index
    %c1_153 = arith.constant 1 : index
    %c0_154 = arith.constant 0 : index
    %175 = vector.load %arg18[%c0_152, %c1_153, %c0_154] : memref<4x16x128xf32, #tpu.memory_space<vmem>>, vector<4x1x128xf32>
    %176 = vector.shape_cast %175 : vector<4x1x128xf32> to vector<4x128xf32>
    %cst_155 = arith.constant dense<0.000000e+00> : vector<4x128xf32>
    %177 = tpu.matmul %153, %120, %cst_155 {dimension_numbers = #tpu.dot_dimension_numbers<[1], [0], [0], [1], [0, 0, 1, 1], [], []>} : vector<4x32xf32>, vector<32x128xf32>, vector<4x128xf32> -> vector<4x128xf32>
    %178 = arith.addf %176, %177 : vector<4x128xf32>
    %179 = arith.negf %178 : vector<4x128xf32>
    %180 = math.exp %179 : vector<4x128xf32>
    %cst_156 = arith.constant 1.000000e+00 : f32
    %181 = vector.broadcast %cst_156 : f32 to vector<4x128xf32>
    %182 = arith.addf %181, %180 : vector<4x128xf32>
    %183 = arith.divf %181, %182 : vector<4x128xf32>
    %184 = math.tanh %178 : vector<4x128xf32>
    %185 = vector.extract_strided_slice %183 {offsets = [0, 0], sizes = [4, 32], strides = [1, 1]} : vector<4x128xf32> to vector<4x32xf32>
    %186 = vector.extract_strided_slice %183 {offsets = [0, 32], sizes = [4, 32], strides = [1, 1]} : vector<4x128xf32> to vector<4x32xf32>
    %187 = vector.extract_strided_slice %184 {offsets = [0, 64], sizes = [4, 32], strides = [1, 1]} : vector<4x128xf32> to vector<4x32xf32>
    %188 = vector.extract_strided_slice %183 {offsets = [0, 96], sizes = [4, 32], strides = [1, 1]} : vector<4x128xf32> to vector<4x32xf32>
    %189 = arith.mulf %186, %151 : vector<4x32xf32>
    %190 = arith.mulf %185, %187 : vector<4x32xf32>
    %191 = arith.addf %189, %190 : vector<4x32xf32>
    %192 = math.tanh %191 : vector<4x32xf32>
    %193 = arith.mulf %188, %192 : vector<4x32xf32>
    %cst_157 = arith.constant dense<0.000000e+00> : vector<4x128xf32>
    %194 = tpu.matmul %193, %119, %cst_157 {dimension_numbers = #tpu.dot_dimension_numbers<[1], [0], [0], [1], [0, 0, 1, 1], [], []>} : vector<4x32xf32>, vector<32x128xf32>, vector<4x128xf32> -> vector<4x128xf32>
    %cst_158 = arith.constant dense<0.000000e+00> : vector<4x128xf32>
    %195 = tpu.matmul %173, %121, %cst_158 {dimension_numbers = #tpu.dot_dimension_numbers<[1], [0], [0], [1], [0, 0, 1, 1], [], []>} : vector<4x32xf32>, vector<32x128xf32>, vector<4x128xf32> -> vector<4x128xf32>
    %196 = arith.addf %194, %195 : vector<4x128xf32>
    %197 = vector.broadcast %123 : vector<1x128xf32> to vector<4x128xf32>
    %198 = arith.addf %196, %197 : vector<4x128xf32>
    %199 = arith.negf %198 : vector<4x128xf32>
    %200 = math.exp %199 : vector<4x128xf32>
    %cst_159 = arith.constant 1.000000e+00 : f32
    %201 = vector.broadcast %cst_159 : f32 to vector<4x128xf32>
    %202 = arith.addf %201, %200 : vector<4x128xf32>
    %203 = arith.divf %201, %202 : vector<4x128xf32>
    %204 = math.tanh %198 : vector<4x128xf32>
    %205 = vector.extract_strided_slice %203 {offsets = [0, 0], sizes = [4, 32], strides = [1, 1]} : vector<4x128xf32> to vector<4x32xf32>
    %206 = vector.extract_strided_slice %203 {offsets = [0, 32], sizes = [4, 32], strides = [1, 1]} : vector<4x128xf32> to vector<4x32xf32>
    %207 = vector.extract_strided_slice %204 {offsets = [0, 64], sizes = [4, 32], strides = [1, 1]} : vector<4x128xf32> to vector<4x32xf32>
    %208 = vector.extract_strided_slice %203 {offsets = [0, 96], sizes = [4, 32], strides = [1, 1]} : vector<4x128xf32> to vector<4x32xf32>
    %209 = arith.mulf %206, %171 : vector<4x32xf32>
    %210 = arith.mulf %205, %207 : vector<4x32xf32>
    %211 = arith.addf %209, %210 : vector<4x32xf32>
    %212 = math.tanh %211 : vector<4x32xf32>
    %213 = arith.mulf %208, %212 : vector<4x32xf32>
    %214 = arith.addf %174, %213 : vector<4x32xf32>
    %c0_160 = arith.constant 0 : index
    %c2_161 = arith.constant 2 : index
    %c0_162 = arith.constant 0 : index
    %215 = vector.load %arg18[%c0_160, %c2_161, %c0_162] : memref<4x16x128xf32, #tpu.memory_space<vmem>>, vector<4x1x128xf32>
    %216 = vector.shape_cast %215 : vector<4x1x128xf32> to vector<4x128xf32>
    %cst_163 = arith.constant dense<0.000000e+00> : vector<4x128xf32>
    %217 = tpu.matmul %193, %120, %cst_163 {dimension_numbers = #tpu.dot_dimension_numbers<[1], [0], [0], [1], [0, 0, 1, 1], [], []>} : vector<4x32xf32>, vector<32x128xf32>, vector<4x128xf32> -> vector<4x128xf32>
    %218 = arith.addf %216, %217 : vector<4x128xf32>
    %219 = arith.negf %218 : vector<4x128xf32>
    %220 = math.exp %219 : vector<4x128xf32>
    %cst_164 = arith.constant 1.000000e+00 : f32
    %221 = vector.broadcast %cst_164 : f32 to vector<4x128xf32>
    %222 = arith.addf %221, %220 : vector<4x128xf32>
    %223 = arith.divf %221, %222 : vector<4x128xf32>
    %224 = math.tanh %218 : vector<4x128xf32>
    %225 = vector.extract_strided_slice %223 {offsets = [0, 0], sizes = [4, 32], strides = [1, 1]} : vector<4x128xf32> to vector<4x32xf32>
    %226 = vector.extract_strided_slice %223 {offsets = [0, 32], sizes = [4, 32], strides = [1, 1]} : vector<4x128xf32> to vector<4x32xf32>
    %227 = vector.extract_strided_slice %224 {offsets = [0, 64], sizes = [4, 32], strides = [1, 1]} : vector<4x128xf32> to vector<4x32xf32>
    %228 = vector.extract_strided_slice %223 {offsets = [0, 96], sizes = [4, 32], strides = [1, 1]} : vector<4x128xf32> to vector<4x32xf32>
    %229 = arith.mulf %226, %191 : vector<4x32xf32>
    %230 = arith.mulf %225, %227 : vector<4x32xf32>
    %231 = arith.addf %229, %230 : vector<4x32xf32>
    %232 = math.tanh %231 : vector<4x32xf32>
    %233 = arith.mulf %228, %232 : vector<4x32xf32>
    %cst_165 = arith.constant dense<0.000000e+00> : vector<4x128xf32>
    %234 = tpu.matmul %233, %119, %cst_165 {dimension_numbers = #tpu.dot_dimension_numbers<[1], [0], [0], [1], [0, 0, 1, 1], [], []>} : vector<4x32xf32>, vector<32x128xf32>, vector<4x128xf32> -> vector<4x128xf32>
    %cst_166 = arith.constant dense<0.000000e+00> : vector<4x128xf32>
    %235 = tpu.matmul %213, %121, %cst_166 {dimension_numbers = #tpu.dot_dimension_numbers<[1], [0], [0], [1], [0, 0, 1, 1], [], []>} : vector<4x32xf32>, vector<32x128xf32>, vector<4x128xf32> -> vector<4x128xf32>
    %236 = arith.addf %234, %235 : vector<4x128xf32>
    %237 = vector.broadcast %123 : vector<1x128xf32> to vector<4x128xf32>
    %238 = arith.addf %236, %237 : vector<4x128xf32>
    %239 = arith.negf %238 : vector<4x128xf32>
    %240 = math.exp %239 : vector<4x128xf32>
    %cst_167 = arith.constant 1.000000e+00 : f32
    %241 = vector.broadcast %cst_167 : f32 to vector<4x128xf32>
    %242 = arith.addf %241, %240 : vector<4x128xf32>
    %243 = arith.divf %241, %242 : vector<4x128xf32>
    %244 = math.tanh %238 : vector<4x128xf32>
    %245 = vector.extract_strided_slice %243 {offsets = [0, 0], sizes = [4, 32], strides = [1, 1]} : vector<4x128xf32> to vector<4x32xf32>
    %246 = vector.extract_strided_slice %243 {offsets = [0, 32], sizes = [4, 32], strides = [1, 1]} : vector<4x128xf32> to vector<4x32xf32>
    %247 = vector.extract_strided_slice %244 {offsets = [0, 64], sizes = [4, 32], strides = [1, 1]} : vector<4x128xf32> to vector<4x32xf32>
    %248 = vector.extract_strided_slice %243 {offsets = [0, 96], sizes = [4, 32], strides = [1, 1]} : vector<4x128xf32> to vector<4x32xf32>
    %249 = arith.mulf %246, %211 : vector<4x32xf32>
    %250 = arith.mulf %245, %247 : vector<4x32xf32>
    %251 = arith.addf %249, %250 : vector<4x32xf32>
    %252 = math.tanh %251 : vector<4x32xf32>
    %253 = arith.mulf %248, %252 : vector<4x32xf32>
    %254 = arith.addf %214, %253 : vector<4x32xf32>
    %c0_168 = arith.constant 0 : index
    %c3 = arith.constant 3 : index
    %c0_169 = arith.constant 0 : index
    %255 = vector.load %arg18[%c0_168, %c3, %c0_169] : memref<4x16x128xf32, #tpu.memory_space<vmem>>, vector<4x1x128xf32>
    %256 = vector.shape_cast %255 : vector<4x1x128xf32> to vector<4x128xf32>
    %cst_170 = arith.constant dense<0.000000e+00> : vector<4x128xf32>
    %257 = tpu.matmul %233, %120, %cst_170 {dimension_numbers = #tpu.dot_dimension_numbers<[1], [0], [0], [1], [0, 0, 1, 1], [], []>} : vector<4x32xf32>, vector<32x128xf32>, vector<4x128xf32> -> vector<4x128xf32>
    %258 = arith.addf %256, %257 : vector<4x128xf32>
    %259 = arith.negf %258 : vector<4x128xf32>
    %260 = math.exp %259 : vector<4x128xf32>
    %cst_171 = arith.constant 1.000000e+00 : f32
    %261 = vector.broadcast %cst_171 : f32 to vector<4x128xf32>
    %262 = arith.addf %261, %260 : vector<4x128xf32>
    %263 = arith.divf %261, %262 : vector<4x128xf32>
    %264 = math.tanh %258 : vector<4x128xf32>
    %265 = vector.extract_strided_slice %263 {offsets = [0, 0], sizes = [4, 32], strides = [1, 1]} : vector<4x128xf32> to vector<4x32xf32>
    %266 = vector.extract_strided_slice %263 {offsets = [0, 32], sizes = [4, 32], strides = [1, 1]} : vector<4x128xf32> to vector<4x32xf32>
    %267 = vector.extract_strided_slice %264 {offsets = [0, 64], sizes = [4, 32], strides = [1, 1]} : vector<4x128xf32> to vector<4x32xf32>
    %268 = vector.extract_strided_slice %263 {offsets = [0, 96], sizes = [4, 32], strides = [1, 1]} : vector<4x128xf32> to vector<4x32xf32>
    %269 = arith.mulf %266, %231 : vector<4x32xf32>
    %270 = arith.mulf %265, %267 : vector<4x32xf32>
    %271 = arith.addf %269, %270 : vector<4x32xf32>
    %272 = math.tanh %271 : vector<4x32xf32>
    %273 = arith.mulf %268, %272 : vector<4x32xf32>
    %cst_172 = arith.constant dense<0.000000e+00> : vector<4x128xf32>
    %274 = tpu.matmul %273, %119, %cst_172 {dimension_numbers = #tpu.dot_dimension_numbers<[1], [0], [0], [1], [0, 0, 1, 1], [], []>} : vector<4x32xf32>, vector<32x128xf32>, vector<4x128xf32> -> vector<4x128xf32>
    %cst_173 = arith.constant dense<0.000000e+00> : vector<4x128xf32>
    %275 = tpu.matmul %253, %121, %cst_173 {dimension_numbers = #tpu.dot_dimension_numbers<[1], [0], [0], [1], [0, 0, 1, 1], [], []>} : vector<4x32xf32>, vector<32x128xf32>, vector<4x128xf32> -> vector<4x128xf32>
    %276 = arith.addf %274, %275 : vector<4x128xf32>
    %277 = vector.broadcast %123 : vector<1x128xf32> to vector<4x128xf32>
    %278 = arith.addf %276, %277 : vector<4x128xf32>
    %279 = arith.negf %278 : vector<4x128xf32>
    %280 = math.exp %279 : vector<4x128xf32>
    %cst_174 = arith.constant 1.000000e+00 : f32
    %281 = vector.broadcast %cst_174 : f32 to vector<4x128xf32>
    %282 = arith.addf %281, %280 : vector<4x128xf32>
    %283 = arith.divf %281, %282 : vector<4x128xf32>
    %284 = math.tanh %278 : vector<4x128xf32>
    %285 = vector.extract_strided_slice %283 {offsets = [0, 0], sizes = [4, 32], strides = [1, 1]} : vector<4x128xf32> to vector<4x32xf32>
    %286 = vector.extract_strided_slice %283 {offsets = [0, 32], sizes = [4, 32], strides = [1, 1]} : vector<4x128xf32> to vector<4x32xf32>
    %287 = vector.extract_strided_slice %284 {offsets = [0, 64], sizes = [4, 32], strides = [1, 1]} : vector<4x128xf32> to vector<4x32xf32>
    %288 = vector.extract_strided_slice %283 {offsets = [0, 96], sizes = [4, 32], strides = [1, 1]} : vector<4x128xf32> to vector<4x32xf32>
    %289 = arith.mulf %286, %251 : vector<4x32xf32>
    %290 = arith.mulf %285, %287 : vector<4x32xf32>
    %291 = arith.addf %289, %290 : vector<4x32xf32>
    %292 = math.tanh %291 : vector<4x32xf32>
    %293 = arith.mulf %288, %292 : vector<4x32xf32>
    %294 = arith.addf %254, %293 : vector<4x32xf32>
    %c0_175 = arith.constant 0 : index
    %c4 = arith.constant 4 : index
    %c0_176 = arith.constant 0 : index
    %295 = vector.load %arg18[%c0_175, %c4, %c0_176] : memref<4x16x128xf32, #tpu.memory_space<vmem>>, vector<4x1x128xf32>
    %296 = vector.shape_cast %295 : vector<4x1x128xf32> to vector<4x128xf32>
    %cst_177 = arith.constant dense<0.000000e+00> : vector<4x128xf32>
    %297 = tpu.matmul %273, %120, %cst_177 {dimension_numbers = #tpu.dot_dimension_numbers<[1], [0], [0], [1], [0, 0, 1, 1], [], []>} : vector<4x32xf32>, vector<32x128xf32>, vector<4x128xf32> -> vector<4x128xf32>
    %298 = arith.addf %296, %297 : vector<4x128xf32>
    %299 = arith.negf %298 : vector<4x128xf32>
    %300 = math.exp %299 : vector<4x128xf32>
    %cst_178 = arith.constant 1.000000e+00 : f32
    %301 = vector.broadcast %cst_178 : f32 to vector<4x128xf32>
    %302 = arith.addf %301, %300 : vector<4x128xf32>
    %303 = arith.divf %301, %302 : vector<4x128xf32>
    %304 = math.tanh %298 : vector<4x128xf32>
    %305 = vector.extract_strided_slice %303 {offsets = [0, 0], sizes = [4, 32], strides = [1, 1]} : vector<4x128xf32> to vector<4x32xf32>
    %306 = vector.extract_strided_slice %303 {offsets = [0, 32], sizes = [4, 32], strides = [1, 1]} : vector<4x128xf32> to vector<4x32xf32>
    %307 = vector.extract_strided_slice %304 {offsets = [0, 64], sizes = [4, 32], strides = [1, 1]} : vector<4x128xf32> to vector<4x32xf32>
    %308 = vector.extract_strided_slice %303 {offsets = [0, 96], sizes = [4, 32], strides = [1, 1]} : vector<4x128xf32> to vector<4x32xf32>
    %309 = arith.mulf %306, %271 : vector<4x32xf32>
    %310 = arith.mulf %305, %307 : vector<4x32xf32>
    %311 = arith.addf %309, %310 : vector<4x32xf32>
    %312 = math.tanh %311 : vector<4x32xf32>
    %313 = arith.mulf %308, %312 : vector<4x32xf32>
    %cst_179 = arith.constant dense<0.000000e+00> : vector<4x128xf32>
    %314 = tpu.matmul %313, %119, %cst_179 {dimension_numbers = #tpu.dot_dimension_numbers<[1], [0], [0], [1], [0, 0, 1, 1], [], []>} : vector<4x32xf32>, vector<32x128xf32>, vector<4x128xf32> -> vector<4x128xf32>
    %cst_180 = arith.constant dense<0.000000e+00> : vector<4x128xf32>
    %315 = tpu.matmul %293, %121, %cst_180 {dimension_numbers = #tpu.dot_dimension_numbers<[1], [0], [0], [1], [0, 0, 1, 1], [], []>} : vector<4x32xf32>, vector<32x128xf32>, vector<4x128xf32> -> vector<4x128xf32>
    %316 = arith.addf %314, %315 : vector<4x128xf32>
    %317 = vector.broadcast %123 : vector<1x128xf32> to vector<4x128xf32>
    %318 = arith.addf %316, %317 : vector<4x128xf32>
    %319 = arith.negf %318 : vector<4x128xf32>
    %320 = math.exp %319 : vector<4x128xf32>
    %cst_181 = arith.constant 1.000000e+00 : f32
    %321 = vector.broadcast %cst_181 : f32 to vector<4x128xf32>
    %322 = arith.addf %321, %320 : vector<4x128xf32>
    %323 = arith.divf %321, %322 : vector<4x128xf32>
    %324 = math.tanh %318 : vector<4x128xf32>
    %325 = vector.extract_strided_slice %323 {offsets = [0, 0], sizes = [4, 32], strides = [1, 1]} : vector<4x128xf32> to vector<4x32xf32>
    %326 = vector.extract_strided_slice %323 {offsets = [0, 32], sizes = [4, 32], strides = [1, 1]} : vector<4x128xf32> to vector<4x32xf32>
    %327 = vector.extract_strided_slice %324 {offsets = [0, 64], sizes = [4, 32], strides = [1, 1]} : vector<4x128xf32> to vector<4x32xf32>
    %328 = vector.extract_strided_slice %323 {offsets = [0, 96], sizes = [4, 32], strides = [1, 1]} : vector<4x128xf32> to vector<4x32xf32>
    %329 = arith.mulf %326, %291 : vector<4x32xf32>
    %330 = arith.mulf %325, %327 : vector<4x32xf32>
    %331 = arith.addf %329, %330 : vector<4x32xf32>
    %332 = math.tanh %331 : vector<4x32xf32>
    %333 = arith.mulf %328, %332 : vector<4x32xf32>
    %334 = arith.addf %294, %333 : vector<4x32xf32>
    %c0_182 = arith.constant 0 : index
    %c5 = arith.constant 5 : index
    %c0_183 = arith.constant 0 : index
    %335 = vector.load %arg18[%c0_182, %c5, %c0_183] : memref<4x16x128xf32, #tpu.memory_space<vmem>>, vector<4x1x128xf32>
    %336 = vector.shape_cast %335 : vector<4x1x128xf32> to vector<4x128xf32>
    %cst_184 = arith.constant dense<0.000000e+00> : vector<4x128xf32>
    %337 = tpu.matmul %313, %120, %cst_184 {dimension_numbers = #tpu.dot_dimension_numbers<[1], [0], [0], [1], [0, 0, 1, 1], [], []>} : vector<4x32xf32>, vector<32x128xf32>, vector<4x128xf32> -> vector<4x128xf32>
    %338 = arith.addf %336, %337 : vector<4x128xf32>
    %339 = arith.negf %338 : vector<4x128xf32>
    %340 = math.exp %339 : vector<4x128xf32>
    %cst_185 = arith.constant 1.000000e+00 : f32
    %341 = vector.broadcast %cst_185 : f32 to vector<4x128xf32>
    %342 = arith.addf %341, %340 : vector<4x128xf32>
    %343 = arith.divf %341, %342 : vector<4x128xf32>
    %344 = math.tanh %338 : vector<4x128xf32>
    %345 = vector.extract_strided_slice %343 {offsets = [0, 0], sizes = [4, 32], strides = [1, 1]} : vector<4x128xf32> to vector<4x32xf32>
    %346 = vector.extract_strided_slice %343 {offsets = [0, 32], sizes = [4, 32], strides = [1, 1]} : vector<4x128xf32> to vector<4x32xf32>
    %347 = vector.extract_strided_slice %344 {offsets = [0, 64], sizes = [4, 32], strides = [1, 1]} : vector<4x128xf32> to vector<4x32xf32>
    %348 = vector.extract_strided_slice %343 {offsets = [0, 96], sizes = [4, 32], strides = [1, 1]} : vector<4x128xf32> to vector<4x32xf32>
    %349 = arith.mulf %346, %311 : vector<4x32xf32>
    %350 = arith.mulf %345, %347 : vector<4x32xf32>
    %351 = arith.addf %349, %350 : vector<4x32xf32>
    %352 = math.tanh %351 : vector<4x32xf32>
    %353 = arith.mulf %348, %352 : vector<4x32xf32>
    %cst_186 = arith.constant dense<0.000000e+00> : vector<4x128xf32>
    %354 = tpu.matmul %353, %119, %cst_186 {dimension_numbers = #tpu.dot_dimension_numbers<[1], [0], [0], [1], [0, 0, 1, 1], [], []>} : vector<4x32xf32>, vector<32x128xf32>, vector<4x128xf32> -> vector<4x128xf32>
    %cst_187 = arith.constant dense<0.000000e+00> : vector<4x128xf32>
    %355 = tpu.matmul %333, %121, %cst_187 {dimension_numbers = #tpu.dot_dimension_numbers<[1], [0], [0], [1], [0, 0, 1, 1], [], []>} : vector<4x32xf32>, vector<32x128xf32>, vector<4x128xf32> -> vector<4x128xf32>
    %356 = arith.addf %354, %355 : vector<4x128xf32>
    %357 = vector.broadcast %123 : vector<1x128xf32> to vector<4x128xf32>
    %358 = arith.addf %356, %357 : vector<4x128xf32>
    %359 = arith.negf %358 : vector<4x128xf32>
    %360 = math.exp %359 : vector<4x128xf32>
    %cst_188 = arith.constant 1.000000e+00 : f32
    %361 = vector.broadcast %cst_188 : f32 to vector<4x128xf32>
    %362 = arith.addf %361, %360 : vector<4x128xf32>
    %363 = arith.divf %361, %362 : vector<4x128xf32>
    %364 = math.tanh %358 : vector<4x128xf32>
    %365 = vector.extract_strided_slice %363 {offsets = [0, 0], sizes = [4, 32], strides = [1, 1]} : vector<4x128xf32> to vector<4x32xf32>
    %366 = vector.extract_strided_slice %363 {offsets = [0, 32], sizes = [4, 32], strides = [1, 1]} : vector<4x128xf32> to vector<4x32xf32>
    %367 = vector.extract_strided_slice %364 {offsets = [0, 64], sizes = [4, 32], strides = [1, 1]} : vector<4x128xf32> to vector<4x32xf32>
    %368 = vector.extract_strided_slice %363 {offsets = [0, 96], sizes = [4, 32], strides = [1, 1]} : vector<4x128xf32> to vector<4x32xf32>
    %369 = arith.mulf %366, %331 : vector<4x32xf32>
    %370 = arith.mulf %365, %367 : vector<4x32xf32>
    %371 = arith.addf %369, %370 : vector<4x32xf32>
    %372 = math.tanh %371 : vector<4x32xf32>
    %373 = arith.mulf %368, %372 : vector<4x32xf32>
    %374 = arith.addf %334, %373 : vector<4x32xf32>
    %c0_189 = arith.constant 0 : index
    %c6 = arith.constant 6 : index
    %c0_190 = arith.constant 0 : index
    %375 = vector.load %arg18[%c0_189, %c6, %c0_190] : memref<4x16x128xf32, #tpu.memory_space<vmem>>, vector<4x1x128xf32>
    %376 = vector.shape_cast %375 : vector<4x1x128xf32> to vector<4x128xf32>
    %cst_191 = arith.constant dense<0.000000e+00> : vector<4x128xf32>
    %377 = tpu.matmul %353, %120, %cst_191 {dimension_numbers = #tpu.dot_dimension_numbers<[1], [0], [0], [1], [0, 0, 1, 1], [], []>} : vector<4x32xf32>, vector<32x128xf32>, vector<4x128xf32> -> vector<4x128xf32>
    %378 = arith.addf %376, %377 : vector<4x128xf32>
    %379 = arith.negf %378 : vector<4x128xf32>
    %380 = math.exp %379 : vector<4x128xf32>
    %cst_192 = arith.constant 1.000000e+00 : f32
    %381 = vector.broadcast %cst_192 : f32 to vector<4x128xf32>
    %382 = arith.addf %381, %380 : vector<4x128xf32>
    %383 = arith.divf %381, %382 : vector<4x128xf32>
    %384 = math.tanh %378 : vector<4x128xf32>
    %385 = vector.extract_strided_slice %383 {offsets = [0, 0], sizes = [4, 32], strides = [1, 1]} : vector<4x128xf32> to vector<4x32xf32>
    %386 = vector.extract_strided_slice %383 {offsets = [0, 32], sizes = [4, 32], strides = [1, 1]} : vector<4x128xf32> to vector<4x32xf32>
    %387 = vector.extract_strided_slice %384 {offsets = [0, 64], sizes = [4, 32], strides = [1, 1]} : vector<4x128xf32> to vector<4x32xf32>
    %388 = vector.extract_strided_slice %383 {offsets = [0, 96], sizes = [4, 32], strides = [1, 1]} : vector<4x128xf32> to vector<4x32xf32>
    %389 = arith.mulf %386, %351 : vector<4x32xf32>
    %390 = arith.mulf %385, %387 : vector<4x32xf32>
    %391 = arith.addf %389, %390 : vector<4x32xf32>
    %392 = math.tanh %391 : vector<4x32xf32>
    %393 = arith.mulf %388, %392 : vector<4x32xf32>
    %cst_193 = arith.constant dense<0.000000e+00> : vector<4x128xf32>
    %394 = tpu.matmul %393, %119, %cst_193 {dimension_numbers = #tpu.dot_dimension_numbers<[1], [0], [0], [1], [0, 0, 1, 1], [], []>} : vector<4x32xf32>, vector<32x128xf32>, vector<4x128xf32> -> vector<4x128xf32>
    %cst_194 = arith.constant dense<0.000000e+00> : vector<4x128xf32>
    %395 = tpu.matmul %373, %121, %cst_194 {dimension_numbers = #tpu.dot_dimension_numbers<[1], [0], [0], [1], [0, 0, 1, 1], [], []>} : vector<4x32xf32>, vector<32x128xf32>, vector<4x128xf32> -> vector<4x128xf32>
    %396 = arith.addf %394, %395 : vector<4x128xf32>
    %397 = vector.broadcast %123 : vector<1x128xf32> to vector<4x128xf32>
    %398 = arith.addf %396, %397 : vector<4x128xf32>
    %399 = arith.negf %398 : vector<4x128xf32>
    %400 = math.exp %399 : vector<4x128xf32>
    %cst_195 = arith.constant 1.000000e+00 : f32
    %401 = vector.broadcast %cst_195 : f32 to vector<4x128xf32>
    %402 = arith.addf %401, %400 : vector<4x128xf32>
    %403 = arith.divf %401, %402 : vector<4x128xf32>
    %404 = math.tanh %398 : vector<4x128xf32>
    %405 = vector.extract_strided_slice %403 {offsets = [0, 0], sizes = [4, 32], strides = [1, 1]} : vector<4x128xf32> to vector<4x32xf32>
    %406 = vector.extract_strided_slice %403 {offsets = [0, 32], sizes = [4, 32], strides = [1, 1]} : vector<4x128xf32> to vector<4x32xf32>
    %407 = vector.extract_strided_slice %404 {offsets = [0, 64], sizes = [4, 32], strides = [1, 1]} : vector<4x128xf32> to vector<4x32xf32>
    %408 = vector.extract_strided_slice %403 {offsets = [0, 96], sizes = [4, 32], strides = [1, 1]} : vector<4x128xf32> to vector<4x32xf32>
    %409 = arith.mulf %406, %371 : vector<4x32xf32>
    %410 = arith.mulf %405, %407 : vector<4x32xf32>
    %411 = arith.addf %409, %410 : vector<4x32xf32>
    %412 = math.tanh %411 : vector<4x32xf32>
    %413 = arith.mulf %408, %412 : vector<4x32xf32>
    %414 = arith.addf %374, %413 : vector<4x32xf32>
    %c0_196 = arith.constant 0 : index
    %c7 = arith.constant 7 : index
    %c0_197 = arith.constant 0 : index
    %415 = vector.load %arg18[%c0_196, %c7, %c0_197] : memref<4x16x128xf32, #tpu.memory_space<vmem>>, vector<4x1x128xf32>
    %416 = vector.shape_cast %415 : vector<4x1x128xf32> to vector<4x128xf32>
    %cst_198 = arith.constant dense<0.000000e+00> : vector<4x128xf32>
    %417 = tpu.matmul %393, %120, %cst_198 {dimension_numbers = #tpu.dot_dimension_numbers<[1], [0], [0], [1], [0, 0, 1, 1], [], []>} : vector<4x32xf32>, vector<32x128xf32>, vector<4x128xf32> -> vector<4x128xf32>
    %418 = arith.addf %416, %417 : vector<4x128xf32>
    %419 = arith.negf %418 : vector<4x128xf32>
    %420 = math.exp %419 : vector<4x128xf32>
    %cst_199 = arith.constant 1.000000e+00 : f32
    %421 = vector.broadcast %cst_199 : f32 to vector<4x128xf32>
    %422 = arith.addf %421, %420 : vector<4x128xf32>
    %423 = arith.divf %421, %422 : vector<4x128xf32>
    %424 = math.tanh %418 : vector<4x128xf32>
    %425 = vector.extract_strided_slice %423 {offsets = [0, 0], sizes = [4, 32], strides = [1, 1]} : vector<4x128xf32> to vector<4x32xf32>
    %426 = vector.extract_strided_slice %423 {offsets = [0, 32], sizes = [4, 32], strides = [1, 1]} : vector<4x128xf32> to vector<4x32xf32>
    %427 = vector.extract_strided_slice %424 {offsets = [0, 64], sizes = [4, 32], strides = [1, 1]} : vector<4x128xf32> to vector<4x32xf32>
    %428 = vector.extract_strided_slice %423 {offsets = [0, 96], sizes = [4, 32], strides = [1, 1]} : vector<4x128xf32> to vector<4x32xf32>
    %429 = arith.mulf %426, %391 : vector<4x32xf32>
    %430 = arith.mulf %425, %427 : vector<4x32xf32>
    %431 = arith.addf %429, %430 : vector<4x32xf32>
    %432 = math.tanh %431 : vector<4x32xf32>
    %433 = arith.mulf %428, %432 : vector<4x32xf32>
    %cst_200 = arith.constant dense<0.000000e+00> : vector<4x128xf32>
    %434 = tpu.matmul %433, %119, %cst_200 {dimension_numbers = #tpu.dot_dimension_numbers<[1], [0], [0], [1], [0, 0, 1, 1], [], []>} : vector<4x32xf32>, vector<32x128xf32>, vector<4x128xf32> -> vector<4x128xf32>
    %cst_201 = arith.constant dense<0.000000e+00> : vector<4x128xf32>
    %435 = tpu.matmul %413, %121, %cst_201 {dimension_numbers = #tpu.dot_dimension_numbers<[1], [0], [0], [1], [0, 0, 1, 1], [], []>} : vector<4x32xf32>, vector<32x128xf32>, vector<4x128xf32> -> vector<4x128xf32>
    %436 = arith.addf %434, %435 : vector<4x128xf32>
    %437 = vector.broadcast %123 : vector<1x128xf32> to vector<4x128xf32>
    %438 = arith.addf %436, %437 : vector<4x128xf32>
    %439 = arith.negf %438 : vector<4x128xf32>
    %440 = math.exp %439 : vector<4x128xf32>
    %cst_202 = arith.constant 1.000000e+00 : f32
    %441 = vector.broadcast %cst_202 : f32 to vector<4x128xf32>
    %442 = arith.addf %441, %440 : vector<4x128xf32>
    %443 = arith.divf %441, %442 : vector<4x128xf32>
    %444 = math.tanh %438 : vector<4x128xf32>
    %445 = vector.extract_strided_slice %443 {offsets = [0, 0], sizes = [4, 32], strides = [1, 1]} : vector<4x128xf32> to vector<4x32xf32>
    %446 = vector.extract_strided_slice %443 {offsets = [0, 32], sizes = [4, 32], strides = [1, 1]} : vector<4x128xf32> to vector<4x32xf32>
    %447 = vector.extract_strided_slice %444 {offsets = [0, 64], sizes = [4, 32], strides = [1, 1]} : vector<4x128xf32> to vector<4x32xf32>
    %448 = vector.extract_strided_slice %443 {offsets = [0, 96], sizes = [4, 32], strides = [1, 1]} : vector<4x128xf32> to vector<4x32xf32>
    %449 = arith.mulf %446, %411 : vector<4x32xf32>
    %450 = arith.mulf %445, %447 : vector<4x32xf32>
    %451 = arith.addf %449, %450 : vector<4x32xf32>
    %452 = math.tanh %451 : vector<4x32xf32>
    %453 = arith.mulf %448, %452 : vector<4x32xf32>
    %454 = arith.addf %414, %453 : vector<4x32xf32>
    %c0_203 = arith.constant 0 : index
    %c8 = arith.constant 8 : index
    %c0_204 = arith.constant 0 : index
    %455 = vector.load %arg18[%c0_203, %c8, %c0_204] : memref<4x16x128xf32, #tpu.memory_space<vmem>>, vector<4x1x128xf32>
    %456 = vector.shape_cast %455 : vector<4x1x128xf32> to vector<4x128xf32>
    %cst_205 = arith.constant dense<0.000000e+00> : vector<4x128xf32>
    %457 = tpu.matmul %433, %120, %cst_205 {dimension_numbers = #tpu.dot_dimension_numbers<[1], [0], [0], [1], [0, 0, 1, 1], [], []>} : vector<4x32xf32>, vector<32x128xf32>, vector<4x128xf32> -> vector<4x128xf32>
    %458 = arith.addf %456, %457 : vector<4x128xf32>
    %459 = arith.negf %458 : vector<4x128xf32>
    %460 = math.exp %459 : vector<4x128xf32>
    %cst_206 = arith.constant 1.000000e+00 : f32
    %461 = vector.broadcast %cst_206 : f32 to vector<4x128xf32>
    %462 = arith.addf %461, %460 : vector<4x128xf32>
    %463 = arith.divf %461, %462 : vector<4x128xf32>
    %464 = math.tanh %458 : vector<4x128xf32>
    %465 = vector.extract_strided_slice %463 {offsets = [0, 0], sizes = [4, 32], strides = [1, 1]} : vector<4x128xf32> to vector<4x32xf32>
    %466 = vector.extract_strided_slice %463 {offsets = [0, 32], sizes = [4, 32], strides = [1, 1]} : vector<4x128xf32> to vector<4x32xf32>
    %467 = vector.extract_strided_slice %464 {offsets = [0, 64], sizes = [4, 32], strides = [1, 1]} : vector<4x128xf32> to vector<4x32xf32>
    %468 = vector.extract_strided_slice %463 {offsets = [0, 96], sizes = [4, 32], strides = [1, 1]} : vector<4x128xf32> to vector<4x32xf32>
    %469 = arith.mulf %466, %431 : vector<4x32xf32>
    %470 = arith.mulf %465, %467 : vector<4x32xf32>
    %471 = arith.addf %469, %470 : vector<4x32xf32>
    %472 = math.tanh %471 : vector<4x32xf32>
    %473 = arith.mulf %468, %472 : vector<4x32xf32>
    %cst_207 = arith.constant dense<0.000000e+00> : vector<4x128xf32>
    %474 = tpu.matmul %473, %119, %cst_207 {dimension_numbers = #tpu.dot_dimension_numbers<[1], [0], [0], [1], [0, 0, 1, 1], [], []>} : vector<4x32xf32>, vector<32x128xf32>, vector<4x128xf32> -> vector<4x128xf32>
    %cst_208 = arith.constant dense<0.000000e+00> : vector<4x128xf32>
    %475 = tpu.matmul %453, %121, %cst_208 {dimension_numbers = #tpu.dot_dimension_numbers<[1], [0], [0], [1], [0, 0, 1, 1], [], []>} : vector<4x32xf32>, vector<32x128xf32>, vector<4x128xf32> -> vector<4x128xf32>
    %476 = arith.addf %474, %475 : vector<4x128xf32>
    %477 = vector.broadcast %123 : vector<1x128xf32> to vector<4x128xf32>
    %478 = arith.addf %476, %477 : vector<4x128xf32>
    %479 = arith.negf %478 : vector<4x128xf32>
    %480 = math.exp %479 : vector<4x128xf32>
    %cst_209 = arith.constant 1.000000e+00 : f32
    %481 = vector.broadcast %cst_209 : f32 to vector<4x128xf32>
    %482 = arith.addf %481, %480 : vector<4x128xf32>
    %483 = arith.divf %481, %482 : vector<4x128xf32>
    %484 = math.tanh %478 : vector<4x128xf32>
    %485 = vector.extract_strided_slice %483 {offsets = [0, 0], sizes = [4, 32], strides = [1, 1]} : vector<4x128xf32> to vector<4x32xf32>
    %486 = vector.extract_strided_slice %483 {offsets = [0, 32], sizes = [4, 32], strides = [1, 1]} : vector<4x128xf32> to vector<4x32xf32>
    %487 = vector.extract_strided_slice %484 {offsets = [0, 64], sizes = [4, 32], strides = [1, 1]} : vector<4x128xf32> to vector<4x32xf32>
    %488 = vector.extract_strided_slice %483 {offsets = [0, 96], sizes = [4, 32], strides = [1, 1]} : vector<4x128xf32> to vector<4x32xf32>
    %489 = arith.mulf %486, %451 : vector<4x32xf32>
    %490 = arith.mulf %485, %487 : vector<4x32xf32>
    %491 = arith.addf %489, %490 : vector<4x32xf32>
    %492 = math.tanh %491 : vector<4x32xf32>
    %493 = arith.mulf %488, %492 : vector<4x32xf32>
    %494 = arith.addf %454, %493 : vector<4x32xf32>
    %c0_210 = arith.constant 0 : index
    %c9 = arith.constant 9 : index
    %c0_211 = arith.constant 0 : index
    %495 = vector.load %arg18[%c0_210, %c9, %c0_211] : memref<4x16x128xf32, #tpu.memory_space<vmem>>, vector<4x1x128xf32>
    %496 = vector.shape_cast %495 : vector<4x1x128xf32> to vector<4x128xf32>
    %cst_212 = arith.constant dense<0.000000e+00> : vector<4x128xf32>
    %497 = tpu.matmul %473, %120, %cst_212 {dimension_numbers = #tpu.dot_dimension_numbers<[1], [0], [0], [1], [0, 0, 1, 1], [], []>} : vector<4x32xf32>, vector<32x128xf32>, vector<4x128xf32> -> vector<4x128xf32>
    %498 = arith.addf %496, %497 : vector<4x128xf32>
    %499 = arith.negf %498 : vector<4x128xf32>
    %500 = math.exp %499 : vector<4x128xf32>
    %cst_213 = arith.constant 1.000000e+00 : f32
    %501 = vector.broadcast %cst_213 : f32 to vector<4x128xf32>
    %502 = arith.addf %501, %500 : vector<4x128xf32>
    %503 = arith.divf %501, %502 : vector<4x128xf32>
    %504 = math.tanh %498 : vector<4x128xf32>
    %505 = vector.extract_strided_slice %503 {offsets = [0, 0], sizes = [4, 32], strides = [1, 1]} : vector<4x128xf32> to vector<4x32xf32>
    %506 = vector.extract_strided_slice %503 {offsets = [0, 32], sizes = [4, 32], strides = [1, 1]} : vector<4x128xf32> to vector<4x32xf32>
    %507 = vector.extract_strided_slice %504 {offsets = [0, 64], sizes = [4, 32], strides = [1, 1]} : vector<4x128xf32> to vector<4x32xf32>
    %508 = vector.extract_strided_slice %503 {offsets = [0, 96], sizes = [4, 32], strides = [1, 1]} : vector<4x128xf32> to vector<4x32xf32>
    %509 = arith.mulf %506, %471 : vector<4x32xf32>
    %510 = arith.mulf %505, %507 : vector<4x32xf32>
    %511 = arith.addf %509, %510 : vector<4x32xf32>
    %512 = math.tanh %511 : vector<4x32xf32>
    %513 = arith.mulf %508, %512 : vector<4x32xf32>
    %cst_214 = arith.constant dense<0.000000e+00> : vector<4x128xf32>
    %514 = tpu.matmul %513, %119, %cst_214 {dimension_numbers = #tpu.dot_dimension_numbers<[1], [0], [0], [1], [0, 0, 1, 1], [], []>} : vector<4x32xf32>, vector<32x128xf32>, vector<4x128xf32> -> vector<4x128xf32>
    %cst_215 = arith.constant dense<0.000000e+00> : vector<4x128xf32>
    %515 = tpu.matmul %493, %121, %cst_215 {dimension_numbers = #tpu.dot_dimension_numbers<[1], [0], [0], [1], [0, 0, 1, 1], [], []>} : vector<4x32xf32>, vector<32x128xf32>, vector<4x128xf32> -> vector<4x128xf32>
    %516 = arith.addf %514, %515 : vector<4x128xf32>
    %517 = vector.broadcast %123 : vector<1x128xf32> to vector<4x128xf32>
    %518 = arith.addf %516, %517 : vector<4x128xf32>
    %519 = arith.negf %518 : vector<4x128xf32>
    %520 = math.exp %519 : vector<4x128xf32>
    %cst_216 = arith.constant 1.000000e+00 : f32
    %521 = vector.broadcast %cst_216 : f32 to vector<4x128xf32>
    %522 = arith.addf %521, %520 : vector<4x128xf32>
    %523 = arith.divf %521, %522 : vector<4x128xf32>
    %524 = math.tanh %518 : vector<4x128xf32>
    %525 = vector.extract_strided_slice %523 {offsets = [0, 0], sizes = [4, 32], strides = [1, 1]} : vector<4x128xf32> to vector<4x32xf32>
    %526 = vector.extract_strided_slice %523 {offsets = [0, 32], sizes = [4, 32], strides = [1, 1]} : vector<4x128xf32> to vector<4x32xf32>
    %527 = vector.extract_strided_slice %524 {offsets = [0, 64], sizes = [4, 32], strides = [1, 1]} : vector<4x128xf32> to vector<4x32xf32>
    %528 = vector.extract_strided_slice %523 {offsets = [0, 96], sizes = [4, 32], strides = [1, 1]} : vector<4x128xf32> to vector<4x32xf32>
    %529 = arith.mulf %526, %491 : vector<4x32xf32>
    %530 = arith.mulf %525, %527 : vector<4x32xf32>
    %531 = arith.addf %529, %530 : vector<4x32xf32>
    %532 = math.tanh %531 : vector<4x32xf32>
    %533 = arith.mulf %528, %532 : vector<4x32xf32>
    %534 = arith.addf %494, %533 : vector<4x32xf32>
    %c0_217 = arith.constant 0 : index
    %c10 = arith.constant 10 : index
    %c0_218 = arith.constant 0 : index
    %535 = vector.load %arg18[%c0_217, %c10, %c0_218] : memref<4x16x128xf32, #tpu.memory_space<vmem>>, vector<4x1x128xf32>
    %536 = vector.shape_cast %535 : vector<4x1x128xf32> to vector<4x128xf32>
    %cst_219 = arith.constant dense<0.000000e+00> : vector<4x128xf32>
    %537 = tpu.matmul %513, %120, %cst_219 {dimension_numbers = #tpu.dot_dimension_numbers<[1], [0], [0], [1], [0, 0, 1, 1], [], []>} : vector<4x32xf32>, vector<32x128xf32>, vector<4x128xf32> -> vector<4x128xf32>
    %538 = arith.addf %536, %537 : vector<4x128xf32>
    %539 = arith.negf %538 : vector<4x128xf32>
    %540 = math.exp %539 : vector<4x128xf32>
    %cst_220 = arith.constant 1.000000e+00 : f32
    %541 = vector.broadcast %cst_220 : f32 to vector<4x128xf32>
    %542 = arith.addf %541, %540 : vector<4x128xf32>
    %543 = arith.divf %541, %542 : vector<4x128xf32>
    %544 = math.tanh %538 : vector<4x128xf32>
    %545 = vector.extract_strided_slice %543 {offsets = [0, 0], sizes = [4, 32], strides = [1, 1]} : vector<4x128xf32> to vector<4x32xf32>
    %546 = vector.extract_strided_slice %543 {offsets = [0, 32], sizes = [4, 32], strides = [1, 1]} : vector<4x128xf32> to vector<4x32xf32>
    %547 = vector.extract_strided_slice %544 {offsets = [0, 64], sizes = [4, 32], strides = [1, 1]} : vector<4x128xf32> to vector<4x32xf32>
    %548 = vector.extract_strided_slice %543 {offsets = [0, 96], sizes = [4, 32], strides = [1, 1]} : vector<4x128xf32> to vector<4x32xf32>
    %549 = arith.mulf %546, %511 : vector<4x32xf32>
    %550 = arith.mulf %545, %547 : vector<4x32xf32>
    %551 = arith.addf %549, %550 : vector<4x32xf32>
    %552 = math.tanh %551 : vector<4x32xf32>
    %553 = arith.mulf %548, %552 : vector<4x32xf32>
    %cst_221 = arith.constant dense<0.000000e+00> : vector<4x128xf32>
    %554 = tpu.matmul %553, %119, %cst_221 {dimension_numbers = #tpu.dot_dimension_numbers<[1], [0], [0], [1], [0, 0, 1, 1], [], []>} : vector<4x32xf32>, vector<32x128xf32>, vector<4x128xf32> -> vector<4x128xf32>
    %cst_222 = arith.constant dense<0.000000e+00> : vector<4x128xf32>
    %555 = tpu.matmul %533, %121, %cst_222 {dimension_numbers = #tpu.dot_dimension_numbers<[1], [0], [0], [1], [0, 0, 1, 1], [], []>} : vector<4x32xf32>, vector<32x128xf32>, vector<4x128xf32> -> vector<4x128xf32>
    %556 = arith.addf %554, %555 : vector<4x128xf32>
    %557 = vector.broadcast %123 : vector<1x128xf32> to vector<4x128xf32>
    %558 = arith.addf %556, %557 : vector<4x128xf32>
    %559 = arith.negf %558 : vector<4x128xf32>
    %560 = math.exp %559 : vector<4x128xf32>
    %cst_223 = arith.constant 1.000000e+00 : f32
    %561 = vector.broadcast %cst_223 : f32 to vector<4x128xf32>
    %562 = arith.addf %561, %560 : vector<4x128xf32>
    %563 = arith.divf %561, %562 : vector<4x128xf32>
    %564 = math.tanh %558 : vector<4x128xf32>
    %565 = vector.extract_strided_slice %563 {offsets = [0, 0], sizes = [4, 32], strides = [1, 1]} : vector<4x128xf32> to vector<4x32xf32>
    %566 = vector.extract_strided_slice %563 {offsets = [0, 32], sizes = [4, 32], strides = [1, 1]} : vector<4x128xf32> to vector<4x32xf32>
    %567 = vector.extract_strided_slice %564 {offsets = [0, 64], sizes = [4, 32], strides = [1, 1]} : vector<4x128xf32> to vector<4x32xf32>
    %568 = vector.extract_strided_slice %563 {offsets = [0, 96], sizes = [4, 32], strides = [1, 1]} : vector<4x128xf32> to vector<4x32xf32>
    %569 = arith.mulf %566, %531 : vector<4x32xf32>
    %570 = arith.mulf %565, %567 : vector<4x32xf32>
    %571 = arith.addf %569, %570 : vector<4x32xf32>
    %572 = math.tanh %571 : vector<4x32xf32>
    %573 = arith.mulf %568, %572 : vector<4x32xf32>
    %574 = arith.addf %534, %573 : vector<4x32xf32>
    %c0_224 = arith.constant 0 : index
    %c11 = arith.constant 11 : index
    %c0_225 = arith.constant 0 : index
    %575 = vector.load %arg18[%c0_224, %c11, %c0_225] : memref<4x16x128xf32, #tpu.memory_space<vmem>>, vector<4x1x128xf32>
    %576 = vector.shape_cast %575 : vector<4x1x128xf32> to vector<4x128xf32>
    %cst_226 = arith.constant dense<0.000000e+00> : vector<4x128xf32>
    %577 = tpu.matmul %553, %120, %cst_226 {dimension_numbers = #tpu.dot_dimension_numbers<[1], [0], [0], [1], [0, 0, 1, 1], [], []>} : vector<4x32xf32>, vector<32x128xf32>, vector<4x128xf32> -> vector<4x128xf32>
    %578 = arith.addf %576, %577 : vector<4x128xf32>
    %579 = arith.negf %578 : vector<4x128xf32>
    %580 = math.exp %579 : vector<4x128xf32>
    %cst_227 = arith.constant 1.000000e+00 : f32
    %581 = vector.broadcast %cst_227 : f32 to vector<4x128xf32>
    %582 = arith.addf %581, %580 : vector<4x128xf32>
    %583 = arith.divf %581, %582 : vector<4x128xf32>
    %584 = math.tanh %578 : vector<4x128xf32>
    %585 = vector.extract_strided_slice %583 {offsets = [0, 0], sizes = [4, 32], strides = [1, 1]} : vector<4x128xf32> to vector<4x32xf32>
    %586 = vector.extract_strided_slice %583 {offsets = [0, 32], sizes = [4, 32], strides = [1, 1]} : vector<4x128xf32> to vector<4x32xf32>
    %587 = vector.extract_strided_slice %584 {offsets = [0, 64], sizes = [4, 32], strides = [1, 1]} : vector<4x128xf32> to vector<4x32xf32>
    %588 = vector.extract_strided_slice %583 {offsets = [0, 96], sizes = [4, 32], strides = [1, 1]} : vector<4x128xf32> to vector<4x32xf32>
    %589 = arith.mulf %586, %551 : vector<4x32xf32>
    %590 = arith.mulf %585, %587 : vector<4x32xf32>
    %591 = arith.addf %589, %590 : vector<4x32xf32>
    %592 = math.tanh %591 : vector<4x32xf32>
    %593 = arith.mulf %588, %592 : vector<4x32xf32>
    %cst_228 = arith.constant dense<0.000000e+00> : vector<4x128xf32>
    %594 = tpu.matmul %593, %119, %cst_228 {dimension_numbers = #tpu.dot_dimension_numbers<[1], [0], [0], [1], [0, 0, 1, 1], [], []>} : vector<4x32xf32>, vector<32x128xf32>, vector<4x128xf32> -> vector<4x128xf32>
    %cst_229 = arith.constant dense<0.000000e+00> : vector<4x128xf32>
    %595 = tpu.matmul %573, %121, %cst_229 {dimension_numbers = #tpu.dot_dimension_numbers<[1], [0], [0], [1], [0, 0, 1, 1], [], []>} : vector<4x32xf32>, vector<32x128xf32>, vector<4x128xf32> -> vector<4x128xf32>
    %596 = arith.addf %594, %595 : vector<4x128xf32>
    %597 = vector.broadcast %123 : vector<1x128xf32> to vector<4x128xf32>
    %598 = arith.addf %596, %597 : vector<4x128xf32>
    %599 = arith.negf %598 : vector<4x128xf32>
    %600 = math.exp %599 : vector<4x128xf32>
    %cst_230 = arith.constant 1.000000e+00 : f32
    %601 = vector.broadcast %cst_230 : f32 to vector<4x128xf32>
    %602 = arith.addf %601, %600 : vector<4x128xf32>
    %603 = arith.divf %601, %602 : vector<4x128xf32>
    %604 = math.tanh %598 : vector<4x128xf32>
    %605 = vector.extract_strided_slice %603 {offsets = [0, 0], sizes = [4, 32], strides = [1, 1]} : vector<4x128xf32> to vector<4x32xf32>
    %606 = vector.extract_strided_slice %603 {offsets = [0, 32], sizes = [4, 32], strides = [1, 1]} : vector<4x128xf32> to vector<4x32xf32>
    %607 = vector.extract_strided_slice %604 {offsets = [0, 64], sizes = [4, 32], strides = [1, 1]} : vector<4x128xf32> to vector<4x32xf32>
    %608 = vector.extract_strided_slice %603 {offsets = [0, 96], sizes = [4, 32], strides = [1, 1]} : vector<4x128xf32> to vector<4x32xf32>
    %609 = arith.mulf %606, %571 : vector<4x32xf32>
    %610 = arith.mulf %605, %607 : vector<4x32xf32>
    %611 = arith.addf %609, %610 : vector<4x32xf32>
    %612 = math.tanh %611 : vector<4x32xf32>
    %613 = arith.mulf %608, %612 : vector<4x32xf32>
    %614 = arith.addf %574, %613 : vector<4x32xf32>
    %c0_231 = arith.constant 0 : index
    %c12 = arith.constant 12 : index
    %c0_232 = arith.constant 0 : index
    %615 = vector.load %arg18[%c0_231, %c12, %c0_232] : memref<4x16x128xf32, #tpu.memory_space<vmem>>, vector<4x1x128xf32>
    %616 = vector.shape_cast %615 : vector<4x1x128xf32> to vector<4x128xf32>
    %cst_233 = arith.constant dense<0.000000e+00> : vector<4x128xf32>
    %617 = tpu.matmul %593, %120, %cst_233 {dimension_numbers = #tpu.dot_dimension_numbers<[1], [0], [0], [1], [0, 0, 1, 1], [], []>} : vector<4x32xf32>, vector<32x128xf32>, vector<4x128xf32> -> vector<4x128xf32>
    %618 = arith.addf %616, %617 : vector<4x128xf32>
    %619 = arith.negf %618 : vector<4x128xf32>
    %620 = math.exp %619 : vector<4x128xf32>
    %cst_234 = arith.constant 1.000000e+00 : f32
    %621 = vector.broadcast %cst_234 : f32 to vector<4x128xf32>
    %622 = arith.addf %621, %620 : vector<4x128xf32>
    %623 = arith.divf %621, %622 : vector<4x128xf32>
    %624 = math.tanh %618 : vector<4x128xf32>
    %625 = vector.extract_strided_slice %623 {offsets = [0, 0], sizes = [4, 32], strides = [1, 1]} : vector<4x128xf32> to vector<4x32xf32>
    %626 = vector.extract_strided_slice %623 {offsets = [0, 32], sizes = [4, 32], strides = [1, 1]} : vector<4x128xf32> to vector<4x32xf32>
    %627 = vector.extract_strided_slice %624 {offsets = [0, 64], sizes = [4, 32], strides = [1, 1]} : vector<4x128xf32> to vector<4x32xf32>
    %628 = vector.extract_strided_slice %623 {offsets = [0, 96], sizes = [4, 32], strides = [1, 1]} : vector<4x128xf32> to vector<4x32xf32>
    %629 = arith.mulf %626, %591 : vector<4x32xf32>
    %630 = arith.mulf %625, %627 : vector<4x32xf32>
    %631 = arith.addf %629, %630 : vector<4x32xf32>
    %632 = math.tanh %631 : vector<4x32xf32>
    %633 = arith.mulf %628, %632 : vector<4x32xf32>
    %cst_235 = arith.constant dense<0.000000e+00> : vector<4x128xf32>
    %634 = tpu.matmul %633, %119, %cst_235 {dimension_numbers = #tpu.dot_dimension_numbers<[1], [0], [0], [1], [0, 0, 1, 1], [], []>} : vector<4x32xf32>, vector<32x128xf32>, vector<4x128xf32> -> vector<4x128xf32>
    %cst_236 = arith.constant dense<0.000000e+00> : vector<4x128xf32>
    %635 = tpu.matmul %613, %121, %cst_236 {dimension_numbers = #tpu.dot_dimension_numbers<[1], [0], [0], [1], [0, 0, 1, 1], [], []>} : vector<4x32xf32>, vector<32x128xf32>, vector<4x128xf32> -> vector<4x128xf32>
    %636 = arith.addf %634, %635 : vector<4x128xf32>
    %637 = vector.broadcast %123 : vector<1x128xf32> to vector<4x128xf32>
    %638 = arith.addf %636, %637 : vector<4x128xf32>
    %639 = arith.negf %638 : vector<4x128xf32>
    %640 = math.exp %639 : vector<4x128xf32>
    %cst_237 = arith.constant 1.000000e+00 : f32
    %641 = vector.broadcast %cst_237 : f32 to vector<4x128xf32>
    %642 = arith.addf %641, %640 : vector<4x128xf32>
    %643 = arith.divf %641, %642 : vector<4x128xf32>
    %644 = math.tanh %638 : vector<4x128xf32>
    %645 = vector.extract_strided_slice %643 {offsets = [0, 0], sizes = [4, 32], strides = [1, 1]} : vector<4x128xf32> to vector<4x32xf32>
    %646 = vector.extract_strided_slice %643 {offsets = [0, 32], sizes = [4, 32], strides = [1, 1]} : vector<4x128xf32> to vector<4x32xf32>
    %647 = vector.extract_strided_slice %644 {offsets = [0, 64], sizes = [4, 32], strides = [1, 1]} : vector<4x128xf32> to vector<4x32xf32>
    %648 = vector.extract_strided_slice %643 {offsets = [0, 96], sizes = [4, 32], strides = [1, 1]} : vector<4x128xf32> to vector<4x32xf32>
    %649 = arith.mulf %646, %611 : vector<4x32xf32>
    %650 = arith.mulf %645, %647 : vector<4x32xf32>
    %651 = arith.addf %649, %650 : vector<4x32xf32>
    %652 = math.tanh %651 : vector<4x32xf32>
    %653 = arith.mulf %648, %652 : vector<4x32xf32>
    %654 = arith.addf %614, %653 : vector<4x32xf32>
    %c0_238 = arith.constant 0 : index
    %c13 = arith.constant 13 : index
    %c0_239 = arith.constant 0 : index
    %655 = vector.load %arg18[%c0_238, %c13, %c0_239] : memref<4x16x128xf32, #tpu.memory_space<vmem>>, vector<4x1x128xf32>
    %656 = vector.shape_cast %655 : vector<4x1x128xf32> to vector<4x128xf32>
    %cst_240 = arith.constant dense<0.000000e+00> : vector<4x128xf32>
    %657 = tpu.matmul %633, %120, %cst_240 {dimension_numbers = #tpu.dot_dimension_numbers<[1], [0], [0], [1], [0, 0, 1, 1], [], []>} : vector<4x32xf32>, vector<32x128xf32>, vector<4x128xf32> -> vector<4x128xf32>
    %658 = arith.addf %656, %657 : vector<4x128xf32>
    %659 = arith.negf %658 : vector<4x128xf32>
    %660 = math.exp %659 : vector<4x128xf32>
    %cst_241 = arith.constant 1.000000e+00 : f32
    %661 = vector.broadcast %cst_241 : f32 to vector<4x128xf32>
    %662 = arith.addf %661, %660 : vector<4x128xf32>
    %663 = arith.divf %661, %662 : vector<4x128xf32>
    %664 = math.tanh %658 : vector<4x128xf32>
    %665 = vector.extract_strided_slice %663 {offsets = [0, 0], sizes = [4, 32], strides = [1, 1]} : vector<4x128xf32> to vector<4x32xf32>
    %666 = vector.extract_strided_slice %663 {offsets = [0, 32], sizes = [4, 32], strides = [1, 1]} : vector<4x128xf32> to vector<4x32xf32>
    %667 = vector.extract_strided_slice %664 {offsets = [0, 64], sizes = [4, 32], strides = [1, 1]} : vector<4x128xf32> to vector<4x32xf32>
    %668 = vector.extract_strided_slice %663 {offsets = [0, 96], sizes = [4, 32], strides = [1, 1]} : vector<4x128xf32> to vector<4x32xf32>
    %669 = arith.mulf %666, %631 : vector<4x32xf32>
    %670 = arith.mulf %665, %667 : vector<4x32xf32>
    %671 = arith.addf %669, %670 : vector<4x32xf32>
    %672 = math.tanh %671 : vector<4x32xf32>
    %673 = arith.mulf %668, %672 : vector<4x32xf32>
    %cst_242 = arith.constant dense<0.000000e+00> : vector<4x128xf32>
    %674 = tpu.matmul %673, %119, %cst_242 {dimension_numbers = #tpu.dot_dimension_numbers<[1], [0], [0], [1], [0, 0, 1, 1], [], []>} : vector<4x32xf32>, vector<32x128xf32>, vector<4x128xf32> -> vector<4x128xf32>
    %cst_243 = arith.constant dense<0.000000e+00> : vector<4x128xf32>
    %675 = tpu.matmul %653, %121, %cst_243 {dimension_numbers = #tpu.dot_dimension_numbers<[1], [0], [0], [1], [0, 0, 1, 1], [], []>} : vector<4x32xf32>, vector<32x128xf32>, vector<4x128xf32> -> vector<4x128xf32>
    %676 = arith.addf %674, %675 : vector<4x128xf32>
    %677 = vector.broadcast %123 : vector<1x128xf32> to vector<4x128xf32>
    %678 = arith.addf %676, %677 : vector<4x128xf32>
    %679 = arith.negf %678 : vector<4x128xf32>
    %680 = math.exp %679 : vector<4x128xf32>
    %cst_244 = arith.constant 1.000000e+00 : f32
    %681 = vector.broadcast %cst_244 : f32 to vector<4x128xf32>
    %682 = arith.addf %681, %680 : vector<4x128xf32>
    %683 = arith.divf %681, %682 : vector<4x128xf32>
    %684 = math.tanh %678 : vector<4x128xf32>
    %685 = vector.extract_strided_slice %683 {offsets = [0, 0], sizes = [4, 32], strides = [1, 1]} : vector<4x128xf32> to vector<4x32xf32>
    %686 = vector.extract_strided_slice %683 {offsets = [0, 32], sizes = [4, 32], strides = [1, 1]} : vector<4x128xf32> to vector<4x32xf32>
    %687 = vector.extract_strided_slice %684 {offsets = [0, 64], sizes = [4, 32], strides = [1, 1]} : vector<4x128xf32> to vector<4x32xf32>
    %688 = vector.extract_strided_slice %683 {offsets = [0, 96], sizes = [4, 32], strides = [1, 1]} : vector<4x128xf32> to vector<4x32xf32>
    %689 = arith.mulf %686, %651 : vector<4x32xf32>
    %690 = arith.mulf %685, %687 : vector<4x32xf32>
    %691 = arith.addf %689, %690 : vector<4x32xf32>
    %692 = math.tanh %691 : vector<4x32xf32>
    %693 = arith.mulf %688, %692 : vector<4x32xf32>
    %694 = arith.addf %654, %693 : vector<4x32xf32>
    %c0_245 = arith.constant 0 : index
    %c14 = arith.constant 14 : index
    %c0_246 = arith.constant 0 : index
    %695 = vector.load %arg18[%c0_245, %c14, %c0_246] : memref<4x16x128xf32, #tpu.memory_space<vmem>>, vector<4x1x128xf32>
    %696 = vector.shape_cast %695 : vector<4x1x128xf32> to vector<4x128xf32>
    %cst_247 = arith.constant dense<0.000000e+00> : vector<4x128xf32>
    %697 = tpu.matmul %673, %120, %cst_247 {dimension_numbers = #tpu.dot_dimension_numbers<[1], [0], [0], [1], [0, 0, 1, 1], [], []>} : vector<4x32xf32>, vector<32x128xf32>, vector<4x128xf32> -> vector<4x128xf32>
    %698 = arith.addf %696, %697 : vector<4x128xf32>
    %699 = arith.negf %698 : vector<4x128xf32>
    %700 = math.exp %699 : vector<4x128xf32>
    %cst_248 = arith.constant 1.000000e+00 : f32
    %701 = vector.broadcast %cst_248 : f32 to vector<4x128xf32>
    %702 = arith.addf %701, %700 : vector<4x128xf32>
    %703 = arith.divf %701, %702 : vector<4x128xf32>
    %704 = math.tanh %698 : vector<4x128xf32>
    %705 = vector.extract_strided_slice %703 {offsets = [0, 0], sizes = [4, 32], strides = [1, 1]} : vector<4x128xf32> to vector<4x32xf32>
    %706 = vector.extract_strided_slice %703 {offsets = [0, 32], sizes = [4, 32], strides = [1, 1]} : vector<4x128xf32> to vector<4x32xf32>
    %707 = vector.extract_strided_slice %704 {offsets = [0, 64], sizes = [4, 32], strides = [1, 1]} : vector<4x128xf32> to vector<4x32xf32>
    %708 = vector.extract_strided_slice %703 {offsets = [0, 96], sizes = [4, 32], strides = [1, 1]} : vector<4x128xf32> to vector<4x32xf32>
    %709 = arith.mulf %706, %671 : vector<4x32xf32>
    %710 = arith.mulf %705, %707 : vector<4x32xf32>
    %711 = arith.addf %709, %710 : vector<4x32xf32>
    %712 = math.tanh %711 : vector<4x32xf32>
    %713 = arith.mulf %708, %712 : vector<4x32xf32>
    %cst_249 = arith.constant dense<0.000000e+00> : vector<4x128xf32>
    %714 = tpu.matmul %713, %119, %cst_249 {dimension_numbers = #tpu.dot_dimension_numbers<[1], [0], [0], [1], [0, 0, 1, 1], [], []>} : vector<4x32xf32>, vector<32x128xf32>, vector<4x128xf32> -> vector<4x128xf32>
    %cst_250 = arith.constant dense<0.000000e+00> : vector<4x128xf32>
    %715 = tpu.matmul %693, %121, %cst_250 {dimension_numbers = #tpu.dot_dimension_numbers<[1], [0], [0], [1], [0, 0, 1, 1], [], []>} : vector<4x32xf32>, vector<32x128xf32>, vector<4x128xf32> -> vector<4x128xf32>
    %716 = arith.addf %714, %715 : vector<4x128xf32>
    %717 = vector.broadcast %123 : vector<1x128xf32> to vector<4x128xf32>
    %718 = arith.addf %716, %717 : vector<4x128xf32>
    %719 = arith.negf %718 : vector<4x128xf32>
    %720 = math.exp %719 : vector<4x128xf32>
    %cst_251 = arith.constant 1.000000e+00 : f32
    %721 = vector.broadcast %cst_251 : f32 to vector<4x128xf32>
    %722 = arith.addf %721, %720 : vector<4x128xf32>
    %723 = arith.divf %721, %722 : vector<4x128xf32>
    %724 = math.tanh %718 : vector<4x128xf32>
    %725 = vector.extract_strided_slice %723 {offsets = [0, 0], sizes = [4, 32], strides = [1, 1]} : vector<4x128xf32> to vector<4x32xf32>
    %726 = vector.extract_strided_slice %723 {offsets = [0, 32], sizes = [4, 32], strides = [1, 1]} : vector<4x128xf32> to vector<4x32xf32>
    %727 = vector.extract_strided_slice %724 {offsets = [0, 64], sizes = [4, 32], strides = [1, 1]} : vector<4x128xf32> to vector<4x32xf32>
    %728 = vector.extract_strided_slice %723 {offsets = [0, 96], sizes = [4, 32], strides = [1, 1]} : vector<4x128xf32> to vector<4x32xf32>
    %729 = arith.mulf %726, %691 : vector<4x32xf32>
    %730 = arith.mulf %725, %727 : vector<4x32xf32>
    %731 = arith.addf %729, %730 : vector<4x32xf32>
    %732 = math.tanh %731 : vector<4x32xf32>
    %733 = arith.mulf %728, %732 : vector<4x32xf32>
    %734 = arith.addf %694, %733 : vector<4x32xf32>
    %c0_252 = arith.constant 0 : index
    %c15 = arith.constant 15 : index
    %c0_253 = arith.constant 0 : index
    %735 = vector.load %arg18[%c0_252, %c15, %c0_253] : memref<4x16x128xf32, #tpu.memory_space<vmem>>, vector<4x1x128xf32>
    %736 = vector.shape_cast %735 : vector<4x1x128xf32> to vector<4x128xf32>
    %cst_254 = arith.constant dense<0.000000e+00> : vector<4x128xf32>
    %737 = tpu.matmul %713, %120, %cst_254 {dimension_numbers = #tpu.dot_dimension_numbers<[1], [0], [0], [1], [0, 0, 1, 1], [], []>} : vector<4x32xf32>, vector<32x128xf32>, vector<4x128xf32> -> vector<4x128xf32>
    %738 = arith.addf %736, %737 : vector<4x128xf32>
    %739 = arith.negf %738 : vector<4x128xf32>
    %740 = math.exp %739 : vector<4x128xf32>
    %cst_255 = arith.constant 1.000000e+00 : f32
    %741 = vector.broadcast %cst_255 : f32 to vector<4x128xf32>
    %742 = arith.addf %741, %740 : vector<4x128xf32>
    %743 = arith.divf %741, %742 : vector<4x128xf32>
    %744 = math.tanh %738 : vector<4x128xf32>
    %745 = vector.extract_strided_slice %743 {offsets = [0, 0], sizes = [4, 32], strides = [1, 1]} : vector<4x128xf32> to vector<4x32xf32>
    %746 = vector.extract_strided_slice %743 {offsets = [0, 32], sizes = [4, 32], strides = [1, 1]} : vector<4x128xf32> to vector<4x32xf32>
    %747 = vector.extract_strided_slice %744 {offsets = [0, 64], sizes = [4, 32], strides = [1, 1]} : vector<4x128xf32> to vector<4x32xf32>
    %748 = vector.extract_strided_slice %743 {offsets = [0, 96], sizes = [4, 32], strides = [1, 1]} : vector<4x128xf32> to vector<4x32xf32>
    %749 = arith.mulf %746, %711 : vector<4x32xf32>
    %750 = arith.mulf %745, %747 : vector<4x32xf32>
    %751 = arith.addf %749, %750 : vector<4x32xf32>
    %752 = math.tanh %751 : vector<4x32xf32>
    %753 = arith.mulf %748, %752 : vector<4x32xf32>
    %cst_256 = arith.constant dense<0.000000e+00> : vector<4x128xf32>
    %754 = tpu.matmul %753, %119, %cst_256 {dimension_numbers = #tpu.dot_dimension_numbers<[1], [0], [0], [1], [0, 0, 1, 1], [], []>} : vector<4x32xf32>, vector<32x128xf32>, vector<4x128xf32> -> vector<4x128xf32>
    %cst_257 = arith.constant dense<0.000000e+00> : vector<4x128xf32>
    %755 = tpu.matmul %733, %121, %cst_257 {dimension_numbers = #tpu.dot_dimension_numbers<[1], [0], [0], [1], [0, 0, 1, 1], [], []>} : vector<4x32xf32>, vector<32x128xf32>, vector<4x128xf32> -> vector<4x128xf32>
    %756 = arith.addf %754, %755 : vector<4x128xf32>
    %757 = vector.broadcast %123 : vector<1x128xf32> to vector<4x128xf32>
    %758 = arith.addf %756, %757 : vector<4x128xf32>
    %759 = arith.negf %758 : vector<4x128xf32>
    %760 = math.exp %759 : vector<4x128xf32>
    %cst_258 = arith.constant 1.000000e+00 : f32
    %761 = vector.broadcast %cst_258 : f32 to vector<4x128xf32>
    %762 = arith.addf %761, %760 : vector<4x128xf32>
    %763 = arith.divf %761, %762 : vector<4x128xf32>
    %764 = math.tanh %758 : vector<4x128xf32>
    %765 = vector.extract_strided_slice %763 {offsets = [0, 0], sizes = [4, 32], strides = [1, 1]} : vector<4x128xf32> to vector<4x32xf32>
    %766 = vector.extract_strided_slice %763 {offsets = [0, 32], sizes = [4, 32], strides = [1, 1]} : vector<4x128xf32> to vector<4x32xf32>
    %767 = vector.extract_strided_slice %764 {offsets = [0, 64], sizes = [4, 32], strides = [1, 1]} : vector<4x128xf32> to vector<4x32xf32>
    %768 = vector.extract_strided_slice %763 {offsets = [0, 96], sizes = [4, 32], strides = [1, 1]} : vector<4x128xf32> to vector<4x32xf32>
    %769 = arith.mulf %766, %731 : vector<4x32xf32>
    %770 = arith.mulf %765, %767 : vector<4x32xf32>
    %771 = arith.addf %769, %770 : vector<4x32xf32>
    %772 = math.tanh %771 : vector<4x32xf32>
    %773 = arith.mulf %768, %772 : vector<4x32xf32>
    %774 = arith.addf %734, %773 : vector<4x32xf32>
    %cst_259 = arith.constant 6.250000e-02 : f32
    %775 = vector.broadcast %cst_259 : f32 to vector<4x32xf32>
    %776 = arith.mulf %774, %775 : vector<4x32xf32>
    %c0_260 = arith.constant 0 : index
    %c0_261 = arith.constant 0 : index
    %777 = vector.load %arg12[%c0_260, %c0_261] : memref<32x16xf32, #tpu.memory_space<vmem>>, vector<32x16xf32>
    %cst_262 = arith.constant dense<0.000000e+00> : vector<4x16xf32>
    %778 = tpu.matmul %776, %777, %cst_262 {dimension_numbers = #tpu.dot_dimension_numbers<[1], [0], [0], [1], [0, 0, 1, 1], [], []>} : vector<4x32xf32>, vector<32x16xf32>, vector<4x16xf32> -> vector<4x16xf32>
    %c0_263 = arith.constant 0 : index
    %c0_264 = arith.constant 0 : index
    %779 = vector.load %arg13[%c0_263, %c0_264] : memref<1x16xf32, #tpu.memory_space<vmem>>, vector<1x16xf32>
    %780 = vector.broadcast %779 : vector<1x16xf32> to vector<4x16xf32>
    %781 = arith.addf %778, %780 : vector<4x16xf32>
    %cst_265 = arith.constant 0.000000e+00 : f32
    %782 = vector.broadcast %cst_265 : f32 to vector<4x16xf32>
    %783 = arith.maximumf %781, %782 : vector<4x16xf32>
    %c0_266 = arith.constant 0 : index
    %c0_267 = arith.constant 0 : index
    %784 = vector.load %arg14[%c0_266, %c0_267] : memref<16x5xf32, #tpu.memory_space<vmem>>, vector<16x5xf32>
    %cst_268 = arith.constant dense<0.000000e+00> : vector<4x5xf32>
    %785 = tpu.matmul %783, %784, %cst_268 {dimension_numbers = #tpu.dot_dimension_numbers<[1], [0], [0], [1], [0, 0, 1, 1], [], []>} : vector<4x16xf32>, vector<16x5xf32>, vector<4x5xf32> -> vector<4x5xf32>
    %c0_269 = arith.constant 0 : index
    %c0_270 = arith.constant 0 : index
    %786 = vector.load %arg15[%c0_269, %c0_270] : memref<1x5xf32, #tpu.memory_space<vmem>>, vector<1x5xf32>
    %787 = vector.broadcast %786 : vector<1x5xf32> to vector<4x5xf32>
    %788 = arith.addf %785, %787 : vector<4x5xf32>
    %c0_271 = arith.constant 0 : index
    %c0_272 = arith.constant 0 : index
    %c0_273 = arith.constant 0 : index
    %789 = vector.load %arg16[%c0_271, %c0_272, %c0_273] : memref<1x4x5xf32, #tpu.memory_space<vmem>>, vector<1x4x5xf32>
    %790 = vector.shape_cast %789 : vector<1x4x5xf32> to vector<4x5xf32>
    %791 = vector.shape_cast %788 : vector<4x5xf32> to vector<1x4x5xf32>
    tpu.vector_store %arg16[%c0_271, %c0_272, %c0_273], %791 {strides = array<i32>} : memref<1x4x5xf32, #tpu.memory_space<vmem>>, vector<1x4x5xf32>,
    return
  }
  func.func @transform_0(%arg0: i32) -> (i32, i32, i32) {
    %c0_i32 = arith.constant 0 : i32
    %c0_i32_0 = arith.constant 0 : i32
    %c0_i32_1 = arith.constant 0 : i32
    return %arg0, %c0_i32, %c0_i32_0 : i32, i32, i32
  }
  func.func @transform_1(%arg0: i32) -> (i32, i32, i32) {
    %c0_i32 = arith.constant 0 : i32
    %c0_i32_0 = arith.constant 0 : i32
    %c0_i32_1 = arith.constant 0 : i32
    %c0_i32_2 = arith.constant 0 : i32
    return %c0_i32, %c0_i32_0, %c0_i32_1 : i32, i32, i32
  }
  func.func @transform_2(%arg0: i32) -> (i32, i32) {
    %c0_i32 = arith.constant 0 : i32
    %c0_i32_0 = arith.constant 0 : i32
    %c0_i32_1 = arith.constant 0 : i32
    return %c0_i32, %c0_i32_0 : i32, i32
  }
  func.func @transform_3(%arg0: i32) -> (i32, i32, i32) {
    %c0_i32 = arith.constant 0 : i32
    %c0_i32_0 = arith.constant 0 : i32
    %c0_i32_1 = arith.constant 0 : i32
    %c0_i32_2 = arith.constant 0 : i32
    return %c0_i32, %c0_i32_0, %c0_i32_1 : i32, i32, i32
  }
  func.func @transform_4(%arg0: i32) -> (i32, i32) {
    %c0_i32 = arith.constant 0 : i32
    %c0_i32_0 = arith.constant 0 : i32
    %c0_i32_1 = arith.constant 0 : i32
    return %c0_i32, %c0_i32_0 : i32, i32
  }
  func.func @transform_5(%arg0: i32) -> (i32, i32) {
    %c0_i32 = arith.constant 0 : i32
    %c0_i32_0 = arith.constant 0 : i32
    %c0_i32_1 = arith.constant 0 : i32
    return %c0_i32, %c0_i32_0 : i32, i32
  }
  func.func @transform_6(%arg0: i32) -> (i32, i32) {
    %c0_i32 = arith.constant 0 : i32
    %c0_i32_0 = arith.constant 0 : i32
    %c0_i32_1 = arith.constant 0 : i32
    return %c0_i32, %c0_i32_0 : i32, i32
  }
  func.func @transform_7(%arg0: i32) -> (i32, i32) {
    %c0_i32 = arith.constant 0 : i32
    %c0_i32_0 = arith.constant 0 : i32
    %c0_i32_1 = arith.constant 0 : i32
    return %c0_i32, %c0_i32_0 : i32, i32
  }
  func.func @transform_8(%arg0: i32) -> (i32, i32) {
    %c0_i32 = arith.constant 0 : i32
    %c0_i32_0 = arith.constant 0 : i32
    %c0_i32_1 = arith.constant 0 : i32
    return %c0_i32, %c0_i32_0 : i32, i32
  }
  func.func @transform_9(%arg0: i32) -> (i32, i32) {
    %c0_i32 = arith.constant 0 : i32
    %c0_i32_0 = arith.constant 0 : i32
    %c0_i32_1 = arith.constant 0 : i32
    return %c0_i32, %c0_i32_0 : i32, i32
  }
  func.func @transform_10(%arg0: i32) -> (i32, i32) {
    %c0_i32 = arith.constant 0 : i32
    %c0_i32_0 = arith.constant 0 : i32
    %c0_i32_1 = arith.constant 0 : i32
    return %c0_i32, %c0_i32_0 : i32, i32
  }
  func.func @transform_11(%arg0: i32) -> (i32, i32) {
    %c0_i32 = arith.constant 0 : i32
    %c0_i32_0 = arith.constant 0 : i32
    %c0_i32_1 = arith.constant 0 : i32
    return %c0_i32, %c0_i32_0 : i32, i32
  }
  func.func @transform_12(%arg0: i32) -> (i32, i32) {
    %c0_i32 = arith.constant 0 : i32
    %c0_i32_0 = arith.constant 0 : i32
    %c0_i32_1 = arith.constant 0 : i32
    return %c0_i32, %c0_i32_0 : i32, i32
  }
  func.func @transform_13(%arg0: i32) -> (i32, i32) {
    %c0_i32 = arith.constant 0 : i32
    %c0_i32_0 = arith.constant 0 : i32
    %c0_i32_1 = arith.constant 0 : i32
    return %c0_i32, %c0_i32_0 : i32, i32
  }
  func.func @transform_14(%arg0: i32) -> (i32, i32) {
    %c0_i32 = arith.constant 0 : i32
    %c0_i32_0 = arith.constant 0 : i32
    %c0_i32_1 = arith.constant 0 : i32
    return %c0_i32, %c0_i32_0 : i32, i32
  }
  func.func @transform_15(%arg0: i32) -> (i32, i32, i32) {
    %c0_i32 = arith.constant 0 : i32
    %c0_i32_0 = arith.constant 0 : i32
    %c0_i32_1 = arith.constant 0 : i32
    return %arg0, %c0_i32, %c0_i32_0 : i32, i32, i32
  }
}

</mosaic_0001>

<llo_original>
// kernel: cnn_lstm_forward.1
$region0: #{cnn_lstm_forward.1}
  #allocation0 [shape = 'u32[]', space=smem, size = 0x4, offset = 0x4, fixed_abs, tag = 'smem constant byte address 0x4 - core index']
  #allocation1 [shape = 'u32[144,128]{1,0:T(1,128)}', space=vmem, size = 0x12000, scoped, tag = 'internal scratch']
  #allocation2 [shape = 'f32[4,18,60]{2,1,0:T(8,128)}', space=vmem, size = 0xc000, scoped, tag = 'scratch operand']
  #allocation3 [shape = 'f32[4,16,128]{2,1,0:T(8,128)}', space=vmem, size = 0x8000, scoped, tag = 'scratch operand']
  %s0 = inlined_call_operand.vmem [shape: f32[8,16,8], index: 0, kind: input, shape index: {}]
  %s1 = inlined_call_operand.hbm [shape: f32[3,8,60], index: 1, kind: input, shape index: {}]
  %s2 = inlined_call_operand.vmem [shape: f32[1,60], index: 2, kind: input, shape index: {}]
  %s3 = inlined_call_operand.vmem [shape: f32[3,60,60], index: 3, kind: input, shape index: {}]
  %s4 = inlined_call_operand.vmem [shape: f32[1,60], index: 4, kind: input, shape index: {}]
  %s5 = inlined_call_operand.vmem [shape: f32[60,128], index: 5, kind: input, shape index: {}]
  %s6 = inlined_call_operand.vmem [shape: f32[32,128], index: 6, kind: input, shape index: {}]
  %s7 = inlined_call_operand.vmem [shape: f32[1,128], index: 7, kind: input, shape index: {}]
  %s8 = inlined_call_operand.hbm [shape: f32[32,128], index: 8, kind: input, shape index: {}]
  %s9 = inlined_call_operand.hbm [shape: f32[32,128], index: 9, kind: input, shape index: {}]
  %s10 = inlined_call_operand.vmem [shape: f32[1,128], index: 10, kind: input, shape index: {}]
  %s11 = inlined_call_operand.vmem [shape: f32[32,16], index: 11, kind: input, shape index: {}]
  %s12 = inlined_call_operand.hbm [shape: f32[1,16], index: 12, kind: input, shape index: {}]
  %s13 = inlined_call_operand.vmem [shape: f32[16,5], index: 13, kind: input, shape index: {}]
  %s14 = inlined_call_operand.hbm [shape: f32[1,5], index: 14, kind: input, shape index: {}]
  %s15 = inlined_call_operand.hbm [shape: f32[2,4,5], index: 15, kind: output, shape index: {}]
  %s16 = sld [smem:[#allocation0]]
  $region113: #{cnn_lstm_forward.1} parent=0
    _
  %s18 = ssub.s32 1, %s16
  %s19 = scalar_select 0, %s18, %s16
  $region1: #{cnn_lstm_forward.1} parent=0
    #allocation4 [shape = 'u8[12288]{0}', space=vmem, size = 0x3000, scoped, tag = 'input window, operand 1, single buffered']
    #allocation5 [shape = 's32[2]{0}', space=sflag, size = 0x8, scoped, tag = 'scoped memory for cnn_lstm_forward.1']
    #allocation6 [shape = 's32[2]{0}', space=sflag, size = 0x8, scoped, tag = 'scoped memory for cnn_lstm_forward.1']
    #allocation7 [shape = 'u8[16384]{0}', space=vmem, size = 0x4000, scoped, tag = 'input window, operand 8, single buffered']
    #allocation8 [shape = 's32[1]{0}', space=sflag, size = 0x4, scoped, tag = 'scoped memory for cnn_lstm_forward.1']
    #allocation9 [shape = 'u8[16384]{0}', space=vmem, size = 0x4000, scoped, tag = 'input window, operand 9, single buffered']
    #allocation10 [shape = 'u8[512]{0}', space=vmem, size = 0x400, scoped, tag = 'input window, operand 12, single buffered']
    #allocation11 [shape = 's32[1]{0}', space=sflag, size = 0x4, scoped, tag = 'scoped memory for cnn_lstm_forward.1']
    #allocation12 [shape = 'u8[512]{0}', space=vmem, size = 0x400, scoped, tag = 'input window, operand 14, single buffered']
    #allocation13 [shape = 'u8[4096]{0}', space=vmem, size = 0x1000, scoped, tag = 'output window, operand 0']
    %20 = vsyncpa [#allocation5], 0
    %21 = vsyncpa [#allocation8], 0
    %22 = vsyncpa [#allocation11], 0
    %23 = vsyncpa [#allocation6], 0
    %s24 = scalar_lea.sflag [#allocation6], 1
    %25 = vsyncpa %s24, 0
    loop: start=0, step=1, limit=4
    $region2: #{cnn_lstm_forward.1} parent=1 // loop_pre_header
      _
    $region3: #{cnn_lstm_forward.1} parent=1 // loop_header
      %s27 = sphi 0, %s31
      %p28 = scmp.ge.s32.totalorder %s27, 4
      %s37 = sphi 0, %s39
      %s40 = sphi 0, %s37
      %s41 = sphi 0, %s40
      %s57 = sphi 0, %s41
      %s61 = sphi 0, %s61
      %s63 = sphi 0, %s61
      %s64 = sphi 0, %s63
      %s78 = sphi 0, %s64
      %s82 = sphi 0, %s82
      %s84 = sphi 0, %s82
      %s85 = sphi 0, %s84
      %s99 = sphi 0, %s85
      %s103 = sphi 0, %s103
      %s105 = sphi 0, %s103
      %s106 = sphi 0, %s105
      %s120 = sphi 0, %s106
      %s124 = sphi 0, %s124
      %s126 = sphi 0, %s124
      %s127 = sphi 0, %s126
      %s141 = sphi 0, %s127
      %s145 = sphi 0, %s145
      %s147 = sphi 0, %s145
      %s148 = sphi 0, %s147
      %s162 = sphi 0, %s148
      %s166 = sphi 0, %s166
      %s168 = sphi 0, %s166
      %s169 = sphi 0, %s168
      %s183 = sphi 0, %s169
      %s187 = sphi 0, %s187
      %s189 = sphi 0, %s187
      %s190 = sphi 0, %s189
      %s204 = sphi 0, %s190
      %s208 = sphi 0, %s208
      %s210 = sphi 0, %s208
      %s211 = sphi 0, %s210
      %s225 = sphi 0, %s211
      %s229 = sphi 0, %s229
      %s231 = sphi 0, %s229
      %s232 = sphi 0, %s231
      %s246 = sphi 0, %s232
      %s250 = sphi 0, %s250
      %s252 = sphi 0, %s250
      %s253 = sphi 0, %s252
      %s267 = sphi 0, %s253
      %s271 = sphi 0, %s271
      %s273 = sphi 0, %s271
      %s274 = sphi 0, %s273
      %s288 = sphi 0, %s274
      %s292 = sphi 0, %s292
      %s294 = sphi 0, %s292
      %s295 = sphi 0, %s294
      %s309 = sphi 0, %s295
      %s313 = sphi 0, %s313
      %s315 = sphi 0, %s313
      %s316 = sphi 0, %s315
      %s330 = sphi 0, %s316
      %s334 = sphi 0, %s334
      %s336 = sphi 0, %s334
      %s337 = sphi 0, %s336
      %s351 = sphi 0, %s337
      %s357 = sphi 0, %s359
      %s360 = sphi 0, %s357
      %s361 = sphi 0, %s360
      %s377 = sphi 0, %s361
    $region4: #{cnn_lstm_forward.1} parent=1 // loop_header_branch
      %30 = sbr.rel (%p28) target = $region8
    $region5: #{cnn_lstm_forward.1} parent=1 // loop_body
      %s32 = ssub.s32 %s27, 1
      %s33 = ssub.s32 %s27, 2
      %s34 = sadd.s32 %s27, 1
      %s35 = ssub.s32 %s27, %s34
      %p36 = scmp.eq.s32.totalorder %s35, 0
      %s38 = sadd.s32 %s37, 1
      %s39 = scalar_select %p36, %s37, %s38
      %p42 = pneg %p36
      %p43 = scmp.eq.s32.totalorder %s27, 1
      %p44 = por %p42, %p43
      %p45 = scmp.ne.s32.totalorder %s37, %s40
      %p46 = scmp.eq.s32.totalorder %s27, 0
      %p47 = por %p45, %p46
      %p48 = scmp.ne.s32.totalorder %s37, %s40
      %p49 = scmp.eq.s32.totalorder %s32, 1
      %p50 = por %p48, %p49
      %p51 = scmp.ne.s32.totalorder %s40, %s41
      %p52 = scmp.eq.s32.totalorder %s32, 0
      %p53 = por %p51, %p52
      %p54 = scmp.ne.s32.totalorder %s40, %s41
      %p55 = scmp.eq.s32.totalorder %s33, 1
      %p56 = por %p54, %p55
      %p58 = scmp.ne.s32.totalorder %s41, %s57
      %p59 = scmp.eq.s32.totalorder %s33, 0
      %p60 = por %p58, %p59
      %s62 = sadd.s32 %s61, 1
      %p65 = scmp.eq.s32.totalorder %s27, 1
      %p66 = scmp.ne.s32.totalorder %s61, %s63
      %p67 = scmp.eq.s32.totalorder %s27, 0
      %p68 = por %p66, %p67
      %p69 = scmp.ne.s32.totalorder %s61, %s63
      %p70 = scmp.eq.s32.totalorder %s32, 1
      %p71 = por %p69, %p70
      %p72 = scmp.ne.s32.totalorder %s63, %s64
      %p73 = scmp.eq.s32.totalorder %s32, 0
      %p74 = por %p72, %p73
      %p75 = scmp.ne.s32.totalorder %s63, %s64
      %p76 = scmp.eq.s32.totalorder %s33, 1
      %p77 = por %p75, %p76
      %p79 = scmp.ne.s32.totalorder %s64, %s78
      %p80 = scmp.eq.s32.totalorder %s33, 0
      %p81 = por %p79, %p80
      %s83 = sadd.s32 %s82, 1
      %p86 = scmp.eq.s32.totalorder %s27, 1
      %p87 = scmp.ne.s32.totalorder %s82, %s84
      %p88 = scmp.eq.s32.totalorder %s27, 0
      %p89 = por %p87, %p88
      %p90 = scmp.ne.s32.totalorder %s82, %s84
      %p91 = scmp.eq.s32.totalorder %s32, 1
      %p92 = por %p90, %p91
      %p93 = scmp.ne.s32.totalorder %s84, %s85
      %p94 = scmp.eq.s32.totalorder %s32, 0
      %p95 = por %p93, %p94
      %p96 = scmp.ne.s32.totalorder %s84, %s85
      %p97 = scmp.eq.s32.totalorder %s33, 1
      %p98 = por %p96, %p97
      %p100 = scmp.ne.s32.totalorder %s85, %s99
      %p101 = scmp.eq.s32.totalorder %s33, 0
      %p102 = por %p100, %p101
      %s104 = sadd.s32 %s103, 1
      %p107 = scmp.eq.s32.totalorder %s27, 1
      %p108 = scmp.ne.s32.totalorder %s103, %s105
      %p109 = scmp.eq.s32.totalorder %s27, 0
      %p110 = por %p108, %p109
      %p111 = scmp.ne.s32.totalorder %s103, %s105
      %p112 = scmp.eq.s32.totalorder %s32, 1
      %p113 = por %p111, %p112
      %p114 = scmp.ne.s32.totalorder %s105, %s106
      %p115 = scmp.eq.s32.totalorder %s32, 0
      %p116 = por %p114, %p115
      %p117 = scmp.ne.s32.totalorder %s105, %s106
      %p118 = scmp.eq.s32.totalorder %s33, 1
      %p119 = por %p117, %p118
      %p121 = scmp.ne.s32.totalorder %s106, %s120
      %p122 = scmp.eq.s32.totalorder %s33, 0
      %p123 = por %p121, %p122
      %s125 = sadd.s32 %s124, 1
      %p128 = scmp.eq.s32.totalorder %s27, 1
      %p129 = scmp.ne.s32.totalorder %s124, %s126
      %p130 = scmp.eq.s32.totalorder %s27, 0
      %p131 = por %p129, %p130
      %p132 = scmp.ne.s32.totalorder %s124, %s126
      %p133 = scmp.eq.s32.totalorder %s32, 1
      %p134 = por %p132, %p133
      %p135 = scmp.ne.s32.totalorder %s126, %s127
      %p136 = scmp.eq.s32.totalorder %s32, 0
      %p137 = por %p135, %p136
      %p138 = scmp.ne.s32.totalorder %s126, %s127
      %p139 = scmp.eq.s32.totalorder %s33, 1
      %p140 = por %p138, %p139
      %p142 = scmp.ne.s32.totalorder %s127, %s141
      %p143 = scmp.eq.s32.totalorder %s33, 0
      %p144 = por %p142, %p143
      %s146 = sadd.s32 %s145, 1
      %p149 = scmp.eq.s32.totalorder %s27, 1
      %p150 = scmp.ne.s32.totalorder %s145, %s147
      %p151 = scmp.eq.s32.totalorder %s27, 0
      %p152 = por %p150, %p151
      %p153 = scmp.ne.s32.totalorder %s145, %s147
      %p154 = scmp.eq.s32.totalorder %s32, 1
      %p155 = por %p153, %p154
      %p156 = scmp.ne.s32.totalorder %s147, %s148
      %p157 = scmp.eq.s32.totalorder %s32, 0
      %p158 = por %p156, %p157
      %p159 = scmp.ne.s32.totalorder %s147, %s148
      %p160 = scmp.eq.s32.totalorder %s33, 1
      %p161 = por %p159, %p160
      %p163 = scmp.ne.s32.totalorder %s148, %s162
      %p164 = scmp.eq.s32.totalorder %s33, 0
      %p165 = por %p163, %p164
      %s167 = sadd.s32 %s166, 1
      %p170 = scmp.eq.s32.totalorder %s27, 1
      %p171 = scmp.ne.s32.totalorder %s166, %s168
      %p172 = scmp.eq.s32.totalorder %s27, 0
      %p173 = por %p171, %p172
      %p174 = scmp.ne.s32.totalorder %s166, %s168
      %p175 = scmp.eq.s32.totalorder %s32, 1
      %p176 = por %p174, %p175
      %p177 = scmp.ne.s32.totalorder %s168, %s169
      %p178 = scmp.eq.s32.totalorder %s32, 0
      %p179 = por %p177, %p178
      %p180 = scmp.ne.s32.totalorder %s168, %s169
      %p181 = scmp.eq.s32.totalorder %s33, 1
      %p182 = por %p180, %p181
      %p184 = scmp.ne.s32.totalorder %s169, %s183
      %p185 = scmp.eq.s32.totalorder %s33, 0
      %p186 = por %p184, %p185
      %s188 = sadd.s32 %s187, 1
      %p191 = scmp.eq.s32.totalorder %s27, 1
      %p192 = scmp.ne.s32.totalorder %s187, %s189
      %p193 = scmp.eq.s32.totalorder %s27, 0
      %p194 = por %p192, %p193
      %p195 = scmp.ne.s32.totalorder %s187, %s189
      %p196 = scmp.eq.s32.totalorder %s32, 1
      %p197 = por %p195, %p196
      %p198 = scmp.ne.s32.totalorder %s189, %s190
      %p199 = scmp.eq.s32.totalorder %s32, 0
      %p200 = por %p198, %p199
      %p201 = scmp.ne.s32.totalorder %s189, %s190
      %p202 = scmp.eq.s32.totalorder %s33, 1
      %p203 = por %p201, %p202
      %p205 = scmp.ne.s32.totalorder %s190, %s204
      %p206 = scmp.eq.s32.totalorder %s33, 0
      %p207 = por %p205, %p206
      %s209 = sadd.s32 %s208, 1
      %p212 = scmp.eq.s32.totalorder %s27, 1
      %p213 = scmp.ne.s32.totalorder %s208, %s210
      %p214 = scmp.eq.s32.totalorder %s27, 0
      %p215 = por %p213, %p214
      %p216 = scmp.ne.s32.totalorder %s208, %s210
      %p217 = scmp.eq.s32.totalorder %s32, 1
      %p218 = por %p216, %p217
      %p219 = scmp.ne.s32.totalorder %s210, %s211
      %p220 = scmp.eq.s32.totalorder %s32, 0
      %p221 = por %p219, %p220
      %p222 = scmp.ne.s32.totalorder %s210, %s211
      %p223 = scmp.eq.s32.totalorder %s33, 1
      %p224 = por %p222, %p223
      %p226 = scmp.ne.s32.totalorder %s211, %s225
      %p227 = scmp.eq.s32.totalorder %s33, 0
      %p228 = por %p226, %p227
      %s230 = sadd.s32 %s229, 1
      %p233 = scmp.eq.s32.totalorder %s27, 1
      %p234 = scmp.ne.s32.totalorder %s229, %s231
      %p235 = scmp.eq.s32.totalorder %s27, 0
      %p236 = por %p234, %p235
      %p237 = scmp.ne.s32.totalorder %s229, %s231
      %p238 = scmp.eq.s32.totalorder %s32, 1
      %p239 = por %p237, %p238
      %p240 = scmp.ne.s32.totalorder %s231, %s232
      %p241 = scmp.eq.s32.totalorder %s32, 0
      %p242 = por %p240, %p241
      %p243 = scmp.ne.s32.totalorder %s231, %s232
      %p244 = scmp.eq.s32.totalorder %s33, 1
      %p245 = por %p243, %p244
      %p247 = scmp.ne.s32.totalorder %s232, %s246
      %p248 = scmp.eq.s32.totalorder %s33, 0
      %p249 = por %p247, %p248
      %s251 = sadd.s32 %s250, 1
      %p254 = scmp.eq.s32.totalorder %s27, 1
      %p255 = scmp.ne.s32.totalorder %s250, %s252
      %p256 = scmp.eq.s32.totalorder %s27, 0
      %p257 = por %p255, %p256
      %p258 = scmp.ne.s32.totalorder %s250, %s252
      %p259 = scmp.eq.s32.totalorder %s32, 1
      %p260 = por %p258, %p259
      %p261 = scmp.ne.s32.totalorder %s252, %s253
      %p262 = scmp.eq.s32.totalorder %s32, 0
      %p263 = por %p261, %p262
      %p264 = scmp.ne.s32.totalorder %s252, %s253
      %p265 = scmp.eq.s32.totalorder %s33, 1
      %p266 = por %p264, %p265
      %p268 = scmp.ne.s32.totalorder %s253, %s267
      %p269 = scmp.eq.s32.totalorder %s33, 0
      %p270 = por %p268, %p269
      %s272 = sadd.s32 %s271, 1
      %p275 = scmp.eq.s32.totalorder %s27, 1
      %p276 = scmp.ne.s32.totalorder %s271, %s273
      %p277 = scmp.eq.s32.totalorder %s27, 0
      %p278 = por %p276, %p277
      %p279 = scmp.ne.s32.totalorder %s271, %s273
      %p280 = scmp.eq.s32.totalorder %s32, 1
      %p281 = por %p279, %p280
      %p282 = scmp.ne.s32.totalorder %s273, %s274
      %p283 = scmp.eq.s32.totalorder %s32, 0
      %p284 = por %p282, %p283
      %p285 = scmp.ne.s32.totalorder %s273, %s274
      %p286 = scmp.eq.s32.totalorder %s33, 1
      %p287 = por %p285, %p286
      %p289 = scmp.ne.s32.totalorder %s274, %s288
      %p290 = scmp.eq.s32.totalorder %s33, 0
      %p291 = por %p289, %p290
      %s293 = sadd.s32 %s292, 1
      %p296 = scmp.eq.s32.totalorder %s27, 1
      %p297 = scmp.ne.s32.totalorder %s292, %s294
      %p298 = scmp.eq.s32.totalorder %s27, 0
      %p299 = por %p297, %p298
      %p300 = scmp.ne.s32.totalorder %s292, %s294
      %p301 = scmp.eq.s32.totalorder %s32, 1
      %p302 = por %p300, %p301
      %p303 = scmp.ne.s32.totalorder %s294, %s295
      %p304 = scmp.eq.s32.totalorder %s32, 0
      %p305 = por %p303, %p304
      %p306 = scmp.ne.s32.totalorder %s294, %s295
      %p307 = scmp.eq.s32.totalorder %s33, 1
      %p308 = por %p306, %p307
      %p310 = scmp.ne.s32.totalorder %s295, %s309
      %p311 = scmp.eq.s32.totalorder %s33, 0
      %p312 = por %p310, %p311
      %s314 = sadd.s32 %s313, 1
      %p317 = scmp.eq.s32.totalorder %s27, 1
      %p318 = scmp.ne.s32.totalorder %s313, %s315
      %p319 = scmp.eq.s32.totalorder %s27, 0
      %p320 = por %p318, %p319
      %p321 = scmp.ne.s32.totalorder %s313, %s315
      %p322 = scmp.eq.s32.totalorder %s32, 1
      %p323 = por %p321, %p322
      %p324 = scmp.ne.s32.totalorder %s315, %s316
      %p325 = scmp.eq.s32.totalorder %s32, 0
      %p326 = por %p324, %p325
      %p327 = scmp.ne.s32.totalorder %s315, %s316
      %p328 = scmp.eq.s32.totalorder %s33, 1
      %p329 = por %p327, %p328
      %p331 = scmp.ne.s32.totalorder %s316, %s330
      %p332 = scmp.eq.s32.totalorder %s33, 0
      %p333 = por %p331, %p332
      %s335 = sadd.s32 %s334, 1
      %p338 = scmp.eq.s32.totalorder %s27, 1
      %p339 = scmp.ne.s32.totalorder %s334, %s336
      %p340 = scmp.eq.s32.totalorder %s27, 0
      %p341 = por %p339, %p340
      %p342 = scmp.ne.s32.totalorder %s334, %s336
      %p343 = scmp.eq.s32.totalorder %s32, 1
      %p344 = por %p342, %p343
      %p345 = scmp.ne.s32.totalorder %s336, %s337
      %p346 = scmp.eq.s32.totalorder %s32, 0
      %p347 = por %p345, %p346
      %p348 = scmp.ne.s32.totalorder %s336, %s337
      %p349 = scmp.eq.s32.totalorder %s33, 1
      %p350 = por %p348, %p349
      %p352 = scmp.ne.s32.totalorder %s337, %s351
      %p353 = scmp.eq.s32.totalorder %s33, 0
      %p354 = por %p352, %p353
      %s355 = ssub.s32 %s27, %s34
      %p356 = scmp.eq.s32.totalorder %s355, 0
      %s358 = sadd.s32 %s357, 1
      %s359 = scalar_select %p356, %s357, %s358
      %p362 = pneg %p356
      %p363 = scmp.eq.s32.totalorder %s27, 1
      %p364 = por %p362, %p363
      %p365 = scmp.ne.s32.totalorder %s357, %s360
      %p366 = scmp.eq.s32.totalorder %s27, 0
      %p367 = por %p365, %p366
      %p368 = scmp.ne.s32.totalorder %s357, %s360
      %p369 = scmp.eq.s32.totalorder %s32, 1
      %p370 = por %p368, %p369
      %p371 = scmp.ne.s32.totalorder %s360, %s361
      %p372 = scmp.eq.s32.totalorder %s32, 0
      %p373 = por %p371, %p372
      %p374 = scmp.ne.s32.totalorder %s360, %s361
      %p375 = scmp.eq.s32.totalorder %s33, 1
      %p376 = por %p374, %p375
      %p378 = scmp.ne.s32.totalorder %s361, %s377
      %p379 = scmp.eq.s32.totalorder %s33, 0
      %p380 = por %p378, %p379
      %p381 = scmp.le.s32.totalorder 1, %s27
      %p382 = scmp.lt.s32.totalorder %s27, 3
      %p383 = pnand %p381, %p382
      %p384 = pneg %p383
      // Predicated region
      $region9: #{cnn_lstm_forward.1} parent=5 // pred_check
        _
      $region10: #{cnn_lstm_forward.1} parent=5 // pred_check_branch
        %386 = sbr.rel (%p383) target = $region12
      $region11: #{cnn_lstm_forward.1} parent=5 // pred_region
        %s387 = ssub.s32 %s27, 1
        // Predicated region
        $region13: #{cnn_lstm_forward.1} parent=11 // pred_check
          %p388 = pneg %p74
        $region14: #{cnn_lstm_forward.1} parent=11 // pred_check_branch
          %390 = sbr.rel (%p388) target = $region16
        $region15: #{cnn_lstm_forward.1} parent=11 // pred_region
          %s392 = ssub.s32 384, 384
          %393 = vsyncadd [#allocation5], %s392
          %s394 = sshll.u32 [#allocation4], 4
          %s395 = int_to_ptr.vmem [resolvable:$true] %s394
          %400 = dma.hbm_to_vmem [thread:$0]  %s1, 384, %s395, [#allocation5], 128, 128, 8
        $region16: #{cnn_lstm_forward.1} parent=11 // pred_fallthru
          _
        // Predicated region
        $region17: #{cnn_lstm_forward.1} parent=11 // pred_check
          %p401 = pneg %p95
        $region18: #{cnn_lstm_forward.1} parent=11 // pred_check_branch
          %403 = sbr.rel (%p401) target = $region20
        $region19: #{cnn_lstm_forward.1} parent=11 // pred_region
          _
        $region20: #{cnn_lstm_forward.1} parent=11 // pred_fallthru
          _
        // Predicated region
        $region21: #{cnn_lstm_forward.1} parent=11 // pred_check
          %p404 = pneg %p116
        $region22: #{cnn_lstm_forward.1} parent=11 // pred_check_branch
          %406 = sbr.rel (%p404) target = $region24
        $region23: #{cnn_lstm_forward.1} parent=11 // pred_region
          _
        $region24: #{cnn_lstm_forward.1} parent=11 // pred_fallthru
          _
        // Predicated region
        $region25: #{cnn_lstm_forward.1} parent=11 // pred_check
          %p407 = pneg %p137
        $region26: #{cnn_lstm_forward.1} parent=11 // pred_check_branch
          %409 = sbr.rel (%p407) target = $region28
        $region27: #{cnn_lstm_forward.1} parent=11 // pred_region
          _
        $region28: #{cnn_lstm_forward.1} parent=11 // pred_fallthru
          _
        // Predicated region
        $region29: #{cnn_lstm_forward.1} parent=11 // pred_check
          %p410 = pneg %p158
        $region30: #{cnn_lstm_forward.1} parent=11 // pred_check_branch
          %412 = sbr.rel (%p410) target = $region32
        $region31: #{cnn_lstm_forward.1} parent=11 // pred_region
          _
        $region32: #{cnn_lstm_forward.1} parent=11 // pred_fallthru
          _
        // Predicated region
        $region33: #{cnn_lstm_forward.1} parent=11 // pred_check
          %p413 = pneg %p179
        $region34: #{cnn_lstm_forward.1} parent=11 // pred_check_branch
          %415 = sbr.rel (%p413) target = $region36
        $region35: #{cnn_lstm_forward.1} parent=11 // pred_region
          _
        $region36: #{cnn_lstm_forward.1} parent=11 // pred_fallthru
          _
        // Predicated region
        $region37: #{cnn_lstm_forward.1} parent=11 // pred_check
          %p416 = pneg %p200
        $region38: #{cnn_lstm_forward.1} parent=11 // pred_check_branch
          %418 = sbr.rel (%p416) target = $region40
        $region39: #{cnn_lstm_forward.1} parent=11 // pred_region
          _
        $region40: #{cnn_lstm_forward.1} parent=11 // pred_fallthru
          _
        // Predicated region
        $region41: #{cnn_lstm_forward.1} parent=11 // pred_check
          %p419 = pneg %p221
        $region42: #{cnn_lstm_forward.1} parent=11 // pred_check_branch
          %421 = sbr.rel (%p419) target = $region44
        $region43: #{cnn_lstm_forward.1} parent=11 // pred_region
          %s423 = ssub.s32 512, 512
          %424 = vsyncadd [#allocation8], %s423
          %s425 = sshll.u32 [#allocation7], 4
          %s426 = int_to_ptr.vmem [resolvable:$true] %s425
          %431 = dma.hbm_to_vmem [thread:$0]  %s8, 512, %s426, [#allocation8], 128, 128, 8
        $region44: #{cnn_lstm_forward.1} parent=11 // pred_fallthru
          _
        // Predicated region
        $region45: #{cnn_lstm_forward.1} parent=11 // pred_check
          %p432 = pneg %p242
        $region46: #{cnn_lstm_forward.1} parent=11 // pred_check_branch
          %434 = sbr.rel (%p432) target = $region48
        $region47: #{cnn_lstm_forward.1} parent=11 // pred_region
          %s436 = ssub.s32 512, 512
          %437 = vsyncadd [#allocation8], %s436
          %s438 = sshll.u32 [#allocation9], 4
          %s439 = int_to_ptr.vmem [resolvable:$true] %s438
          %444 = dma.hbm_to_vmem [thread:$0]  %s9, 512, %s439, [#allocation8], 128, 128, 8
        $region48: #{cnn_lstm_forward.1} parent=11 // pred_fallthru
          _
        // Predicated region
        $region49: #{cnn_lstm_forward.1} parent=11 // pred_check
          %p445 = pneg %p263
        $region50: #{cnn_lstm_forward.1} parent=11 // pred_check_branch
          %447 = sbr.rel (%p445) target = $region52
        $region51: #{cnn_lstm_forward.1} parent=11 // pred_region
          _
        $region52: #{cnn_lstm_forward.1} parent=11 // pred_fallthru
          _
        // Predicated region
        $region53: #{cnn_lstm_forward.1} parent=11 // pred_check
          %p448 = pneg %p284
        $region54: #{cnn_lstm_forward.1} parent=11 // pred_check_branch
          %450 = sbr.rel (%p448) target = $region56
        $region55: #{cnn_lstm_forward.1} parent=11 // pred_region
          _
        $region56: #{cnn_lstm_forward.1} parent=11 // pred_fallthru
          _
        // Predicated region
        $region57: #{cnn_lstm_forward.1} parent=11 // pred_check
          %p451 = pneg %p305
        $region58: #{cnn_lstm_forward.1} parent=11 // pred_check_branch
          %453 = sbr.rel (%p451) target = $region60
        $region59: #{cnn_lstm_forward.1} parent=11 // pred_region
          %s455 = ssub.s32 16, 16
          %456 = vsyncadd [#allocation11], %s455
          %s458 = sshll.u32 [#allocation10], 4
          %s459 = int_to_ptr.vmem [resolvable:$true] %s458
          %461 = dma.hbm_to_vmem [thread:$0]  %s12, 16, %s459, [#allocation11]
        $region60: #{cnn_lstm_forward.1} parent=11 // pred_fallthru
          _
        // Predicated region
        $region61: #{cnn_lstm_forward.1} parent=11 // pred_check
          %p462 = pneg %p326
        $region62: #{cnn_lstm_forward.1} parent=11 // pred_check_branch
          %464 = sbr.rel (%p462) target = $region64
        $region63: #{cnn_lstm_forward.1} parent=11 // pred_region
          _
        $region64: #{cnn_lstm_forward.1} parent=11 // pred_fallthru
          _
        // Predicated region
        $region65: #{cnn_lstm_forward.1} parent=11 // pred_check
          %p465 = pneg %p347
        $region66: #{cnn_lstm_forward.1} parent=11 // pred_check_branch
          %467 = sbr.rel (%p465) target = $region68
        $region67: #{cnn_lstm_forward.1} parent=11 // pred_region
          %s469 = ssub.s32 16, 16
          %470 = vsyncadd [#allocation11], %s469
          %s472 = sshll.u32 [#allocation12], 4
          %s473 = int_to_ptr.vmem [resolvable:$true] %s472
          %475 = dma.hbm_to_vmem [thread:$0]  %s14, 16, %s473, [#allocation11]
        $region68: #{cnn_lstm_forward.1} parent=11 // pred_fallthru
          _
      $region12: #{cnn_lstm_forward.1} parent=5 // pred_fallthru
        _
      %p476 = scmp.lt.s32.totalorder %s27, 2
      // Predicated region
      $region69: #{cnn_lstm_forward.1} parent=5 // pred_check
        %p477 = pneg %p476
      $region70: #{cnn_lstm_forward.1} parent=5 // pred_check_branch
        %479 = sbr.rel (%p477) target = $region72
      $region71: #{cnn_lstm_forward.1} parent=5 // pred_region
        // Predicated region
        $region73: #{cnn_lstm_forward.1} parent=71 // pred_check
          %p480 = pneg %p47
        $region74: #{cnn_lstm_forward.1} parent=71 // pred_check_branch
          %482 = sbr.rel (%p480) target = $region76
        $region75: #{cnn_lstm_forward.1} parent=71 // pred_region
          %s483 = smul.u32 4, %s27
          %p484 = scmp.lt.s32.totalorder %s483, 7
          %s485 = scalar_select %p484, %s483, 7
          %s486 = smul.addr %s485, 2
          %s487 = smul.addr %s486, 8
          %s488 = scalar_lea.vmem %s0, %s487
          %s489 = smul.u32 4, %s27
        $region76: #{cnn_lstm_forward.1} parent=71 // pred_fallthru
          _
      $region72: #{cnn_lstm_forward.1} parent=5 // pred_fallthru
        _
      %p490 = scmp.le.s32.totalorder 1, %s27
      %p491 = scmp.lt.s32.totalorder %s27, 3
      %p492 = pnand %p490, %p491
      %p493 = pneg %p492
      // Predicated region
      $region77: #{cnn_lstm_forward.1} parent=5 // pred_check
        _
      $region78: #{cnn_lstm_forward.1} parent=5 // pred_check_branch
        %495 = sbr.rel (%p492) target = $region80
      $region79: #{cnn_lstm_forward.1} parent=5 // pred_region
        %s496 = ssub.s32 %s27, 1
        // Predicated region
        $region81: #{cnn_lstm_forward.1} parent=79 // pred_check
          %p497 = pneg %p74
        $region82: #{cnn_lstm_forward.1} parent=79 // pred_check_branch
          %499 = sbr.rel (%p497) target = $region84
        $region83: #{cnn_lstm_forward.1} parent=79 // pred_region
          %500 = dma.done [#allocation5], 384
        $region84: #{cnn_lstm_forward.1} parent=79 // pred_fallthru
          _
        // Predicated region
        $region85: #{cnn_lstm_forward.1} parent=79 // pred_check
          %p501 = pneg %p221
        $region86: #{cnn_lstm_forward.1} parent=79 // pred_check_branch
          %503 = sbr.rel (%p501) target = $region88
        $region87: #{cnn_lstm_forward.1} parent=79 // pred_region
          %504 = dma.done [#allocation8], 512
        $region88: #{cnn_lstm_forward.1} parent=79 // pred_fallthru
          _
        // Predicated region
        $region89: #{cnn_lstm_forward.1} parent=79 // pred_check
          %p505 = pneg %p242
        $region90: #{cnn_lstm_forward.1} parent=79 // pred_check_branch
          %507 = sbr.rel (%p505) target = $region92
        $region91: #{cnn_lstm_forward.1} parent=79 // pred_region
          %508 = dma.done [#allocation8], 512
        $region92: #{cnn_lstm_forward.1} parent=79 // pred_fallthru
          _
        // Predicated region
        $region93: #{cnn_lstm_forward.1} parent=79 // pred_check
          %p509 = pneg %p305
        $region94: #{cnn_lstm_forward.1} parent=79 // pred_check_branch
          %511 = sbr.rel (%p509) target = $region96
        $region95: #{cnn_lstm_forward.1} parent=79 // pred_region
          %512 = dma.done [#allocation11], 16
        $region96: #{cnn_lstm_forward.1} parent=79 // pred_fallthru
          _
        // Predicated region
        $region97: #{cnn_lstm_forward.1} parent=79 // pred_check
          %p513 = pneg %p347
        $region98: #{cnn_lstm_forward.1} parent=79 // pred_check_branch
          %515 = sbr.rel (%p513) target = $region100
        $region99: #{cnn_lstm_forward.1} parent=79 // pred_region
          %516 = dma.done [#allocation11], 16
        $region100: #{cnn_lstm_forward.1} parent=79 // pred_fallthru
          _
        %s517 = smul.u32 4, %s32
        %p518 = scmp.lt.s32.totalorder %s517, 7
        %s519 = scalar_select %p518, %s517, 7
        %s520 = smul.addr %s519, 2
        %s521 = smul.addr %s520, 8
        %s522 = scalar_lea.vmem %s0, %s521
        %p523 = pneg %p53
        %p524 = pneg %p50
        %p525 = pneg %p74
        %p526 = pneg %p71
        %p527 = pneg %p95
        %p528 = pneg %p92
        %p529 = pneg %p116
        %p530 = pneg %p113
        %p531 = pneg %p137
        %p532 = pneg %p134
        %p533 = pneg %p158
        %p534 = pneg %p155
        %p535 = pneg %p179
        %p536 = pneg %p176
        %p537 = pneg %p200
        %p538 = pneg %p197
        %p539 = pneg %p221
        %p540 = pneg %p218
        %p541 = pneg %p242
        %p542 = pneg %p239
        %p543 = pneg %p263
        %p544 = pneg %p260
        %p545 = pneg %p284
        %p546 = pneg %p281
        %p547 = pneg %p305
        %p548 = pneg %p302
        %p549 = pneg %p326
        %p550 = pneg %p323
        %p551 = pneg %p347
        %p552 = pneg %p344
        %p553 = pneg %p373
        %p554 = pneg %p370
        %s555 = sand.u32 %s360, 1
        %s556 = scalar_lea.sflag [#allocation6], %s555
        %s557 = sand.u32 %s360, 1
        %s558 = smul.addr %s557, 4
        %s559 = scalar_lea.vmem [#allocation13], %s558
        %s560 = smul.u32 4, %s32
        %p561 = scmp.lt.s32.totalorder %s560, 7
        %s562 = scalar_select %p561, %s560, 7
        %s563 = smul.addr %s562, 2
        %s564 = smul.addr %s563, 8
        %s565 = scalar_lea.vmem %s0, %s564
        %s566 = smul.u32 4, %s32
        %vm567 = vcmask 490496
        %568 = vst.msk [vmem:[#allocation2] sm:$0xff] %vm567, 0.0
        %569 = vst.msk [vmem:[#allocation2 + $0x8] sm:$0xff] %vm567, 0.0
        %vm570 = vcmask 484352
        %571 = vst.msk [vmem:[#allocation2 + $0x10] sm:$0x3] %vm570, 0.0
        %572 = vst.msk [vmem:[#allocation2 + $0x18] sm:$0xff] %vm567, 0.0
        %573 = vst.msk [vmem:[#allocation2 + $0x20] sm:$0xff] %vm567, 0.0
        %574 = vst.msk [vmem:[#allocation2 + $0x28] sm:$0x3] %vm570, 0.0
        %575 = vst.msk [vmem:[#allocation2 + $0x30] sm:$0xff] %vm567, 0.0
        %576 = vst.msk [vmem:[#allocation2 + $0x38] sm:$0xff] %vm567, 0.0
        %577 = vst.msk [vmem:[#allocation2 + $0x40] sm:$0x3] %vm570, 0.0
        %578 = vst.msk [vmem:[#allocation2 + $0x48] sm:$0xff] %vm567, 0.0
        %579 = vst.msk [vmem:[#allocation2 + $0x50] sm:$0xff] %vm567, 0.0
        %580 = vst.msk [vmem:[#allocation2 + $0x58] sm:$0x3] %vm570, 0.0
        %v581 = vld [vmem:[%s565] sm:$0xff]
        %v582 = vld [vmem:[%s565 + $0x8] sm:$0xff]
        %v583 = vld [vmem:[%s565 + $0x10] sm:$0xff]
        %v584 = vld [vmem:[%s565 + $0x18] sm:$0xff]
        %v585 = vld [vmem:[%s565 + $0x20] sm:$0xff]
        %v586 = vld [vmem:[%s565 + $0x28] sm:$0xff]
        %v587 = vld [vmem:[%s565 + $0x30] sm:$0xff]
        %v588 = vld [vmem:[%s565 + $0x38] sm:$0xff]
        %vm589 = vcmask 64512
        %590 = vst.msk [vmem:[#allocation2 + $0x1] sm:$0xff] %vm589, %v581
        %591 = vst.msk [vmem:[#allocation2 + $0x9] sm:$0xff] %vm589, %v582
        %592 = vst.msk [vmem:[#allocation2 + $0x19] sm:$0xff] %vm589, %v583
        %593 = vst.msk [vmem:[#allocation2 + $0x21] sm:$0xff] %vm589, %v584
        %594 = vst.msk [vmem:[#allocation2 + $0x31] sm:$0xff] %vm589, %v585
        %595 = vst.msk [vmem:[#allocation2 + $0x39] sm:$0xff] %vm589, %v586
        %596 = vst.msk [vmem:[#allocation2 + $0x49] sm:$0xff] %vm589, %v587
        %597 = vst.msk [vmem:[#allocation2 + $0x51] sm:$0xff] %vm589, %v588
        %v598 = vld [vmem:[#allocation2] sm:$0xff]
        %v599 = vld [vmem:[#allocation2 + $0x8] sm:$0xff]
        %v600 = vld [vmem:[#allocation2 + $0x18] sm:$0xff]
        %v601 = vld [vmem:[#allocation2 + $0x20] sm:$0xff]
        %v602 = vld [vmem:[#allocation2 + $0x30] sm:$0xff]
        %v603 = vld [vmem:[#allocation2 + $0x38] sm:$0xff]
        %v604 = vld [vmem:[#allocation2 + $0x48] sm:$0xff]
        %v605 = vld [vmem:[#allocation2 + $0x50] sm:$0xff]
        %v606 = vld [vmem:[#allocation2 + $0x2] sm:$0xff]
        %v607 = vld [vmem:[#allocation2 + $0xa] sm:$0xff]
        %v608 = vld [vmem:[#allocation2 + $0x1a] sm:$0xff]
        %v609 = vld [vmem:[#allocation2 + $0x22] sm:$0xff]
        %v610 = vld [vmem:[#allocation2 + $0x32] sm:$0xff]
        %v611 = vld [vmem:[#allocation2 + $0x3a] sm:$0xff]
        %v612 = vld [vmem:[#allocation2 + $0x4a] sm:$0xff]
        %v613 = vld [vmem:[#allocation2 + $0x52] sm:$0xff]
        %v614 = vld [vmem:[#allocation4] sm:$0xff]
        %s615 = scalar_lea.vmem [#allocation4], 8
        %v616 = vld [vmem:[%s615] sm:$0xff]
        %v618 = vsel %vm589, %v581, 0
        %v621 = vsel %vm589, %v582, 0
        %v624 = vsel %vm589, %v583, 0
        %v627 = vsel %vm589, %v584, 0
        %v630 = vsel %vm589, %v585, 0
        %v633 = vsel %vm589, %v586, 0
        %v636 = vsel %vm589, %v587, 0
        %v639 = vsel %vm589, %v588, 0
        %641 = vmatprep.subr.mxu0 0.0
        %642 = vmatpush1.msra.mxu0 %v616
        %643 = vmatprep.subr.mxu0 0.0
        %644 = vmatpush1.msra.mxu0 0.0
        %645 = vmatprep.subr.mxu0 0.0
        %646 = vmatpush1.msra.mxu0 0.0
        %647 = vmatprep.subr.mxu0 0.0
        %648 = vmatpush1.msra.mxu0 0.0
        %649 = vmatprep.subr.mxu0 0.0
        %650 = vmatpush1.msra.mxu0 0.0
        %651 = vmatprep.subr.mxu0 0.0
        %652 = vmatpush1.msra.mxu0 0.0
        %653 = vmatprep.subr.mxu0 0.0
        %654 = vmatpush1.msra.mxu0 0.0
        %655 = vmatprep.subr.mxu0 0.0
        %656 = vmatpush1.msra.mxu0 0.0
        %657 = vmatprep.subr.mxu0 0.0
        %658 = vmatpush1.msra.mxu0 0.0
        %659 = vmatprep.subr.mxu0 0.0
        %660 = vmatpush1.msra.mxu0 0.0
        %661 = vmatprep.subr.mxu0 0.0
        %662 = vmatpush1.msra.mxu0 0.0
        %663 = vmatprep.subr.mxu0 0.0
        %664 = vmatpush1.msra.mxu0 0.0
        %665 = vmatprep.subr.mxu0 0.0
        %666 = vmatpush1.msra.mxu0 0.0
        %667 = vmatprep.subr.mxu0 0.0
        %668 = vmatpush1.msra.mxu0 0.0
        %669 = vmatprep.subr.mxu0 0.0
        %670 = vmatpush1.msra.mxu0 0.0
        %671 = vmatprep.subr.mxu0 0.0
        %672 = vmatpush1.msra.mxu0 0.0
        %673 = vmatprep.subr.mxu0 0.0
        %674 = vmatpush1.msra.mxu0 0.0
        %675 = vmatprep.subr.mxu0 0.0
        %676 = vmatpush1.msra.mxu0 0.0
        %677 = vmatprep.subr.mxu0 0.0
        %678 = vmatpush1.msra.mxu0 0.0
        %679 = vmatprep.subr.mxu0 0.0
        %680 = vmatpush1.msra.mxu0 0.0
        %681 = vmatprep.subr.mxu0 0.0
        %682 = vmatpush1.msra.mxu0 0.0
        %683 = vmatprep.subr.mxu0 0.0
        %684 = vmatpush1.msra.mxu0 0.0
        %685 = vmatprep.subr.mxu0 0.0
        %686 = vmatpush1.msra.mxu0 0.0
        %687 = vmatprep.subr.mxu0 0.0
        %688 = vmatpush1.msra.mxu0 0.0
        %689 = vmatprep.subr.mxu0 0.0
        %690 = vmatpush1.msra.mxu0 0.0
        %691 = vmatprep.subr.mxu0 0.0
        %692 = vmatpush1.msra.mxu0 0.0
        %693 = vmatprep.subr.mxu0 0.0
        %694 = vmatpush1.msra.mxu0 0.0
        %695 = vmatprep.subr.mxu0 0.0
        %696 = vmatpush1.msra.mxu0 0.0
        %697 = vmatprep.subr.mxu0 0.0
        %698 = vmatpush1.msra.mxu0 0.0
        %699 = vmatprep.subr.mxu0 0.0
        %700 = vmatpush1.msra.mxu0 0.0
        %701 = vmatprep.subr.mxu0 0.0
        %702 = vmatpush1.msra.mxu0 0.0
        %703 = vmatprep.subr.mxu0 0.0
        %704 = vmatpush1.msra.mxu0 0.0
        %705 = vmatprep.mubr.f32.mxu0 0.0
        %706 = vmatmul.mubr.f32.gmra.mrb[0].mxu0 %v618
        %v707 = vpop.f32.mrb[0].mxu0
        %v708 = vadd.f32 0.0, %v707
        %v709 = vpop.f32.mrb[0].mxu0
        %710 = vmatprep.mubr.f32.mxu0 0.0
        %711 = vmatmul.mubr.f32.gmra.mrb[0].mxu0 %v621
        %v712 = vpop.f32.mrb[0].mxu0
        %v713 = vadd.f32 0.0, %v712
        %v714 = vpop.f32.mrb[0].mxu0
        %715 = vmatprep.mubr.f32.mxu0 0.0
        %716 = vmatmul.mubr.f32.gmra.mrb[0].mxu0 %v624
        %v717 = vpop.f32.mrb[0].mxu0
        %v718 = vadd.f32 0.0, %v717
        %v719 = vpop.f32.mrb[0].mxu0
        %720 = vmatprep.mubr.f32.mxu0 0.0
        %721 = vmatmul.mubr.f32.gmra.mrb[0].mxu0 %v627
        %v722 = vpop.f32.mrb[0].mxu0
        %v723 = vadd.f32 0.0, %v722
        %v724 = vpop.f32.mrb[0].mxu0
        %725 = vmatprep.mubr.f32.mxu0 0.0
        %726 = vmatmul.mubr.f32.gmra.mrb[0].mxu0 %v630
        %v727 = vpop.f32.mrb[0].mxu0
        %v728 = vadd.f32 0.0, %v727
        %v729 = vpop.f32.mrb[0].mxu0
        %730 = vmatprep.mubr.f32.mxu0 0.0
        %731 = vmatmul.mubr.f32.gmra.mrb[0].mxu0 %v633
        %v732 = vpop.f32.mrb[0].mxu0
        %v733 = vadd.f32 0.0, %v732
        %v734 = vpop.f32.mrb[0].mxu0
        %735 = vmatprep.mubr.f32.mxu0 0.0
        %736 = vmatmul.mubr.f32.gmra.mrb[0].mxu0 %v636
        %v737 = vpop.f32.mrb[0].mxu0
        %v738 = vadd.f32 0.0, %v737
        %v739 = vpop.f32.mrb[0].mxu0
        %740 = vmatprep.mubr.f32.mxu0 0.0
        %741 = vmatmul.mubr.f32.gmra.mrb[0].mxu0 %v639
        %v742 = vpop.f32.mrb[0].mxu0
        %v743 = vadd.f32 0.0, %v742
        %v744 = vpop.f32.mrb[0].mxu0
        %745 = vdwg.mxu0
        %v747 = vsel %vm589, %v598, 0
        %v750 = vsel %vm589, %v599, 0
        %v753 = vsel %vm589, %v600, 0
        %v756 = vsel %vm589, %v601, 0
        %v759 = vsel %vm589, %v602, 0
        %v762 = vsel %vm589, %v603, 0
        %v765 = vsel %vm589, %v604, 0
        %v768 = vsel %vm589, %v605, 0
        %770 = vmatprep.subr.mxu0 0.0
        %771 = vmatpush1.msra.mxu0 %v614
        %772 = vmatprep.subr.mxu0 0.0
        %773 = vmatpush1.msra.mxu0 0.0
        %774 = vmatprep.subr.mxu0 0.0
        %775 = vmatpush1.msra.mxu0 0.0
        %776 = vmatprep.subr.mxu0 0.0
        %777 = vmatpush1.msra.mxu0 0.0
        %778 = vmatprep.subr.mxu0 0.0
        %779 = vmatpush1.msra.mxu0 0.0
        %780 = vmatprep.subr.mxu0 0.0
        %781 = vmatpush1.msra.mxu0 0.0
        %782 = vmatprep.subr.mxu0 0.0
        %783 = vmatpush1.msra.mxu0 0.0
        %784 = vmatprep.subr.mxu0 0.0
        %785 = vmatpush1.msra.mxu0 0.0
        %786 = vmatprep.subr.mxu0 0.0
        %787 = vmatpush1.msra.mxu0 0.0
        %788 = vmatprep.subr.mxu0 0.0
        %789 = vmatpush1.msra.mxu0 0.0
        %790 = vmatprep.subr.mxu0 0.0
        %791 = vmatpush1.msra.mxu0 0.0
        %792 = vmatprep.subr.mxu0 0.0
        %793 = vmatpush1.msra.mxu0 0.0
        %794 = vmatprep.subr.mxu0 0.0
        %795 = vmatpush1.msra.mxu0 0.0
        %796 = vmatprep.subr.mxu0 0.0
        %797 = vmatpush1.msra.mxu0 0.0
        %798 = vmatprep.subr.mxu0 0.0
        %799 = vmatpush1.msra.mxu0 0.0
        %800 = vmatprep.subr.mxu0 0.0
        %801 = vmatpush1.msra.mxu0 0.0
        %802 = vmatprep.subr.mxu0 0.0
        %803 = vmatpush1.msra.mxu0 0.0
        %804 = vmatprep.subr.mxu0 0.0
        %805 = vmatpush1.msra.mxu0 0.0
        %806 = vmatprep.subr.mxu0 0.0
        %807 = vmatpush1.msra.mxu0 0.0
        %808 = vmatprep.subr.mxu0 0.0
        %809 = vmatpush1.msra.mxu0 0.0
        %810 = vmatprep.subr.mxu0 0.0
        %811 = vmatpush1.msra.mxu0 0.0
        %812 = vmatprep.subr.mxu0 0.0
        %813 = vmatpush1.msra.mxu0 0.0
        %814 = vmatprep.subr.mxu0 0.0
        %815 = vmatpush1.msra.mxu0 0.0
        %816 = vmatprep.subr.mxu0 0.0
        %817 = vmatpush1.msra.mxu0 0.0
        %818 = vmatprep.subr.mxu0 0.0
        %819 = vmatpush1.msra.mxu0 0.0
        %820 = vmatprep.subr.mxu0 0.0
        %821 = vmatpush1.msra.mxu0 0.0
        %822 = vmatprep.subr.mxu0 0.0
        %823 = vmatpush1.msra.mxu0 0.0
        %824 = vmatprep.subr.mxu0 0.0
        %825 = vmatpush1.msra.mxu0 0.0
        %826 = vmatprep.subr.mxu0 0.0
        %827 = vmatpush1.msra.mxu0 0.0
        %828 = vmatprep.subr.mxu0 0.0
        %829 = vmatpush1.msra.mxu0 0.0
        %830 = vmatprep.subr.mxu0 0.0
        %831 = vmatpush1.msra.mxu0 0.0
        %832 = vmatprep.subr.mxu0 0.0
        %833 = vmatpush1.msra.mxu0 0.0
        %834 = vmatprep.mubr.f32.mxu0 0.0
        %835 = vmatmul.mubr.f32.gmra.mrb[0].mxu0 %v747
        %v836 = vpop.f32.mrb[0].mxu0
        %v837 = vadd.f32 %v708, %v836
        %v838 = vpop.f32.mrb[0].mxu0
        %839 = vmatprep.mubr.f32.mxu0 0.0
        %840 = vmatmul.mubr.f32.gmra.mrb[0].mxu0 %v750
        %v841 = vpop.f32.mrb[0].mxu0
        %v842 = vadd.f32 %v713, %v841
        %v843 = vpop.f32.mrb[0].mxu0
        %844 = vmatprep.mubr.f32.mxu0 0.0
        %845 = vmatmul.mubr.f32.gmra.mrb[0].mxu0 %v753
        %v846 = vpop.f32.mrb[0].mxu0
        %v847 = vadd.f32 %v718, %v846
        %v848 = vpop.f32.mrb[0].mxu0
        %849 = vmatprep.mubr.f32.mxu0 0.0
        %850 = vmatmul.mubr.f32.gmra.mrb[0].mxu0 %v756
        %v851 = vpop.f32.mrb[0].mxu0
        %v852 = vadd.f32 %v723, %v851
        %v853 = vpop.f32.mrb[0].mxu0
        %854 = vmatprep.mubr.f32.mxu0 0.0
        %855 = vmatmul.mubr.f32.gmra.mrb[0].mxu0 %v759
        %v856 = vpop.f32.mrb[0].mxu0
        %v857 = vadd.f32 %v728, %v856
        %v858 = vpop.f32.mrb[0].mxu0
        %859 = vmatprep.mubr.f32.mxu0 0.0
        %860 = vmatmul.mubr.f32.gmra.mrb[0].mxu0 %v762
        %v861 = vpop.f32.mrb[0].mxu0
        %v862 = vadd.f32 %v733, %v861
        %v863 = vpop.f32.mrb[0].mxu0
        %864 = vmatprep.mubr.f32.mxu0 0.0
        %865 = vmatmul.mubr.f32.gmra.mrb[0].mxu0 %v765
        %v866 = vpop.f32.mrb[0].mxu0
        %v867 = vadd.f32 %v738, %v866
        %v868 = vpop.f32.mrb[0].mxu0
        %869 = vmatprep.mubr.f32.mxu0 0.0
        %870 = vmatmul.mubr.f32.gmra.mrb[0].mxu0 %v768
        %v871 = vpop.f32.mrb[0].mxu0
        %v872 = vadd.f32 %v743, %v871
        %v873 = vpop.f32.mrb[0].mxu0
        %874 = vdwg.mxu0
        %s875 = scalar_lea.vmem [#allocation4], 16
        %v876 = vld [vmem:[%s875] sm:$0xff]
        %v878 = vsel %vm589, %v606, 0
        %v881 = vsel %vm589, %v607, 0
        %v884 = vsel %vm589, %v608, 0
        %v887 = vsel %vm589, %v609, 0
        %v890 = vsel %vm589, %v610, 0
        %v893 = vsel %vm589, %v611, 0
        %v896 = vsel %vm589, %v612, 0
        %v899 = vsel %vm589, %v613, 0
        %901 = vmatprep.subr.mxu0 0.0
        %902 = vmatpush1.msra.mxu0 %v876
        %903 = vmatprep.subr.mxu0 0.0
        %904 = vmatpush1.msra.mxu0 0.0
        %905 = vmatprep.subr.mxu0 0.0
        %906 = vmatpush1.msra.mxu0 0.0
        %907 = vmatprep.subr.mxu0 0.0
        %908 = vmatpush1.msra.mxu0 0.0
        %909 = vmatprep.subr.mxu0 0.0
        %910 = vmatpush1.msra.mxu0 0.0
        %911 = vmatprep.subr.mxu0 0.0
        %912 = vmatpush1.msra.mxu0 0.0
        %913 = vmatprep.subr.mxu0 0.0
        %914 = vmatpush1.msra.mxu0 0.0
        %915 = vmatprep.subr.mxu0 0.0
        %916 = vmatpush1.msra.mxu0 0.0
        %917 = vmatprep.subr.mxu0 0.0
        %918 = vmatpush1.msra.mxu0 0.0
        %919 = vmatprep.subr.mxu0 0.0
        %920 = vmatpush1.msra.mxu0 0.0
        %921 = vmatprep.subr.mxu0 0.0
        %922 = vmatpush1.msra.mxu0 0.0
        %923 = vmatprep.subr.mxu0 0.0
        %924 = vmatpush1.msra.mxu0 0.0
        %925 = vmatprep.subr.mxu0 0.0
        %926 = vmatpush1.msra.mxu0 0.0
        %927 = vmatprep.subr.mxu0 0.0
        %928 = vmatpush1.msra.mxu0 0.0
        %929 = vmatprep.subr.mxu0 0.0
        %930 = vmatpush1.msra.mxu0 0.0
        %931 = vmatprep.subr.mxu0 0.0
        %932 = vmatpush1.msra.mxu0 0.0
        %933 = vmatprep.subr.mxu0 0.0
        %934 = vmatpush1.msra.mxu0 0.0
        %935 = vmatprep.subr.mxu0 0.0
        %936 = vmatpush1.msra.mxu0 0.0
        %937 = vmatprep.subr.mxu0 0.0
        %938 = vmatpush1.msra.mxu0 0.0
        %939 = vmatprep.subr.mxu0 0.0
        %940 = vmatpush1.msra.mxu0 0.0
        %941 = vmatprep.subr.mxu0 0.0
        %942 = vmatpush1.msra.mxu0 0.0
        %943 = vmatprep.subr.mxu0 0.0
        %944 = vmatpush1.msra.mxu0 0.0
        %945 = vmatprep.subr.mxu0 0.0
        %946 = vmatpush1.msra.mxu0 0.0
        %947 = vmatprep.subr.mxu0 0.0
        %948 = vmatpush1.msra.mxu0 0.0
        %949 = vmatprep.subr.mxu0 0.0
        %950 = vmatpush1.msra.mxu0 0.0
        %951 = vmatprep.subr.mxu0 0.0
        %952 = vmatpush1.msra.mxu0 0.0
        %953 = vmatprep.subr.mxu0 0.0
        %954 = vmatpush1.msra.mxu0 0.0
        %955 = vmatprep.subr.mxu0 0.0
        %956 = vmatpush1.msra.mxu0 0.0
        %957 = vmatprep.subr.mxu0 0.0
        %958 = vmatpush1.msra.mxu0 0.0
        %959 = vmatprep.subr.mxu0 0.0
        %960 = vmatpush1.msra.mxu0 0.0
        %961 = vmatprep.subr.mxu0 0.0
        %962 = vmatpush1.msra.mxu0 0.0
        %963 = vmatprep.subr.mxu0 0.0
        %964 = vmatpush1.msra.mxu0 0.0
        %965 = vmatprep.mubr.f32.mxu0 0.0
        %966 = vmatmul.mubr.f32.gmra.mrb[0].mxu0 %v878
        %v967 = vpop.f32.mrb[0].mxu0
        %v968 = vadd.f32 0.0, %v967
        %v969 = vpop.f32.mrb[0].mxu0
        %970 = vmatprep.mubr.f32.mxu0 0.0
        %971 = vmatmul.mubr.f32.gmra.mrb[0].mxu0 %v881
        %v972 = vpop.f32.mrb[0].mxu0
        %v973 = vadd.f32 0.0, %v972
        %v974 = vpop.f32.mrb[0].mxu0
        %975 = vmatprep.mubr.f32.mxu0 0.0
        %976 = vmatmul.mubr.f32.gmra.mrb[0].mxu0 %v884
        %v977 = vpop.f32.mrb[0].mxu0
        %v978 = vadd.f32 0.0, %v977
        %v979 = vpop.f32.mrb[0].mxu0
        %980 = vmatprep.mubr.f32.mxu0 0.0
        %981 = vmatmul.mubr.f32.gmra.mrb[0].mxu0 %v887
        %v982 = vpop.f32.mrb[0].mxu0
        %v983 = vadd.f32 0.0, %v982
        %v984 = vpop.f32.mrb[0].mxu0
        %985 = vmatprep.mubr.f32.mxu0 0.0
        %986 = vmatmul.mubr.f32.gmra.mrb[0].mxu0 %v890
        %v987 = vpop.f32.mrb[0].mxu0
        %v988 = vadd.f32 0.0, %v987
        %v989 = vpop.f32.mrb[0].mxu0
        %990 = vmatprep.mubr.f32.mxu0 0.0
        %991 = vmatmul.mubr.f32.gmra.mrb[0].mxu0 %v893
        %v992 = vpop.f32.mrb[0].mxu0
        %v993 = vadd.f32 0.0, %v992
        %v994 = vpop.f32.mrb[0].mxu0
        %995 = vmatprep.mubr.f32.mxu0 0.0
        %996 = vmatmul.mubr.f32.gmra.mrb[0].mxu0 %v896
        %v997 = vpop.f32.mrb[0].mxu0
        %v998 = vadd.f32 0.0, %v997
        %v999 = vpop.f32.mrb[0].mxu0
        %1000 = vmatprep.mubr.f32.mxu0 0.0
        %1001 = vmatmul.mubr.f32.gmra.mrb[0].mxu0 %v899
        %v1002 = vpop.f32.mrb[0].mxu0
        %v1003 = vadd.f32 0.0, %v1002
        %v1004 = vpop.f32.mrb[0].mxu0
        %1005 = vdwg.mxu0
        %v1006 = vadd.f32 %v837, %v968
        %v1007 = vadd.f32 %v842, %v973
        %v1008 = vadd.f32 %v847, %v978
        %v1009 = vadd.f32 %v852, %v983
        %v1010 = vadd.f32 %v857, %v988
        %v1011 = vadd.f32 %v862, %v993
        %v1012 = vadd.f32 %v867, %v998
        %v1013 = vadd.f32 %v872, %v1003
        %v1014 = vld [vmem:[%s2] sm:$0x1]
        %v1016 = vlaneseq
        %v1017 = vshrl.u32 %v1016, 7
        %v1018 = vsub.s32 0, %v1017
        %v1019 = vrot.slane %v1014, %v1018
        %v1021 = vadd.f32 %v1006, %v1019
        %v1022 = vadd.f32 %v1007, %v1019
        %v1023 = vadd.f32 %v1008, %v1019
        %v1024 = vadd.f32 %v1009, %v1019
        %v1025 = vadd.f32 %v1010, %v1019
        %v1026 = vadd.f32 %v1011, %v1019
        %v1027 = vadd.f32 %v1012, %v1019
        %v1028 = vadd.f32 %v1013, %v1019
        %v1029 = vmax.f32 %v1021, 0.0
        %v1030 = vmax.f32 %v1022, 0.0
        %v1031 = vmax.f32 %v1023, 0.0
        %v1032 = vmax.f32 %v1024, 0.0
        %v1033 = vmax.f32 %v1025, 0.0
        %v1034 = vmax.f32 %v1026, 0.0
        %v1035 = vmax.f32 %v1027, 0.0
        %v1036 = vmax.f32 %v1028, 0.0
        %1037 = vst.msk [vmem:[#allocation2 + $0x1] sm:$0xff] %vm567, %v1029
        %1038 = vst.msk [vmem:[#allocation2 + $0x9] sm:$0xff] %vm567, %v1030
        %1039 = vst.msk [vmem:[#allocation2 + $0x19] sm:$0xff] %vm567, %v1031
        %1040 = vst.msk [vmem:[#allocation2 + $0x21] sm:$0xff] %vm567, %v1032
        %1041 = vst.msk [vmem:[#allocation2 + $0x31] sm:$0xff] %vm567, %v1033
        %1042 = vst.msk [vmem:[#allocation2 + $0x39] sm:$0xff] %vm567, %v1034
        %1043 = vst.msk [vmem:[#allocation2 + $0x49] sm:$0xff] %vm567, %v1035
        %1044 = vst.msk [vmem:[#allocation2 + $0x51] sm:$0xff] %vm567, %v1036
        %v1045 = vld [vmem:[#allocation2] sm:$0xff]
        %v1046 = vld [vmem:[#allocation2 + $0x8] sm:$0xff]
        %v1047 = vld [vmem:[#allocation2 + $0x18] sm:$0xff]
        %v1048 = vld [vmem:[#allocation2 + $0x20] sm:$0xff]
        %v1049 = vld [vmem:[#allocation2 + $0x30] sm:$0xff]
        %v1050 = vld [vmem:[#allocation2 + $0x38] sm:$0xff]
        %v1051 = vld [vmem:[#allocation2 + $0x48] sm:$0xff]
        %v1052 = vld [vmem:[#allocation2 + $0x50] sm:$0xff]
        %v1053 = vld [vmem:[#allocation2 + $0x2] sm:$0xff]
        %v1054 = vld [vmem:[#allocation2 + $0xa] sm:$0xff]
        %v1055 = vld [vmem:[#allocation2 + $0x1a] sm:$0xff]
        %v1056 = vld [vmem:[#allocation2 + $0x22] sm:$0xff]
        %v1057 = vld [vmem:[#allocation2 + $0x32] sm:$0xff]
        %v1058 = vld [vmem:[#allocation2 + $0x3a] sm:$0xff]
        %v1059 = vld [vmem:[#allocation2 + $0x4a] sm:$0xff]
        %v1060 = vld [vmem:[#allocation2 + $0x52] sm:$0xff]
        %v1061 = vld [vmem:[%s3] sm:$0xff]
        %v1062 = vld [vmem:[%s3 + $0x8] sm:$0xff]
        %v1063 = vld [vmem:[%s3 + $0x10] sm:$0xff]
        %v1064 = vld [vmem:[%s3 + $0x18] sm:$0xff]
        %v1065 = vld [vmem:[%s3 + $0x20] sm:$0xff]
        %v1066 = vld [vmem:[%s3 + $0x28] sm:$0xff]
        %v1067 = vld [vmem:[%s3 + $0x30] sm:$0xff]
        %v1068 = vld [vmem:[%s3 + $0x38] sm:$0xf]
        %s1069 = scalar_lea.vmem %s3, 64
        %v1070 = vld [vmem:[%s1069] sm:$0xff]
        %v1071 = vld [vmem:[%s1069 + $0x8] sm:$0xff]
        %v1072 = vld [vmem:[%s1069 + $0x10] sm:$0xff]
        %v1073 = vld [vmem:[%s1069 + $0x18] sm:$0xff]
        %v1074 = vld [vmem:[%s1069 + $0x20] sm:$0xff]
        %v1075 = vld [vmem:[%s1069 + $0x28] sm:$0xff]
        %v1076 = vld [vmem:[%s1069 + $0x30] sm:$0xff]
        %v1077 = vld [vmem:[%s1069 + $0x38] sm:$0xf]
        %v1079 = vsel %vm567, %v1029, 0
        %v1082 = vsel %vm567, %v1030, 0
        %v1085 = vsel %vm567, %v1031, 0
        %v1088 = vsel %vm567, %v1032, 0
        %v1091 = vsel %vm567, %v1033, 0
        %v1094 = vsel %vm567, %v1034, 0
        %v1097 = vsel %vm567, %v1035, 0
        %v1100 = vsel %vm567, %v1036, 0
        %vm1102 = vcmask 1043456
        %v1104 = vsel %vm1102, %v1077, 0
        %1106 = vmatprep.subr.mxu0 0.0
        %1107 = vmatpush1.msra.mxu0 %v1070
        %1108 = vmatprep.subr.mxu0 0.0
        %1109 = vmatpush1.msra.mxu0 %v1071
        %1110 = vmatprep.subr.mxu0 0.0
        %1111 = vmatpush1.msra.mxu0 %v1072
        %1112 = vmatprep.subr.mxu0 0.0
        %1113 = vmatpush1.msra.mxu0 %v1073
        %1114 = vmatprep.subr.mxu0 0.0
        %1115 = vmatpush1.msra.mxu0 %v1074
        %1116 = vmatprep.subr.mxu0 0.0
        %1117 = vmatpush1.msra.mxu0 %v1075
        %1118 = vmatprep.subr.mxu0 0.0
        %1119 = vmatpush1.msra.mxu0 %v1076
        %1120 = vmatprep.subr.mxu0 0.0
        %1121 = vmatpush1.msra.mxu0 %v1104
        %1122 = vmatprep.subr.mxu0 0.0
        %1123 = vmatpush1.msra.mxu0 0.0
        %1124 = vmatprep.subr.mxu0 0.0
        %1125 = vmatpush1.msra.mxu0 0.0
        %1126 = vmatprep.subr.mxu0 0.0
        %1127 = vmatpush1.msra.mxu0 0.0
        %1128 = vmatprep.subr.mxu0 0.0
        %1129 = vmatpush1.msra.mxu0 0.0
        %1130 = vmatprep.subr.mxu0 0.0
        %1131 = vmatpush1.msra.mxu0 0.0
        %1132 = vmatprep.subr.mxu0 0.0
        %1133 = vmatpush1.msra.mxu0 0.0
        %1134 = vmatprep.subr.mxu0 0.0
        %1135 = vmatpush1.msra.mxu0 0.0
        %1136 = vmatprep.subr.mxu0 0.0
        %1137 = vmatpush1.msra.mxu0 0.0
        %1138 = vmatprep.subr.mxu0 0.0
        %1139 = vmatpush1.msra.mxu0 0.0
        %1140 = vmatprep.subr.mxu0 0.0
        %1141 = vmatpush1.msra.mxu0 0.0
        %1142 = vmatprep.subr.mxu0 0.0
        %1143 = vmatpush1.msra.mxu0 0.0
        %1144 = vmatprep.subr.mxu0 0.0
        %1145 = vmatpush1.msra.mxu0 0.0
        %1146 = vmatprep.subr.mxu0 0.0
        %1147 = vmatpush1.msra.mxu0 0.0
        %1148 = vmatprep.subr.mxu0 0.0
        %1149 = vmatpush1.msra.mxu0 0.0
        %1150 = vmatprep.subr.mxu0 0.0
        %1151 = vmatpush1.msra.mxu0 0.0
        %1152 = vmatprep.subr.mxu0 0.0
        %1153 = vmatpush1.msra.mxu0 0.0
        %1154 = vmatprep.subr.mxu0 0.0
        %1155 = vmatpush1.msra.mxu0 0.0
        %1156 = vmatprep.subr.mxu0 0.0
        %1157 = vmatpush1.msra.mxu0 0.0
        %1158 = vmatprep.subr.mxu0 0.0
        %1159 = vmatpush1.msra.mxu0 0.0
        %1160 = vmatprep.subr.mxu0 0.0
        %1161 = vmatpush1.msra.mxu0 0.0
        %1162 = vmatprep.subr.mxu0 0.0
        %1163 = vmatpush1.msra.mxu0 0.0
        %1164 = vmatprep.subr.mxu0 0.0
        %1165 = vmatpush1.msra.mxu0 0.0
        %1166 = vmatprep.subr.mxu0 0.0
        %1167 = vmatpush1.msra.mxu0 0.0
        %1168 = vmatprep.subr.mxu0 0.0
        %1169 = vmatpush1.msra.mxu0 0.0
        %1170 = vmatprep.mubr.f32.mxu0 0.0
        %1171 = vmatmul.mubr.f32.gmra.mrb[0].mxu0 %v1079
        %v1172 = vpop.f32.mrb[0].mxu0
        %v1173 = vadd.f32 0.0, %v1172
        %v1174 = vpop.f32.mrb[0].mxu0
        %1175 = vmatprep.mubr.f32.mxu0 0.0
        %1176 = vmatmul.mubr.f32.gmra.mrb[0].mxu0 %v1082
        %v1177 = vpop.f32.mrb[0].mxu0
        %v1178 = vadd.f32 0.0, %v1177
        %v1179 = vpop.f32.mrb[0].mxu0
        %1180 = vmatprep.mubr.f32.mxu0 0.0
        %1181 = vmatmul.mubr.f32.gmra.mrb[0].mxu0 %v1085
        %v1182 = vpop.f32.mrb[0].mxu0
        %v1183 = vadd.f32 0.0, %v1182
        %v1184 = vpop.f32.mrb[0].mxu0
        %1185 = vmatprep.mubr.f32.mxu0 0.0
        %1186 = vmatmul.mubr.f32.gmra.mrb[0].mxu0 %v1088
        %v1187 = vpop.f32.mrb[0].mxu0
        %v1188 = vadd.f32 0.0, %v1187
        %v1189 = vpop.f32.mrb[0].mxu0
        %1190 = vmatprep.mubr.f32.mxu0 0.0
        %1191 = vmatmul.mubr.f32.gmra.mrb[0].mxu0 %v1091
        %v1192 = vpop.f32.mrb[0].mxu0
        %v1193 = vadd.f32 0.0, %v1192
        %v1194 = vpop.f32.mrb[0].mxu0
        %1195 = vmatprep.mubr.f32.mxu0 0.0
        %1196 = vmatmul.mubr.f32.gmra.mrb[0].mxu0 %v1094
        %v1197 = vpop.f32.mrb[0].mxu0
        %v1198 = vadd.f32 0.0, %v1197
        %v1199 = vpop.f32.mrb[0].mxu0
        %1200 = vmatprep.mubr.f32.mxu0 0.0
        %1201 = vmatmul.mubr.f32.gmra.mrb[0].mxu0 %v1097
        %v1202 = vpop.f32.mrb[0].mxu0
        %v1203 = vadd.f32 0.0, %v1202
        %v1204 = vpop.f32.mrb[0].mxu0
        %1205 = vmatprep.mubr.f32.mxu0 0.0
        %1206 = vmatmul.mubr.f32.gmra.mrb[0].mxu0 %v1100
        %v1207 = vpop.f32.mrb[0].mxu0
        %v1208 = vadd.f32 0.0, %v1207
        %v1209 = vpop.f32.mrb[0].mxu0
        %1210 = vdwg.mxu0
        %v1212 = vsel %vm567, %v1045, 0
        %v1215 = vsel %vm567, %v1046, 0
        %v1218 = vsel %vm567, %v1047, 0
        %v1221 = vsel %vm567, %v1048, 0
        %v1224 = vsel %vm567, %v1049, 0
        %v1227 = vsel %vm567, %v1050, 0
        %v1230 = vsel %vm567, %v1051, 0
        %v1233 = vsel %vm567, %v1052, 0
        %v1236 = vsel %vm1102, %v1068, 0
        %1238 = vmatprep.subr.mxu0 0.0
        %1239 = vmatpush1.msra.mxu0 %v1061
        %1240 = vmatprep.subr.mxu0 0.0
        %1241 = vmatpush1.msra.mxu0 %v1062
        %1242 = vmatprep.subr.mxu0 0.0
        %1243 = vmatpush1.msra.mxu0 %v1063
        %1244 = vmatprep.subr.mxu0 0.0
        %1245 = vmatpush1.msra.mxu0 %v1064
        %1246 = vmatprep.subr.mxu0 0.0
        %1247 = vmatpush1.msra.mxu0 %v1065
        %1248 = vmatprep.subr.mxu0 0.0
        %1249 = vmatpush1.msra.mxu0 %v1066
        %1250 = vmatprep.subr.mxu0 0.0
        %1251 = vmatpush1.msra.mxu0 %v1067
        %1252 = vmatprep.subr.mxu0 0.0
        %1253 = vmatpush1.msra.mxu0 %v1236
        %1254 = vmatprep.subr.mxu0 0.0
        %1255 = vmatpush1.msra.mxu0 0.0
        %1256 = vmatprep.subr.mxu0 0.0
        %1257 = vmatpush1.msra.mxu0 0.0
        %1258 = vmatprep.subr.mxu0 0.0
        %1259 = vmatpush1.msra.mxu0 0.0
        %1260 = vmatprep.subr.mxu0 0.0
        %1261 = vmatpush1.msra.mxu0 0.0
        %1262 = vmatprep.subr.mxu0 0.0
        %1263 = vmatpush1.msra.mxu0 0.0
        %1264 = vmatprep.subr.mxu0 0.0
        %1265 = vmatpush1.msra.mxu0 0.0
        %1266 = vmatprep.subr.mxu0 0.0
        %1267 = vmatpush1.msra.mxu0 0.0
        %1268 = vmatprep.subr.mxu0 0.0
        %1269 = vmatpush1.msra.mxu0 0.0
        %1270 = vmatprep.subr.mxu0 0.0
        %1271 = vmatpush1.msra.mxu0 0.0
        %1272 = vmatprep.subr.mxu0 0.0
        %1273 = vmatpush1.msra.mxu0 0.0
        %1274 = vmatprep.subr.mxu0 0.0
        %1275 = vmatpush1.msra.mxu0 0.0
        %1276 = vmatprep.subr.mxu0 0.0
        %1277 = vmatpush1.msra.mxu0 0.0
        %1278 = vmatprep.subr.mxu0 0.0
        %1279 = vmatpush1.msra.mxu0 0.0
        %1280 = vmatprep.subr.mxu0 0.0
        %1281 = vmatpush1.msra.mxu0 0.0
        %1282 = vmatprep.subr.mxu0 0.0
        %1283 = vmatpush1.msra.mxu0 0.0
        %1284 = vmatprep.subr.mxu0 0.0
        %1285 = vmatpush1.msra.mxu0 0.0
        %1286 = vmatprep.subr.mxu0 0.0
        %1287 = vmatpush1.msra.mxu0 0.0
        %1288 = vmatprep.subr.mxu0 0.0
        %1289 = vmatpush1.msra.mxu0 0.0
        %1290 = vmatprep.subr.mxu0 0.0
        %1291 = vmatpush1.msra.mxu0 0.0
        %1292 = vmatprep.subr.mxu0 0.0
        %1293 = vmatpush1.msra.mxu0 0.0
        %1294 = vmatprep.subr.mxu0 0.0
        %1295 = vmatpush1.msra.mxu0 0.0
        %1296 = vmatprep.subr.mxu0 0.0
        %1297 = vmatpush1.msra.mxu0 0.0
        %1298 = vmatprep.subr.mxu0 0.0
        %1299 = vmatpush1.msra.mxu0 0.0
        %1300 = vmatprep.subr.mxu0 0.0
        %1301 = vmatpush1.msra.mxu0 0.0
        %1302 = vmatprep.mubr.f32.mxu0 0.0
        %1303 = vmatmul.mubr.f32.gmra.mrb[0].mxu0 %v1212
        %v1304 = vpop.f32.mrb[0].mxu0
        %v1305 = vadd.f32 %v1173, %v1304
        %v1306 = vpop.f32.mrb[0].mxu0
        %1307 = vmatprep.mubr.f32.mxu0 0.0
        %1308 = vmatmul.mubr.f32.gmra.mrb[0].mxu0 %v1215
        %v1309 = vpop.f32.mrb[0].mxu0
        %v1310 = vadd.f32 %v1178, %v1309
        %v1311 = vpop.f32.mrb[0].mxu0
        %1312 = vmatprep.mubr.f32.mxu0 0.0
        %1313 = vmatmul.mubr.f32.gmra.mrb[0].mxu0 %v1218
        %v1314 = vpop.f32.mrb[0].mxu0
        %v1315 = vadd.f32 %v1183, %v1314
        %v1316 = vpop.f32.mrb[0].mxu0
        %1317 = vmatprep.mubr.f32.mxu0 0.0
        %1318 = vmatmul.mubr.f32.gmra.mrb[0].mxu0 %v1221
        %v1319 = vpop.f32.mrb[0].mxu0
        %v1320 = vadd.f32 %v1188, %v1319
        %v1321 = vpop.f32.mrb[0].mxu0
        %1322 = vmatprep.mubr.f32.mxu0 0.0
        %1323 = vmatmul.mubr.f32.gmra.mrb[0].mxu0 %v1224
        %v1324 = vpop.f32.mrb[0].mxu0
        %v1325 = vadd.f32 %v1193, %v1324
        %v1326 = vpop.f32.mrb[0].mxu0
        %1327 = vmatprep.mubr.f32.mxu0 0.0
        %1328 = vmatmul.mubr.f32.gmra.mrb[0].mxu0 %v1227
        %v1329 = vpop.f32.mrb[0].mxu0
        %v1330 = vadd.f32 %v1198, %v1329
        %v1331 = vpop.f32.mrb[0].mxu0
        %1332 = vmatprep.mubr.f32.mxu0 0.0
        %1333 = vmatmul.mubr.f32.gmra.mrb[0].mxu0 %v1230
        %v1334 = vpop.f32.mrb[0].mxu0
        %v1335 = vadd.f32 %v1203, %v1334
        %v1336 = vpop.f32.mrb[0].mxu0
        %1337 = vmatprep.mubr.f32.mxu0 0.0
        %1338 = vmatmul.mubr.f32.gmra.mrb[0].mxu0 %v1233
        %v1339 = vpop.f32.mrb[0].mxu0
        %v1340 = vadd.f32 %v1208, %v1339
        %v1341 = vpop.f32.mrb[0].mxu0
        %1342 = vdwg.mxu0
        %s1343 = scalar_lea.vmem %s3, 128
        %v1344 = vld [vmem:[%s1343] sm:$0xff]
        %v1345 = vld [vmem:[%s1343 + $0x8] sm:$0xff]
        %v1346 = vld [vmem:[%s1343 + $0x10] sm:$0xff]
        %v1347 = vld [vmem:[%s1343 + $0x18] sm:$0xff]
        %v1348 = vld [vmem:[%s1343 + $0x20] sm:$0xff]
        %v1349 = vld [vmem:[%s1343 + $0x28] sm:$0xff]
        %v1350 = vld [vmem:[%s1343 + $0x30] sm:$0xff]
        %v1351 = vld [vmem:[%s1343 + $0x38] sm:$0xf]
        %v1353 = vsel %vm567, %v1053, 0
        %v1356 = vsel %vm567, %v1054, 0
        %v1359 = vsel %vm567, %v1055, 0
        %v1362 = vsel %vm567, %v1056, 0
        %v1365 = vsel %vm567, %v1057, 0
        %v1368 = vsel %vm567, %v1058, 0
        %v1371 = vsel %vm567, %v1059, 0
        %v1374 = vsel %vm567, %v1060, 0
        %v1377 = vsel %vm1102, %v1351, 0
        %1379 = vmatprep.subr.mxu0 0.0
        %1380 = vmatpush1.msra.mxu0 %v1344
        %1381 = vmatprep.subr.mxu0 0.0
        %1382 = vmatpush1.msra.mxu0 %v1345
        %1383 = vmatprep.subr.mxu0 0.0
        %1384 = vmatpush1.msra.mxu0 %v1346
        %1385 = vmatprep.subr.mxu0 0.0
        %1386 = vmatpush1.msra.mxu0 %v1347
        %1387 = vmatprep.subr.mxu0 0.0
        %1388 = vmatpush1.msra.mxu0 %v1348
        %1389 = vmatprep.subr.mxu0 0.0
        %1390 = vmatpush1.msra.mxu0 %v1349
        %1391 = vmatprep.subr.mxu0 0.0
        %1392 = vmatpush1.msra.mxu0 %v1350
        %1393 = vmatprep.subr.mxu0 0.0
        %1394 = vmatpush1.msra.mxu0 %v1377
        %1395 = vmatprep.subr.mxu0 0.0
        %1396 = vmatpush1.msra.mxu0 0.0
        %1397 = vmatprep.subr.mxu0 0.0
        %1398 = vmatpush1.msra.mxu0 0.0
        %1399 = vmatprep.subr.mxu0 0.0
        %1400 = vmatpush1.msra.mxu0 0.0
        %1401 = vmatprep.subr.mxu0 0.0
        %1402 = vmatpush1.msra.mxu0 0.0
        %1403 = vmatprep.subr.mxu0 0.0
        %1404 = vmatpush1.msra.mxu0 0.0
        %1405 = vmatprep.subr.mxu0 0.0
        %1406 = vmatpush1.msra.mxu0 0.0
        %1407 = vmatprep.subr.mxu0 0.0
        %1408 = vmatpush1.msra.mxu0 0.0
        %1409 = vmatprep.subr.mxu0 0.0
        %1410 = vmatpush1.msra.mxu0 0.0
        %1411 = vmatprep.subr.mxu0 0.0
        %1412 = vmatpush1.msra.mxu0 0.0
        %1413 = vmatprep.subr.mxu0 0.0
        %1414 = vmatpush1.msra.mxu0 0.0
        %1415 = vmatprep.subr.mxu0 0.0
        %1416 = vmatpush1.msra.mxu0 0.0
        %1417 = vmatprep.subr.mxu0 0.0
        %1418 = vmatpush1.msra.mxu0 0.0
        %1419 = vmatprep.subr.mxu0 0.0
        %1420 = vmatpush1.msra.mxu0 0.0
        %1421 = vmatprep.subr.mxu0 0.0
        %1422 = vmatpush1.msra.mxu0 0.0
        %1423 = vmatprep.subr.mxu0 0.0
        %1424 = vmatpush1.msra.mxu0 0.0
        %1425 = vmatprep.subr.mxu0 0.0
        %1426 = vmatpush1.msra.mxu0 0.0
        %1427 = vmatprep.subr.mxu0 0.0
        %1428 = vmatpush1.msra.mxu0 0.0
        %1429 = vmatprep.subr.mxu0 0.0
        %1430 = vmatpush1.msra.mxu0 0.0
        %1431 = vmatprep.subr.mxu0 0.0
        %1432 = vmatpush1.msra.mxu0 0.0
        %1433 = vmatprep.subr.mxu0 0.0
        %1434 = vmatpush1.msra.mxu0 0.0
        %1435 = vmatprep.subr.mxu0 0.0
        %1436 = vmatpush1.msra.mxu0 0.0
        %1437 = vmatprep.subr.mxu0 0.0
        %1438 = vmatpush1.msra.mxu0 0.0
        %1439 = vmatprep.subr.mxu0 0.0
        %1440 = vmatpush1.msra.mxu0 0.0
        %1441 = vmatprep.subr.mxu0 0.0
        %1442 = vmatpush1.msra.mxu0 0.0
        %1443 = vmatprep.mubr.f32.mxu0 0.0
        %1444 = vmatmul.mubr.f32.gmra.mrb[0].mxu0 %v1353
        %v1445 = vpop.f32.mrb[0].mxu0
        %v1446 = vadd.f32 0.0, %v1445
        %v1447 = vpop.f32.mrb[0].mxu0
        %1448 = vmatprep.mubr.f32.mxu0 0.0
        %1449 = vmatmul.mubr.f32.gmra.mrb[0].mxu0 %v1356
        %v1450 = vpop.f32.mrb[0].mxu0
        %v1451 = vadd.f32 0.0, %v1450
        %v1452 = vpop.f32.mrb[0].mxu0
        %1453 = vmatprep.mubr.f32.mxu0 0.0
        %1454 = vmatmul.mubr.f32.gmra.mrb[0].mxu0 %v1359
        %v1455 = vpop.f32.mrb[0].mxu0
        %v1456 = vadd.f32 0.0, %v1455
        %v1457 = vpop.f32.mrb[0].mxu0
        %1458 = vmatprep.mubr.f32.mxu0 0.0
        %1459 = vmatmul.mubr.f32.gmra.mrb[0].mxu0 %v1362
        %v1460 = vpop.f32.mrb[0].mxu0
        %v1461 = vadd.f32 0.0, %v1460
        %v1462 = vpop.f32.mrb[0].mxu0
        %1463 = vmatprep.mubr.f32.mxu0 0.0
        %1464 = vmatmul.mubr.f32.gmra.mrb[0].mxu0 %v1365
        %v1465 = vpop.f32.mrb[0].mxu0
        %v1466 = vadd.f32 0.0, %v1465
        %v1467 = vpop.f32.mrb[0].mxu0
        %1468 = vmatprep.mubr.f32.mxu0 0.0
        %1469 = vmatmul.mubr.f32.gmra.mrb[0].mxu0 %v1368
        %v1470 = vpop.f32.mrb[0].mxu0
        %v1471 = vadd.f32 0.0, %v1470
        %v1472 = vpop.f32.mrb[0].mxu0
        %1473 = vmatprep.mubr.f32.mxu0 0.0
        %1474 = vmatmul.mubr.f32.gmra.mrb[0].mxu0 %v1371
        %v1475 = vpop.f32.mrb[0].mxu0
        %v1476 = vadd.f32 0.0, %v1475
        %v1477 = vpop.f32.mrb[0].mxu0
        %1478 = vmatprep.mubr.f32.mxu0 0.0
        %1479 = vmatmul.mubr.f32.gmra.mrb[0].mxu0 %v1374
        %v1480 = vpop.f32.mrb[0].mxu0
        %v1481 = vadd.f32 0.0, %v1480
        %v1482 = vpop.f32.mrb[0].mxu0
        %1483 = vdwg.mxu0
        %v1484 = vadd.f32 %v1305, %v1446
        %v1485 = vadd.f32 %v1310, %v1451
        %v1486 = vadd.f32 %v1315, %v1456
        %v1487 = vadd.f32 %v1320, %v1461
        %v1488 = vadd.f32 %v1325, %v1466
        %v1489 = vadd.f32 %v1330, %v1471
        %v1490 = vadd.f32 %v1335, %v1476
        %v1491 = vadd.f32 %v1340, %v1481
        %v1492 = vld [vmem:[%s4] sm:$0x1]
        %v1494 = vlaneseq
        %v1495 = vshrl.u32 %v1494, 7
        %v1496 = vsub.s32 0, %v1495
        %v1497 = vrot.slane %v1492, %v1496
        %v1499 = vadd.f32 %v1484, %v1497
        %v1500 = vadd.f32 %v1485, %v1497
        %v1501 = vadd.f32 %v1486, %v1497
        %v1502 = vadd.f32 %v1487, %v1497
        %v1503 = vadd.f32 %v1488, %v1497
        %v1504 = vadd.f32 %v1489, %v1497
        %v1505 = vadd.f32 %v1490, %v1497
        %v1506 = vadd.f32 %v1491, %v1497
        %v1507 = vmax.f32 %v1499, 0.0
        %v1508 = vmax.f32 %v1500, 0.0
        %v1509 = vmax.f32 %v1501, 0.0
        %v1510 = vmax.f32 %v1502, 0.0
        %v1511 = vmax.f32 %v1503, 0.0
        %v1512 = vmax.f32 %v1504, 0.0
        %v1513 = vmax.f32 %v1505, 0.0
        %v1514 = vmax.f32 %v1506, 0.0
        %1515 = vst.msk [vmem:[#allocation2 + $0x1] sm:$0xff] %vm567, %v1507
        %1516 = vst.msk [vmem:[#allocation2 + $0x9] sm:$0xff] %vm567, %v1508
        %1517 = vst.msk [vmem:[#allocation2 + $0x19] sm:$0xff] %vm567, %v1509
        %1518 = vst.msk [vmem:[#allocation2 + $0x21] sm:$0xff] %vm567, %v1510
        %1519 = vst.msk [vmem:[#allocation2 + $0x31] sm:$0xff] %vm567, %v1511
        %1520 = vst.msk [vmem:[#allocation2 + $0x39] sm:$0xff] %vm567, %v1512
        %1521 = vst.msk [vmem:[#allocation2 + $0x49] sm:$0xff] %vm567, %v1513
        %1522 = vst.msk [vmem:[#allocation2 + $0x51] sm:$0xff] %vm567, %v1514
        %v1523 = vld [vmem:[#allocation2] sm:$0xff]
        %v1524 = vld [vmem:[#allocation2 + $0x8] sm:$0xff]
        %v1525 = vld [vmem:[#allocation2 + $0x18] sm:$0xff]
        %v1526 = vld [vmem:[#allocation2 + $0x20] sm:$0xff]
        %v1527 = vld [vmem:[#allocation2 + $0x30] sm:$0xff]
        %v1528 = vld [vmem:[#allocation2 + $0x38] sm:$0xff]
        %v1529 = vld [vmem:[#allocation2 + $0x48] sm:$0xff]
        %v1530 = vld [vmem:[#allocation2 + $0x50] sm:$0xff]
        %v1531 = vld [vmem:[#allocation2 + $0x2] sm:$0xff]
        %v1532 = vld [vmem:[#allocation2 + $0xa] sm:$0xff]
        %v1533 = vld [vmem:[#allocation2 + $0x1a] sm:$0xff]
        %v1534 = vld [vmem:[#allocation2 + $0x22] sm:$0xff]
        %v1535 = vld [vmem:[#allocation2 + $0x32] sm:$0xff]
        %v1536 = vld [vmem:[#allocation2 + $0x3a] sm:$0xff]
        %v1537 = vld [vmem:[#allocation2 + $0x4a] sm:$0xff]
        %v1538 = vld [vmem:[#allocation2 + $0x52] sm:$0xff]
        %v1539 = vld [vmem:[%s3] sm:$0xff]
        %v1540 = vld [vmem:[%s3 + $0x8] sm:$0xff]
        %v1541 = vld [vmem:[%s3 + $0x10] sm:$0xff]
        %v1542 = vld [vmem:[%s3 + $0x18] sm:$0xff]
        %v1543 = vld [vmem:[%s3 + $0x20] sm:$0xff]
        %v1544 = vld [vmem:[%s3 + $0x28] sm:$0xff]
        %v1545 = vld [vmem:[%s3 + $0x30] sm:$0xff]
        %v1546 = vld [vmem:[%s3 + $0x38] sm:$0xf]
        %v1547 = vld [vmem:[%s1069] sm:$0xff]
        %v1548 = vld [vmem:[%s1069 + $0x8] sm:$0xff]
        %v1549 = vld [vmem:[%s1069 + $0x10] sm:$0xff]
        %v1550 = vld [vmem:[%s1069 + $0x18] sm:$0xff]
        %v1551 = vld [vmem:[%s1069 + $0x20] sm:$0xff]
        %v1552 = vld [vmem:[%s1069 + $0x28] sm:$0xff]
        %v1553 = vld [vmem:[%s1069 + $0x30] sm:$0xff]
        %v1554 = vld [vmem:[%s1069 + $0x38] sm:$0xf]
        %v1556 = vsel %vm567, %v1507, 0
        %v1559 = vsel %vm567, %v1508, 0
        %v1562 = vsel %vm567, %v1509, 0
        %v1565 = vsel %vm567, %v1510, 0
        %v1568 = vsel %vm567, %v1511, 0
        %v1571 = vsel %vm567, %v1512, 0
        %v1574 = vsel %vm567, %v1513, 0
        %v1577 = vsel %vm567, %v1514, 0
        %v1580 = vsel %vm1102, %v1554, 0
        %1582 = vmatprep.subr.mxu0 0.0
        %1583 = vmatpush1.msra.mxu0 %v1547
        %1584 = vmatprep.subr.mxu0 0.0
        %1585 = vmatpush1.msra.mxu0 %v1548
        %1586 = vmatprep.subr.mxu0 0.0
        %1587 = vmatpush1.msra.mxu0 %v1549
        %1588 = vmatprep.subr.mxu0 0.0
        %1589 = vmatpush1.msra.mxu0 %v1550
        %1590 = vmatprep.subr.mxu0 0.0
        %1591 = vmatpush1.msra.mxu0 %v1551
        %1592 = vmatprep.subr.mxu0 0.0
        %1593 = vmatpush1.msra.mxu0 %v1552
        %1594 = vmatprep.subr.mxu0 0.0
        %1595 = vmatpush1.msra.mxu0 %v1553
        %1596 = vmatprep.subr.mxu0 0.0
        %1597 = vmatpush1.msra.mxu0 %v1580
        %1598 = vmatprep.subr.mxu0 0.0
        %1599 = vmatpush1.msra.mxu0 0.0
        %1600 = vmatprep.subr.mxu0 0.0
        %1601 = vmatpush1.msra.mxu0 0.0
        %1602 = vmatprep.subr.mxu0 0.0
        %1603 = vmatpush1.msra.mxu0 0.0
        %1604 = vmatprep.subr.mxu0 0.0
        %1605 = vmatpush1.msra.mxu0 0.0
        %1606 = vmatprep.subr.mxu0 0.0
        %1607 = vmatpush1.msra.mxu0 0.0
        %1608 = vmatprep.subr.mxu0 0.0
        %1609 = vmatpush1.msra.mxu0 0.0
        %1610 = vmatprep.subr.mxu0 0.0
        %1611 = vmatpush1.msra.mxu0 0.0
        %1612 = vmatprep.subr.mxu0 0.0
        %1613 = vmatpush1.msra.mxu0 0.0
        %1614 = vmatprep.subr.mxu0 0.0
        %1615 = vmatpush1.msra.mxu0 0.0
        %1616 = vmatprep.subr.mxu0 0.0
        %1617 = vmatpush1.msra.mxu0 0.0
        %1618 = vmatprep.subr.mxu0 0.0
        %1619 = vmatpush1.msra.mxu0 0.0
        %1620 = vmatprep.subr.mxu0 0.0
        %1621 = vmatpush1.msra.mxu0 0.0
        %1622 = vmatprep.subr.mxu0 0.0
        %1623 = vmatpush1.msra.mxu0 0.0
        %1624 = vmatprep.subr.mxu0 0.0
        %1625 = vmatpush1.msra.mxu0 0.0
        %1626 = vmatprep.subr.mxu0 0.0
        %1627 = vmatpush1.msra.mxu0 0.0
        %1628 = vmatprep.subr.mxu0 0.0
        %1629 = vmatpush1.msra.mxu0 0.0
        %1630 = vmatprep.subr.mxu0 0.0
        %1631 = vmatpush1.msra.mxu0 0.0
        %1632 = vmatprep.subr.mxu0 0.0
        %1633 = vmatpush1.msra.mxu0 0.0
        %1634 = vmatprep.subr.mxu0 0.0
        %1635 = vmatpush1.msra.mxu0 0.0
        %1636 = vmatprep.subr.mxu0 0.0
        %1637 = vmatpush1.msra.mxu0 0.0
        %1638 = vmatprep.subr.mxu0 0.0
        %1639 = vmatpush1.msra.mxu0 0.0
        %1640 = vmatprep.subr.mxu0 0.0
        %1641 = vmatpush1.msra.mxu0 0.0
        %1642 = vmatprep.subr.mxu0 0.0
        %1643 = vmatpush1.msra.mxu0 0.0
        %1644 = vmatprep.subr.mxu0 0.0
        %1645 = vmatpush1.msra.mxu0 0.0
        %1646 = vmatprep.mubr.f32.mxu0 0.0
        %1647 = vmatmul.mubr.f32.gmra.mrb[0].mxu0 %v1556
        %v1648 = vpop.f32.mrb[0].mxu0
        %v1649 = vadd.f32 0.0, %v1648
        %v1650 = vpop.f32.mrb[0].mxu0
        %1651 = vmatprep.mubr.f32.mxu0 0.0
        %1652 = vmatmul.mubr.f32.gmra.mrb[0].mxu0 %v1559
        %v1653 = vpop.f32.mrb[0].mxu0
        %v1654 = vadd.f32 0.0, %v1653
        %v1655 = vpop.f32.mrb[0].mxu0
        %1656 = vmatprep.mubr.f32.mxu0 0.0
        %1657 = vmatmul.mubr.f32.gmra.mrb[0].mxu0 %v1562
        %v1658 = vpop.f32.mrb[0].mxu0
        %v1659 = vadd.f32 0.0, %v1658
        %v1660 = vpop.f32.mrb[0].mxu0
        %1661 = vmatprep.mubr.f32.mxu0 0.0
        %1662 = vmatmul.mubr.f32.gmra.mrb[0].mxu0 %v1565
        %v1663 = vpop.f32.mrb[0].mxu0
        %v1664 = vadd.f32 0.0, %v1663
        %v1665 = vpop.f32.mrb[0].mxu0
        %1666 = vmatprep.mubr.f32.mxu0 0.0
        %1667 = vmatmul.mubr.f32.gmra.mrb[0].mxu0 %v1568
        %v1668 = vpop.f32.mrb[0].mxu0
        %v1669 = vadd.f32 0.0, %v1668
        %v1670 = vpop.f32.mrb[0].mxu0
        %1671 = vmatprep.mubr.f32.mxu0 0.0
        %1672 = vmatmul.mubr.f32.gmra.mrb[0].mxu0 %v1571
        %v1673 = vpop.f32.mrb[0].mxu0
        %v1674 = vadd.f32 0.0, %v1673
        %v1675 = vpop.f32.mrb[0].mxu0
        %1676 = vmatprep.mubr.f32.mxu0 0.0
        %1677 = vmatmul.mubr.f32.gmra.mrb[0].mxu0 %v1574
        %v1678 = vpop.f32.mrb[0].mxu0
        %v1679 = vadd.f32 0.0, %v1678
        %v1680 = vpop.f32.mrb[0].mxu0
        %1681 = vmatprep.mubr.f32.mxu0 0.0
        %1682 = vmatmul.mubr.f32.gmra.mrb[0].mxu0 %v1577
        %v1683 = vpop.f32.mrb[0].mxu0
        %v1684 = vadd.f32 0.0, %v1683
        %v1685 = vpop.f32.mrb[0].mxu0
        %1686 = vdwg.mxu0
        %v1688 = vsel %vm567, %v1523, 0
        %v1691 = vsel %vm567, %v1524, 0
        %v1694 = vsel %vm567, %v1525, 0
        %v1697 = vsel %vm567, %v1526, 0
        %v1700 = vsel %vm567, %v1527, 0
        %v1703 = vsel %vm567, %v1528, 0
        %v1706 = vsel %vm567, %v1529, 0
        %v1709 = vsel %vm567, %v1530, 0
        %v1712 = vsel %vm1102, %v1546, 0
        %1714 = vmatprep.subr.mxu0 0.0
        %1715 = vmatpush1.msra.mxu0 %v1539
        %1716 = vmatprep.subr.mxu0 0.0
        %1717 = vmatpush1.msra.mxu0 %v1540
        %1718 = vmatprep.subr.mxu0 0.0
        %1719 = vmatpush1.msra.mxu0 %v1541
        %1720 = vmatprep.subr.mxu0 0.0
        %1721 = vmatpush1.msra.mxu0 %v1542
        %1722 = vmatprep.subr.mxu0 0.0
        %1723 = vmatpush1.msra.mxu0 %v1543
        %1724 = vmatprep.subr.mxu0 0.0
        %1725 = vmatpush1.msra.mxu0 %v1544
        %1726 = vmatprep.subr.mxu0 0.0
        %1727 = vmatpush1.msra.mxu0 %v1545
        %1728 = vmatprep.subr.mxu0 0.0
        %1729 = vmatpush1.msra.mxu0 %v1712
        %1730 = vmatprep.subr.mxu0 0.0
        %1731 = vmatpush1.msra.mxu0 0.0
        %1732 = vmatprep.subr.mxu0 0.0
        %1733 = vmatpush1.msra.mxu0 0.0
        %1734 = vmatprep.subr.mxu0 0.0
        %1735 = vmatpush1.msra.mxu0 0.0
        %1736 = vmatprep.subr.mxu0 0.0
        %1737 = vmatpush1.msra.mxu0 0.0
        %1738 = vmatprep.subr.mxu0 0.0
        %1739 = vmatpush1.msra.mxu0 0.0
        %1740 = vmatprep.subr.mxu0 0.0
        %1741 = vmatpush1.msra.mxu0 0.0
        %1742 = vmatprep.subr.mxu0 0.0
        %1743 = vmatpush1.msra.mxu0 0.0
        %1744 = vmatprep.subr.mxu0 0.0
        %1745 = vmatpush1.msra.mxu0 0.0
        %1746 = vmatprep.subr.mxu0 0.0
        %1747 = vmatpush1.msra.mxu0 0.0
        %1748 = vmatprep.subr.mxu0 0.0
        %1749 = vmatpush1.msra.mxu0 0.0
        %1750 = vmatprep.subr.mxu0 0.0
        %1751 = vmatpush1.msra.mxu0 0.0
        %1752 = vmatprep.subr.mxu0 0.0
        %1753 = vmatpush1.msra.mxu0 0.0
        %1754 = vmatprep.subr.mxu0 0.0
        %1755 = vmatpush1.msra.mxu0 0.0
        %1756 = vmatprep.subr.mxu0 0.0
        %1757 = vmatpush1.msra.mxu0 0.0
        %1758 = vmatprep.subr.mxu0 0.0
        %1759 = vmatpush1.msra.mxu0 0.0
        %1760 = vmatprep.subr.mxu0 0.0
        %1761 = vmatpush1.msra.mxu0 0.0
        %1762 = vmatprep.subr.mxu0 0.0
        %1763 = vmatpush1.msra.mxu0 0.0
        %1764 = vmatprep.subr.mxu0 0.0
        %1765 = vmatpush1.msra.mxu0 0.0
        %1766 = vmatprep.subr.mxu0 0.0
        %1767 = vmatpush1.msra.mxu0 0.0
        %1768 = vmatprep.subr.mxu0 0.0
        %1769 = vmatpush1.msra.mxu0 0.0
        %1770 = vmatprep.subr.mxu0 0.0
        %1771 = vmatpush1.msra.mxu0 0.0
        %1772 = vmatprep.subr.mxu0 0.0
        %1773 = vmatpush1.msra.mxu0 0.0
        %1774 = vmatprep.subr.mxu0 0.0
        %1775 = vmatpush1.msra.mxu0 0.0
        %1776 = vmatprep.subr.mxu0 0.0
        %1777 = vmatpush1.msra.mxu0 0.0
        %1778 = vmatprep.mubr.f32.mxu0 0.0
        %1779 = vmatmul.mubr.f32.gmra.mrb[0].mxu0 %v1688
        %v1780 = vpop.f32.mrb[0].mxu0
        %v1781 = vadd.f32 %v1649, %v1780
        %v1782 = vpop.f32.mrb[0].mxu0
        %1783 = vmatprep.mubr.f32.mxu0 0.0
        %1784 = vmatmul.mubr.f32.gmra.mrb[0].mxu0 %v1691
        %v1785 = vpop.f32.mrb[0].mxu0
        %v1786 = vadd.f32 %v1654, %v1785
        %v1787 = vpop.f32.mrb[0].mxu0
        %1788 = vmatprep.mubr.f32.mxu0 0.0
        %1789 = vmatmul.mubr.f32.gmra.mrb[0].mxu0 %v1694
        %v1790 = vpop.f32.mrb[0].mxu0
        %v1791 = vadd.f32 %v1659, %v1790
        %v1792 = vpop.f32.mrb[0].mxu0
        %1793 = vmatprep.mubr.f32.mxu0 0.0
        %1794 = vmatmul.mubr.f32.gmra.mrb[0].mxu0 %v1697
        %v1795 = vpop.f32.mrb[0].mxu0
        %v1796 = vadd.f32 %v1664, %v1795
        %v1797 = vpop.f32.mrb[0].mxu0
        %1798 = vmatprep.mubr.f32.mxu0 0.0
        %1799 = vmatmul.mubr.f32.gmra.mrb[0].mxu0 %v1700
        %v1800 = vpop.f32.mrb[0].mxu0
        %v1801 = vadd.f32 %v1669, %v1800
        %v1802 = vpop.f32.mrb[0].mxu0
        %1803 = vmatprep.mubr.f32.mxu0 0.0
        %1804 = vmatmul.mubr.f32.gmra.mrb[0].mxu0 %v1703
        %v1805 = vpop.f32.mrb[0].mxu0
        %v1806 = vadd.f32 %v1674, %v1805
        %v1807 = vpop.f32.mrb[0].mxu0
        %1808 = vmatprep.mubr.f32.mxu0 0.0
        %1809 = vmatmul.mubr.f32.gmra.mrb[0].mxu0 %v1706
        %v1810 = vpop.f32.mrb[0].mxu0
        %v1811 = vadd.f32 %v1679, %v1810
        %v1812 = vpop.f32.mrb[0].mxu0
        %1813 = vmatprep.mubr.f32.mxu0 0.0
        %1814 = vmatmul.mubr.f32.gmra.mrb[0].mxu0 %v1709
        %v1815 = vpop.f32.mrb[0].mxu0
        %v1816 = vadd.f32 %v1684, %v1815
        %v1817 = vpop.f32.mrb[0].mxu0
        %1818 = vdwg.mxu0
        %v1819 = vld [vmem:[%s1343] sm:$0xff]
        %v1820 = vld [vmem:[%s1343 + $0x8] sm:$0xff]
        %v1821 = vld [vmem:[%s1343 + $0x10] sm:$0xff]
        %v1822 = vld [vmem:[%s1343 + $0x18] sm:$0xff]
        %v1823 = vld [vmem:[%s1343 + $0x20] sm:$0xff]
        %v1824 = vld [vmem:[%s1343 + $0x28] sm:$0xff]
        %v1825 = vld [vmem:[%s1343 + $0x30] sm:$0xff]
        %v1826 = vld [vmem:[%s1343 + $0x38] sm:$0xf]
        %v1828 = vsel %vm567, %v1531, 0
        %v1831 = vsel %vm567, %v1532, 0
        %v1834 = vsel %vm567, %v1533, 0
        %v1837 = vsel %vm567, %v1534, 0
        %v1840 = vsel %vm567, %v1535, 0
        %v1843 = vsel %vm567, %v1536, 0
        %v1846 = vsel %vm567, %v1537, 0
        %v1849 = vsel %vm567, %v1538, 0
        %v1852 = vsel %vm1102, %v1826, 0
        %1854 = vmatprep.subr.mxu0 0.0
        %1855 = vmatpush1.msra.mxu0 %v1819
        %1856 = vmatprep.subr.mxu0 0.0
        %1857 = vmatpush1.msra.mxu0 %v1820
        %1858 = vmatprep.subr.mxu0 0.0
        %1859 = vmatpush1.msra.mxu0 %v1821
        %1860 = vmatprep.subr.mxu0 0.0
        %1861 = vmatpush1.msra.mxu0 %v1822
        %1862 = vmatprep.subr.mxu0 0.0
        %1863 = vmatpush1.msra.mxu0 %v1823
        %1864 = vmatprep.subr.mxu0 0.0
        %1865 = vmatpush1.msra.mxu0 %v1824
        %1866 = vmatprep.subr.mxu0 0.0
        %1867 = vmatpush1.msra.mxu0 %v1825
        %1868 = vmatprep.subr.mxu0 0.0
        %1869 = vmatpush1.msra.mxu0 %v1852
        %1870 = vmatprep.subr.mxu0 0.0
        %1871 = vmatpush1.msra.mxu0 0.0
        %1872 = vmatprep.subr.mxu0 0.0
        %1873 = vmatpush1.msra.mxu0 0.0
        %1874 = vmatprep.subr.mxu0 0.0
        %1875 = vmatpush1.msra.mxu0 0.0
        %1876 = vmatprep.subr.mxu0 0.0
        %1877 = vmatpush1.msra.mxu0 0.0
        %1878 = vmatprep.subr.mxu0 0.0
        %1879 = vmatpush1.msra.mxu0 0.0
        %1880 = vmatprep.subr.mxu0 0.0
        %1881 = vmatpush1.msra.mxu0 0.0
        %1882 = vmatprep.subr.mxu0 0.0
        %1883 = vmatpush1.msra.mxu0 0.0
        %1884 = vmatprep.subr.mxu0 0.0
        %1885 = vmatpush1.msra.mxu0 0.0
        %1886 = vmatprep.subr.mxu0 0.0
        %1887 = vmatpush1.msra.mxu0 0.0
        %1888 = vmatprep.subr.mxu0 0.0
        %1889 = vmatpush1.msra.mxu0 0.0
        %1890 = vmatprep.subr.mxu0 0.0
        %1891 = vmatpush1.msra.mxu0 0.0
        %1892 = vmatprep.subr.mxu0 0.0
        %1893 = vmatpush1.msra.mxu0 0.0
        %1894 = vmatprep.subr.mxu0 0.0
        %1895 = vmatpush1.msra.mxu0 0.0
        %1896 = vmatprep.subr.mxu0 0.0
        %1897 = vmatpush1.msra.mxu0 0.0
        %1898 = vmatprep.subr.mxu0 0.0
        %1899 = vmatpush1.msra.mxu0 0.0
        %1900 = vmatprep.subr.mxu0 0.0
        %1901 = vmatpush1.msra.mxu0 0.0
        %1902 = vmatprep.subr.mxu0 0.0
        %1903 = vmatpush1.msra.mxu0 0.0
        %1904 = vmatprep.subr.mxu0 0.0
        %1905 = vmatpush1.msra.mxu0 0.0
        %1906 = vmatprep.subr.mxu0 0.0
        %1907 = vmatpush1.msra.mxu0 0.0
        %1908 = vmatprep.subr.mxu0 0.0
        %1909 = vmatpush1.msra.mxu0 0.0
        %1910 = vmatprep.subr.mxu0 0.0
        %1911 = vmatpush1.msra.mxu0 0.0
        %1912 = vmatprep.subr.mxu0 0.0
        %1913 = vmatpush1.msra.mxu0 0.0
        %1914 = vmatprep.subr.mxu0 0.0
        %1915 = vmatpush1.msra.mxu0 0.0
        %1916 = vmatprep.subr.mxu0 0.0
        %1917 = vmatpush1.msra.mxu0 0.0
        %1918 = vmatprep.mubr.f32.mxu0 0.0
        %1919 = vmatmul.mubr.f32.gmra.mrb[0].mxu0 %v1828
        %v1920 = vpop.f32.mrb[0].mxu0
        %v1921 = vadd.f32 0.0, %v1920
        %v1922 = vpop.f32.mrb[0].mxu0
        %1923 = vmatprep.mubr.f32.mxu0 0.0
        %1924 = vmatmul.mubr.f32.gmra.mrb[0].mxu0 %v1831
        %v1925 = vpop.f32.mrb[0].mxu0
        %v1926 = vadd.f32 0.0, %v1925
        %v1927 = vpop.f32.mrb[0].mxu0
        %1928 = vmatprep.mubr.f32.mxu0 0.0
        %1929 = vmatmul.mubr.f32.gmra.mrb[0].mxu0 %v1834
        %v1930 = vpop.f32.mrb[0].mxu0
        %v1931 = vadd.f32 0.0, %v1930
        %v1932 = vpop.f32.mrb[0].mxu0
        %1933 = vmatprep.mubr.f32.mxu0 0.0
        %1934 = vmatmul.mubr.f32.gmra.mrb[0].mxu0 %v1837
        %v1935 = vpop.f32.mrb[0].mxu0
        %v1936 = vadd.f32 0.0, %v1935
        %v1937 = vpop.f32.mrb[0].mxu0
        %1938 = vmatprep.mubr.f32.mxu0 0.0
        %1939 = vmatmul.mubr.f32.gmra.mrb[0].mxu0 %v1840
        %v1940 = vpop.f32.mrb[0].mxu0
        %v1941 = vadd.f32 0.0, %v1940
        %v1942 = vpop.f32.mrb[0].mxu0
        %1943 = vmatprep.mubr.f32.mxu0 0.0
        %1944 = vmatmul.mubr.f32.gmra.mrb[0].mxu0 %v1843
        %v1945 = vpop.f32.mrb[0].mxu0
        %v1946 = vadd.f32 0.0, %v1945
        %v1947 = vpop.f32.mrb[0].mxu0
        %1948 = vmatprep.mubr.f32.mxu0 0.0
        %1949 = vmatmul.mubr.f32.gmra.mrb[0].mxu0 %v1846
        %v1950 = vpop.f32.mrb[0].mxu0
        %v1951 = vadd.f32 0.0, %v1950
        %v1952 = vpop.f32.mrb[0].mxu0
        %1953 = vmatprep.mubr.f32.mxu0 0.0
        %1954 = vmatmul.mubr.f32.gmra.mrb[0].mxu0 %v1849
        %v1955 = vpop.f32.mrb[0].mxu0
        %v1956 = vadd.f32 0.0, %v1955
        %v1957 = vpop.f32.mrb[0].mxu0
        %1958 = vdwg.mxu0
        %v1959 = vadd.f32 %v1781, %v1921
        %v1960 = vadd.f32 %v1786, %v1926
        %v1961 = vadd.f32 %v1791, %v1931
        %v1962 = vadd.f32 %v1796, %v1936
        %v1963 = vadd.f32 %v1801, %v1941
        %v1964 = vadd.f32 %v1806, %v1946
        %v1965 = vadd.f32 %v1811, %v1951
        %v1966 = vadd.f32 %v1816, %v1956
        %v1967 = vld [vmem:[%s4] sm:$0x1]
        %v1969 = vlaneseq
        %v1970 = vshrl.u32 %v1969, 7
        %v1971 = vsub.s32 0, %v1970
        %v1972 = vrot.slane %v1967, %v1971
        %v1974 = vadd.f32 %v1959, %v1972
        %v1975 = vadd.f32 %v1960, %v1972
        %v1976 = vadd.f32 %v1961, %v1972
        %v1977 = vadd.f32 %v1962, %v1972
        %v1978 = vadd.f32 %v1963, %v1972
        %v1979 = vadd.f32 %v1964, %v1972
        %v1980 = vadd.f32 %v1965, %v1972
        %v1981 = vadd.f32 %v1966, %v1972
        %v1982 = vmax.f32 %v1974, 0.0
        %v1983 = vmax.f32 %v1975, 0.0
        %v1984 = vmax.f32 %v1976, 0.0
        %v1985 = vmax.f32 %v1977, 0.0
        %v1986 = vmax.f32 %v1978, 0.0
        %v1987 = vmax.f32 %v1979, 0.0
        %v1988 = vmax.f32 %v1980, 0.0
        %v1989 = vmax.f32 %v1981, 0.0
        %1990 = vst.msk [vmem:[#allocation2 + $0x1] sm:$0xff] %vm567, %v1982
        %1991 = vst.msk [vmem:[#allocation2 + $0x9] sm:$0xff] %vm567, %v1983
        %1992 = vst.msk [vmem:[#allocation2 + $0x19] sm:$0xff] %vm567, %v1984
        %1993 = vst.msk [vmem:[#allocation2 + $0x21] sm:$0xff] %vm567, %v1985
        %1994 = vst.msk [vmem:[#allocation2 + $0x31] sm:$0xff] %vm567, %v1986
        %1995 = vst.msk [vmem:[#allocation2 + $0x39] sm:$0xff] %vm567, %v1987
        %1996 = vst.msk [vmem:[#allocation2 + $0x49] sm:$0xff] %vm567, %v1988
        %1997 = vst.msk [vmem:[#allocation2 + $0x51] sm:$0xff] %vm567, %v1989
        %v1998 = vld [vmem:[#allocation2] sm:$0xff]
        %v1999 = vld [vmem:[#allocation2 + $0x8] sm:$0xff]
        %v2000 = vld [vmem:[#allocation2 + $0x18] sm:$0xff]
        %v2001 = vld [vmem:[#allocation2 + $0x20] sm:$0xff]
        %v2002 = vld [vmem:[#allocation2 + $0x30] sm:$0xff]
        %v2003 = vld [vmem:[#allocation2 + $0x38] sm:$0xff]
        %v2004 = vld [vmem:[#allocation2 + $0x48] sm:$0xff]
        %v2005 = vld [vmem:[#allocation2 + $0x50] sm:$0xff]
        %v2006 = vld [vmem:[#allocation2 + $0x2] sm:$0xff]
        %v2007 = vld [vmem:[#allocation2 + $0xa] sm:$0xff]
        %v2008 = vld [vmem:[#allocation2 + $0x1a] sm:$0xff]
        %v2009 = vld [vmem:[#allocation2 + $0x22] sm:$0xff]
        %v2010 = vld [vmem:[#allocation2 + $0x32] sm:$0xff]
        %v2011 = vld [vmem:[#allocation2 + $0x3a] sm:$0xff]
        %v2012 = vld [vmem:[#allocation2 + $0x4a] sm:$0xff]
        %v2013 = vld [vmem:[#allocation2 + $0x52] sm:$0xff]
        %v2014 = vld [vmem:[%s3] sm:$0xff]
        %v2015 = vld [vmem:[%s3 + $0x8] sm:$0xff]
        %v2016 = vld [vmem:[%s3 + $0x10] sm:$0xff]
        %v2017 = vld [vmem:[%s3 + $0x18] sm:$0xff]
        %v2018 = vld [vmem:[%s3 + $0x20] sm:$0xff]
        %v2019 = vld [vmem:[%s3 + $0x28] sm:$0xff]
        %v2020 = vld [vmem:[%s3 + $0x30] sm:$0xff]
        %v2021 = vld [vmem:[%s3 + $0x38] sm:$0xf]
        %v2022 = vld [vmem:[%s1069] sm:$0xff]
        %v2023 = vld [vmem:[%s1069 + $0x8] sm:$0xff]
        %v2024 = vld [vmem:[%s1069 + $0x10] sm:$0xff]
        %v2025 = vld [vmem:[%s1069 + $0x18] sm:$0xff]
        %v2026 = vld [vmem:[%s1069 + $0x20] sm:$0xff]
        %v2027 = vld [vmem:[%s1069 + $0x28] sm:$0xff]
        %v2028 = vld [vmem:[%s1069 + $0x30] sm:$0xff]
        %v2029 = vld [vmem:[%s1069 + $0x38] sm:$0xf]
        %v2031 = vsel %vm567, %v1982, 0
        %v2034 = vsel %vm567, %v1983, 0
        %v2037 = vsel %vm567, %v1984, 0
        %v2040 = vsel %vm567, %v1985, 0
        %v2043 = vsel %vm567, %v1986, 0
        %v2046 = vsel %vm567, %v1987, 0
        %v2049 = vsel %vm567, %v1988, 0
        %v2052 = vsel %vm567, %v1989, 0
        %v2055 = vsel %vm1102, %v2029, 0
        %2057 = vmatprep.subr.mxu0 0.0
        %2058 = vmatpush1.msra.mxu0 %v2022
        %2059 = vmatprep.subr.mxu0 0.0
        %2060 = vmatpush1.msra.mxu0 %v2023
        %2061 = vmatprep.subr.mxu0 0.0
        %2062 = vmatpush1.msra.mxu0 %v2024
        %2063 = vmatprep.subr.mxu0 0.0
        %2064 = vmatpush1.msra.mxu0 %v2025
        %2065 = vmatprep.subr.mxu0 0.0
        %2066 = vmatpush1.msra.mxu0 %v2026
        %2067 = vmatprep.subr.mxu0 0.0
        %2068 = vmatpush1.msra.mxu0 %v2027
        %2069 = vmatprep.subr.mxu0 0.0
        %2070 = vmatpush1.msra.mxu0 %v2028
        %2071 = vmatprep.subr.mxu0 0.0
        %2072 = vmatpush1.msra.mxu0 %v2055
        %2073 = vmatprep.subr.mxu0 0.0
        %2074 = vmatpush1.msra.mxu0 0.0
        %2075 = vmatprep.subr.mxu0 0.0
        %2076 = vmatpush1.msra.mxu0 0.0
        %2077 = vmatprep.subr.mxu0 0.0
        %2078 = vmatpush1.msra.mxu0 0.0
        %2079 = vmatprep.subr.mxu0 0.0
        %2080 = vmatpush1.msra.mxu0 0.0
        %2081 = vmatprep.subr.mxu0 0.0
        %2082 = vmatpush1.msra.mxu0 0.0
        %2083 = vmatprep.subr.mxu0 0.0
        %2084 = vmatpush1.msra.mxu0 0.0
        %2085 = vmatprep.subr.mxu0 0.0
        %2086 = vmatpush1.msra.mxu0 0.0
        %2087 = vmatprep.subr.mxu0 0.0
        %2088 = vmatpush1.msra.mxu0 0.0
        %2089 = vmatprep.subr.mxu0 0.0
        %2090 = vmatpush1.msra.mxu0 0.0
        %2091 = vmatprep.subr.mxu0 0.0
        %2092 = vmatpush1.msra.mxu0 0.0
        %2093 = vmatprep.subr.mxu0 0.0
        %2094 = vmatpush1.msra.mxu0 0.0
        %2095 = vmatprep.subr.mxu0 0.0
        %2096 = vmatpush1.msra.mxu0 0.0
        %2097 = vmatprep.subr.mxu0 0.0
        %2098 = vmatpush1.msra.mxu0 0.0
        %2099 = vmatprep.subr.mxu0 0.0
        %2100 = vmatpush1.msra.mxu0 0.0
        %2101 = vmatprep.subr.mxu0 0.0
        %2102 = vmatpush1.msra.mxu0 0.0
        %2103 = vmatprep.subr.mxu0 0.0
        %2104 = vmatpush1.msra.mxu0 0.0
        %2105 = vmatprep.subr.mxu0 0.0
        %2106 = vmatpush1.msra.mxu0 0.0
        %2107 = vmatprep.subr.mxu0 0.0
        %2108 = vmatpush1.msra.mxu0 0.0
        %2109 = vmatprep.subr.mxu0 0.0
        %2110 = vmatpush1.msra.mxu0 0.0
        %2111 = vmatprep.subr.mxu0 0.0
        %2112 = vmatpush1.msra.mxu0 0.0
        %2113 = vmatprep.subr.mxu0 0.0
        %2114 = vmatpush1.msra.mxu0 0.0
        %2115 = vmatprep.subr.mxu0 0.0
        %2116 = vmatpush1.msra.mxu0 0.0
        %2117 = vmatprep.subr.mxu0 0.0
        %2118 = vmatpush1.msra.mxu0 0.0
        %2119 = vmatprep.subr.mxu0 0.0
        %2120 = vmatpush1.msra.mxu0 0.0
        %2121 = vmatprep.mubr.f32.mxu0 0.0
        %2122 = vmatmul.mubr.f32.gmra.mrb[0].mxu0 %v2031
        %v2123 = vpop.f32.mrb[0].mxu0
        %v2124 = vadd.f32 0.0, %v2123
        %v2125 = vpop.f32.mrb[0].mxu0
        %2126 = vmatprep.mubr.f32.mxu0 0.0
        %2127 = vmatmul.mubr.f32.gmra.mrb[0].mxu0 %v2034
        %v2128 = vpop.f32.mrb[0].mxu0
        %v2129 = vadd.f32 0.0, %v2128
        %v2130 = vpop.f32.mrb[0].mxu0
        %2131 = vmatprep.mubr.f32.mxu0 0.0
        %2132 = vmatmul.mubr.f32.gmra.mrb[0].mxu0 %v2037
        %v2133 = vpop.f32.mrb[0].mxu0
        %v2134 = vadd.f32 0.0, %v2133
        %v2135 = vpop.f32.mrb[0].mxu0
        %2136 = vmatprep.mubr.f32.mxu0 0.0
        %2137 = vmatmul.mubr.f32.gmra.mrb[0].mxu0 %v2040
        %v2138 = vpop.f32.mrb[0].mxu0
        %v2139 = vadd.f32 0.0, %v2138
        %v2140 = vpop.f32.mrb[0].mxu0
        %2141 = vmatprep.mubr.f32.mxu0 0.0
        %2142 = vmatmul.mubr.f32.gmra.mrb[0].mxu0 %v2043
        %v2143 = vpop.f32.mrb[0].mxu0
        %v2144 = vadd.f32 0.0, %v2143
        %v2145 = vpop.f32.mrb[0].mxu0
        %2146 = vmatprep.mubr.f32.mxu0 0.0
        %2147 = vmatmul.mubr.f32.gmra.mrb[0].mxu0 %v2046
        %v2148 = vpop.f32.mrb[0].mxu0
        %v2149 = vadd.f32 0.0, %v2148
        %v2150 = vpop.f32.mrb[0].mxu0
        %2151 = vmatprep.mubr.f32.mxu0 0.0
        %2152 = vmatmul.mubr.f32.gmra.mrb[0].mxu0 %v2049
        %v2153 = vpop.f32.mrb[0].mxu0
        %v2154 = vadd.f32 0.0, %v2153
        %v2155 = vpop.f32.mrb[0].mxu0
        %2156 = vmatprep.mubr.f32.mxu0 0.0
        %2157 = vmatmul.mubr.f32.gmra.mrb[0].mxu0 %v2052
        %v2158 = vpop.f32.mrb[0].mxu0
        %v2159 = vadd.f32 0.0, %v2158
        %v2160 = vpop.f32.mrb[0].mxu0
        %2161 = vdwg.mxu0
        %v2163 = vsel %vm567, %v1998, 0
        %v2166 = vsel %vm567, %v1999, 0
        %v2169 = vsel %vm567, %v2000, 0
        %v2172 = vsel %vm567, %v2001, 0
        %v2175 = vsel %vm567, %v2002, 0
        %v2178 = vsel %vm567, %v2003, 0
        %v2181 = vsel %vm567, %v2004, 0
        %v2184 = vsel %vm567, %v2005, 0
        %v2187 = vsel %vm1102, %v2021, 0
        %2189 = vmatprep.subr.mxu0 0.0
        %2190 = vmatpush1.msra.mxu0 %v2014
        %2191 = vmatprep.subr.mxu0 0.0
        %2192 = vmatpush1.msra.mxu0 %v2015
        %2193 = vmatprep.subr.mxu0 0.0
        %2194 = vmatpush1.msra.mxu0 %v2016
        %2195 = vmatprep.subr.mxu0 0.0
        %2196 = vmatpush1.msra.mxu0 %v2017
        %2197 = vmatprep.subr.mxu0 0.0
        %2198 = vmatpush1.msra.mxu0 %v2018
        %2199 = vmatprep.subr.mxu0 0.0
        %2200 = vmatpush1.msra.mxu0 %v2019
        %2201 = vmatprep.subr.mxu0 0.0
        %2202 = vmatpush1.msra.mxu0 %v2020
        %2203 = vmatprep.subr.mxu0 0.0
        %2204 = vmatpush1.msra.mxu0 %v2187
        %2205 = vmatprep.subr.mxu0 0.0
        %2206 = vmatpush1.msra.mxu0 0.0
        %2207 = vmatprep.subr.mxu0 0.0
        %2208 = vmatpush1.msra.mxu0 0.0
        %2209 = vmatprep.subr.mxu0 0.0
        %2210 = vmatpush1.msra.mxu0 0.0
        %2211 = vmatprep.subr.mxu0 0.0
        %2212 = vmatpush1.msra.mxu0 0.0
        %2213 = vmatprep.subr.mxu0 0.0
        %2214 = vmatpush1.msra.mxu0 0.0
        %2215 = vmatprep.subr.mxu0 0.0
        %2216 = vmatpush1.msra.mxu0 0.0
        %2217 = vmatprep.subr.mxu0 0.0
        %2218 = vmatpush1.msra.mxu0 0.0
        %2219 = vmatprep.subr.mxu0 0.0
        %2220 = vmatpush1.msra.mxu0 0.0
        %2221 = vmatprep.subr.mxu0 0.0
        %2222 = vmatpush1.msra.mxu0 0.0
        %2223 = vmatprep.subr.mxu0 0.0
        %2224 = vmatpush1.msra.mxu0 0.0
        %2225 = vmatprep.subr.mxu0 0.0
        %2226 = vmatpush1.msra.mxu0 0.0
        %2227 = vmatprep.subr.mxu0 0.0
        %2228 = vmatpush1.msra.mxu0 0.0
        %2229 = vmatprep.subr.mxu0 0.0
        %2230 = vmatpush1.msra.mxu0 0.0
        %2231 = vmatprep.subr.mxu0 0.0
        %2232 = vmatpush1.msra.mxu0 0.0
        %2233 = vmatprep.subr.mxu0 0.0
        %2234 = vmatpush1.msra.mxu0 0.0
        %2235 = vmatprep.subr.mxu0 0.0
        %2236 = vmatpush1.msra.mxu0 0.0
        %2237 = vmatprep.subr.mxu0 0.0
        %2238 = vmatpush1.msra.mxu0 0.0
        %2239 = vmatprep.subr.mxu0 0.0
        %2240 = vmatpush1.msra.mxu0 0.0
        %2241 = vmatprep.subr.mxu0 0.0
        %2242 = vmatpush1.msra.mxu0 0.0
        %2243 = vmatprep.subr.mxu0 0.0
        %2244 = vmatpush1.msra.mxu0 0.0
        %2245 = vmatprep.subr.mxu0 0.0
        %2246 = vmatpush1.msra.mxu0 0.0
        %2247 = vmatprep.subr.mxu0 0.0
        %2248 = vmatpush1.msra.mxu0 0.0
        %2249 = vmatprep.subr.mxu0 0.0
        %2250 = vmatpush1.msra.mxu0 0.0
        %2251 = vmatprep.subr.mxu0 0.0
        %2252 = vmatpush1.msra.mxu0 0.0
        %2253 = vmatprep.mubr.f32.mxu0 0.0
        %2254 = vmatmul.mubr.f32.gmra.mrb[0].mxu0 %v2163
        %v2255 = vpop.f32.mrb[0].mxu0
        %v2256 = vadd.f32 %v2124, %v2255
        %v2257 = vpop.f32.mrb[0].mxu0
        %2258 = vmatprep.mubr.f32.mxu0 0.0
        %2259 = vmatmul.mubr.f32.gmra.mrb[0].mxu0 %v2166
        %v2260 = vpop.f32.mrb[0].mxu0
        %v2261 = vadd.f32 %v2129, %v2260
        %v2262 = vpop.f32.mrb[0].mxu0
        %2263 = vmatprep.mubr.f32.mxu0 0.0
        %2264 = vmatmul.mubr.f32.gmra.mrb[0].mxu0 %v2169
        %v2265 = vpop.f32.mrb[0].mxu0
        %v2266 = vadd.f32 %v2134, %v2265
        %v2267 = vpop.f32.mrb[0].mxu0
        %2268 = vmatprep.mubr.f32.mxu0 0.0
        %2269 = vmatmul.mubr.f32.gmra.mrb[0].mxu0 %v2172
        %v2270 = vpop.f32.mrb[0].mxu0
        %v2271 = vadd.f32 %v2139, %v2270
        %v2272 = vpop.f32.mrb[0].mxu0
        %2273 = vmatprep.mubr.f32.mxu0 0.0
        %2274 = vmatmul.mubr.f32.gmra.mrb[0].mxu0 %v2175
        %v2275 = vpop.f32.mrb[0].mxu0
        %v2276 = vadd.f32 %v2144, %v2275
        %v2277 = vpop.f32.mrb[0].mxu0
        %2278 = vmatprep.mubr.f32.mxu0 0.0
        %2279 = vmatmul.mubr.f32.gmra.mrb[0].mxu0 %v2178
        %v2280 = vpop.f32.mrb[0].mxu0
        %v2281 = vadd.f32 %v2149, %v2280
        %v2282 = vpop.f32.mrb[0].mxu0
        %2283 = vmatprep.mubr.f32.mxu0 0.0
        %2284 = vmatmul.mubr.f32.gmra.mrb[0].mxu0 %v2181
        %v2285 = vpop.f32.mrb[0].mxu0
        %v2286 = vadd.f32 %v2154, %v2285
        %v2287 = vpop.f32.mrb[0].mxu0
        %2288 = vmatprep.mubr.f32.mxu0 0.0
        %2289 = vmatmul.mubr.f32.gmra.mrb[0].mxu0 %v2184
        %v2290 = vpop.f32.mrb[0].mxu0
        %v2291 = vadd.f32 %v2159, %v2290
        %v2292 = vpop.f32.mrb[0].mxu0
        %2293 = vdwg.mxu0
        %v2294 = vld [vmem:[%s1343] sm:$0xff]
        %v2295 = vld [vmem:[%s1343 + $0x8] sm:$0xff]
        %v2296 = vld [vmem:[%s1343 + $0x10] sm:$0xff]
        %v2297 = vld [vmem:[%s1343 + $0x18] sm:$0xff]
        %v2298 = vld [vmem:[%s1343 + $0x20] sm:$0xff]
        %v2299 = vld [vmem:[%s1343 + $0x28] sm:$0xff]
        %v2300 = vld [vmem:[%s1343 + $0x30] sm:$0xff]
        %v2301 = vld [vmem:[%s1343 + $0x38] sm:$0xf]
        %v2303 = vsel %vm567, %v2006, 0
        %v2306 = vsel %vm567, %v2007, 0
        %v2309 = vsel %vm567, %v2008, 0
        %v2312 = vsel %vm567, %v2009, 0
        %v2315 = vsel %vm567, %v2010, 0
        %v2318 = vsel %vm567, %v2011, 0
        %v2321 = vsel %vm567, %v2012, 0
        %v2324 = vsel %vm567, %v2013, 0
        %v2327 = vsel %vm1102, %v2301, 0
        %2329 = vmatprep.subr.mxu0 0.0
        %2330 = vmatpush1.msra.mxu0 %v2294
        %2331 = vmatprep.subr.mxu0 0.0
        %2332 = vmatpush1.msra.mxu0 %v2295
        %2333 = vmatprep.subr.mxu0 0.0
        %2334 = vmatpush1.msra.mxu0 %v2296
        %2335 = vmatprep.subr.mxu0 0.0
        %2336 = vmatpush1.msra.mxu0 %v2297
        %2337 = vmatprep.subr.mxu0 0.0
        %2338 = vmatpush1.msra.mxu0 %v2298
        %2339 = vmatprep.subr.mxu0 0.0
        %2340 = vmatpush1.msra.mxu0 %v2299
        %2341 = vmatprep.subr.mxu0 0.0
        %2342 = vmatpush1.msra.mxu0 %v2300
        %2343 = vmatprep.subr.mxu0 0.0
        %2344 = vmatpush1.msra.mxu0 %v2327
        %2345 = vmatprep.subr.mxu0 0.0
        %2346 = vmatpush1.msra.mxu0 0.0
        %2347 = vmatprep.subr.mxu0 0.0
        %2348 = vmatpush1.msra.mxu0 0.0
        %2349 = vmatprep.subr.mxu0 0.0
        %2350 = vmatpush1.msra.mxu0 0.0
        %2351 = vmatprep.subr.mxu0 0.0
        %2352 = vmatpush1.msra.mxu0 0.0
        %2353 = vmatprep.subr.mxu0 0.0
        %2354 = vmatpush1.msra.mxu0 0.0
        %2355 = vmatprep.subr.mxu0 0.0
        %2356 = vmatpush1.msra.mxu0 0.0
        %2357 = vmatprep.subr.mxu0 0.0
        %2358 = vmatpush1.msra.mxu0 0.0
        %2359 = vmatprep.subr.mxu0 0.0
        %2360 = vmatpush1.msra.mxu0 0.0
        %2361 = vmatprep.subr.mxu0 0.0
        %2362 = vmatpush1.msra.mxu0 0.0
        %2363 = vmatprep.subr.mxu0 0.0
        %2364 = vmatpush1.msra.mxu0 0.0
        %2365 = vmatprep.subr.mxu0 0.0
        %2366 = vmatpush1.msra.mxu0 0.0
        %2367 = vmatprep.subr.mxu0 0.0
        %2368 = vmatpush1.msra.mxu0 0.0
        %2369 = vmatprep.subr.mxu0 0.0
        %2370 = vmatpush1.msra.mxu0 0.0
        %2371 = vmatprep.subr.mxu0 0.0
        %2372 = vmatpush1.msra.mxu0 0.0
        %2373 = vmatprep.subr.mxu0 0.0
        %2374 = vmatpush1.msra.mxu0 0.0
        %2375 = vmatprep.subr.mxu0 0.0
        %2376 = vmatpush1.msra.mxu0 0.0
        %2377 = vmatprep.subr.mxu0 0.0
        %2378 = vmatpush1.msra.mxu0 0.0
        %2379 = vmatprep.subr.mxu0 0.0
        %2380 = vmatpush1.msra.mxu0 0.0
        %2381 = vmatprep.subr.mxu0 0.0
        %2382 = vmatpush1.msra.mxu0 0.0
        %2383 = vmatprep.subr.mxu0 0.0
        %2384 = vmatpush1.msra.mxu0 0.0
        %2385 = vmatprep.subr.mxu0 0.0
        %2386 = vmatpush1.msra.mxu0 0.0
        %2387 = vmatprep.subr.mxu0 0.0
        %2388 = vmatpush1.msra.mxu0 0.0
        %2389 = vmatprep.subr.mxu0 0.0
        %2390 = vmatpush1.msra.mxu0 0.0
        %2391 = vmatprep.subr.mxu0 0.0
        %2392 = vmatpush1.msra.mxu0 0.0
        %2393 = vmatprep.mubr.f32.mxu0 0.0
        %2394 = vmatmul.mubr.f32.gmra.mrb[0].mxu0 %v2303
        %v2395 = vpop.f32.mrb[0].mxu0
        %v2396 = vadd.f32 0.0, %v2395
        %v2397 = vpop.f32.mrb[0].mxu0
        %2398 = vmatprep.mubr.f32.mxu0 0.0
        %2399 = vmatmul.mubr.f32.gmra.mrb[0].mxu0 %v2306
        %v2400 = vpop.f32.mrb[0].mxu0
        %v2401 = vadd.f32 0.0, %v2400
        %v2402 = vpop.f32.mrb[0].mxu0
        %2403 = vmatprep.mubr.f32.mxu0 0.0
        %2404 = vmatmul.mubr.f32.gmra.mrb[0].mxu0 %v2309
        %v2405 = vpop.f32.mrb[0].mxu0
        %v2406 = vadd.f32 0.0, %v2405
        %v2407 = vpop.f32.mrb[0].mxu0
        %2408 = vmatprep.mubr.f32.mxu0 0.0
        %2409 = vmatmul.mubr.f32.gmra.mrb[0].mxu0 %v2312
        %v2410 = vpop.f32.mrb[0].mxu0
        %v2411 = vadd.f32 0.0, %v2410
        %v2412 = vpop.f32.mrb[0].mxu0
        %2413 = vmatprep.mubr.f32.mxu0 0.0
        %2414 = vmatmul.mubr.f32.gmra.mrb[0].mxu0 %v2315
        %v2415 = vpop.f32.mrb[0].mxu0
        %v2416 = vadd.f32 0.0, %v2415
        %v2417 = vpop.f32.mrb[0].mxu0
        %2418 = vmatprep.mubr.f32.mxu0 0.0
        %2419 = vmatmul.mubr.f32.gmra.mrb[0].mxu0 %v2318
        %v2420 = vpop.f32.mrb[0].mxu0
        %v2421 = vadd.f32 0.0, %v2420
        %v2422 = vpop.f32.mrb[0].mxu0
        %2423 = vmatprep.mubr.f32.mxu0 0.0
        %2424 = vmatmul.mubr.f32.gmra.mrb[0].mxu0 %v2321
        %v2425 = vpop.f32.mrb[0].mxu0
        %v2426 = vadd.f32 0.0, %v2425
        %v2427 = vpop.f32.mrb[0].mxu0
        %2428 = vmatprep.mubr.f32.mxu0 0.0
        %2429 = vmatmul.mubr.f32.gmra.mrb[0].mxu0 %v2324
        %v2430 = vpop.f32.mrb[0].mxu0
        %v2431 = vadd.f32 0.0, %v2430
        %v2432 = vpop.f32.mrb[0].mxu0
        %2433 = vdwg.mxu0
        %v2434 = vadd.f32 %v2256, %v2396
        %v2435 = vadd.f32 %v2261, %v2401
        %v2436 = vadd.f32 %v2266, %v2406
        %v2437 = vadd.f32 %v2271, %v2411
        %v2438 = vadd.f32 %v2276, %v2416
        %v2439 = vadd.f32 %v2281, %v2421
        %v2440 = vadd.f32 %v2286, %v2426
        %v2441 = vadd.f32 %v2291, %v2431
        %v2442 = vld [vmem:[%s4] sm:$0x1]
        %v2444 = vlaneseq
        %v2445 = vshrl.u32 %v2444, 7
        %v2446 = vsub.s32 0, %v2445
        %v2447 = vrot.slane %v2442, %v2446
        %v2449 = vadd.f32 %v2434, %v2447
        %v2450 = vadd.f32 %v2435, %v2447
        %v2451 = vadd.f32 %v2436, %v2447
        %v2452 = vadd.f32 %v2437, %v2447
        %v2453 = vadd.f32 %v2438, %v2447
        %v2454 = vadd.f32 %v2439, %v2447
        %v2455 = vadd.f32 %v2440, %v2447
        %v2456 = vadd.f32 %v2441, %v2447
        %v2457 = vmax.f32 %v2449, 0.0
        %v2458 = vmax.f32 %v2450, 0.0
        %v2459 = vmax.f32 %v2451, 0.0
        %v2460 = vmax.f32 %v2452, 0.0
        %v2461 = vmax.f32 %v2453, 0.0
        %v2462 = vmax.f32 %v2454, 0.0
        %v2463 = vmax.f32 %v2455, 0.0
        %v2464 = vmax.f32 %v2456, 0.0
        %2465 = vst.msk [vmem:[#allocation2 + $0x1] sm:$0xff] %vm567, %v2457
        %2466 = vst.msk [vmem:[#allocation2 + $0x9] sm:$0xff] %vm567, %v2458
        %2467 = vst.msk [vmem:[#allocation2 + $0x19] sm:$0xff] %vm567, %v2459
        %2468 = vst.msk [vmem:[#allocation2 + $0x21] sm:$0xff] %vm567, %v2460
        %2469 = vst.msk [vmem:[#allocation2 + $0x31] sm:$0xff] %vm567, %v2461
        %2470 = vst.msk [vmem:[#allocation2 + $0x39] sm:$0xff] %vm567, %v2462
        %2471 = vst.msk [vmem:[#allocation2 + $0x49] sm:$0xff] %vm567, %v2463
        %2472 = vst.msk [vmem:[#allocation2 + $0x51] sm:$0xff] %vm567, %v2464
        %v2473 = vld [vmem:[#allocation2] sm:$0xff]
        %v2474 = vld [vmem:[#allocation2 + $0x8] sm:$0xff]
        %v2475 = vld [vmem:[#allocation2 + $0x18] sm:$0xff]
        %v2476 = vld [vmem:[#allocation2 + $0x20] sm:$0xff]
        %v2477 = vld [vmem:[#allocation2 + $0x30] sm:$0xff]
        %v2478 = vld [vmem:[#allocation2 + $0x38] sm:$0xff]
        %v2479 = vld [vmem:[#allocation2 + $0x48] sm:$0xff]
        %v2480 = vld [vmem:[#allocation2 + $0x50] sm:$0xff]
        %v2481 = vld [vmem:[#allocation2 + $0x2] sm:$0xff]
        %v2482 = vld [vmem:[#allocation2 + $0xa] sm:$0xff]
        %v2483 = vld [vmem:[#allocation2 + $0x1a] sm:$0xff]
        %v2484 = vld [vmem:[#allocation2 + $0x22] sm:$0xff]
        %v2485 = vld [vmem:[#allocation2 + $0x32] sm:$0xff]
        %v2486 = vld [vmem:[#allocation2 + $0x3a] sm:$0xff]
        %v2487 = vld [vmem:[#allocation2 + $0x4a] sm:$0xff]
        %v2488 = vld [vmem:[#allocation2 + $0x52] sm:$0xff]
        %v2489 = vld [vmem:[%s3] sm:$0xff]
        %v2490 = vld [vmem:[%s3 + $0x8] sm:$0xff]
        %v2491 = vld [vmem:[%s3 + $0x10] sm:$0xff]
        %v2492 = vld [vmem:[%s3 + $0x18] sm:$0xff]
        %v2493 = vld [vmem:[%s3 + $0x20] sm:$0xff]
        %v2494 = vld [vmem:[%s3 + $0x28] sm:$0xff]
        %v2495 = vld [vmem:[%s3 + $0x30] sm:$0xff]
        %v2496 = vld [vmem:[%s3 + $0x38] sm:$0xf]
        %v2497 = vld [vmem:[%s1069] sm:$0xff]
        %v2498 = vld [vmem:[%s1069 + $0x8] sm:$0xff]
        %v2499 = vld [vmem:[%s1069 + $0x10] sm:$0xff]
        %v2500 = vld [vmem:[%s1069 + $0x18] sm:$0xff]
        %v2501 = vld [vmem:[%s1069 + $0x20] sm:$0xff]
        %v2502 = vld [vmem:[%s1069 + $0x28] sm:$0xff]
        %v2503 = vld [vmem:[%s1069 + $0x30] sm:$0xff]
        %v2504 = vld [vmem:[%s1069 + $0x38] sm:$0xf]
        %v2506 = vsel %vm567, %v2457, 0
        %v2509 = vsel %vm567, %v2458, 0
        %v2512 = vsel %vm567, %v2459, 0
        %v2515 = vsel %vm567, %v2460, 0
        %v2518 = vsel %vm567, %v2461, 0
        %v2521 = vsel %vm567, %v2462, 0
        %v2524 = vsel %vm567, %v2463, 0
        %v2527 = vsel %vm567, %v2464, 0
        %v2530 = vsel %vm1102, %v2504, 0
        %2532 = vmatprep.subr.mxu0 0.0
        %2533 = vmatpush1.msra.mxu0 %v2497
        %2534 = vmatprep.subr.mxu0 0.0
        %2535 = vmatpush1.msra.mxu0 %v2498
        %2536 = vmatprep.subr.mxu0 0.0
        %2537 = vmatpush1.msra.mxu0 %v2499
        %2538 = vmatprep.subr.mxu0 0.0
        %2539 = vmatpush1.msra.mxu0 %v2500
        %2540 = vmatprep.subr.mxu0 0.0
        %2541 = vmatpush1.msra.mxu0 %v2501
        %2542 = vmatprep.subr.mxu0 0.0
        %2543 = vmatpush1.msra.mxu0 %v2502
        %2544 = vmatprep.subr.mxu0 0.0
        %2545 = vmatpush1.msra.mxu0 %v2503
        %2546 = vmatprep.subr.mxu0 0.0
        %2547 = vmatpush1.msra.mxu0 %v2530
        %2548 = vmatprep.subr.mxu0 0.0
        %2549 = vmatpush1.msra.mxu0 0.0
        %2550 = vmatprep.subr.mxu0 0.0
        %2551 = vmatpush1.msra.mxu0 0.0
        %2552 = vmatprep.subr.mxu0 0.0
        %2553 = vmatpush1.msra.mxu0 0.0
        %2554 = vmatprep.subr.mxu0 0.0
        %2555 = vmatpush1.msra.mxu0 0.0
        %2556 = vmatprep.subr.mxu0 0.0
        %2557 = vmatpush1.msra.mxu0 0.0
        %2558 = vmatprep.subr.mxu0 0.0
        %2559 = vmatpush1.msra.mxu0 0.0
        %2560 = vmatprep.subr.mxu0 0.0
        %2561 = vmatpush1.msra.mxu0 0.0
        %2562 = vmatprep.subr.mxu0 0.0
        %2563 = vmatpush1.msra.mxu0 0.0
        %2564 = vmatprep.subr.mxu0 0.0
        %2565 = vmatpush1.msra.mxu0 0.0
        %2566 = vmatprep.subr.mxu0 0.0
        %2567 = vmatpush1.msra.mxu0 0.0
        %2568 = vmatprep.subr.mxu0 0.0
        %2569 = vmatpush1.msra.mxu0 0.0
        %2570 = vmatprep.subr.mxu0 0.0
        %2571 = vmatpush1.msra.mxu0 0.0
        %2572 = vmatprep.subr.mxu0 0.0
        %2573 = vmatpush1.msra.mxu0 0.0
        %2574 = vmatprep.subr.mxu0 0.0
        %2575 = vmatpush1.msra.mxu0 0.0
        %2576 = vmatprep.subr.mxu0 0.0
        %2577 = vmatpush1.msra.mxu0 0.0
        %2578 = vmatprep.subr.mxu0 0.0
        %2579 = vmatpush1.msra.mxu0 0.0
        %2580 = vmatprep.subr.mxu0 0.0
        %2581 = vmatpush1.msra.mxu0 0.0
        %2582 = vmatprep.subr.mxu0 0.0
        %2583 = vmatpush1.msra.mxu0 0.0
        %2584 = vmatprep.subr.mxu0 0.0
        %2585 = vmatpush1.msra.mxu0 0.0
        %2586 = vmatprep.subr.mxu0 0.0
        %2587 = vmatpush1.msra.mxu0 0.0
        %2588 = vmatprep.subr.mxu0 0.0
        %2589 = vmatpush1.msra.mxu0 0.0
        %2590 = vmatprep.subr.mxu0 0.0
        %2591 = vmatpush1.msra.mxu0 0.0
        %2592 = vmatprep.subr.mxu0 0.0
        %2593 = vmatpush1.msra.mxu0 0.0
        %2594 = vmatprep.subr.mxu0 0.0
        %2595 = vmatpush1.msra.mxu0 0.0
        %2596 = vmatprep.mubr.f32.mxu0 0.0
        %2597 = vmatmul.mubr.f32.gmra.mrb[0].mxu0 %v2506
        %v2598 = vpop.f32.mrb[0].mxu0
        %v2599 = vadd.f32 0.0, %v2598
        %v2600 = vpop.f32.mrb[0].mxu0
        %2601 = vmatprep.mubr.f32.mxu0 0.0
        %2602 = vmatmul.mubr.f32.gmra.mrb[0].mxu0 %v2509
        %v2603 = vpop.f32.mrb[0].mxu0
        %v2604 = vadd.f32 0.0, %v2603
        %v2605 = vpop.f32.mrb[0].mxu0
        %2606 = vmatprep.mubr.f32.mxu0 0.0
        %2607 = vmatmul.mubr.f32.gmra.mrb[0].mxu0 %v2512
        %v2608 = vpop.f32.mrb[0].mxu0
        %v2609 = vadd.f32 0.0, %v2608
        %v2610 = vpop.f32.mrb[0].mxu0
        %2611 = vmatprep.mubr.f32.mxu0 0.0
        %2612 = vmatmul.mubr.f32.gmra.mrb[0].mxu0 %v2515
        %v2613 = vpop.f32.mrb[0].mxu0
        %v2614 = vadd.f32 0.0, %v2613
        %v2615 = vpop.f32.mrb[0].mxu0
        %2616 = vmatprep.mubr.f32.mxu0 0.0
        %2617 = vmatmul.mubr.f32.gmra.mrb[0].mxu0 %v2518
        %v2618 = vpop.f32.mrb[0].mxu0
        %v2619 = vadd.f32 0.0, %v2618
        %v2620 = vpop.f32.mrb[0].mxu0
        %2621 = vmatprep.mubr.f32.mxu0 0.0
        %2622 = vmatmul.mubr.f32.gmra.mrb[0].mxu0 %v2521
        %v2623 = vpop.f32.mrb[0].mxu0
        %v2624 = vadd.f32 0.0, %v2623
        %v2625 = vpop.f32.mrb[0].mxu0
        %2626 = vmatprep.mubr.f32.mxu0 0.0
        %2627 = vmatmul.mubr.f32.gmra.mrb[0].mxu0 %v2524
        %v2628 = vpop.f32.mrb[0].mxu0
        %v2629 = vadd.f32 0.0, %v2628
        %v2630 = vpop.f32.mrb[0].mxu0
        %2631 = vmatprep.mubr.f32.mxu0 0.0
        %2632 = vmatmul.mubr.f32.gmra.mrb[0].mxu0 %v2527
        %v2633 = vpop.f32.mrb[0].mxu0
        %v2634 = vadd.f32 0.0, %v2633
        %v2635 = vpop.f32.mrb[0].mxu0
        %2636 = vdwg.mxu0
        %v2638 = vsel %vm567, %v2473, 0
        %v2641 = vsel %vm567, %v2474, 0
        %v2644 = vsel %vm567, %v2475, 0
        %v2647 = vsel %vm567, %v2476, 0
        %v2650 = vsel %vm567, %v2477, 0
        %v2653 = vsel %vm567, %v2478, 0
        %v2656 = vsel %vm567, %v2479, 0
        %v2659 = vsel %vm567, %v2480, 0
        %v2662 = vsel %vm1102, %v2496, 0
        %2664 = vmatprep.subr.mxu0 0.0
        %2665 = vmatpush1.msra.mxu0 %v2489
        %2666 = vmatprep.subr.mxu0 0.0
        %2667 = vmatpush1.msra.mxu0 %v2490
        %2668 = vmatprep.subr.mxu0 0.0
        %2669 = vmatpush1.msra.mxu0 %v2491
        %2670 = vmatprep.subr.mxu0 0.0
        %2671 = vmatpush1.msra.mxu0 %v2492
        %2672 = vmatprep.subr.mxu0 0.0
        %2673 = vmatpush1.msra.mxu0 %v2493
        %2674 = vmatprep.subr.mxu0 0.0
        %2675 = vmatpush1.msra.mxu0 %v2494
        %2676 = vmatprep.subr.mxu0 0.0
        %2677 = vmatpush1.msra.mxu0 %v2495
        %2678 = vmatprep.subr.mxu0 0.0
        %2679 = vmatpush1.msra.mxu0 %v2662
        %2680 = vmatprep.subr.mxu0 0.0
        %2681 = vmatpush1.msra.mxu0 0.0
        %2682 = vmatprep.subr.mxu0 0.0
        %2683 = vmatpush1.msra.mxu0 0.0
        %2684 = vmatprep.subr.mxu0 0.0
        %2685 = vmatpush1.msra.mxu0 0.0
        %2686 = vmatprep.subr.mxu0 0.0
        %2687 = vmatpush1.msra.mxu0 0.0
        %2688 = vmatprep.subr.mxu0 0.0
        %2689 = vmatpush1.msra.mxu0 0.0
        %2690 = vmatprep.subr.mxu0 0.0
        %2691 = vmatpush1.msra.mxu0 0.0
        %2692 = vmatprep.subr.mxu0 0.0
        %2693 = vmatpush1.msra.mxu0 0.0
        %2694 = vmatprep.subr.mxu0 0.0
        %2695 = vmatpush1.msra.mxu0 0.0
        %2696 = vmatprep.subr.mxu0 0.0
        %2697 = vmatpush1.msra.mxu0 0.0
        %2698 = vmatprep.subr.mxu0 0.0
        %2699 = vmatpush1.msra.mxu0 0.0
        %2700 = vmatprep.subr.mxu0 0.0
        %2701 = vmatpush1.msra.mxu0 0.0
        %2702 = vmatprep.subr.mxu0 0.0
        %2703 = vmatpush1.msra.mxu0 0.0
        %2704 = vmatprep.subr.mxu0 0.0
        %2705 = vmatpush1.msra.mxu0 0.0
        %2706 = vmatprep.subr.mxu0 0.0
        %2707 = vmatpush1.msra.mxu0 0.0
        %2708 = vmatprep.subr.mxu0 0.0
        %2709 = vmatpush1.msra.mxu0 0.0
        %2710 = vmatprep.subr.mxu0 0.0
        %2711 = vmatpush1.msra.mxu0 0.0
        %2712 = vmatprep.subr.mxu0 0.0
        %2713 = vmatpush1.msra.mxu0 0.0
        %2714 = vmatprep.subr.mxu0 0.0
        %2715 = vmatpush1.msra.mxu0 0.0
        %2716 = vmatprep.subr.mxu0 0.0
        %2717 = vmatpush1.msra.mxu0 0.0
        %2718 = vmatprep.subr.mxu0 0.0
        %2719 = vmatpush1.msra.mxu0 0.0
        %2720 = vmatprep.subr.mxu0 0.0
        %2721 = vmatpush1.msra.mxu0 0.0
        %2722 = vmatprep.subr.mxu0 0.0
        %2723 = vmatpush1.msra.mxu0 0.0
        %2724 = vmatprep.subr.mxu0 0.0
        %2725 = vmatpush1.msra.mxu0 0.0
        %2726 = vmatprep.subr.mxu0 0.0
        %2727 = vmatpush1.msra.mxu0 0.0
        %2728 = vmatprep.mubr.f32.mxu0 0.0
        %2729 = vmatmul.mubr.f32.gmra.mrb[0].mxu0 %v2638
        %v2730 = vpop.f32.mrb[0].mxu0
        %v2731 = vadd.f32 %v2599, %v2730
        %v2732 = vpop.f32.mrb[0].mxu0
        %2733 = vmatprep.mubr.f32.mxu0 0.0
        %2734 = vmatmul.mubr.f32.gmra.mrb[0].mxu0 %v2641
        %v2735 = vpop.f32.mrb[0].mxu0
        %v2736 = vadd.f32 %v2604, %v2735
        %v2737 = vpop.f32.mrb[0].mxu0
        %2738 = vmatprep.mubr.f32.mxu0 0.0
        %2739 = vmatmul.mubr.f32.gmra.mrb[0].mxu0 %v2644
        %v2740 = vpop.f32.mrb[0].mxu0
        %v2741 = vadd.f32 %v2609, %v2740
        %v2742 = vpop.f32.mrb[0].mxu0
        %2743 = vmatprep.mubr.f32.mxu0 0.0
        %2744 = vmatmul.mubr.f32.gmra.mrb[0].mxu0 %v2647
        %v2745 = vpop.f32.mrb[0].mxu0
        %v2746 = vadd.f32 %v2614, %v2745
        %v2747 = vpop.f32.mrb[0].mxu0
        %2748 = vmatprep.mubr.f32.mxu0 0.0
        %2749 = vmatmul.mubr.f32.gmra.mrb[0].mxu0 %v2650
        %v2750 = vpop.f32.mrb[0].mxu0
        %v2751 = vadd.f32 %v2619, %v2750
        %v2752 = vpop.f32.mrb[0].mxu0
        %2753 = vmatprep.mubr.f32.mxu0 0.0
        %2754 = vmatmul.mubr.f32.gmra.mrb[0].mxu0 %v2653
        %v2755 = vpop.f32.mrb[0].mxu0
        %v2756 = vadd.f32 %v2624, %v2755
        %v2757 = vpop.f32.mrb[0].mxu0
        %2758 = vmatprep.mubr.f32.mxu0 0.0
        %2759 = vmatmul.mubr.f32.gmra.mrb[0].mxu0 %v2656
        %v2760 = vpop.f32.mrb[0].mxu0
        %v2761 = vadd.f32 %v2629, %v2760
        %v2762 = vpop.f32.mrb[0].mxu0
        %2763 = vmatprep.mubr.f32.mxu0 0.0
        %2764 = vmatmul.mubr.f32.gmra.mrb[0].mxu0 %v2659
        %v2765 = vpop.f32.mrb[0].mxu0
        %v2766 = vadd.f32 %v2634, %v2765
        %v2767 = vpop.f32.mrb[0].mxu0
        %2768 = vdwg.mxu0
        %v2769 = vld [vmem:[%s1343] sm:$0xff]
        %v2770 = vld [vmem:[%s1343 + $0x8] sm:$0xff]
        %v2771 = vld [vmem:[%s1343 + $0x10] sm:$0xff]
        %v2772 = vld [vmem:[%s1343 + $0x18] sm:$0xff]
        %v2773 = vld [vmem:[%s1343 + $0x20] sm:$0xff]
        %v2774 = vld [vmem:[%s1343 + $0x28] sm:$0xff]
        %v2775 = vld [vmem:[%s1343 + $0x30] sm:$0xff]
        %v2776 = vld [vmem:[%s1343 + $0x38] sm:$0xf]
        %v2778 = vsel %vm567, %v2481, 0
        %v2781 = vsel %vm567, %v2482, 0
        %v2784 = vsel %vm567, %v2483, 0
        %v2787 = vsel %vm567, %v2484, 0
        %v2790 = vsel %vm567, %v2485, 0
        %v2793 = vsel %vm567, %v2486, 0
        %v2796 = vsel %vm567, %v2487, 0
        %v2799 = vsel %vm567, %v2488, 0
        %v2802 = vsel %vm1102, %v2776, 0
        %2804 = vmatprep.subr.mxu0 0.0
        %2805 = vmatpush1.msra.mxu0 %v2769
        %2806 = vmatprep.subr.mxu0 0.0
        %2807 = vmatpush1.msra.mxu0 %v2770
        %2808 = vmatprep.subr.mxu0 0.0
        %2809 = vmatpush1.msra.mxu0 %v2771
        %2810 = vmatprep.subr.mxu0 0.0
        %2811 = vmatpush1.msra.mxu0 %v2772
        %2812 = vmatprep.subr.mxu0 0.0
        %2813 = vmatpush1.msra.mxu0 %v2773
        %2814 = vmatprep.subr.mxu0 0.0
        %2815 = vmatpush1.msra.mxu0 %v2774
        %2816 = vmatprep.subr.mxu0 0.0
        %2817 = vmatpush1.msra.mxu0 %v2775
        %2818 = vmatprep.subr.mxu0 0.0
        %2819 = vmatpush1.msra.mxu0 %v2802
        %2820 = vmatprep.subr.mxu0 0.0
        %2821 = vmatpush1.msra.mxu0 0.0
        %2822 = vmatprep.subr.mxu0 0.0
        %2823 = vmatpush1.msra.mxu0 0.0
        %2824 = vmatprep.subr.mxu0 0.0
        %2825 = vmatpush1.msra.mxu0 0.0
        %2826 = vmatprep.subr.mxu0 0.0
        %2827 = vmatpush1.msra.mxu0 0.0
        %2828 = vmatprep.subr.mxu0 0.0
        %2829 = vmatpush1.msra.mxu0 0.0
        %2830 = vmatprep.subr.mxu0 0.0
        %2831 = vmatpush1.msra.mxu0 0.0
        %2832 = vmatprep.subr.mxu0 0.0
        %2833 = vmatpush1.msra.mxu0 0.0
        %2834 = vmatprep.subr.mxu0 0.0
        %2835 = vmatpush1.msra.mxu0 0.0
        %2836 = vmatprep.subr.mxu0 0.0
        %2837 = vmatpush1.msra.mxu0 0.0
        %2838 = vmatprep.subr.mxu0 0.0
        %2839 = vmatpush1.msra.mxu0 0.0
        %2840 = vmatprep.subr.mxu0 0.0
        %2841 = vmatpush1.msra.mxu0 0.0
        %2842 = vmatprep.subr.mxu0 0.0
        %2843 = vmatpush1.msra.mxu0 0.0
        %2844 = vmatprep.subr.mxu0 0.0
        %2845 = vmatpush1.msra.mxu0 0.0
        %2846 = vmatprep.subr.mxu0 0.0
        %2847 = vmatpush1.msra.mxu0 0.0
        %2848 = vmatprep.subr.mxu0 0.0
        %2849 = vmatpush1.msra.mxu0 0.0
        %2850 = vmatprep.subr.mxu0 0.0
        %2851 = vmatpush1.msra.mxu0 0.0
        %2852 = vmatprep.subr.mxu0 0.0
        %2853 = vmatpush1.msra.mxu0 0.0
        %2854 = vmatprep.subr.mxu0 0.0
        %2855 = vmatpush1.msra.mxu0 0.0
        %2856 = vmatprep.subr.mxu0 0.0
        %2857 = vmatpush1.msra.mxu0 0.0
        %2858 = vmatprep.subr.mxu0 0.0
        %2859 = vmatpush1.msra.mxu0 0.0
        %2860 = vmatprep.subr.mxu0 0.0
        %2861 = vmatpush1.msra.mxu0 0.0
        %2862 = vmatprep.subr.mxu0 0.0
        %2863 = vmatpush1.msra.mxu0 0.0
        %2864 = vmatprep.subr.mxu0 0.0
        %2865 = vmatpush1.msra.mxu0 0.0
        %2866 = vmatprep.subr.mxu0 0.0
        %2867 = vmatpush1.msra.mxu0 0.0
        %2868 = vmatprep.mubr.f32.mxu0 0.0
        %2869 = vmatmul.mubr.f32.gmra.mrb[0].mxu0 %v2778
        %v2870 = vpop.f32.mrb[0].mxu0
        %v2871 = vadd.f32 0.0, %v2870
        %v2872 = vpop.f32.mrb[0].mxu0
        %2873 = vmatprep.mubr.f32.mxu0 0.0
        %2874 = vmatmul.mubr.f32.gmra.mrb[0].mxu0 %v2781
        %v2875 = vpop.f32.mrb[0].mxu0
        %v2876 = vadd.f32 0.0, %v2875
        %v2877 = vpop.f32.mrb[0].mxu0
        %2878 = vmatprep.mubr.f32.mxu0 0.0
        %2879 = vmatmul.mubr.f32.gmra.mrb[0].mxu0 %v2784
        %v2880 = vpop.f32.mrb[0].mxu0
        %v2881 = vadd.f32 0.0, %v2880
        %v2882 = vpop.f32.mrb[0].mxu0
        %2883 = vmatprep.mubr.f32.mxu0 0.0
        %2884 = vmatmul.mubr.f32.gmra.mrb[0].mxu0 %v2787
        %v2885 = vpop.f32.mrb[0].mxu0
        %v2886 = vadd.f32 0.0, %v2885
        %v2887 = vpop.f32.mrb[0].mxu0
        %2888 = vmatprep.mubr.f32.mxu0 0.0
        %2889 = vmatmul.mubr.f32.gmra.mrb[0].mxu0 %v2790
        %v2890 = vpop.f32.mrb[0].mxu0
        %v2891 = vadd.f32 0.0, %v2890
        %v2892 = vpop.f32.mrb[0].mxu0
        %2893 = vmatprep.mubr.f32.mxu0 0.0
        %2894 = vmatmul.mubr.f32.gmra.mrb[0].mxu0 %v2793
        %v2895 = vpop.f32.mrb[0].mxu0
        %v2896 = vadd.f32 0.0, %v2895
        %v2897 = vpop.f32.mrb[0].mxu0
        %2898 = vmatprep.mubr.f32.mxu0 0.0
        %2899 = vmatmul.mubr.f32.gmra.mrb[0].mxu0 %v2796
        %v2900 = vpop.f32.mrb[0].mxu0
        %v2901 = vadd.f32 0.0, %v2900
        %v2902 = vpop.f32.mrb[0].mxu0
        %2903 = vmatprep.mubr.f32.mxu0 0.0
        %2904 = vmatmul.mubr.f32.gmra.mrb[0].mxu0 %v2799
        %v2905 = vpop.f32.mrb[0].mxu0
        %v2906 = vadd.f32 0.0, %v2905
        %v2907 = vpop.f32.mrb[0].mxu0
        %2908 = vdwg.mxu0
        %v2909 = vadd.f32 %v2731, %v2871
        %v2910 = vadd.f32 %v2736, %v2876
        %v2911 = vadd.f32 %v2741, %v2881
        %v2912 = vadd.f32 %v2746, %v2886
        %v2913 = vadd.f32 %v2751, %v2891
        %v2914 = vadd.f32 %v2756, %v2896
        %v2915 = vadd.f32 %v2761, %v2901
        %v2916 = vadd.f32 %v2766, %v2906
        %v2917 = vld [vmem:[%s4] sm:$0x1]
        %v2919 = vlaneseq
        %v2920 = vshrl.u32 %v2919, 7
        %v2921 = vsub.s32 0, %v2920
        %v2922 = vrot.slane %v2917, %v2921
        %v2924 = vadd.f32 %v2909, %v2922
        %v2925 = vadd.f32 %v2910, %v2922
        %v2926 = vadd.f32 %v2911, %v2922
        %v2927 = vadd.f32 %v2912, %v2922
        %v2928 = vadd.f32 %v2913, %v2922
        %v2929 = vadd.f32 %v2914, %v2922
        %v2930 = vadd.f32 %v2915, %v2922
        %v2931 = vadd.f32 %v2916, %v2922
        %v2932 = vmax.f32 %v2924, 0.0
        %v2933 = vmax.f32 %v2925, 0.0
        %v2934 = vmax.f32 %v2926, 0.0
        %v2935 = vmax.f32 %v2927, 0.0
        %v2936 = vmax.f32 %v2928, 0.0
        %v2937 = vmax.f32 %v2929, 0.0
        %v2938 = vmax.f32 %v2930, 0.0
        %v2939 = vmax.f32 %v2931, 0.0
        %v2940 = vld [vmem:[%s5] sm:$0xff]
        %v2941 = vld [vmem:[%s5 + $0x8] sm:$0xff]
        %v2942 = vld [vmem:[%s5 + $0x10] sm:$0xff]
        %v2943 = vld [vmem:[%s5 + $0x18] sm:$0xff]
        %v2944 = vld [vmem:[%s5 + $0x20] sm:$0xff]
        %v2945 = vld [vmem:[%s5 + $0x28] sm:$0xff]
        %v2946 = vld [vmem:[%s5 + $0x30] sm:$0xff]
        %v2947 = vld [vmem:[%s5 + $0x38] sm:$0xf]
        %v2948 = vld [vmem:[#allocation7] sm:$0xff]
        %v2949 = vld [vmem:[#allocation7 + $0x8] sm:$0xff]
        %v2950 = vld [vmem:[#allocation7 + $0x10] sm:$0xff]
        %v2951 = vld [vmem:[#allocation7 + $0x18] sm:$0xff]
        %v2952 = vld [vmem:[%s6] sm:$0xff]
        %v2953 = vld [vmem:[%s6 + $0x8] sm:$0xff]
        %v2954 = vld [vmem:[%s6 + $0x10] sm:$0xff]
        %v2955 = vld [vmem:[%s6 + $0x18] sm:$0xff]
        %v2956 = vld [vmem:[#allocation9] sm:$0xff]
        %v2957 = vld [vmem:[#allocation9 + $0x8] sm:$0xff]
        %v2958 = vld [vmem:[#allocation9 + $0x10] sm:$0xff]
        %v2959 = vld [vmem:[#allocation9 + $0x18] sm:$0xff]
        %v2960 = vld [vmem:[%s7] sm:$0x1]
        %v2961 = vld [vmem:[%s10] sm:$0x1]
        %v2963 = vlaneseq
        %v2964 = vshrl.u32 %v2963, 7
        %v2965 = vsub.s32 0, %v2964
        %v2966 = vrot.slane %v2960, %v2965
        %v2969 = vsel %vm567, %v2932, 0
        %v2972 = vsel %vm567, %v2933, 0
        %v2975 = vsel %vm567, %v2934, 0
        %v2978 = vsel %vm567, %v2935, 0
        %v2981 = vsel %vm567, %v2936, 0
        %v2984 = vsel %vm567, %v2937, 0
        %v2987 = vsel %vm567, %v2938, 0
        %v2990 = vsel %vm567, %v2939, 0
        %v2993 = vsel %vm1102, %v2947, 0
        %2995 = vmatprep.subr.mxu0 0.0
        %2996 = vmatpush1.msra.mxu0 %v2940
        %2997 = vmatprep.subr.mxu0 0.0
        %2998 = vmatpush1.msra.mxu0 %v2941
        %2999 = vmatprep.subr.mxu0 0.0
        %3000 = vmatpush1.msra.mxu0 %v2942
        %3001 = vmatprep.subr.mxu0 0.0
        %3002 = vmatpush1.msra.mxu0 %v2943
        %3003 = vmatprep.subr.mxu0 0.0
        %3004 = vmatpush1.msra.mxu0 %v2944
        %3005 = vmatprep.subr.mxu0 0.0
        %3006 = vmatpush1.msra.mxu0 %v2945
        %3007 = vmatprep.subr.mxu0 0.0
        %3008 = vmatpush1.msra.mxu0 %v2946
        %3009 = vmatprep.subr.mxu0 0.0
        %3010 = vmatpush1.msra.mxu0 %v2993
        %3011 = vmatprep.subr.mxu0 0.0
        %3012 = vmatpush1.msra.mxu0 0.0
        %3013 = vmatprep.subr.mxu0 0.0
        %3014 = vmatpush1.msra.mxu0 0.0
        %3015 = vmatprep.subr.mxu0 0.0
        %3016 = vmatpush1.msra.mxu0 0.0
        %3017 = vmatprep.subr.mxu0 0.0
        %3018 = vmatpush1.msra.mxu0 0.0
        %3019 = vmatprep.subr.mxu0 0.0
        %3020 = vmatpush1.msra.mxu0 0.0
        %3021 = vmatprep.subr.mxu0 0.0
        %3022 = vmatpush1.msra.mxu0 0.0
        %3023 = vmatprep.subr.mxu0 0.0
        %3024 = vmatpush1.msra.mxu0 0.0
        %3025 = vmatprep.subr.mxu0 0.0
        %3026 = vmatpush1.msra.mxu0 0.0
        %3027 = vmatprep.subr.mxu0 0.0
        %3028 = vmatpush1.msra.mxu0 0.0
        %3029 = vmatprep.subr.mxu0 0.0
        %3030 = vmatpush1.msra.mxu0 0.0
        %3031 = vmatprep.subr.mxu0 0.0
        %3032 = vmatpush1.msra.mxu0 0.0
        %3033 = vmatprep.subr.mxu0 0.0
        %3034 = vmatpush1.msra.mxu0 0.0
        %3035 = vmatprep.subr.mxu0 0.0
        %3036 = vmatpush1.msra.mxu0 0.0
        %3037 = vmatprep.subr.mxu0 0.0
        %3038 = vmatpush1.msra.mxu0 0.0
        %3039 = vmatprep.subr.mxu0 0.0
        %3040 = vmatpush1.msra.mxu0 0.0
        %3041 = vmatprep.subr.mxu0 0.0
        %3042 = vmatpush1.msra.mxu0 0.0
        %3043 = vmatprep.subr.mxu0 0.0
        %3044 = vmatpush1.msra.mxu0 0.0
        %3045 = vmatprep.subr.mxu0 0.0
        %3046 = vmatpush1.msra.mxu0 0.0
        %3047 = vmatprep.subr.mxu0 0.0
        %3048 = vmatpush1.msra.mxu0 0.0
        %3049 = vmatprep.subr.mxu0 0.0
        %3050 = vmatpush1.msra.mxu0 0.0
        %3051 = vmatprep.subr.mxu0 0.0
        %3052 = vmatpush1.msra.mxu0 0.0
        %3053 = vmatprep.subr.mxu0 0.0
        %3054 = vmatpush1.msra.mxu0 0.0
        %3055 = vmatprep.subr.mxu0 0.0
        %3056 = vmatpush1.msra.mxu0 0.0
        %3057 = vmatprep.subr.mxu0 0.0
        %3058 = vmatpush1.msra.mxu0 0.0
        %3059 = vmatprep.mubr.f32.mxu0 0.0
        %3060 = vmatmul.mubr.f32.gmra.mrb[0].mxu0 %v2969
        %v3061 = vpop.f32.mrb[0].mxu0
        %v3062 = vadd.f32 %v2966, %v3061
        %v3063 = vpop.f32.mrb[0].mxu0
        %3064 = vmatprep.mubr.f32.mxu0 0.0
        %3065 = vmatmul.mubr.f32.gmra.mrb[0].mxu0 %v2972
        %v3066 = vpop.f32.mrb[0].mxu0
        %v3067 = vadd.f32 %v2966, %v3066
        %v3068 = vpop.f32.mrb[0].mxu0
        %3069 = vmatprep.mubr.f32.mxu0 0.0
        %3070 = vmatmul.mubr.f32.gmra.mrb[0].mxu0 %v2975
        %v3071 = vpop.f32.mrb[0].mxu0
        %v3072 = vadd.f32 %v2966, %v3071
        %v3073 = vpop.f32.mrb[0].mxu0
        %3074 = vmatprep.mubr.f32.mxu0 0.0
        %3075 = vmatmul.mubr.f32.gmra.mrb[0].mxu0 %v2978
        %v3076 = vpop.f32.mrb[0].mxu0
        %v3077 = vadd.f32 %v2966, %v3076
        %v3078 = vpop.f32.mrb[0].mxu0
        %3079 = vmatprep.mubr.f32.mxu0 0.0
        %3080 = vmatmul.mubr.f32.gmra.mrb[0].mxu0 %v2981
        %v3081 = vpop.f32.mrb[0].mxu0
        %v3082 = vadd.f32 %v2966, %v3081
        %v3083 = vpop.f32.mrb[0].mxu0
        %3084 = vmatprep.mubr.f32.mxu0 0.0
        %3085 = vmatmul.mubr.f32.gmra.mrb[0].mxu0 %v2984
        %v3086 = vpop.f32.mrb[0].mxu0
        %v3087 = vadd.f32 %v2966, %v3086
        %v3088 = vpop.f32.mrb[0].mxu0
        %3089 = vmatprep.mubr.f32.mxu0 0.0
        %3090 = vmatmul.mubr.f32.gmra.mrb[0].mxu0 %v2987
        %v3091 = vpop.f32.mrb[0].mxu0
        %v3092 = vadd.f32 %v2966, %v3091
        %v3093 = vpop.f32.mrb[0].mxu0
        %3094 = vmatprep.mubr.f32.mxu0 0.0
        %3095 = vmatmul.mubr.f32.gmra.mrb[0].mxu0 %v2990
        %v3096 = vpop.f32.mrb[0].mxu0
        %v3097 = vadd.f32 %v2966, %v3096
        %v3098 = vpop.f32.mrb[0].mxu0
        %3099 = vdwg.mxu0
        %3100 = vst [vmem:[#allocation3] sm:$0xff] %v3062
        %3101 = vst [vmem:[#allocation3 + $0x8] sm:$0xff] %v3067
        %3102 = vst [vmem:[#allocation3 + $0x10] sm:$0xff] %v3072
        %3103 = vst [vmem:[#allocation3 + $0x18] sm:$0xff] %v3077
        %3104 = vst [vmem:[#allocation3 + $0x20] sm:$0xff] %v3082
        %3105 = vst [vmem:[#allocation3 + $0x28] sm:$0xff] %v3087
        %3106 = vst [vmem:[#allocation3 + $0x30] sm:$0xff] %v3092
        %3107 = vst [vmem:[#allocation3 + $0x38] sm:$0xff] %v3097
        %v3108 = vld [vmem:[#allocation3] sm:$0x1]
        %v3109 = vld [vmem:[#allocation3 + $0x10] sm:$0x1]
        %v3110 = vld [vmem:[#allocation3 + $0x20] sm:$0x1]
        %v3111 = vld [vmem:[#allocation3 + $0x30] sm:$0x1]
        %vm3112 = vcmask 261120
        %v3114 = vsel %vm3112, 0.0, 0
        %3116 = vmatprep.subr.mxu0 0.0
        %3117 = vmatpush1.msra.mxu0 %v2952
        %3118 = vmatprep.subr.mxu0 0.0
        %3119 = vmatpush1.msra.mxu0 %v2953
        %3120 = vmatprep.subr.mxu0 0.0
        %3121 = vmatpush1.msra.mxu0 %v2954
        %3122 = vmatprep.subr.mxu0 0.0
        %3123 = vmatpush1.msra.mxu0 %v2955
        %3124 = vmatprep.subr.mxu0 0.0
        %3125 = vmatpush1.msra.mxu0 0.0
        %3126 = vmatprep.subr.mxu0 0.0
        %3127 = vmatpush1.msra.mxu0 0.0
        %3128 = vmatprep.subr.mxu0 0.0
        %3129 = vmatpush1.msra.mxu0 0.0
        %3130 = vmatprep.subr.mxu0 0.0
        %3131 = vmatpush1.msra.mxu0 0.0
        %3132 = vmatprep.subr.mxu0 0.0
        %3133 = vmatpush1.msra.mxu0 0.0
        %3134 = vmatprep.subr.mxu0 0.0
        %3135 = vmatpush1.msra.mxu0 0.0
        %3136 = vmatprep.subr.mxu0 0.0
        %3137 = vmatpush1.msra.mxu0 0.0
        %3138 = vmatprep.subr.mxu0 0.0
        %3139 = vmatpush1.msra.mxu0 0.0
        %3140 = vmatprep.subr.mxu0 0.0
        %3141 = vmatpush1.msra.mxu0 0.0
        %3142 = vmatprep.subr.mxu0 0.0
        %3143 = vmatpush1.msra.mxu0 0.0
        %3144 = vmatprep.subr.mxu0 0.0
        %3145 = vmatpush1.msra.mxu0 0.0
        %3146 = vmatprep.subr.mxu0 0.0
        %3147 = vmatpush1.msra.mxu0 0.0
        %3148 = vmatprep.subr.mxu0 0.0
        %3149 = vmatpush1.msra.mxu0 0.0
        %3150 = vmatprep.subr.mxu0 0.0
        %3151 = vmatpush1.msra.mxu0 0.0
        %3152 = vmatprep.subr.mxu0 0.0
        %3153 = vmatpush1.msra.mxu0 0.0
        %3154 = vmatprep.subr.mxu0 0.0
        %3155 = vmatpush1.msra.mxu0 0.0
        %3156 = vmatprep.subr.mxu0 0.0
        %3157 = vmatpush1.msra.mxu0 0.0
        %3158 = vmatprep.subr.mxu0 0.0
        %3159 = vmatpush1.msra.mxu0 0.0
        %3160 = vmatprep.subr.mxu0 0.0
        %3161 = vmatpush1.msra.mxu0 0.0
        %3162 = vmatprep.subr.mxu0 0.0
        %3163 = vmatpush1.msra.mxu0 0.0
        %3164 = vmatprep.subr.mxu0 0.0
        %3165 = vmatpush1.msra.mxu0 0.0
        %3166 = vmatprep.subr.mxu0 0.0
        %3167 = vmatpush1.msra.mxu0 0.0
        %3168 = vmatprep.subr.mxu0 0.0
        %3169 = vmatpush1.msra.mxu0 0.0
        %3170 = vmatprep.subr.mxu0 0.0
        %3171 = vmatpush1.msra.mxu0 0.0
        %3172 = vmatprep.subr.mxu0 0.0
        %3173 = vmatpush1.msra.mxu0 0.0
        %3174 = vmatprep.subr.mxu0 0.0
        %3175 = vmatpush1.msra.mxu0 0.0
        %3176 = vmatprep.subr.mxu0 0.0
        %3177 = vmatpush1.msra.mxu0 0.0
        %3178 = vmatprep.subr.mxu0 0.0
        %3179 = vmatpush1.msra.mxu0 0.0
        %3180 = vmatprep.mubr.f32.mxu0 0.0
        %3181 = vmatmul.mubr.f32.gmra.mrb[0].mxu0 %v3114
        %v3182 = vpop.f32.mrb[0].mxu0
        %v3183 = vadd.f32 0.0, %v3182
        %v3184 = vpop.f32.mrb[0].mxu0
        %3185 = vdwg.mxu0
        %v3187 = vrot.slane %v3183, 1
        %v3188 = vrot.slane %v3183, 2
        %v3189 = vrot.slane %v3183, 3
        %v3194 = vadd.f32 %v3108, %v3183
        %v3195 = vadd.f32 %v3109, %v3187
        %v3196 = vadd.f32 %v3110, %v3188
        %v3197 = vadd.f32 %v3111, %v3189
        %v3198 = vxor.u32 %v3194, 2147483648
        %v3199 = vxor.u32 %v3195, 2147483648
        %v3200 = vxor.u32 %v3196, 2147483648
        %v3201 = vxor.u32 %v3197, 2147483648
        %v3202 = vmul.f32 %v3198, 1.442695
        %v3203 = vpow.pop %v3202
        %v3204 = vmul.f32 %v3199, 1.442695
        %v3205 = vpow.pop %v3204
        %v3206 = vmul.f32 %v3200, 1.442695
        %v3207 = vpow.pop %v3206
        %v3208 = vmul.f32 %v3201, 1.442695
        %v3209 = vpow.pop %v3208
        %v3210 = vadd.f32 %v3203, 1.0
        %v3211 = vadd.f32 %v3205, 1.0
        %v3212 = vadd.f32 %v3207, 1.0
        %v3213 = vadd.f32 %v3209, 1.0
        %v3214 = vrcp.pop %v3210
        %v3215 = vmul.f32 1.0, %v3214
        %v3216 = vrcp.pop %v3211
        %v3217 = vmul.f32 1.0, %v3216
        %v3218 = vrcp.pop %v3212
        %v3219 = vmul.f32 1.0, %v3218
        %v3220 = vrcp.pop %v3213
        %v3221 = vmul.f32 1.0, %v3220
        %v3222 = vtanh.pop %v3194
        %v3223 = vtanh.pop %v3195
        %v3224 = vtanh.pop %v3196
        %v3225 = vtanh.pop %v3197
        %v3226 = vmul.f32 %v3215, 0.0
        %v3227 = vmul.f32 %v3217, 0.0
        %v3228 = vmul.f32 %v3219, 0.0
        %v3229 = vmul.f32 %v3221, 0.0
        %3234 = vrot.lane.b32.xlu0 %v3222, 64
        %v3235 = vpop.permute.xlu0 %3234
        %3236 = vrot.lane.b32.xlu0 %v3223, 64
        %v3237 = vpop.permute.xlu0 %3236
        %3238 = vrot.lane.b32.xlu0 %v3224, 64
        %v3239 = vpop.permute.xlu0 %3238
        %3240 = vrot.lane.b32.xlu0 %v3225, 64
        %v3241 = vpop.permute.xlu0 %3240
        %v3246 = vmul.f32 %v3215, %v3235
        %v3247 = vmul.f32 %v3217, %v3237
        %v3248 = vmul.f32 %v3219, %v3239
        %v3249 = vmul.f32 %v3221, %v3241
        %3254 = vrot.lane.b32.xlu0 %v3246, 32
        %v3255 = vpop.permute.xlu0 %3254
        %3256 = vrot.lane.b32.xlu0 %v3247, 32
        %v3257 = vpop.permute.xlu0 %3256
        %3258 = vrot.lane.b32.xlu0 %v3248, 32
        %v3259 = vpop.permute.xlu0 %3258
        %3260 = vrot.lane.b32.xlu0 %v3249, 32
        %v3261 = vpop.permute.xlu0 %3260
        %v3266 = vadd.f32 %v3226, %v3255
        %v3267 = vadd.f32 %v3227, %v3257
        %v3268 = vadd.f32 %v3228, %v3259
        %v3269 = vadd.f32 %v3229, %v3261
        %v3270 = vtanh.pop %v3266
        %v3271 = vtanh.pop %v3267
        %v3272 = vtanh.pop %v3268
        %v3273 = vtanh.pop %v3269
        %3278 = vrot.lane.b32.xlu0 %v3270, 64
        %v3279 = vpop.permute.xlu0 %3278
        %3280 = vrot.lane.b32.xlu0 %v3271, 64
        %v3281 = vpop.permute.xlu0 %3280
        %3282 = vrot.lane.b32.xlu0 %v3272, 64
        %v3283 = vpop.permute.xlu0 %3282
        %3284 = vrot.lane.b32.xlu0 %v3273, 64
        %v3285 = vpop.permute.xlu0 %3284
        %v3290 = vmul.f32 %v3215, %v3279
        %v3291 = vmul.f32 %v3217, %v3281
        %v3292 = vmul.f32 %v3219, %v3283
        %v3293 = vmul.f32 %v3221, %v3285
        %3294 = vmatprep.subr.mxu0 0.0
        %3295 = vmatpush1.msra.mxu0 %v2956
        %3296 = vmatprep.subr.mxu0 0.0
        %3297 = vmatpush1.msra.mxu0 %v2957
        %3298 = vmatprep.subr.mxu0 0.0
        %3299 = vmatpush1.msra.mxu0 %v2958
        %3300 = vmatprep.subr.mxu0 0.0
        %3301 = vmatpush1.msra.mxu0 %v2959
        %3302 = vmatprep.subr.mxu0 0.0
        %3303 = vmatpush1.msra.mxu0 0.0
        %3304 = vmatprep.subr.mxu0 0.0
        %3305 = vmatpush1.msra.mxu0 0.0
        %3306 = vmatprep.subr.mxu0 0.0
        %3307 = vmatpush1.msra.mxu0 0.0
        %3308 = vmatprep.subr.mxu0 0.0
        %3309 = vmatpush1.msra.mxu0 0.0
        %3310 = vmatprep.subr.mxu0 0.0
        %3311 = vmatpush1.msra.mxu0 0.0
        %3312 = vmatprep.subr.mxu0 0.0
        %3313 = vmatpush1.msra.mxu0 0.0
        %3314 = vmatprep.subr.mxu0 0.0
        %3315 = vmatpush1.msra.mxu0 0.0
        %3316 = vmatprep.subr.mxu0 0.0
        %3317 = vmatpush1.msra.mxu0 0.0
        %3318 = vmatprep.subr.mxu0 0.0
        %3319 = vmatpush1.msra.mxu0 0.0
        %3320 = vmatprep.subr.mxu0 0.0
        %3321 = vmatpush1.msra.mxu0 0.0
        %3322 = vmatprep.subr.mxu0 0.0
        %3323 = vmatpush1.msra.mxu0 0.0
        %3324 = vmatprep.subr.mxu0 0.0
        %3325 = vmatpush1.msra.mxu0 0.0
        %3326 = vmatprep.subr.mxu0 0.0
        %3327 = vmatpush1.msra.mxu0 0.0
        %3328 = vmatprep.subr.mxu0 0.0
        %3329 = vmatpush1.msra.mxu0 0.0
        %3330 = vmatprep.subr.mxu0 0.0
        %3331 = vmatpush1.msra.mxu0 0.0
        %3332 = vmatprep.subr.mxu0 0.0
        %3333 = vmatpush1.msra.mxu0 0.0
        %3334 = vmatprep.subr.mxu0 0.0
        %3335 = vmatpush1.msra.mxu0 0.0
        %3336 = vmatprep.subr.mxu0 0.0
        %3337 = vmatpush1.msra.mxu0 0.0
        %3338 = vmatprep.subr.mxu0 0.0
        %3339 = vmatpush1.msra.mxu0 0.0
        %3340 = vmatprep.subr.mxu0 0.0
        %3341 = vmatpush1.msra.mxu0 0.0
        %3342 = vmatprep.subr.mxu0 0.0
        %3343 = vmatpush1.msra.mxu0 0.0
        %3344 = vmatprep.subr.mxu0 0.0
        %3345 = vmatpush1.msra.mxu0 0.0
        %3346 = vmatprep.subr.mxu0 0.0
        %3347 = vmatpush1.msra.mxu0 0.0
        %3348 = vmatprep.subr.mxu0 0.0
        %3349 = vmatpush1.msra.mxu0 0.0
        %3350 = vmatprep.subr.mxu0 0.0
        %3351 = vmatpush1.msra.mxu0 0.0
        %3352 = vmatprep.subr.mxu0 0.0
        %3353 = vmatpush1.msra.mxu0 0.0
        %3354 = vmatprep.subr.mxu0 0.0
        %3355 = vmatpush1.msra.mxu0 0.0
        %3356 = vmatprep.subr.mxu0 0.0
        %3357 = vmatpush1.msra.mxu0 0.0
        %3358 = vmatprep.mubr.f32.mxu0 0.0
        %3359 = vmatmul.mubr.f32.gmra.mrb[0].mxu0 %v3114
        %v3360 = vpop.f32.mrb[0].mxu0
        %v3361 = vadd.f32 0.0, %v3360
        %v3362 = vpop.f32.mrb[0].mxu0
        %3363 = vdwg.mxu0
        %v3368 = vrot.slane %v3291, 7
        %vm3369 = vcmask 1041409
        %v3370 = vsel %vm3369, %v3368, %v3290
        %v3371 = vrot.slane %v3292, 6
        %vm3372 = vcmask 1042434
        %v3373 = vsel %vm3372, %v3371, %v3370
        %v3374 = vrot.slane %v3293, 5
        %vm3375 = vcmask 1043459
        %v3376 = vsel %vm3375, %v3374, %v3373
        %3377 = vrot.lane.b32.xlu0 %v3376, 32
        %v3378 = vpop.permute.xlu0 %3377
        %v3379 = vsel %vm3112, %v3378, 0
        %3381 = vmatprep.subr.mxu0 0.0
        %3382 = vmatpush1.msra.mxu0 %v2948
        %3383 = vmatprep.subr.mxu0 0.0
        %3384 = vmatpush1.msra.mxu0 %v2949
        %3385 = vmatprep.subr.mxu0 0.0
        %3386 = vmatpush1.msra.mxu0 %v2950
        %3387 = vmatprep.subr.mxu0 0.0
        %3388 = vmatpush1.msra.mxu0 %v2951
        %3389 = vmatprep.subr.mxu0 0.0
        %3390 = vmatpush1.msra.mxu0 0.0
        %3391 = vmatprep.subr.mxu0 0.0
        %3392 = vmatpush1.msra.mxu0 0.0
        %3393 = vmatprep.subr.mxu0 0.0
        %3394 = vmatpush1.msra.mxu0 0.0
        %3395 = vmatprep.subr.mxu0 0.0
        %3396 = vmatpush1.msra.mxu0 0.0
        %3397 = vmatprep.subr.mxu0 0.0
        %3398 = vmatpush1.msra.mxu0 0.0
        %3399 = vmatprep.subr.mxu0 0.0
        %3400 = vmatpush1.msra.mxu0 0.0
        %3401 = vmatprep.subr.mxu0 0.0
        %3402 = vmatpush1.msra.mxu0 0.0
        %3403 = vmatprep.subr.mxu0 0.0
        %3404 = vmatpush1.msra.mxu0 0.0
        %3405 = vmatprep.subr.mxu0 0.0
        %3406 = vmatpush1.msra.mxu0 0.0
        %3407 = vmatprep.subr.mxu0 0.0
        %3408 = vmatpush1.msra.mxu0 0.0
        %3409 = vmatprep.subr.mxu0 0.0
        %3410 = vmatpush1.msra.mxu0 0.0
        %3411 = vmatprep.subr.mxu0 0.0
        %3412 = vmatpush1.msra.mxu0 0.0
        %3413 = vmatprep.subr.mxu0 0.0
        %3414 = vmatpush1.msra.mxu0 0.0
        %3415 = vmatprep.subr.mxu0 0.0
        %3416 = vmatpush1.msra.mxu0 0.0
        %3417 = vmatprep.subr.mxu0 0.0
        %3418 = vmatpush1.msra.mxu0 0.0
        %3419 = vmatprep.subr.mxu0 0.0
        %3420 = vmatpush1.msra.mxu0 0.0
        %3421 = vmatprep.subr.mxu0 0.0
        %3422 = vmatpush1.msra.mxu0 0.0
        %3423 = vmatprep.subr.mxu0 0.0
        %3424 = vmatpush1.msra.mxu0 0.0
        %3425 = vmatprep.subr.mxu0 0.0
        %3426 = vmatpush1.msra.mxu0 0.0
        %3427 = vmatprep.subr.mxu0 0.0
        %3428 = vmatpush1.msra.mxu0 0.0
        %3429 = vmatprep.subr.mxu0 0.0
        %3430 = vmatpush1.msra.mxu0 0.0
        %3431 = vmatprep.subr.mxu0 0.0
        %3432 = vmatpush1.msra.mxu0 0.0
        %3433 = vmatprep.subr.mxu0 0.0
        %3434 = vmatpush1.msra.mxu0 0.0
        %3435 = vmatprep.subr.mxu0 0.0
        %3436 = vmatpush1.msra.mxu0 0.0
        %3437 = vmatprep.subr.mxu0 0.0
        %3438 = vmatpush1.msra.mxu0 0.0
        %3439 = vmatprep.subr.mxu0 0.0
        %3440 = vmatpush1.msra.mxu0 0.0
        %3441 = vmatprep.subr.mxu0 0.0
        %3442 = vmatpush1.msra.mxu0 0.0
        %3443 = vmatprep.subr.mxu0 0.0
        %3444 = vmatpush1.msra.mxu0 0.0
        %3445 = vmatprep.mubr.f32.mxu0 0.0
        %3446 = vmatmul.mubr.f32.gmra.mrb[0].mxu0 %v3379
        %v3447 = vpop.f32.mrb[0].mxu0
        %v3448 = vadd.f32 %v3361, %v3447
        %v3449 = vpop.f32.mrb[0].mxu0
        %3450 = vdwg.mxu0
        %v3452 = vlaneseq
        %v3453 = vshrl.u32 %v3452, 7
        %v3454 = vsub.s32 0, %v3453
        %v3455 = vrot.slane %v2961, %v3454
        %v3457 = vadd.f32 %v3448, %v3455
        %v3458 = vxor.u32 %v3457, 2147483648
        %v3459 = vmul.f32 %v3458, 1.442695
        %v3460 = vpow.pop %v3459
        %v3461 = vadd.f32 %v3460, 1.0
        %v3462 = vrcp.pop %v3461
        %v3463 = vmul.f32 1.0, %v3462
        %v3464 = vtanh.pop %v3457
        %v3465 = vmul.f32 %v3463, 0.0
        %3467 = vrot.lane.b32.xlu0 %v3464, 64
        %v3468 = vpop.permute.xlu0 %3467
        %v3470 = vmul.f32 %v3463, %v3468
        %3472 = vrot.lane.b32.xlu0 %v3470, 32
        %v3473 = vpop.permute.xlu0 %3472
        %v3475 = vadd.f32 %v3465, %v3473
        %v3476 = vtanh.pop %v3475
        %3478 = vrot.lane.b32.xlu0 %v3476, 64
        %v3479 = vpop.permute.xlu0 %3478
        %v3481 = vmul.f32 %v3463, %v3479
        %v3482 = vadd.f32 %v3481, 0.0
        %v3483 = vld [vmem:[#allocation3 + $0x1] sm:$0x1]
        %v3484 = vld [vmem:[#allocation3 + $0x11] sm:$0x1]
        %v3485 = vld [vmem:[#allocation3 + $0x21] sm:$0x1]
        %v3486 = vld [vmem:[#allocation3 + $0x31] sm:$0x1]
        %3487 = vmatprep.subr.mxu0 0.0
        %3488 = vmatpush1.msra.mxu0 %v2952
        %3489 = vmatprep.subr.mxu0 0.0
        %3490 = vmatpush1.msra.mxu0 %v2953
        %3491 = vmatprep.subr.mxu0 0.0
        %3492 = vmatpush1.msra.mxu0 %v2954
        %3493 = vmatprep.subr.mxu0 0.0
        %3494 = vmatpush1.msra.mxu0 %v2955
        %3495 = vmatprep.subr.mxu0 0.0
        %3496 = vmatpush1.msra.mxu0 0.0
        %3497 = vmatprep.subr.mxu0 0.0
        %3498 = vmatpush1.msra.mxu0 0.0
        %3499 = vmatprep.subr.mxu0 0.0
        %3500 = vmatpush1.msra.mxu0 0.0
        %3501 = vmatprep.subr.mxu0 0.0
        %3502 = vmatpush1.msra.mxu0 0.0
        %3503 = vmatprep.subr.mxu0 0.0
        %3504 = vmatpush1.msra.mxu0 0.0
        %3505 = vmatprep.subr.mxu0 0.0
        %3506 = vmatpush1.msra.mxu0 0.0
        %3507 = vmatprep.subr.mxu0 0.0
        %3508 = vmatpush1.msra.mxu0 0.0
        %3509 = vmatprep.subr.mxu0 0.0
        %3510 = vmatpush1.msra.mxu0 0.0
        %3511 = vmatprep.subr.mxu0 0.0
        %3512 = vmatpush1.msra.mxu0 0.0
        %3513 = vmatprep.subr.mxu0 0.0
        %3514 = vmatpush1.msra.mxu0 0.0
        %3515 = vmatprep.subr.mxu0 0.0
        %3516 = vmatpush1.msra.mxu0 0.0
        %3517 = vmatprep.subr.mxu0 0.0
        %3518 = vmatpush1.msra.mxu0 0.0
        %3519 = vmatprep.subr.mxu0 0.0
        %3520 = vmatpush1.msra.mxu0 0.0
        %3521 = vmatprep.subr.mxu0 0.0
        %3522 = vmatpush1.msra.mxu0 0.0
        %3523 = vmatprep.subr.mxu0 0.0
        %3524 = vmatpush1.msra.mxu0 0.0
        %3525 = vmatprep.subr.mxu0 0.0
        %3526 = vmatpush1.msra.mxu0 0.0
        %3527 = vmatprep.subr.mxu0 0.0
        %3528 = vmatpush1.msra.mxu0 0.0
        %3529 = vmatprep.subr.mxu0 0.0
        %3530 = vmatpush1.msra.mxu0 0.0
        %3531 = vmatprep.subr.mxu0 0.0
        %3532 = vmatpush1.msra.mxu0 0.0
        %3533 = vmatprep.subr.mxu0 0.0
        %3534 = vmatpush1.msra.mxu0 0.0
        %3535 = vmatprep.subr.mxu0 0.0
        %3536 = vmatpush1.msra.mxu0 0.0
        %3537 = vmatprep.subr.mxu0 0.0
        %3538 = vmatpush1.msra.mxu0 0.0
        %3539 = vmatprep.subr.mxu0 0.0
        %3540 = vmatpush1.msra.mxu0 0.0
        %3541 = vmatprep.subr.mxu0 0.0
        %3542 = vmatpush1.msra.mxu0 0.0
        %3543 = vmatprep.subr.mxu0 0.0
        %3544 = vmatpush1.msra.mxu0 0.0
        %3545 = vmatprep.subr.mxu0 0.0
        %3546 = vmatpush1.msra.mxu0 0.0
        %3547 = vmatprep.subr.mxu0 0.0
        %3548 = vmatpush1.msra.mxu0 0.0
        %3549 = vmatprep.subr.mxu0 0.0
        %3550 = vmatpush1.msra.mxu0 0.0
        %3551 = vmatprep.mubr.f32.mxu0 0.0
        %3552 = vmatmul.mubr.f32.gmra.mrb[0].mxu0 %v3379
        %v3553 = vpop.f32.mrb[0].mxu0
        %v3554 = vadd.f32 0.0, %v3553
        %v3555 = vpop.f32.mrb[0].mxu0
        %3556 = vdwg.mxu0
        %v3558 = vrot.slane %v3554, 1
        %v3559 = vrot.slane %v3554, 2
        %v3560 = vrot.slane %v3554, 3
        %v3565 = vadd.f32 %v3483, %v3554
        %v3566 = vadd.f32 %v3484, %v3558
        %v3567 = vadd.f32 %v3485, %v3559
        %v3568 = vadd.f32 %v3486, %v3560
        %v3569 = vxor.u32 %v3565, 2147483648
        %v3570 = vxor.u32 %v3566, 2147483648
        %v3571 = vxor.u32 %v3567, 2147483648
        %v3572 = vxor.u32 %v3568, 2147483648
        %v3573 = vmul.f32 %v3569, 1.442695
        %v3574 = vpow.pop %v3573
        %v3575 = vmul.f32 %v3570, 1.442695
        %v3576 = vpow.pop %v3575
        %v3577 = vmul.f32 %v3571, 1.442695
        %v3578 = vpow.pop %v3577
        %v3579 = vmul.f32 %v3572, 1.442695
        %v3580 = vpow.pop %v3579
        %v3581 = vadd.f32 %v3574, 1.0
        %v3582 = vadd.f32 %v3576, 1.0
        %v3583 = vadd.f32 %v3578, 1.0
        %v3584 = vadd.f32 %v3580, 1.0
        %v3585 = vrcp.pop %v3581
        %v3586 = vmul.f32 1.0, %v3585
        %v3587 = vrcp.pop %v3582
        %v3588 = vmul.f32 1.0, %v3587
        %v3589 = vrcp.pop %v3583
        %v3590 = vmul.f32 1.0, %v3589
        %v3591 = vrcp.pop %v3584
        %v3592 = vmul.f32 1.0, %v3591
        %v3593 = vtanh.pop %v3565
        %v3594 = vtanh.pop %v3566
        %v3595 = vtanh.pop %v3567
        %v3596 = vtanh.pop %v3568
        %v3597 = vmul.f32 %v3586, %v3266
        %v3598 = vmul.f32 %v3588, %v3267
        %v3599 = vmul.f32 %v3590, %v3268
        %v3600 = vmul.f32 %v3592, %v3269
        %3605 = vrot.lane.b32.xlu0 %v3593, 64
        %v3606 = vpop.permute.xlu0 %3605
        %3607 = vrot.lane.b32.xlu0 %v3594, 64
        %v3608 = vpop.permute.xlu0 %3607
        %3609 = vrot.lane.b32.xlu0 %v3595, 64
        %v3610 = vpop.permute.xlu0 %3609
        %3611 = vrot.lane.b32.xlu0 %v3596, 64
        %v3612 = vpop.permute.xlu0 %3611
        %v3617 = vmul.f32 %v3586, %v3606
        %v3618 = vmul.f32 %v3588, %v3608
        %v3619 = vmul.f32 %v3590, %v3610
        %v3620 = vmul.f32 %v3592, %v3612
        %3625 = vrot.lane.b32.xlu0 %v3617, 32
        %v3626 = vpop.permute.xlu0 %3625
        %3627 = vrot.lane.b32.xlu0 %v3618, 32
        %v3628 = vpop.permute.xlu0 %3627
        %3629 = vrot.lane.b32.xlu0 %v3619, 32
        %v3630 = vpop.permute.xlu0 %3629
        %3631 = vrot.lane.b32.xlu0 %v3620, 32
        %v3632 = vpop.permute.xlu0 %3631
        %v3637 = vadd.f32 %v3597, %v3626
        %v3638 = vadd.f32 %v3598, %v3628
        %v3639 = vadd.f32 %v3599, %v3630
        %v3640 = vadd.f32 %v3600, %v3632
        %v3641 = vtanh.pop %v3637
        %v3642 = vtanh.pop %v3638
        %v3643 = vtanh.pop %v3639
        %v3644 = vtanh.pop %v3640
        %3649 = vrot.lane.b32.xlu0 %v3641, 64
        %v3650 = vpop.permute.xlu0 %3649
        %3651 = vrot.lane.b32.xlu0 %v3642, 64
        %v3652 = vpop.permute.xlu0 %3651
        %3653 = vrot.lane.b32.xlu0 %v3643, 64
        %v3654 = vpop.permute.xlu0 %3653
        %3655 = vrot.lane.b32.xlu0 %v3644, 64
        %v3656 = vpop.permute.xlu0 %3655
        %v3661 = vmul.f32 %v3586, %v3650
        %v3662 = vmul.f32 %v3588, %v3652
        %v3663 = vmul.f32 %v3590, %v3654
        %v3664 = vmul.f32 %v3592, %v3656
        %3666 = vrot.lane.b32.xlu0 %v3481, 32
        %v3667 = vpop.permute.xlu0 %3666
        %v3668 = vsel %vm3112, %v3667, 0
        %3670 = vmatprep.subr.mxu0 0.0
        %3671 = vmatpush1.msra.mxu0 %v2956
        %3672 = vmatprep.subr.mxu0 0.0
        %3673 = vmatpush1.msra.mxu0 %v2957
        %3674 = vmatprep.subr.mxu0 0.0
        %3675 = vmatpush1.msra.mxu0 %v2958
        %3676 = vmatprep.subr.mxu0 0.0
        %3677 = vmatpush1.msra.mxu0 %v2959
        %3678 = vmatprep.subr.mxu0 0.0
        %3679 = vmatpush1.msra.mxu0 0.0
        %3680 = vmatprep.subr.mxu0 0.0
        %3681 = vmatpush1.msra.mxu0 0.0
        %3682 = vmatprep.subr.mxu0 0.0
        %3683 = vmatpush1.msra.mxu0 0.0
        %3684 = vmatprep.subr.mxu0 0.0
        %3685 = vmatpush1.msra.mxu0 0.0
        %3686 = vmatprep.subr.mxu0 0.0
        %3687 = vmatpush1.msra.mxu0 0.0
        %3688 = vmatprep.subr.mxu0 0.0
        %3689 = vmatpush1.msra.mxu0 0.0
        %3690 = vmatprep.subr.mxu0 0.0
        %3691 = vmatpush1.msra.mxu0 0.0
        %3692 = vmatprep.subr.mxu0 0.0
        %3693 = vmatpush1.msra.mxu0 0.0
        %3694 = vmatprep.subr.mxu0 0.0
        %3695 = vmatpush1.msra.mxu0 0.0
        %3696 = vmatprep.subr.mxu0 0.0
        %3697 = vmatpush1.msra.mxu0 0.0
        %3698 = vmatprep.subr.mxu0 0.0
        %3699 = vmatpush1.msra.mxu0 0.0
        %3700 = vmatprep.subr.mxu0 0.0
        %3701 = vmatpush1.msra.mxu0 0.0
        %3702 = vmatprep.subr.mxu0 0.0
        %3703 = vmatpush1.msra.mxu0 0.0
        %3704 = vmatprep.subr.mxu0 0.0
        %3705 = vmatpush1.msra.mxu0 0.0
        %3706 = vmatprep.subr.mxu0 0.0
        %3707 = vmatpush1.msra.mxu0 0.0
        %3708 = vmatprep.subr.mxu0 0.0
        %3709 = vmatpush1.msra.mxu0 0.0
        %3710 = vmatprep.subr.mxu0 0.0
        %3711 = vmatpush1.msra.mxu0 0.0
        %3712 = vmatprep.subr.mxu0 0.0
        %3713 = vmatpush1.msra.mxu0 0.0
        %3714 = vmatprep.subr.mxu0 0.0
        %3715 = vmatpush1.msra.mxu0 0.0
        %3716 = vmatprep.subr.mxu0 0.0
        %3717 = vmatpush1.msra.mxu0 0.0
        %3718 = vmatprep.subr.mxu0 0.0
        %3719 = vmatpush1.msra.mxu0 0.0
        %3720 = vmatprep.subr.mxu0 0.0
        %3721 = vmatpush1.msra.mxu0 0.0
        %3722 = vmatprep.subr.mxu0 0.0
        %3723 = vmatpush1.msra.mxu0 0.0
        %3724 = vmatprep.subr.mxu0 0.0
        %3725 = vmatpush1.msra.mxu0 0.0
        %3726 = vmatprep.subr.mxu0 0.0
        %3727 = vmatpush1.msra.mxu0 0.0
        %3728 = vmatprep.subr.mxu0 0.0
        %3729 = vmatpush1.msra.mxu0 0.0
        %3730 = vmatprep.subr.mxu0 0.0
        %3731 = vmatpush1.msra.mxu0 0.0
        %3732 = vmatprep.subr.mxu0 0.0
        %3733 = vmatpush1.msra.mxu0 0.0
        %3734 = vmatprep.mubr.f32.mxu0 0.0
        %3735 = vmatmul.mubr.f32.gmra.mrb[0].mxu0 %v3668
        %v3736 = vpop.f32.mrb[0].mxu0
        %v3737 = vadd.f32 0.0, %v3736
        %v3738 = vpop.f32.mrb[0].mxu0
        %3739 = vdwg.mxu0
        %v3744 = vrot.slane %v3662, 7
        %v3745 = vsel %vm3369, %v3744, %v3661
        %v3746 = vrot.slane %v3663, 6
        %v3747 = vsel %vm3372, %v3746, %v3745
        %v3748 = vrot.slane %v3664, 5
        %v3749 = vsel %vm3375, %v3748, %v3747
        %3750 = vrot.lane.b32.xlu0 %v3749, 32
        %v3751 = vpop.permute.xlu0 %3750
        %v3752 = vsel %vm3112, %v3751, 0
        %3754 = vmatprep.subr.mxu0 0.0
        %3755 = vmatpush1.msra.mxu0 %v2948
        %3756 = vmatprep.subr.mxu0 0.0
        %3757 = vmatpush1.msra.mxu0 %v2949
        %3758 = vmatprep.subr.mxu0 0.0
        %3759 = vmatpush1.msra.mxu0 %v2950
        %3760 = vmatprep.subr.mxu0 0.0
        %3761 = vmatpush1.msra.mxu0 %v2951
        %3762 = vmatprep.subr.mxu0 0.0
        %3763 = vmatpush1.msra.mxu0 0.0
        %3764 = vmatprep.subr.mxu0 0.0
        %3765 = vmatpush1.msra.mxu0 0.0
        %3766 = vmatprep.subr.mxu0 0.0
        %3767 = vmatpush1.msra.mxu0 0.0
        %3768 = vmatprep.subr.mxu0 0.0
        %3769 = vmatpush1.msra.mxu0 0.0
        %3770 = vmatprep.subr.mxu0 0.0
        %3771 = vmatpush1.msra.mxu0 0.0
        %3772 = vmatprep.subr.mxu0 0.0
        %3773 = vmatpush1.msra.mxu0 0.0
        %3774 = vmatprep.subr.mxu0 0.0
        %3775 = vmatpush1.msra.mxu0 0.0
        %3776 = vmatprep.subr.mxu0 0.0
        %3777 = vmatpush1.msra.mxu0 0.0
        %3778 = vmatprep.subr.mxu0 0.0
        %3779 = vmatpush1.msra.mxu0 0.0
        %3780 = vmatprep.subr.mxu0 0.0
        %3781 = vmatpush1.msra.mxu0 0.0
        %3782 = vmatprep.subr.mxu0 0.0
        %3783 = vmatpush1.msra.mxu0 0.0
        %3784 = vmatprep.subr.mxu0 0.0
        %3785 = vmatpush1.msra.mxu0 0.0
        %3786 = vmatprep.subr.mxu0 0.0
        %3787 = vmatpush1.msra.mxu0 0.0
        %3788 = vmatprep.subr.mxu0 0.0
        %3789 = vmatpush1.msra.mxu0 0.0
        %3790 = vmatprep.subr.mxu0 0.0
        %3791 = vmatpush1.msra.mxu0 0.0
        %3792 = vmatprep.subr.mxu0 0.0
        %3793 = vmatpush1.msra.mxu0 0.0
        %3794 = vmatprep.subr.mxu0 0.0
        %3795 = vmatpush1.msra.mxu0 0.0
        %3796 = vmatprep.subr.mxu0 0.0
        %3797 = vmatpush1.msra.mxu0 0.0
        %3798 = vmatprep.subr.mxu0 0.0
        %3799 = vmatpush1.msra.mxu0 0.0
        %3800 = vmatprep.subr.mxu0 0.0
        %3801 = vmatpush1.msra.mxu0 0.0
        %3802 = vmatprep.subr.mxu0 0.0
        %3803 = vmatpush1.msra.mxu0 0.0
        %3804 = vmatprep.subr.mxu0 0.0
        %3805 = vmatpush1.msra.mxu0 0.0
        %3806 = vmatprep.subr.mxu0 0.0
        %3807 = vmatpush1.msra.mxu0 0.0
        %3808 = vmatprep.subr.mxu0 0.0
        %3809 = vmatpush1.msra.mxu0 0.0
        %3810 = vmatprep.subr.mxu0 0.0
        %3811 = vmatpush1.msra.mxu0 0.0
        %3812 = vmatprep.subr.mxu0 0.0
        %3813 = vmatpush1.msra.mxu0 0.0
        %3814 = vmatprep.subr.mxu0 0.0
        %3815 = vmatpush1.msra.mxu0 0.0
        %3816 = vmatprep.subr.mxu0 0.0
        %3817 = vmatpush1.msra.mxu0 0.0
        %3818 = vmatprep.mubr.f32.mxu0 0.0
        %3819 = vmatmul.mubr.f32.gmra.mrb[0].mxu0 %v3752
        %v3820 = vpop.f32.mrb[0].mxu0
        %v3821 = vadd.f32 %v3737, %v3820
        %v3822 = vpop.f32.mrb[0].mxu0
        %3823 = vdwg.mxu0
        %v3824 = vadd.f32 %v3821, %v3455
        %v3825 = vxor.u32 %v3824, 2147483648
        %v3826 = vmul.f32 %v3825, 1.442695
        %v3827 = vpow.pop %v3826
        %v3828 = vadd.f32 %v3827, 1.0
        %v3829 = vrcp.pop %v3828
        %v3830 = vmul.f32 1.0, %v3829
        %v3831 = vtanh.pop %v3824
        %v3832 = vmul.f32 %v3830, %v3475
        %3834 = vrot.lane.b32.xlu0 %v3831, 64
        %v3835 = vpop.permute.xlu0 %3834
        %v3837 = vmul.f32 %v3830, %v3835
        %3839 = vrot.lane.b32.xlu0 %v3837, 32
        %v3840 = vpop.permute.xlu0 %3839
        %v3842 = vadd.f32 %v3832, %v3840
        %v3843 = vtanh.pop %v3842
        %3845 = vrot.lane.b32.xlu0 %v3843, 64
        %v3846 = vpop.permute.xlu0 %3845
        %v3848 = vmul.f32 %v3830, %v3846
        %v3849 = vadd.f32 %v3482, %v3848
        %v3850 = vld [vmem:[#allocation3 + $0x2] sm:$0x1]
        %v3851 = vld [vmem:[#allocation3 + $0x12] sm:$0x1]
        %v3852 = vld [vmem:[#allocation3 + $0x22] sm:$0x1]
        %v3853 = vld [vmem:[#allocation3 + $0x32] sm:$0x1]
        %3854 = vmatprep.subr.mxu0 0.0
        %3855 = vmatpush1.msra.mxu0 %v2952
        %3856 = vmatprep.subr.mxu0 0.0
        %3857 = vmatpush1.msra.mxu0 %v2953
        %3858 = vmatprep.subr.mxu0 0.0
        %3859 = vmatpush1.msra.mxu0 %v2954
        %3860 = vmatprep.subr.mxu0 0.0
        %3861 = vmatpush1.msra.mxu0 %v2955
        %3862 = vmatprep.subr.mxu0 0.0
        %3863 = vmatpush1.msra.mxu0 0.0
        %3864 = vmatprep.subr.mxu0 0.0
        %3865 = vmatpush1.msra.mxu0 0.0
        %3866 = vmatprep.subr.mxu0 0.0
        %3867 = vmatpush1.msra.mxu0 0.0
        %3868 = vmatprep.subr.mxu0 0.0
        %3869 = vmatpush1.msra.mxu0 0.0
        %3870 = vmatprep.subr.mxu0 0.0
        %3871 = vmatpush1.msra.mxu0 0.0
        %3872 = vmatprep.subr.mxu0 0.0
        %3873 = vmatpush1.msra.mxu0 0.0
        %3874 = vmatprep.subr.mxu0 0.0
        %3875 = vmatpush1.msra.mxu0 0.0
        %3876 = vmatprep.subr.mxu0 0.0
        %3877 = vmatpush1.msra.mxu0 0.0
        %3878 = vmatprep.subr.mxu0 0.0
        %3879 = vmatpush1.msra.mxu0 0.0
        %3880 = vmatprep.subr.mxu0 0.0
        %3881 = vmatpush1.msra.mxu0 0.0
        %3882 = vmatprep.subr.mxu0 0.0
        %3883 = vmatpush1.msra.mxu0 0.0
        %3884 = vmatprep.subr.mxu0 0.0
        %3885 = vmatpush1.msra.mxu0 0.0
        %3886 = vmatprep.subr.mxu0 0.0
        %3887 = vmatpush1.msra.mxu0 0.0
        %3888 = vmatprep.subr.mxu0 0.0
        %3889 = vmatpush1.msra.mxu0 0.0
        %3890 = vmatprep.subr.mxu0 0.0
        %3891 = vmatpush1.msra.mxu0 0.0
        %3892 = vmatprep.subr.mxu0 0.0
        %3893 = vmatpush1.msra.mxu0 0.0
        %3894 = vmatprep.subr.mxu0 0.0
        %3895 = vmatpush1.msra.mxu0 0.0
        %3896 = vmatprep.subr.mxu0 0.0
        %3897 = vmatpush1.msra.mxu0 0.0
        %3898 = vmatprep.subr.mxu0 0.0
        %3899 = vmatpush1.msra.mxu0 0.0
        %3900 = vmatprep.subr.mxu0 0.0
        %3901 = vmatpush1.msra.mxu0 0.0
        %3902 = vmatprep.subr.mxu0 0.0
        %3903 = vmatpush1.msra.mxu0 0.0
        %3904 = vmatprep.subr.mxu0 0.0
        %3905 = vmatpush1.msra.mxu0 0.0
        %3906 = vmatprep.subr.mxu0 0.0
        %3907 = vmatpush1.msra.mxu0 0.0
        %3908 = vmatprep.subr.mxu0 0.0
        %3909 = vmatpush1.msra.mxu0 0.0
        %3910 = vmatprep.subr.mxu0 0.0
        %3911 = vmatpush1.msra.mxu0 0.0
        %3912 = vmatprep.subr.mxu0 0.0
        %3913 = vmatpush1.msra.mxu0 0.0
        %3914 = vmatprep.subr.mxu0 0.0
        %3915 = vmatpush1.msra.mxu0 0.0
        %3916 = vmatprep.subr.mxu0 0.0
        %3917 = vmatpush1.msra.mxu0 0.0
        %3918 = vmatprep.mubr.f32.mxu0 0.0
        %3919 = vmatmul.mubr.f32.gmra.mrb[0].mxu0 %v3752
        %v3920 = vpop.f32.mrb[0].mxu0
        %v3921 = vadd.f32 0.0, %v3920
        %v3922 = vpop.f32.mrb[0].mxu0
        %3923 = vdwg.mxu0
        %v3925 = vrot.slane %v3921, 1
        %v3926 = vrot.slane %v3921, 2
        %v3927 = vrot.slane %v3921, 3
        %v3932 = vadd.f32 %v3850, %v3921
        %v3933 = vadd.f32 %v3851, %v3925
        %v3934 = vadd.f32 %v3852, %v3926
        %v3935 = vadd.f32 %v3853, %v3927
        %v3936 = vxor.u32 %v3932, 2147483648
        %v3937 = vxor.u32 %v3933, 2147483648
        %v3938 = vxor.u32 %v3934, 2147483648
        %v3939 = vxor.u32 %v3935, 2147483648
        %v3940 = vmul.f32 %v3936, 1.442695
        %v3941 = vpow.pop %v3940
        %v3942 = vmul.f32 %v3937, 1.442695
        %v3943 = vpow.pop %v3942
        %v3944 = vmul.f32 %v3938, 1.442695
        %v3945 = vpow.pop %v3944
        %v3946 = vmul.f32 %v3939, 1.442695
        %v3947 = vpow.pop %v3946
        %v3948 = vadd.f32 %v3941, 1.0
        %v3949 = vadd.f32 %v3943, 1.0
        %v3950 = vadd.f32 %v3945, 1.0
        %v3951 = vadd.f32 %v3947, 1.0
        %v3952 = vrcp.pop %v3948
        %v3953 = vmul.f32 1.0, %v3952
        %v3954 = vrcp.pop %v3949
        %v3955 = vmul.f32 1.0, %v3954
        %v3956 = vrcp.pop %v3950
        %v3957 = vmul.f32 1.0, %v3956
        %v3958 = vrcp.pop %v3951
        %v3959 = vmul.f32 1.0, %v3958
        %v3960 = vtanh.pop %v3932
        %v3961 = vtanh.pop %v3933
        %v3962 = vtanh.pop %v3934
        %v3963 = vtanh.pop %v3935
        %v3964 = vmul.f32 %v3953, %v3637
        %v3965 = vmul.f32 %v3955, %v3638
        %v3966 = vmul.f32 %v3957, %v3639
        %v3967 = vmul.f32 %v3959, %v3640
        %3972 = vrot.lane.b32.xlu0 %v3960, 64
        %v3973 = vpop.permute.xlu0 %3972
        %3974 = vrot.lane.b32.xlu0 %v3961, 64
        %v3975 = vpop.permute.xlu0 %3974
        %3976 = vrot.lane.b32.xlu0 %v3962, 64
        %v3977 = vpop.permute.xlu0 %3976
        %3978 = vrot.lane.b32.xlu0 %v3963, 64
        %v3979 = vpop.permute.xlu0 %3978
        %v3984 = vmul.f32 %v3953, %v3973
        %v3985 = vmul.f32 %v3955, %v3975
        %v3986 = vmul.f32 %v3957, %v3977
        %v3987 = vmul.f32 %v3959, %v3979
        %3992 = vrot.lane.b32.xlu0 %v3984, 32
        %v3993 = vpop.permute.xlu0 %3992
        %3994 = vrot.lane.b32.xlu0 %v3985, 32
        %v3995 = vpop.permute.xlu0 %3994
        %3996 = vrot.lane.b32.xlu0 %v3986, 32
        %v3997 = vpop.permute.xlu0 %3996
        %3998 = vrot.lane.b32.xlu0 %v3987, 32
        %v3999 = vpop.permute.xlu0 %3998
        %v4004 = vadd.f32 %v3964, %v3993
        %v4005 = vadd.f32 %v3965, %v3995
        %v4006 = vadd.f32 %v3966, %v3997
        %v4007 = vadd.f32 %v3967, %v3999
        %v4008 = vtanh.pop %v4004
        %v4009 = vtanh.pop %v4005
        %v4010 = vtanh.pop %v4006
        %v4011 = vtanh.pop %v4007
        %4016 = vrot.lane.b32.xlu0 %v4008, 64
        %v4017 = vpop.permute.xlu0 %4016
        %4018 = vrot.lane.b32.xlu0 %v4009, 64
        %v4019 = vpop.permute.xlu0 %4018
        %4020 = vrot.lane.b32.xlu0 %v4010, 64
        %v4021 = vpop.permute.xlu0 %4020
        %4022 = vrot.lane.b32.xlu0 %v4011, 64
        %v4023 = vpop.permute.xlu0 %4022
        %v4028 = vmul.f32 %v3953, %v4017
        %v4029 = vmul.f32 %v3955, %v4019
        %v4030 = vmul.f32 %v3957, %v4021
        %v4031 = vmul.f32 %v3959, %v4023
        %4033 = vrot.lane.b32.xlu0 %v3848, 32
        %v4034 = vpop.permute.xlu0 %4033
        %v4035 = vsel %vm3112, %v4034, 0
        %4037 = vmatprep.subr.mxu0 0.0
        %4038 = vmatpush1.msra.mxu0 %v2956
        %4039 = vmatprep.subr.mxu0 0.0
        %4040 = vmatpush1.msra.mxu0 %v2957
        %4041 = vmatprep.subr.mxu0 0.0
        %4042 = vmatpush1.msra.mxu0 %v2958
        %4043 = vmatprep.subr.mxu0 0.0
        %4044 = vmatpush1.msra.mxu0 %v2959
        %4045 = vmatprep.subr.mxu0 0.0
        %4046 = vmatpush1.msra.mxu0 0.0
        %4047 = vmatprep.subr.mxu0 0.0
        %4048 = vmatpush1.msra.mxu0 0.0
        %4049 = vmatprep.subr.mxu0 0.0
        %4050 = vmatpush1.msra.mxu0 0.0
        %4051 = vmatprep.subr.mxu0 0.0
        %4052 = vmatpush1.msra.mxu0 0.0
        %4053 = vmatprep.subr.mxu0 0.0
        %4054 = vmatpush1.msra.mxu0 0.0
        %4055 = vmatprep.subr.mxu0 0.0
        %4056 = vmatpush1.msra.mxu0 0.0
        %4057 = vmatprep.subr.mxu0 0.0
        %4058 = vmatpush1.msra.mxu0 0.0
        %4059 = vmatprep.subr.mxu0 0.0
        %4060 = vmatpush1.msra.mxu0 0.0
        %4061 = vmatprep.subr.mxu0 0.0
        %4062 = vmatpush1.msra.mxu0 0.0
        %4063 = vmatprep.subr.mxu0 0.0
        %4064 = vmatpush1.msra.mxu0 0.0
        %4065 = vmatprep.subr.mxu0 0.0
        %4066 = vmatpush1.msra.mxu0 0.0
        %4067 = vmatprep.subr.mxu0 0.0
        %4068 = vmatpush1.msra.mxu0 0.0
        %4069 = vmatprep.subr.mxu0 0.0
        %4070 = vmatpush1.msra.mxu0 0.0
        %4071 = vmatprep.subr.mxu0 0.0
        %4072 = vmatpush1.msra.mxu0 0.0
        %4073 = vmatprep.subr.mxu0 0.0
        %4074 = vmatpush1.msra.mxu0 0.0
        %4075 = vmatprep.subr.mxu0 0.0
        %4076 = vmatpush1.msra.mxu0 0.0
        %4077 = vmatprep.subr.mxu0 0.0
        %4078 = vmatpush1.msra.mxu0 0.0
        %4079 = vmatprep.subr.mxu0 0.0
        %4080 = vmatpush1.msra.mxu0 0.0
        %4081 = vmatprep.subr.mxu0 0.0
        %4082 = vmatpush1.msra.mxu0 0.0
        %4083 = vmatprep.subr.mxu0 0.0
        %4084 = vmatpush1.msra.mxu0 0.0
        %4085 = vmatprep.subr.mxu0 0.0
        %4086 = vmatpush1.msra.mxu0 0.0
        %4087 = vmatprep.subr.mxu0 0.0
        %4088 = vmatpush1.msra.mxu0 0.0
        %4089 = vmatprep.subr.mxu0 0.0
        %4090 = vmatpush1.msra.mxu0 0.0
        %4091 = vmatprep.subr.mxu0 0.0
        %4092 = vmatpush1.msra.mxu0 0.0
        %4093 = vmatprep.subr.mxu0 0.0
        %4094 = vmatpush1.msra.mxu0 0.0
        %4095 = vmatprep.subr.mxu0 0.0
        %4096 = vmatpush1.msra.mxu0 0.0
        %4097 = vmatprep.subr.mxu0 0.0
        %4098 = vmatpush1.msra.mxu0 0.0
        %4099 = vmatprep.subr.mxu0 0.0
        %4100 = vmatpush1.msra.mxu0 0.0
        %4101 = vmatprep.mubr.f32.mxu0 0.0
        %4102 = vmatmul.mubr.f32.gmra.mrb[0].mxu0 %v4035
        %v4103 = vpop.f32.mrb[0].mxu0
        %v4104 = vadd.f32 0.0, %v4103
        %v4105 = vpop.f32.mrb[0].mxu0
        %4106 = vdwg.mxu0
        %v4111 = vrot.slane %v4029, 7
        %v4112 = vsel %vm3369, %v4111, %v4028
        %v4113 = vrot.slane %v4030, 6
        %v4114 = vsel %vm3372, %v4113, %v4112
        %v4115 = vrot.slane %v4031, 5
        %v4116 = vsel %vm3375, %v4115, %v4114
        %4117 = vrot.lane.b32.xlu0 %v4116, 32
        %v4118 = vpop.permute.xlu0 %4117
        %v4119 = vsel %vm3112, %v4118, 0
        %4121 = vmatprep.subr.mxu0 0.0
        %4122 = vmatpush1.msra.mxu0 %v2948
        %4123 = vmatprep.subr.mxu0 0.0
        %4124 = vmatpush1.msra.mxu0 %v2949
        %4125 = vmatprep.subr.mxu0 0.0
        %4126 = vmatpush1.msra.mxu0 %v2950
        %4127 = vmatprep.subr.mxu0 0.0
        %4128 = vmatpush1.msra.mxu0 %v2951
        %4129 = vmatprep.subr.mxu0 0.0
        %4130 = vmatpush1.msra.mxu0 0.0
        %4131 = vmatprep.subr.mxu0 0.0
        %4132 = vmatpush1.msra.mxu0 0.0
        %4133 = vmatprep.subr.mxu0 0.0
        %4134 = vmatpush1.msra.mxu0 0.0
        %4135 = vmatprep.subr.mxu0 0.0
        %4136 = vmatpush1.msra.mxu0 0.0
        %4137 = vmatprep.subr.mxu0 0.0
        %4138 = vmatpush1.msra.mxu0 0.0
        %4139 = vmatprep.subr.mxu0 0.0
        %4140 = vmatpush1.msra.mxu0 0.0
        %4141 = vmatprep.subr.mxu0 0.0
        %4142 = vmatpush1.msra.mxu0 0.0
        %4143 = vmatprep.subr.mxu0 0.0
        %4144 = vmatpush1.msra.mxu0 0.0
        %4145 = vmatprep.subr.mxu0 0.0
        %4146 = vmatpush1.msra.mxu0 0.0
        %4147 = vmatprep.subr.mxu0 0.0
        %4148 = vmatpush1.msra.mxu0 0.0
        %4149 = vmatprep.subr.mxu0 0.0
        %4150 = vmatpush1.msra.mxu0 0.0
        %4151 = vmatprep.subr.mxu0 0.0
        %4152 = vmatpush1.msra.mxu0 0.0
        %4153 = vmatprep.subr.mxu0 0.0
        %4154 = vmatpush1.msra.mxu0 0.0
        %4155 = vmatprep.subr.mxu0 0.0
        %4156 = vmatpush1.msra.mxu0 0.0
        %4157 = vmatprep.subr.mxu0 0.0
        %4158 = vmatpush1.msra.mxu0 0.0
        %4159 = vmatprep.subr.mxu0 0.0
        %4160 = vmatpush1.msra.mxu0 0.0
        %4161 = vmatprep.subr.mxu0 0.0
        %4162 = vmatpush1.msra.mxu0 0.0
        %4163 = vmatprep.subr.mxu0 0.0
        %4164 = vmatpush1.msra.mxu0 0.0
        %4165 = vmatprep.subr.mxu0 0.0
        %4166 = vmatpush1.msra.mxu0 0.0
        %4167 = vmatprep.subr.mxu0 0.0
        %4168 = vmatpush1.msra.mxu0 0.0
        %4169 = vmatprep.subr.mxu0 0.0
        %4170 = vmatpush1.msra.mxu0 0.0
        %4171 = vmatprep.subr.mxu0 0.0
        %4172 = vmatpush1.msra.mxu0 0.0
        %4173 = vmatprep.subr.mxu0 0.0
        %4174 = vmatpush1.msra.mxu0 0.0
        %4175 = vmatprep.subr.mxu0 0.0
        %4176 = vmatpush1.msra.mxu0 0.0
        %4177 = vmatprep.subr.mxu0 0.0
        %4178 = vmatpush1.msra.mxu0 0.0
        %4179 = vmatprep.subr.mxu0 0.0
        %4180 = vmatpush1.msra.mxu0 0.0
        %4181 = vmatprep.subr.mxu0 0.0
        %4182 = vmatpush1.msra.mxu0 0.0
        %4183 = vmatprep.subr.mxu0 0.0
        %4184 = vmatpush1.msra.mxu0 0.0
        %4185 = vmatprep.mubr.f32.mxu0 0.0
        %4186 = vmatmul.mubr.f32.gmra.mrb[0].mxu0 %v4119
        %v4187 = vpop.f32.mrb[0].mxu0
        %v4188 = vadd.f32 %v4104, %v4187
        %v4189 = vpop.f32.mrb[0].mxu0
        %4190 = vdwg.mxu0
        %v4191 = vadd.f32 %v4188, %v3455
        %v4192 = vxor.u32 %v4191, 2147483648
        %v4193 = vmul.f32 %v4192, 1.442695
        %v4194 = vpow.pop %v4193
        %v4195 = vadd.f32 %v4194, 1.0
        %v4196 = vrcp.pop %v4195
        %v4197 = vmul.f32 1.0, %v4196
        %v4198 = vtanh.pop %v4191
        %v4199 = vmul.f32 %v4197, %v3842
        %4201 = vrot.lane.b32.xlu0 %v4198, 64
        %v4202 = vpop.permute.xlu0 %4201
        %v4204 = vmul.f32 %v4197, %v4202
        %4206 = vrot.lane.b32.xlu0 %v4204, 32
        %v4207 = vpop.permute.xlu0 %4206
        %v4209 = vadd.f32 %v4199, %v4207
        %v4210 = vtanh.pop %v4209
        %4212 = vrot.lane.b32.xlu0 %v4210, 64
        %v4213 = vpop.permute.xlu0 %4212
        %v4215 = vmul.f32 %v4197, %v4213
        %v4216 = vadd.f32 %v3849, %v4215
        %v4217 = vld [vmem:[#allocation3 + $0x3] sm:$0x1]
        %v4218 = vld [vmem:[#allocation3 + $0x13] sm:$0x1]
        %v4219 = vld [vmem:[#allocation3 + $0x23] sm:$0x1]
        %v4220 = vld [vmem:[#allocation3 + $0x33] sm:$0x1]
        %4221 = vmatprep.subr.mxu0 0.0
        %4222 = vmatpush1.msra.mxu0 %v2952
        %4223 = vmatprep.subr.mxu0 0.0
        %4224 = vmatpush1.msra.mxu0 %v2953
        %4225 = vmatprep.subr.mxu0 0.0
        %4226 = vmatpush1.msra.mxu0 %v2954
        %4227 = vmatprep.subr.mxu0 0.0
        %4228 = vmatpush1.msra.mxu0 %v2955
        %4229 = vmatprep.subr.mxu0 0.0
        %4230 = vmatpush1.msra.mxu0 0.0
        %4231 = vmatprep.subr.mxu0 0.0
        %4232 = vmatpush1.msra.mxu0 0.0
        %4233 = vmatprep.subr.mxu0 0.0
        %4234 = vmatpush1.msra.mxu0 0.0
        %4235 = vmatprep.subr.mxu0 0.0
        %4236 = vmatpush1.msra.mxu0 0.0
        %4237 = vmatprep.subr.mxu0 0.0
        %4238 = vmatpush1.msra.mxu0 0.0
        %4239 = vmatprep.subr.mxu0 0.0
        %4240 = vmatpush1.msra.mxu0 0.0
        %4241 = vmatprep.subr.mxu0 0.0
        %4242 = vmatpush1.msra.mxu0 0.0
        %4243 = vmatprep.subr.mxu0 0.0
        %4244 = vmatpush1.msra.mxu0 0.0
        %4245 = vmatprep.subr.mxu0 0.0
        %4246 = vmatpush1.msra.mxu0 0.0
        %4247 = vmatprep.subr.mxu0 0.0
        %4248 = vmatpush1.msra.mxu0 0.0
        %4249 = vmatprep.subr.mxu0 0.0
        %4250 = vmatpush1.msra.mxu0 0.0
        %4251 = vmatprep.subr.mxu0 0.0
        %4252 = vmatpush1.msra.mxu0 0.0
        %4253 = vmatprep.subr.mxu0 0.0
        %4254 = vmatpush1.msra.mxu0 0.0
        %4255 = vmatprep.subr.mxu0 0.0
        %4256 = vmatpush1.msra.mxu0 0.0
        %4257 = vmatprep.subr.mxu0 0.0
        %4258 = vmatpush1.msra.mxu0 0.0
        %4259 = vmatprep.subr.mxu0 0.0
        %4260 = vmatpush1.msra.mxu0 0.0
        %4261 = vmatprep.subr.mxu0 0.0
        %4262 = vmatpush1.msra.mxu0 0.0
        %4263 = vmatprep.subr.mxu0 0.0
        %4264 = vmatpush1.msra.mxu0 0.0
        %4265 = vmatprep.subr.mxu0 0.0
        %4266 = vmatpush1.msra.mxu0 0.0
        %4267 = vmatprep.subr.mxu0 0.0
        %4268 = vmatpush1.msra.mxu0 0.0
        %4269 = vmatprep.subr.mxu0 0.0
        %4270 = vmatpush1.msra.mxu0 0.0
        %4271 = vmatprep.subr.mxu0 0.0
        %4272 = vmatpush1.msra.mxu0 0.0
        %4273 = vmatprep.subr.mxu0 0.0
        %4274 = vmatpush1.msra.mxu0 0.0
        %4275 = vmatprep.subr.mxu0 0.0
        %4276 = vmatpush1.msra.mxu0 0.0
        %4277 = vmatprep.subr.mxu0 0.0
        %4278 = vmatpush1.msra.mxu0 0.0
        %4279 = vmatprep.subr.mxu0 0.0
        %4280 = vmatpush1.msra.mxu0 0.0
        %4281 = vmatprep.subr.mxu0 0.0
        %4282 = vmatpush1.msra.mxu0 0.0
        %4283 = vmatprep.subr.mxu0 0.0
        %4284 = vmatpush1.msra.mxu0 0.0
        %4285 = vmatprep.mubr.f32.mxu0 0.0
        %4286 = vmatmul.mubr.f32.gmra.mrb[0].mxu0 %v4119
        %v4287 = vpop.f32.mrb[0].mxu0
        %v4288 = vadd.f32 0.0, %v4287
        %v4289 = vpop.f32.mrb[0].mxu0
        %4290 = vdwg.mxu0
        %v4292 = vrot.slane %v4288, 1
        %v4293 = vrot.slane %v4288, 2
        %v4294 = vrot.slane %v4288, 3
        %v4299 = vadd.f32 %v4217, %v4288
        %v4300 = vadd.f32 %v4218, %v4292
        %v4301 = vadd.f32 %v4219, %v4293
        %v4302 = vadd.f32 %v4220, %v4294
        %v4303 = vxor.u32 %v4299, 2147483648
        %v4304 = vxor.u32 %v4300, 2147483648
        %v4305 = vxor.u32 %v4301, 2147483648
        %v4306 = vxor.u32 %v4302, 2147483648
        %v4307 = vmul.f32 %v4303, 1.442695
        %v4308 = vpow.pop %v4307
        %v4309 = vmul.f32 %v4304, 1.442695
        %v4310 = vpow.pop %v4309
        %v4311 = vmul.f32 %v4305, 1.442695
        %v4312 = vpow.pop %v4311
        %v4313 = vmul.f32 %v4306, 1.442695
        %v4314 = vpow.pop %v4313
        %v4315 = vadd.f32 %v4308, 1.0
        %v4316 = vadd.f32 %v4310, 1.0
        %v4317 = vadd.f32 %v4312, 1.0
        %v4318 = vadd.f32 %v4314, 1.0
        %v4319 = vrcp.pop %v4315
        %v4320 = vmul.f32 1.0, %v4319
        %v4321 = vrcp.pop %v4316
        %v4322 = vmul.f32 1.0, %v4321
        %v4323 = vrcp.pop %v4317
        %v4324 = vmul.f32 1.0, %v4323
        %v4325 = vrcp.pop %v4318
        %v4326 = vmul.f32 1.0, %v4325
        %v4327 = vtanh.pop %v4299
        %v4328 = vtanh.pop %v4300
        %v4329 = vtanh.pop %v4301
        %v4330 = vtanh.pop %v4302
        %v4331 = vmul.f32 %v4320, %v4004
        %v4332 = vmul.f32 %v4322, %v4005
        %v4333 = vmul.f32 %v4324, %v4006
        %v4334 = vmul.f32 %v4326, %v4007
        %4339 = vrot.lane.b32.xlu0 %v4327, 64
        %v4340 = vpop.permute.xlu0 %4339
        %4341 = vrot.lane.b32.xlu0 %v4328, 64
        %v4342 = vpop.permute.xlu0 %4341
        %4343 = vrot.lane.b32.xlu0 %v4329, 64
        %v4344 = vpop.permute.xlu0 %4343
        %4345 = vrot.lane.b32.xlu0 %v4330, 64
        %v4346 = vpop.permute.xlu0 %4345
        %v4351 = vmul.f32 %v4320, %v4340
        %v4352 = vmul.f32 %v4322, %v4342
        %v4353 = vmul.f32 %v4324, %v4344
        %v4354 = vmul.f32 %v4326, %v4346
        %4359 = vrot.lane.b32.xlu0 %v4351, 32
        %v4360 = vpop.permute.xlu0 %4359
        %4361 = vrot.lane.b32.xlu0 %v4352, 32
        %v4362 = vpop.permute.xlu0 %4361
        %4363 = vrot.lane.b32.xlu0 %v4353, 32
        %v4364 = vpop.permute.xlu0 %4363
        %4365 = vrot.lane.b32.xlu0 %v4354, 32
        %v4366 = vpop.permute.xlu0 %4365
        %v4371 = vadd.f32 %v4331, %v4360
        %v4372 = vadd.f32 %v4332, %v4362
        %v4373 = vadd.f32 %v4333, %v4364
        %v4374 = vadd.f32 %v4334, %v4366
        %v4375 = vtanh.pop %v4371
        %v4376 = vtanh.pop %v4372
        %v4377 = vtanh.pop %v4373
        %v4378 = vtanh.pop %v4374
        %4383 = vrot.lane.b32.xlu0 %v4375, 64
        %v4384 = vpop.permute.xlu0 %4383
        %4385 = vrot.lane.b32.xlu0 %v4376, 64
        %v4386 = vpop.permute.xlu0 %4385
        %4387 = vrot.lane.b32.xlu0 %v4377, 64
        %v4388 = vpop.permute.xlu0 %4387
        %4389 = vrot.lane.b32.xlu0 %v4378, 64
        %v4390 = vpop.permute.xlu0 %4389
        %v4395 = vmul.f32 %v4320, %v4384
        %v4396 = vmul.f32 %v4322, %v4386
        %v4397 = vmul.f32 %v4324, %v4388
        %v4398 = vmul.f32 %v4326, %v4390
        %4400 = vrot.lane.b32.xlu0 %v4215, 32
        %v4401 = vpop.permute.xlu0 %4400
        %v4402 = vsel %vm3112, %v4401, 0
        %4404 = vmatprep.subr.mxu0 0.0
        %4405 = vmatpush1.msra.mxu0 %v2956
        %4406 = vmatprep.subr.mxu0 0.0
        %4407 = vmatpush1.msra.mxu0 %v2957
        %4408 = vmatprep.subr.mxu0 0.0
        %4409 = vmatpush1.msra.mxu0 %v2958
        %4410 = vmatprep.subr.mxu0 0.0
        %4411 = vmatpush1.msra.mxu0 %v2959
        %4412 = vmatprep.subr.mxu0 0.0
        %4413 = vmatpush1.msra.mxu0 0.0
        %4414 = vmatprep.subr.mxu0 0.0
        %4415 = vmatpush1.msra.mxu0 0.0
        %4416 = vmatprep.subr.mxu0 0.0
        %4417 = vmatpush1.msra.mxu0 0.0
        %4418 = vmatprep.subr.mxu0 0.0
        %4419 = vmatpush1.msra.mxu0 0.0
        %4420 = vmatprep.subr.mxu0 0.0
        %4421 = vmatpush1.msra.mxu0 0.0
        %4422 = vmatprep.subr.mxu0 0.0
        %4423 = vmatpush1.msra.mxu0 0.0
        %4424 = vmatprep.subr.mxu0 0.0
        %4425 = vmatpush1.msra.mxu0 0.0
        %4426 = vmatprep.subr.mxu0 0.0
        %4427 = vmatpush1.msra.mxu0 0.0
        %4428 = vmatprep.subr.mxu0 0.0
        %4429 = vmatpush1.msra.mxu0 0.0
        %4430 = vmatprep.subr.mxu0 0.0
        %4431 = vmatpush1.msra.mxu0 0.0
        %4432 = vmatprep.subr.mxu0 0.0
        %4433 = vmatpush1.msra.mxu0 0.0
        %4434 = vmatprep.subr.mxu0 0.0
        %4435 = vmatpush1.msra.mxu0 0.0
        %4436 = vmatprep.subr.mxu0 0.0
        %4437 = vmatpush1.msra.mxu0 0.0
        %4438 = vmatprep.subr.mxu0 0.0
        %4439 = vmatpush1.msra.mxu0 0.0
        %4440 = vmatprep.subr.mxu0 0.0
        %4441 = vmatpush1.msra.mxu0 0.0
        %4442 = vmatprep.subr.mxu0 0.0
        %4443 = vmatpush1.msra.mxu0 0.0
        %4444 = vmatprep.subr.mxu0 0.0
        %4445 = vmatpush1.msra.mxu0 0.0
        %4446 = vmatprep.subr.mxu0 0.0
        %4447 = vmatpush1.msra.mxu0 0.0
        %4448 = vmatprep.subr.mxu0 0.0
        %4449 = vmatpush1.msra.mxu0 0.0
        %4450 = vmatprep.subr.mxu0 0.0
        %4451 = vmatpush1.msra.mxu0 0.0
        %4452 = vmatprep.subr.mxu0 0.0
        %4453 = vmatpush1.msra.mxu0 0.0
        %4454 = vmatprep.subr.mxu0 0.0
        %4455 = vmatpush1.msra.mxu0 0.0
        %4456 = vmatprep.subr.mxu0 0.0
        %4457 = vmatpush1.msra.mxu0 0.0
        %4458 = vmatprep.subr.mxu0 0.0
        %4459 = vmatpush1.msra.mxu0 0.0
        %4460 = vmatprep.subr.mxu0 0.0
        %4461 = vmatpush1.msra.mxu0 0.0
        %4462 = vmatprep.subr.mxu0 0.0
        %4463 = vmatpush1.msra.mxu0 0.0
        %4464 = vmatprep.subr.mxu0 0.0
        %4465 = vmatpush1.msra.mxu0 0.0
        %4466 = vmatprep.subr.mxu0 0.0
        %4467 = vmatpush1.msra.mxu0 0.0
        %4468 = vmatprep.mubr.f32.mxu0 0.0
        %4469 = vmatmul.mubr.f32.gmra.mrb[0].mxu0 %v4402
        %v4470 = vpop.f32.mrb[0].mxu0
        %v4471 = vadd.f32 0.0, %v4470
        %v4472 = vpop.f32.mrb[0].mxu0
        %4473 = vdwg.mxu0
        %v4478 = vrot.slane %v4396, 7
        %v4479 = vsel %vm3369, %v4478, %v4395
        %v4480 = vrot.slane %v4397, 6
        %v4481 = vsel %vm3372, %v4480, %v4479
        %v4482 = vrot.slane %v4398, 5
        %v4483 = vsel %vm3375, %v4482, %v4481
        %4484 = vrot.lane.b32.xlu0 %v4483, 32
        %v4485 = vpop.permute.xlu0 %4484
        %v4486 = vsel %vm3112, %v4485, 0
        %4488 = vmatprep.subr.mxu0 0.0
        %4489 = vmatpush1.msra.mxu0 %v2948
        %4490 = vmatprep.subr.mxu0 0.0
        %4491 = vmatpush1.msra.mxu0 %v2949
        %4492 = vmatprep.subr.mxu0 0.0
        %4493 = vmatpush1.msra.mxu0 %v2950
        %4494 = vmatprep.subr.mxu0 0.0
        %4495 = vmatpush1.msra.mxu0 %v2951
        %4496 = vmatprep.subr.mxu0 0.0
        %4497 = vmatpush1.msra.mxu0 0.0
        %4498 = vmatprep.subr.mxu0 0.0
        %4499 = vmatpush1.msra.mxu0 0.0
        %4500 = vmatprep.subr.mxu0 0.0
        %4501 = vmatpush1.msra.mxu0 0.0
        %4502 = vmatprep.subr.mxu0 0.0
        %4503 = vmatpush1.msra.mxu0 0.0
        %4504 = vmatprep.subr.mxu0 0.0
        %4505 = vmatpush1.msra.mxu0 0.0
        %4506 = vmatprep.subr.mxu0 0.0
        %4507 = vmatpush1.msra.mxu0 0.0
        %4508 = vmatprep.subr.mxu0 0.0
        %4509 = vmatpush1.msra.mxu0 0.0
        %4510 = vmatprep.subr.mxu0 0.0
        %4511 = vmatpush1.msra.mxu0 0.0
        %4512 = vmatprep.subr.mxu0 0.0
        %4513 = vmatpush1.msra.mxu0 0.0
        %4514 = vmatprep.subr.mxu0 0.0
        %4515 = vmatpush1.msra.mxu0 0.0
        %4516 = vmatprep.subr.mxu0 0.0
        %4517 = vmatpush1.msra.mxu0 0.0
        %4518 = vmatprep.subr.mxu0 0.0
        %4519 = vmatpush1.msra.mxu0 0.0
        %4520 = vmatprep.subr.mxu0 0.0
        %4521 = vmatpush1.msra.mxu0 0.0
        %4522 = vmatprep.subr.mxu0 0.0
        %4523 = vmatpush1.msra.mxu0 0.0
        %4524 = vmatprep.subr.mxu0 0.0
        %4525 = vmatpush1.msra.mxu0 0.0
        %4526 = vmatprep.subr.mxu0 0.0
        %4527 = vmatpush1.msra.mxu0 0.0
        %4528 = vmatprep.subr.mxu0 0.0
        %4529 = vmatpush1.msra.mxu0 0.0
        %4530 = vmatprep.subr.mxu0 0.0
        %4531 = vmatpush1.msra.mxu0 0.0
        %4532 = vmatprep.subr.mxu0 0.0
        %4533 = vmatpush1.msra.mxu0 0.0
        %4534 = vmatprep.subr.mxu0 0.0
        %4535 = vmatpush1.msra.mxu0 0.0
        %4536 = vmatprep.subr.mxu0 0.0
        %4537 = vmatpush1.msra.mxu0 0.0
        %4538 = vmatprep.subr.mxu0 0.0
        %4539 = vmatpush1.msra.mxu0 0.0
        %4540 = vmatprep.subr.mxu0 0.0
        %4541 = vmatpush1.msra.mxu0 0.0
        %4542 = vmatprep.subr.mxu0 0.0
        %4543 = vmatpush1.msra.mxu0 0.0
        %4544 = vmatprep.subr.mxu0 0.0
        %4545 = vmatpush1.msra.mxu0 0.0
        %4546 = vmatprep.subr.mxu0 0.0
        %4547 = vmatpush1.msra.mxu0 0.0
        %4548 = vmatprep.subr.mxu0 0.0
        %4549 = vmatpush1.msra.mxu0 0.0
        %4550 = vmatprep.subr.mxu0 0.0
        %4551 = vmatpush1.msra.mxu0 0.0
        %4552 = vmatprep.mubr.f32.mxu0 0.0
        %4553 = vmatmul.mubr.f32.gmra.mrb[0].mxu0 %v4486
        %v4554 = vpop.f32.mrb[0].mxu0
        %v4555 = vadd.f32 %v4471, %v4554
        %v4556 = vpop.f32.mrb[0].mxu0
        %4557 = vdwg.mxu0
        %v4558 = vadd.f32 %v4555, %v3455
        %v4559 = vxor.u32 %v4558, 2147483648
        %v4560 = vmul.f32 %v4559, 1.442695
        %v4561 = vpow.pop %v4560
        %v4562 = vadd.f32 %v4561, 1.0
        %v4563 = vrcp.pop %v4562
        %v4564 = vmul.f32 1.0, %v4563
        %v4565 = vtanh.pop %v4558
        %v4566 = vmul.f32 %v4564, %v4209
        %4568 = vrot.lane.b32.xlu0 %v4565, 64
        %v4569 = vpop.permute.xlu0 %4568
        %v4571 = vmul.f32 %v4564, %v4569
        %4573 = vrot.lane.b32.xlu0 %v4571, 32
        %v4574 = vpop.permute.xlu0 %4573
        %v4576 = vadd.f32 %v4566, %v4574
        %v4577 = vtanh.pop %v4576
        %4579 = vrot.lane.b32.xlu0 %v4577, 64
        %v4580 = vpop.permute.xlu0 %4579
        %v4582 = vmul.f32 %v4564, %v4580
        %v4583 = vadd.f32 %v4216, %v4582
        %v4584 = vld [vmem:[#allocation3 + $0x4] sm:$0x1]
        %v4585 = vld [vmem:[#allocation3 + $0x14] sm:$0x1]
        %v4586 = vld [vmem:[#allocation3 + $0x24] sm:$0x1]
        %v4587 = vld [vmem:[#allocation3 + $0x34] sm:$0x1]
        %4588 = vmatprep.subr.mxu0 0.0
        %4589 = vmatpush1.msra.mxu0 %v2952
        %4590 = vmatprep.subr.mxu0 0.0
        %4591 = vmatpush1.msra.mxu0 %v2953
        %4592 = vmatprep.subr.mxu0 0.0
        %4593 = vmatpush1.msra.mxu0 %v2954
        %4594 = vmatprep.subr.mxu0 0.0
        %4595 = vmatpush1.msra.mxu0 %v2955
        %4596 = vmatprep.subr.mxu0 0.0
        %4597 = vmatpush1.msra.mxu0 0.0
        %4598 = vmatprep.subr.mxu0 0.0
        %4599 = vmatpush1.msra.mxu0 0.0
        %4600 = vmatprep.subr.mxu0 0.0
        %4601 = vmatpush1.msra.mxu0 0.0
        %4602 = vmatprep.subr.mxu0 0.0
        %4603 = vmatpush1.msra.mxu0 0.0
        %4604 = vmatprep.subr.mxu0 0.0
        %4605 = vmatpush1.msra.mxu0 0.0
        %4606 = vmatprep.subr.mxu0 0.0
        %4607 = vmatpush1.msra.mxu0 0.0
        %4608 = vmatprep.subr.mxu0 0.0
        %4609 = vmatpush1.msra.mxu0 0.0
        %4610 = vmatprep.subr.mxu0 0.0
        %4611 = vmatpush1.msra.mxu0 0.0
        %4612 = vmatprep.subr.mxu0 0.0
        %4613 = vmatpush1.msra.mxu0 0.0
        %4614 = vmatprep.subr.mxu0 0.0
        %4615 = vmatpush1.msra.mxu0 0.0
        %4616 = vmatprep.subr.mxu0 0.0
        %4617 = vmatpush1.msra.mxu0 0.0
        %4618 = vmatprep.subr.mxu0 0.0
        %4619 = vmatpush1.msra.mxu0 0.0
        %4620 = vmatprep.subr.mxu0 0.0
        %4621 = vmatpush1.msra.mxu0 0.0
        %4622 = vmatprep.subr.mxu0 0.0
        %4623 = vmatpush1.msra.mxu0 0.0
        %4624 = vmatprep.subr.mxu0 0.0
        %4625 = vmatpush1.msra.mxu0 0.0
        %4626 = vmatprep.subr.mxu0 0.0
        %4627 = vmatpush1.msra.mxu0 0.0
        %4628 = vmatprep.subr.mxu0 0.0
        %4629 = vmatpush1.msra.mxu0 0.0
        %4630 = vmatprep.subr.mxu0 0.0
        %4631 = vmatpush1.msra.mxu0 0.0
        %4632 = vmatprep.subr.mxu0 0.0
        %4633 = vmatpush1.msra.mxu0 0.0
        %4634 = vmatprep.subr.mxu0 0.0
        %4635 = vmatpush1.msra.mxu0 0.0
        %4636 = vmatprep.subr.mxu0 0.0
        %4637 = vmatpush1.msra.mxu0 0.0
        %4638 = vmatprep.subr.mxu0 0.0
        %4639 = vmatpush1.msra.mxu0 0.0
        %4640 = vmatprep.subr.mxu0 0.0
        %4641 = vmatpush1.msra.mxu0 0.0
        %4642 = vmatprep.subr.mxu0 0.0
        %4643 = vmatpush1.msra.mxu0 0.0
        %4644 = vmatprep.subr.mxu0 0.0
        %4645 = vmatpush1.msra.mxu0 0.0
        %4646 = vmatprep.subr.mxu0 0.0
        %4647 = vmatpush1.msra.mxu0 0.0
        %4648 = vmatprep.subr.mxu0 0.0
        %4649 = vmatpush1.msra.mxu0 0.0
        %4650 = vmatprep.subr.mxu0 0.0
        %4651 = vmatpush1.msra.mxu0 0.0
        %4652 = vmatprep.mubr.f32.mxu0 0.0
        %4653 = vmatmul.mubr.f32.gmra.mrb[0].mxu0 %v4486
        %v4654 = vpop.f32.mrb[0].mxu0
        %v4655 = vadd.f32 0.0, %v4654
        %v4656 = vpop.f32.mrb[0].mxu0
        %4657 = vdwg.mxu0
        %v4659 = vrot.slane %v4655, 1
        %v4660 = vrot.slane %v4655, 2
        %v4661 = vrot.slane %v4655, 3
        %v4666 = vadd.f32 %v4584, %v4655
        %v4667 = vadd.f32 %v4585, %v4659
        %v4668 = vadd.f32 %v4586, %v4660
        %v4669 = vadd.f32 %v4587, %v4661
        %v4670 = vxor.u32 %v4666, 2147483648
        %v4671 = vxor.u32 %v4667, 2147483648
        %v4672 = vxor.u32 %v4668, 2147483648
        %v4673 = vxor.u32 %v4669, 2147483648
        %v4674 = vmul.f32 %v4670, 1.442695
        %v4675 = vpow.pop %v4674
        %v4676 = vmul.f32 %v4671, 1.442695
        %v4677 = vpow.pop %v4676
        %v4678 = vmul.f32 %v4672, 1.442695
        %v4679 = vpow.pop %v4678
        %v4680 = vmul.f32 %v4673, 1.442695
        %v4681 = vpow.pop %v4680
        %v4682 = vadd.f32 %v4675, 1.0
        %v4683 = vadd.f32 %v4677, 1.0
        %v4684 = vadd.f32 %v4679, 1.0
        %v4685 = vadd.f32 %v4681, 1.0
        %v4686 = vrcp.pop %v4682
        %v4687 = vmul.f32 1.0, %v4686
        %v4688 = vrcp.pop %v4683
        %v4689 = vmul.f32 1.0, %v4688
        %v4690 = vrcp.pop %v4684
        %v4691 = vmul.f32 1.0, %v4690
        %v4692 = vrcp.pop %v4685
        %v4693 = vmul.f32 1.0, %v4692
        %v4694 = vtanh.pop %v4666
        %v4695 = vtanh.pop %v4667
        %v4696 = vtanh.pop %v4668
        %v4697 = vtanh.pop %v4669
        %v4698 = vmul.f32 %v4687, %v4371
        %v4699 = vmul.f32 %v4689, %v4372
        %v4700 = vmul.f32 %v4691, %v4373
        %v4701 = vmul.f32 %v4693, %v4374
        %4706 = vrot.lane.b32.xlu0 %v4694, 64
        %v4707 = vpop.permute.xlu0 %4706
        %4708 = vrot.lane.b32.xlu0 %v4695, 64
        %v4709 = vpop.permute.xlu0 %4708
        %4710 = vrot.lane.b32.xlu0 %v4696, 64
        %v4711 = vpop.permute.xlu0 %4710
        %4712 = vrot.lane.b32.xlu0 %v4697, 64
        %v4713 = vpop.permute.xlu0 %4712
        %v4718 = vmul.f32 %v4687, %v4707
        %v4719 = vmul.f32 %v4689, %v4709
        %v4720 = vmul.f32 %v4691, %v4711
        %v4721 = vmul.f32 %v4693, %v4713
        %4726 = vrot.lane.b32.xlu0 %v4718, 32
        %v4727 = vpop.permute.xlu0 %4726
        %4728 = vrot.lane.b32.xlu0 %v4719, 32
        %v4729 = vpop.permute.xlu0 %4728
        %4730 = vrot.lane.b32.xlu0 %v4720, 32
        %v4731 = vpop.permute.xlu0 %4730
        %4732 = vrot.lane.b32.xlu0 %v4721, 32
        %v4733 = vpop.permute.xlu0 %4732
        %v4738 = vadd.f32 %v4698, %v4727
        %v4739 = vadd.f32 %v4699, %v4729
        %v4740 = vadd.f32 %v4700, %v4731
        %v4741 = vadd.f32 %v4701, %v4733
        %v4742 = vtanh.pop %v4738
        %v4743 = vtanh.pop %v4739
        %v4744 = vtanh.pop %v4740
        %v4745 = vtanh.pop %v4741
        %4750 = vrot.lane.b32.xlu0 %v4742, 64
        %v4751 = vpop.permute.xlu0 %4750
        %4752 = vrot.lane.b32.xlu0 %v4743, 64
        %v4753 = vpop.permute.xlu0 %4752
        %4754 = vrot.lane.b32.xlu0 %v4744, 64
        %v4755 = vpop.permute.xlu0 %4754
        %4756 = vrot.lane.b32.xlu0 %v4745, 64
        %v4757 = vpop.permute.xlu0 %4756
        %v4762 = vmul.f32 %v4687, %v4751
        %v4763 = vmul.f32 %v4689, %v4753
        %v4764 = vmul.f32 %v4691, %v4755
        %v4765 = vmul.f32 %v4693, %v4757
        %4767 = vrot.lane.b32.xlu0 %v4582, 32
        %v4768 = vpop.permute.xlu0 %4767
        %v4769 = vsel %vm3112, %v4768, 0
        %4771 = vmatprep.subr.mxu0 0.0
        %4772 = vmatpush1.msra.mxu0 %v2956
        %4773 = vmatprep.subr.mxu0 0.0
        %4774 = vmatpush1.msra.mxu0 %v2957
        %4775 = vmatprep.subr.mxu0 0.0
        %4776 = vmatpush1.msra.mxu0 %v2958
        %4777 = vmatprep.subr.mxu0 0.0
        %4778 = vmatpush1.msra.mxu0 %v2959
        %4779 = vmatprep.subr.mxu0 0.0
        %4780 = vmatpush1.msra.mxu0 0.0
        %4781 = vmatprep.subr.mxu0 0.0
        %4782 = vmatpush1.msra.mxu0 0.0
        %4783 = vmatprep.subr.mxu0 0.0
        %4784 = vmatpush1.msra.mxu0 0.0
        %4785 = vmatprep.subr.mxu0 0.0
        %4786 = vmatpush1.msra.mxu0 0.0
        %4787 = vmatprep.subr.mxu0 0.0
        %4788 = vmatpush1.msra.mxu0 0.0
        %4789 = vmatprep.subr.mxu0 0.0
        %4790 = vmatpush1.msra.mxu0 0.0
        %4791 = vmatprep.subr.mxu0 0.0
        %4792 = vmatpush1.msra.mxu0 0.0
        %4793 = vmatprep.subr.mxu0 0.0
        %4794 = vmatpush1.msra.mxu0 0.0
        %4795 = vmatprep.subr.mxu0 0.0
        %4796 = vmatpush1.msra.mxu0 0.0
        %4797 = vmatprep.subr.mxu0 0.0
        %4798 = vmatpush1.msra.mxu0 0.0
        %4799 = vmatprep.subr.mxu0 0.0
        %4800 = vmatpush1.msra.mxu0 0.0
        %4801 = vmatprep.subr.mxu0 0.0
        %4802 = vmatpush1.msra.mxu0 0.0
        %4803 = vmatprep.subr.mxu0 0.0
        %4804 = vmatpush1.msra.mxu0 0.0
        %4805 = vmatprep.subr.mxu0 0.0
        %4806 = vmatpush1.msra.mxu0 0.0
        %4807 = vmatprep.subr.mxu0 0.0
        %4808 = vmatpush1.msra.mxu0 0.0
        %4809 = vmatprep.subr.mxu0 0.0
        %4810 = vmatpush1.msra.mxu0 0.0
        %4811 = vmatprep.subr.mxu0 0.0
        %4812 = vmatpush1.msra.mxu0 0.0
        %4813 = vmatprep.subr.mxu0 0.0
        %4814 = vmatpush1.msra.mxu0 0.0
        %4815 = vmatprep.subr.mxu0 0.0
        %4816 = vmatpush1.msra.mxu0 0.0
        %4817 = vmatprep.subr.mxu0 0.0
        %4818 = vmatpush1.msra.mxu0 0.0
        %4819 = vmatprep.subr.mxu0 0.0
        %4820 = vmatpush1.msra.mxu0 0.0
        %4821 = vmatprep.subr.mxu0 0.0
        %4822 = vmatpush1.msra.mxu0 0.0
        %4823 = vmatprep.subr.mxu0 0.0
        %4824 = vmatpush1.msra.mxu0 0.0
        %4825 = vmatprep.subr.mxu0 0.0
        %4826 = vmatpush1.msra.mxu0 0.0
        %4827 = vmatprep.subr.mxu0 0.0
        %4828 = vmatpush1.msra.mxu0 0.0
        %4829 = vmatprep.subr.mxu0 0.0
        %4830 = vmatpush1.msra.mxu0 0.0
        %4831 = vmatprep.subr.mxu0 0.0
        %4832 = vmatpush1.msra.mxu0 0.0
        %4833 = vmatprep.subr.mxu0 0.0
        %4834 = vmatpush1.msra.mxu0 0.0
        %4835 = vmatprep.mubr.f32.mxu0 0.0
        %4836 = vmatmul.mubr.f32.gmra.mrb[0].mxu0 %v4769
        %v4837 = vpop.f32.mrb[0].mxu0
        %v4838 = vadd.f32 0.0, %v4837
        %v4839 = vpop.f32.mrb[0].mxu0
        %4840 = vdwg.mxu0
        %v4845 = vrot.slane %v4763, 7
        %v4846 = vsel %vm3369, %v4845, %v4762
        %v4847 = vrot.slane %v4764, 6
        %v4848 = vsel %vm3372, %v4847, %v4846
        %v4849 = vrot.slane %v4765, 5
        %v4850 = vsel %vm3375, %v4849, %v4848
        %4851 = vrot.lane.b32.xlu0 %v4850, 32
        %v4852 = vpop.permute.xlu0 %4851
        %v4853 = vsel %vm3112, %v4852, 0
        %4855 = vmatprep.subr.mxu0 0.0
        %4856 = vmatpush1.msra.mxu0 %v2948
        %4857 = vmatprep.subr.mxu0 0.0
        %4858 = vmatpush1.msra.mxu0 %v2949
        %4859 = vmatprep.subr.mxu0 0.0
        %4860 = vmatpush1.msra.mxu0 %v2950
        %4861 = vmatprep.subr.mxu0 0.0
        %4862 = vmatpush1.msra.mxu0 %v2951
        %4863 = vmatprep.subr.mxu0 0.0
        %4864 = vmatpush1.msra.mxu0 0.0
        %4865 = vmatprep.subr.mxu0 0.0
        %4866 = vmatpush1.msra.mxu0 0.0
        %4867 = vmatprep.subr.mxu0 0.0
        %4868 = vmatpush1.msra.mxu0 0.0
        %4869 = vmatprep.subr.mxu0 0.0
        %4870 = vmatpush1.msra.mxu0 0.0
        %4871 = vmatprep.subr.mxu0 0.0
        %4872 = vmatpush1.msra.mxu0 0.0
        %4873 = vmatprep.subr.mxu0 0.0
        %4874 = vmatpush1.msra.mxu0 0.0
        %4875 = vmatprep.subr.mxu0 0.0
        %4876 = vmatpush1.msra.mxu0 0.0
        %4877 = vmatprep.subr.mxu0 0.0
        %4878 = vmatpush1.msra.mxu0 0.0
        %4879 = vmatprep.subr.mxu0 0.0
        %4880 = vmatpush1.msra.mxu0 0.0
        %4881 = vmatprep.subr.mxu0 0.0
        %4882 = vmatpush1.msra.mxu0 0.0
        %4883 = vmatprep.subr.mxu0 0.0
        %4884 = vmatpush1.msra.mxu0 0.0
        %4885 = vmatprep.subr.mxu0 0.0
        %4886 = vmatpush1.msra.mxu0 0.0
        %4887 = vmatprep.subr.mxu0 0.0
        %4888 = vmatpush1.msra.mxu0 0.0
        %4889 = vmatprep.subr.mxu0 0.0
        %4890 = vmatpush1.msra.mxu0 0.0
        %4891 = vmatprep.subr.mxu0 0.0
        %4892 = vmatpush1.msra.mxu0 0.0
        %4893 = vmatprep.subr.mxu0 0.0
        %4894 = vmatpush1.msra.mxu0 0.0
        %4895 = vmatprep.subr.mxu0 0.0
        %4896 = vmatpush1.msra.mxu0 0.0
        %4897 = vmatprep.subr.mxu0 0.0
        %4898 = vmatpush1.msra.mxu0 0.0
        %4899 = vmatprep.subr.mxu0 0.0
        %4900 = vmatpush1.msra.mxu0 0.0
        %4901 = vmatprep.subr.mxu0 0.0
        %4902 = vmatpush1.msra.mxu0 0.0
        %4903 = vmatprep.subr.mxu0 0.0
        %4904 = vmatpush1.msra.mxu0 0.0
        %4905 = vmatprep.subr.mxu0 0.0
        %4906 = vmatpush1.msra.mxu0 0.0
        %4907 = vmatprep.subr.mxu0 0.0
        %4908 = vmatpush1.msra.mxu0 0.0
        %4909 = vmatprep.subr.mxu0 0.0
        %4910 = vmatpush1.msra.mxu0 0.0
        %4911 = vmatprep.subr.mxu0 0.0
        %4912 = vmatpush1.msra.mxu0 0.0
        %4913 = vmatprep.subr.mxu0 0.0
        %4914 = vmatpush1.msra.mxu0 0.0
        %4915 = vmatprep.subr.mxu0 0.0
        %4916 = vmatpush1.msra.mxu0 0.0
        %4917 = vmatprep.subr.mxu0 0.0
        %4918 = vmatpush1.msra.mxu0 0.0
        %4919 = vmatprep.mubr.f32.mxu0 0.0
        %4920 = vmatmul.mubr.f32.gmra.mrb[0].mxu0 %v4853
        %v4921 = vpop.f32.mrb[0].mxu0
        %v4922 = vadd.f32 %v4838, %v4921
        %v4923 = vpop.f32.mrb[0].mxu0
        %4924 = vdwg.mxu0
        %v4925 = vadd.f32 %v4922, %v3455
        %v4926 = vxor.u32 %v4925, 2147483648
        %v4927 = vmul.f32 %v4926, 1.442695
        %v4928 = vpow.pop %v4927
        %v4929 = vadd.f32 %v4928, 1.0
        %v4930 = vrcp.pop %v4929
        %v4931 = vmul.f32 1.0, %v4930
        %v4932 = vtanh.pop %v4925
        %v4933 = vmul.f32 %v4931, %v4576
        %4935 = vrot.lane.b32.xlu0 %v4932, 64
        %v4936 = vpop.permute.xlu0 %4935
        %v4938 = vmul.f32 %v4931, %v4936
        %4940 = vrot.lane.b32.xlu0 %v4938, 32
        %v4941 = vpop.permute.xlu0 %4940
        %v4943 = vadd.f32 %v4933, %v4941
        %v4944 = vtanh.pop %v4943
        %4946 = vrot.lane.b32.xlu0 %v4944, 64
        %v4947 = vpop.permute.xlu0 %4946
        %v4949 = vmul.f32 %v4931, %v4947
        %v4950 = vadd.f32 %v4583, %v4949
        %v4951 = vld [vmem:[#allocation3 + $0x5] sm:$0x1]
        %v4952 = vld [vmem:[#allocation3 + $0x15] sm:$0x1]
        %v4953 = vld [vmem:[#allocation3 + $0x25] sm:$0x1]
        %v4954 = vld [vmem:[#allocation3 + $0x35] sm:$0x1]
        %4955 = vmatprep.subr.mxu0 0.0
        %4956 = vmatpush1.msra.mxu0 %v2952
        %4957 = vmatprep.subr.mxu0 0.0
        %4958 = vmatpush1.msra.mxu0 %v2953
        %4959 = vmatprep.subr.mxu0 0.0
        %4960 = vmatpush1.msra.mxu0 %v2954
        %4961 = vmatprep.subr.mxu0 0.0
        %4962 = vmatpush1.msra.mxu0 %v2955
        %4963 = vmatprep.subr.mxu0 0.0
        %4964 = vmatpush1.msra.mxu0 0.0
        %4965 = vmatprep.subr.mxu0 0.0
        %4966 = vmatpush1.msra.mxu0 0.0
        %4967 = vmatprep.subr.mxu0 0.0
        %4968 = vmatpush1.msra.mxu0 0.0
        %4969 = vmatprep.subr.mxu0 0.0
        %4970 = vmatpush1.msra.mxu0 0.0
        %4971 = vmatprep.subr.mxu0 0.0
        %4972 = vmatpush1.msra.mxu0 0.0
        %4973 = vmatprep.subr.mxu0 0.0
        %4974 = vmatpush1.msra.mxu0 0.0
        %4975 = vmatprep.subr.mxu0 0.0
        %4976 = vmatpush1.msra.mxu0 0.0
        %4977 = vmatprep.subr.mxu0 0.0
        %4978 = vmatpush1.msra.mxu0 0.0
        %4979 = vmatprep.subr.mxu0 0.0
        %4980 = vmatpush1.msra.mxu0 0.0
        %4981 = vmatprep.subr.mxu0 0.0
        %4982 = vmatpush1.msra.mxu0 0.0
        %4983 = vmatprep.subr.mxu0 0.0
        %4984 = vmatpush1.msra.mxu0 0.0
        %4985 = vmatprep.subr.mxu0 0.0
        %4986 = vmatpush1.msra.mxu0 0.0
        %4987 = vmatprep.subr.mxu0 0.0
        %4988 = vmatpush1.msra.mxu0 0.0
        %4989 = vmatprep.subr.mxu0 0.0
        %4990 = vmatpush1.msra.mxu0 0.0
        %4991 = vmatprep.subr.mxu0 0.0
        %4992 = vmatpush1.msra.mxu0 0.0
        %4993 = vmatprep.subr.mxu0 0.0
        %4994 = vmatpush1.msra.mxu0 0.0
        %4995 = vmatprep.subr.mxu0 0.0
        %4996 = vmatpush1.msra.mxu0 0.0
        %4997 = vmatprep.subr.mxu0 0.0
        %4998 = vmatpush1.msra.mxu0 0.0
        %4999 = vmatprep.subr.mxu0 0.0
        %5000 = vmatpush1.msra.mxu0 0.0
        %5001 = vmatprep.subr.mxu0 0.0
        %5002 = vmatpush1.msra.mxu0 0.0
        %5003 = vmatprep.subr.mxu0 0.0
        %5004 = vmatpush1.msra.mxu0 0.0
        %5005 = vmatprep.subr.mxu0 0.0
        %5006 = vmatpush1.msra.mxu0 0.0
        %5007 = vmatprep.subr.mxu0 0.0
        %5008 = vmatpush1.msra.mxu0 0.0
        %5009 = vmatprep.subr.mxu0 0.0
        %5010 = vmatpush1.msra.mxu0 0.0
        %5011 = vmatprep.subr.mxu0 0.0
        %5012 = vmatpush1.msra.mxu0 0.0
        %5013 = vmatprep.subr.mxu0 0.0
        %5014 = vmatpush1.msra.mxu0 0.0
        %5015 = vmatprep.subr.mxu0 0.0
        %5016 = vmatpush1.msra.mxu0 0.0
        %5017 = vmatprep.subr.mxu0 0.0
        %5018 = vmatpush1.msra.mxu0 0.0
        %5019 = vmatprep.mubr.f32.mxu0 0.0
        %5020 = vmatmul.mubr.f32.gmra.mrb[0].mxu0 %v4853
        %v5021 = vpop.f32.mrb[0].mxu0
        %v5022 = vadd.f32 0.0, %v5021
        %v5023 = vpop.f32.mrb[0].mxu0
        %5024 = vdwg.mxu0
        %v5026 = vrot.slane %v5022, 1
        %v5027 = vrot.slane %v5022, 2
        %v5028 = vrot.slane %v5022, 3
        %v5033 = vadd.f32 %v4951, %v5022
        %v5034 = vadd.f32 %v4952, %v5026
        %v5035 = vadd.f32 %v4953, %v5027
        %v5036 = vadd.f32 %v4954, %v5028
        %v5037 = vxor.u32 %v5033, 2147483648
        %v5038 = vxor.u32 %v5034, 2147483648
        %v5039 = vxor.u32 %v5035, 2147483648
        %v5040 = vxor.u32 %v5036, 2147483648
        %v5041 = vmul.f32 %v5037, 1.442695
        %v5042 = vpow.pop %v5041
        %v5043 = vmul.f32 %v5038, 1.442695
        %v5044 = vpow.pop %v5043
        %v5045 = vmul.f32 %v5039, 1.442695
        %v5046 = vpow.pop %v5045
        %v5047 = vmul.f32 %v5040, 1.442695
        %v5048 = vpow.pop %v5047
        %v5049 = vadd.f32 %v5042, 1.0
        %v5050 = vadd.f32 %v5044, 1.0
        %v5051 = vadd.f32 %v5046, 1.0
        %v5052 = vadd.f32 %v5048, 1.0
        %v5053 = vrcp.pop %v5049
        %v5054 = vmul.f32 1.0, %v5053
        %v5055 = vrcp.pop %v5050
        %v5056 = vmul.f32 1.0, %v5055
        %v5057 = vrcp.pop %v5051
        %v5058 = vmul.f32 1.0, %v5057
        %v5059 = vrcp.pop %v5052
        %v5060 = vmul.f32 1.0, %v5059
        %v5061 = vtanh.pop %v5033
        %v5062 = vtanh.pop %v5034
        %v5063 = vtanh.pop %v5035
        %v5064 = vtanh.pop %v5036
        %v5065 = vmul.f32 %v5054, %v4738
        %v5066 = vmul.f32 %v5056, %v4739
        %v5067 = vmul.f32 %v5058, %v4740
        %v5068 = vmul.f32 %v5060, %v4741
        %5073 = vrot.lane.b32.xlu0 %v5061, 64
        %v5074 = vpop.permute.xlu0 %5073
        %5075 = vrot.lane.b32.xlu0 %v5062, 64
        %v5076 = vpop.permute.xlu0 %5075
        %5077 = vrot.lane.b32.xlu0 %v5063, 64
        %v5078 = vpop.permute.xlu0 %5077
        %5079 = vrot.lane.b32.xlu0 %v5064, 64
        %v5080 = vpop.permute.xlu0 %5079
        %v5085 = vmul.f32 %v5054, %v5074
        %v5086 = vmul.f32 %v5056, %v5076
        %v5087 = vmul.f32 %v5058, %v5078
        %v5088 = vmul.f32 %v5060, %v5080
        %5093 = vrot.lane.b32.xlu0 %v5085, 32
        %v5094 = vpop.permute.xlu0 %5093
        %5095 = vrot.lane.b32.xlu0 %v5086, 32
        %v5096 = vpop.permute.xlu0 %5095
        %5097 = vrot.lane.b32.xlu0 %v5087, 32
        %v5098 = vpop.permute.xlu0 %5097
        %5099 = vrot.lane.b32.xlu0 %v5088, 32
        %v5100 = vpop.permute.xlu0 %5099
        %v5105 = vadd.f32 %v5065, %v5094
        %v5106 = vadd.f32 %v5066, %v5096
        %v5107 = vadd.f32 %v5067, %v5098
        %v5108 = vadd.f32 %v5068, %v5100
        %v5109 = vtanh.pop %v5105
        %v5110 = vtanh.pop %v5106
        %v5111 = vtanh.pop %v5107
        %v5112 = vtanh.pop %v5108
        %5117 = vrot.lane.b32.xlu0 %v5109, 64
        %v5118 = vpop.permute.xlu0 %5117
        %5119 = vrot.lane.b32.xlu0 %v5110, 64
        %v5120 = vpop.permute.xlu0 %5119
        %5121 = vrot.lane.b32.xlu0 %v5111, 64
        %v5122 = vpop.permute.xlu0 %5121
        %5123 = vrot.lane.b32.xlu0 %v5112, 64
        %v5124 = vpop.permute.xlu0 %5123
        %v5129 = vmul.f32 %v5054, %v5118
        %v5130 = vmul.f32 %v5056, %v5120
        %v5131 = vmul.f32 %v5058, %v5122
        %v5132 = vmul.f32 %v5060, %v5124
        %5134 = vrot.lane.b32.xlu0 %v4949, 32
        %v5135 = vpop.permute.xlu0 %5134
        %v5136 = vsel %vm3112, %v5135, 0
        %5138 = vmatprep.subr.mxu0 0.0
        %5139 = vmatpush1.msra.mxu0 %v2956
        %5140 = vmatprep.subr.mxu0 0.0
        %5141 = vmatpush1.msra.mxu0 %v2957
        %5142 = vmatprep.subr.mxu0 0.0
        %5143 = vmatpush1.msra.mxu0 %v2958
        %5144 = vmatprep.subr.mxu0 0.0
        %5145 = vmatpush1.msra.mxu0 %v2959
        %5146 = vmatprep.subr.mxu0 0.0
        %5147 = vmatpush1.msra.mxu0 0.0
        %5148 = vmatprep.subr.mxu0 0.0
        %5149 = vmatpush1.msra.mxu0 0.0
        %5150 = vmatprep.subr.mxu0 0.0
        %5151 = vmatpush1.msra.mxu0 0.0
        %5152 = vmatprep.subr.mxu0 0.0
        %5153 = vmatpush1.msra.mxu0 0.0
        %5154 = vmatprep.subr.mxu0 0.0
        %5155 = vmatpush1.msra.mxu0 0.0
        %5156 = vmatprep.subr.mxu0 0.0
        %5157 = vmatpush1.msra.mxu0 0.0
        %5158 = vmatprep.subr.mxu0 0.0
        %5159 = vmatpush1.msra.mxu0 0.0
        %5160 = vmatprep.subr.mxu0 0.0
        %5161 = vmatpush1.msra.mxu0 0.0
        %5162 = vmatprep.subr.mxu0 0.0
        %5163 = vmatpush1.msra.mxu0 0.0
        %5164 = vmatprep.subr.mxu0 0.0
        %5165 = vmatpush1.msra.mxu0 0.0
        %5166 = vmatprep.subr.mxu0 0.0
        %5167 = vmatpush1.msra.mxu0 0.0
        %5168 = vmatprep.subr.mxu0 0.0
        %5169 = vmatpush1.msra.mxu0 0.0
        %5170 = vmatprep.subr.mxu0 0.0
        %5171 = vmatpush1.msra.mxu0 0.0
        %5172 = vmatprep.subr.mxu0 0.0
        %5173 = vmatpush1.msra.mxu0 0.0
        %5174 = vmatprep.subr.mxu0 0.0
        %5175 = vmatpush1.msra.mxu0 0.0
        %5176 = vmatprep.subr.mxu0 0.0
        %5177 = vmatpush1.msra.mxu0 0.0
        %5178 = vmatprep.subr.mxu0 0.0
        %5179 = vmatpush1.msra.mxu0 0.0
        %5180 = vmatprep.subr.mxu0 0.0
        %5181 = vmatpush1.msra.mxu0 0.0
        %5182 = vmatprep.subr.mxu0 0.0
        %5183 = vmatpush1.msra.mxu0 0.0
        %5184 = vmatprep.subr.mxu0 0.0
        %5185 = vmatpush1.msra.mxu0 0.0
        %5186 = vmatprep.subr.mxu0 0.0
        %5187 = vmatpush1.msra.mxu0 0.0
        %5188 = vmatprep.subr.mxu0 0.0
        %5189 = vmatpush1.msra.mxu0 0.0
        %5190 = vmatprep.subr.mxu0 0.0
        %5191 = vmatpush1.msra.mxu0 0.0
        %5192 = vmatprep.subr.mxu0 0.0
        %5193 = vmatpush1.msra.mxu0 0.0
        %5194 = vmatprep.subr.mxu0 0.0
        %5195 = vmatpush1.msra.mxu0 0.0
        %5196 = vmatprep.subr.mxu0 0.0
        %5197 = vmatpush1.msra.mxu0 0.0
        %5198 = vmatprep.subr.mxu0 0.0
        %5199 = vmatpush1.msra.mxu0 0.0
        %5200 = vmatprep.subr.mxu0 0.0
        %5201 = vmatpush1.msra.mxu0 0.0
        %5202 = vmatprep.mubr.f32.mxu0 0.0
        %5203 = vmatmul.mubr.f32.gmra.mrb[0].mxu0 %v5136
        %v5204 = vpop.f32.mrb[0].mxu0
        %v5205 = vadd.f32 0.0, %v5204
        %v5206 = vpop.f32.mrb[0].mxu0
        %5207 = vdwg.mxu0
        %v5212 = vrot.slane %v5130, 7
        %v5213 = vsel %vm3369, %v5212, %v5129
        %v5214 = vrot.slane %v5131, 6
        %v5215 = vsel %vm3372, %v5214, %v5213
        %v5216 = vrot.slane %v5132, 5
        %v5217 = vsel %vm3375, %v5216, %v5215
        %5218 = vrot.lane.b32.xlu0 %v5217, 32
        %v5219 = vpop.permute.xlu0 %5218
        %v5220 = vsel %vm3112, %v5219, 0
        %5222 = vmatprep.subr.mxu0 0.0
        %5223 = vmatpush1.msra.mxu0 %v2948
        %5224 = vmatprep.subr.mxu0 0.0
        %5225 = vmatpush1.msra.mxu0 %v2949
        %5226 = vmatprep.subr.mxu0 0.0
        %5227 = vmatpush1.msra.mxu0 %v2950
        %5228 = vmatprep.subr.mxu0 0.0
        %5229 = vmatpush1.msra.mxu0 %v2951
        %5230 = vmatprep.subr.mxu0 0.0
        %5231 = vmatpush1.msra.mxu0 0.0
        %5232 = vmatprep.subr.mxu0 0.0
        %5233 = vmatpush1.msra.mxu0 0.0
        %5234 = vmatprep.subr.mxu0 0.0
        %5235 = vmatpush1.msra.mxu0 0.0
        %5236 = vmatprep.subr.mxu0 0.0
        %5237 = vmatpush1.msra.mxu0 0.0
        %5238 = vmatprep.subr.mxu0 0.0
        %5239 = vmatpush1.msra.mxu0 0.0
        %5240 = vmatprep.subr.mxu0 0.0
        %5241 = vmatpush1.msra.mxu0 0.0
        %5242 = vmatprep.subr.mxu0 0.0
        %5243 = vmatpush1.msra.mxu0 0.0
        %5244 = vmatprep.subr.mxu0 0.0
        %5245 = vmatpush1.msra.mxu0 0.0
        %5246 = vmatprep.subr.mxu0 0.0
        %5247 = vmatpush1.msra.mxu0 0.0
        %5248 = vmatprep.subr.mxu0 0.0
        %5249 = vmatpush1.msra.mxu0 0.0
        %5250 = vmatprep.subr.mxu0 0.0
        %5251 = vmatpush1.msra.mxu0 0.0
        %5252 = vmatprep.subr.mxu0 0.0
        %5253 = vmatpush1.msra.mxu0 0.0
        %5254 = vmatprep.subr.mxu0 0.0
        %5255 = vmatpush1.msra.mxu0 0.0
        %5256 = vmatprep.subr.mxu0 0.0
        %5257 = vmatpush1.msra.mxu0 0.0
        %5258 = vmatprep.subr.mxu0 0.0
        %5259 = vmatpush1.msra.mxu0 0.0
        %5260 = vmatprep.subr.mxu0 0.0
        %5261 = vmatpush1.msra.mxu0 0.0
        %5262 = vmatprep.subr.mxu0 0.0
        %5263 = vmatpush1.msra.mxu0 0.0
        %5264 = vmatprep.subr.mxu0 0.0
        %5265 = vmatpush1.msra.mxu0 0.0
        %5266 = vmatprep.subr.mxu0 0.0
        %5267 = vmatpush1.msra.mxu0 0.0
        %5268 = vmatprep.subr.mxu0 0.0
        %5269 = vmatpush1.msra.mxu0 0.0
        %5270 = vmatprep.subr.mxu0 0.0
        %5271 = vmatpush1.msra.mxu0 0.0
        %5272 = vmatprep.subr.mxu0 0.0
        %5273 = vmatpush1.msra.mxu0 0.0
        %5274 = vmatprep.subr.mxu0 0.0
        %5275 = vmatpush1.msra.mxu0 0.0
        %5276 = vmatprep.subr.mxu0 0.0
        %5277 = vmatpush1.msra.mxu0 0.0
        %5278 = vmatprep.subr.mxu0 0.0
        %5279 = vmatpush1.msra.mxu0 0.0
        %5280 = vmatprep.subr.mxu0 0.0
        %5281 = vmatpush1.msra.mxu0 0.0
        %5282 = vmatprep.subr.mxu0 0.0
        %5283 = vmatpush1.msra.mxu0 0.0
        %5284 = vmatprep.subr.mxu0 0.0
        %5285 = vmatpush1.msra.mxu0 0.0
        %5286 = vmatprep.mubr.f32.mxu0 0.0
        %5287 = vmatmul.mubr.f32.gmra.mrb[0].mxu0 %v5220
        %v5288 = vpop.f32.mrb[0].mxu0
        %v5289 = vadd.f32 %v5205, %v5288
        %v5290 = vpop.f32.mrb[0].mxu0
        %5291 = vdwg.mxu0
        %v5292 = vadd.f32 %v5289, %v3455
        %v5293 = vxor.u32 %v5292, 2147483648
        %v5294 = vmul.f32 %v5293, 1.442695
        %v5295 = vpow.pop %v5294
        %v5296 = vadd.f32 %v5295, 1.0
        %v5297 = vrcp.pop %v5296
        %v5298 = vmul.f32 1.0, %v5297
        %v5299 = vtanh.pop %v5292
        %v5300 = vmul.f32 %v5298, %v4943
        %5302 = vrot.lane.b32.xlu0 %v5299, 64
        %v5303 = vpop.permute.xlu0 %5302
        %v5305 = vmul.f32 %v5298, %v5303
        %5307 = vrot.lane.b32.xlu0 %v5305, 32
        %v5308 = vpop.permute.xlu0 %5307
        %v5310 = vadd.f32 %v5300, %v5308
        %v5311 = vtanh.pop %v5310
        %5313 = vrot.lane.b32.xlu0 %v5311, 64
        %v5314 = vpop.permute.xlu0 %5313
        %v5316 = vmul.f32 %v5298, %v5314
        %v5317 = vadd.f32 %v4950, %v5316
        %v5318 = vld [vmem:[#allocation3 + $0x6] sm:$0x1]
        %v5319 = vld [vmem:[#allocation3 + $0x16] sm:$0x1]
        %v5320 = vld [vmem:[#allocation3 + $0x26] sm:$0x1]
        %v5321 = vld [vmem:[#allocation3 + $0x36] sm:$0x1]
        %5322 = vmatprep.subr.mxu0 0.0
        %5323 = vmatpush1.msra.mxu0 %v2952
        %5324 = vmatprep.subr.mxu0 0.0
        %5325 = vmatpush1.msra.mxu0 %v2953
        %5326 = vmatprep.subr.mxu0 0.0
        %5327 = vmatpush1.msra.mxu0 %v2954
        %5328 = vmatprep.subr.mxu0 0.0
        %5329 = vmatpush1.msra.mxu0 %v2955
        %5330 = vmatprep.subr.mxu0 0.0
        %5331 = vmatpush1.msra.mxu0 0.0
        %5332 = vmatprep.subr.mxu0 0.0
        %5333 = vmatpush1.msra.mxu0 0.0
        %5334 = vmatprep.subr.mxu0 0.0
        %5335 = vmatpush1.msra.mxu0 0.0
        %5336 = vmatprep.subr.mxu0 0.0
        %5337 = vmatpush1.msra.mxu0 0.0
        %5338 = vmatprep.subr.mxu0 0.0
        %5339 = vmatpush1.msra.mxu0 0.0
        %5340 = vmatprep.subr.mxu0 0.0
        %5341 = vmatpush1.msra.mxu0 0.0
        %5342 = vmatprep.subr.mxu0 0.0
        %5343 = vmatpush1.msra.mxu0 0.0
        %5344 = vmatprep.subr.mxu0 0.0
        %5345 = vmatpush1.msra.mxu0 0.0
        %5346 = vmatprep.subr.mxu0 0.0
        %5347 = vmatpush1.msra.mxu0 0.0
        %5348 = vmatprep.subr.mxu0 0.0
        %5349 = vmatpush1.msra.mxu0 0.0
        %5350 = vmatprep.subr.mxu0 0.0
        %5351 = vmatpush1.msra.mxu0 0.0
        %5352 = vmatprep.subr.mxu0 0.0
        %5353 = vmatpush1.msra.mxu0 0.0
        %5354 = vmatprep.subr.mxu0 0.0
        %5355 = vmatpush1.msra.mxu0 0.0
        %5356 = vmatprep.subr.mxu0 0.0
        %5357 = vmatpush1.msra.mxu0 0.0
        %5358 = vmatprep.subr.mxu0 0.0
        %5359 = vmatpush1.msra.mxu0 0.0
        %5360 = vmatprep.subr.mxu0 0.0
        %5361 = vmatpush1.msra.mxu0 0.0
        %5362 = vmatprep.subr.mxu0 0.0
        %5363 = vmatpush1.msra.mxu0 0.0
        %5364 = vmatprep.subr.mxu0 0.0
        %5365 = vmatpush1.msra.mxu0 0.0
        %5366 = vmatprep.subr.mxu0 0.0
        %5367 = vmatpush1.msra.mxu0 0.0
        %5368 = vmatprep.subr.mxu0 0.0
        %5369 = vmatpush1.msra.mxu0 0.0
        %5370 = vmatprep.subr.mxu0 0.0
        %5371 = vmatpush1.msra.mxu0 0.0
        %5372 = vmatprep.subr.mxu0 0.0
        %5373 = vmatpush1.msra.mxu0 0.0
        %5374 = vmatprep.subr.mxu0 0.0
        %5375 = vmatpush1.msra.mxu0 0.0
        %5376 = vmatprep.subr.mxu0 0.0
        %5377 = vmatpush1.msra.mxu0 0.0
        %5378 = vmatprep.subr.mxu0 0.0
        %5379 = vmatpush1.msra.mxu0 0.0
        %5380 = vmatprep.subr.mxu0 0.0
        %5381 = vmatpush1.msra.mxu0 0.0
        %5382 = vmatprep.subr.mxu0 0.0
        %5383 = vmatpush1.msra.mxu0 0.0
        %5384 = vmatprep.subr.mxu0 0.0
        %5385 = vmatpush1.msra.mxu0 0.0
        %5386 = vmatprep.mubr.f32.mxu0 0.0
        %5387 = vmatmul.mubr.f32.gmra.mrb[0].mxu0 %v5220
        %v5388 = vpop.f32.mrb[0].mxu0
        %v5389 = vadd.f32 0.0, %v5388
        %v5390 = vpop.f32.mrb[0].mxu0
        %5391 = vdwg.mxu0
        %v5393 = vrot.slane %v5389, 1
        %v5394 = vrot.slane %v5389, 2
        %v5395 = vrot.slane %v5389, 3
        %v5400 = vadd.f32 %v5318, %v5389
        %v5401 = vadd.f32 %v5319, %v5393
        %v5402 = vadd.f32 %v5320, %v5394
        %v5403 = vadd.f32 %v5321, %v5395
        %v5404 = vxor.u32 %v5400, 2147483648
        %v5405 = vxor.u32 %v5401, 2147483648
        %v5406 = vxor.u32 %v5402, 2147483648
        %v5407 = vxor.u32 %v5403, 2147483648
        %v5408 = vmul.f32 %v5404, 1.442695
        %v5409 = vpow.pop %v5408
        %v5410 = vmul.f32 %v5405, 1.442695
        %v5411 = vpow.pop %v5410
        %v5412 = vmul.f32 %v5406, 1.442695
        %v5413 = vpow.pop %v5412
        %v5414 = vmul.f32 %v5407, 1.442695
        %v5415 = vpow.pop %v5414
        %v5416 = vadd.f32 %v5409, 1.0
        %v5417 = vadd.f32 %v5411, 1.0
        %v5418 = vadd.f32 %v5413, 1.0
        %v5419 = vadd.f32 %v5415, 1.0
        %v5420 = vrcp.pop %v5416
        %v5421 = vmul.f32 1.0, %v5420
        %v5422 = vrcp.pop %v5417
        %v5423 = vmul.f32 1.0, %v5422
        %v5424 = vrcp.pop %v5418
        %v5425 = vmul.f32 1.0, %v5424
        %v5426 = vrcp.pop %v5419
        %v5427 = vmul.f32 1.0, %v5426
        %v5428 = vtanh.pop %v5400
        %v5429 = vtanh.pop %v5401
        %v5430 = vtanh.pop %v5402
        %v5431 = vtanh.pop %v5403
        %v5432 = vmul.f32 %v5421, %v5105
        %v5433 = vmul.f32 %v5423, %v5106
        %v5434 = vmul.f32 %v5425, %v5107
        %v5435 = vmul.f32 %v5427, %v5108
        %5440 = vrot.lane.b32.xlu0 %v5428, 64
        %v5441 = vpop.permute.xlu0 %5440
        %5442 = vrot.lane.b32.xlu0 %v5429, 64
        %v5443 = vpop.permute.xlu0 %5442
        %5444 = vrot.lane.b32.xlu0 %v5430, 64
        %v5445 = vpop.permute.xlu0 %5444
        %5446 = vrot.lane.b32.xlu0 %v5431, 64
        %v5447 = vpop.permute.xlu0 %5446
        %v5452 = vmul.f32 %v5421, %v5441
        %v5453 = vmul.f32 %v5423, %v5443
        %v5454 = vmul.f32 %v5425, %v5445
        %v5455 = vmul.f32 %v5427, %v5447
        %5460 = vrot.lane.b32.xlu0 %v5452, 32
        %v5461 = vpop.permute.xlu0 %5460
        %5462 = vrot.lane.b32.xlu0 %v5453, 32
        %v5463 = vpop.permute.xlu0 %5462
        %5464 = vrot.lane.b32.xlu0 %v5454, 32
        %v5465 = vpop.permute.xlu0 %5464
        %5466 = vrot.lane.b32.xlu0 %v5455, 32
        %v5467 = vpop.permute.xlu0 %5466
        %v5472 = vadd.f32 %v5432, %v5461
        %v5473 = vadd.f32 %v5433, %v5463
        %v5474 = vadd.f32 %v5434, %v5465
        %v5475 = vadd.f32 %v5435, %v5467
        %v5476 = vtanh.pop %v5472
        %v5477 = vtanh.pop %v5473
        %v5478 = vtanh.pop %v5474
        %v5479 = vtanh.pop %v5475
        %5484 = vrot.lane.b32.xlu0 %v5476, 64
        %v5485 = vpop.permute.xlu0 %5484
        %5486 = vrot.lane.b32.xlu0 %v5477, 64
        %v5487 = vpop.permute.xlu0 %5486
        %5488 = vrot.lane.b32.xlu0 %v5478, 64
        %v5489 = vpop.permute.xlu0 %5488
        %5490 = vrot.lane.b32.xlu0 %v5479, 64
        %v5491 = vpop.permute.xlu0 %5490
        %v5496 = vmul.f32 %v5421, %v5485
        %v5497 = vmul.f32 %v5423, %v5487
        %v5498 = vmul.f32 %v5425, %v5489
        %v5499 = vmul.f32 %v5427, %v5491
        %5501 = vrot.lane.b32.xlu0 %v5316, 32
        %v5502 = vpop.permute.xlu0 %5501
        %v5503 = vsel %vm3112, %v5502, 0
        %5505 = vmatprep.subr.mxu0 0.0
        %5506 = vmatpush1.msra.mxu0 %v2956
        %5507 = vmatprep.subr.mxu0 0.0
        %5508 = vmatpush1.msra.mxu0 %v2957
        %5509 = vmatprep.subr.mxu0 0.0
        %5510 = vmatpush1.msra.mxu0 %v2958
        %5511 = vmatprep.subr.mxu0 0.0
        %5512 = vmatpush1.msra.mxu0 %v2959
        %5513 = vmatprep.subr.mxu0 0.0
        %5514 = vmatpush1.msra.mxu0 0.0
        %5515 = vmatprep.subr.mxu0 0.0
        %5516 = vmatpush1.msra.mxu0 0.0
        %5517 = vmatprep.subr.mxu0 0.0
        %5518 = vmatpush1.msra.mxu0 0.0
        %5519 = vmatprep.subr.mxu0 0.0
        %5520 = vmatpush1.msra.mxu0 0.0
        %5521 = vmatprep.subr.mxu0 0.0
        %5522 = vmatpush1.msra.mxu0 0.0
        %5523 = vmatprep.subr.mxu0 0.0
        %5524 = vmatpush1.msra.mxu0 0.0
        %5525 = vmatprep.subr.mxu0 0.0
        %5526 = vmatpush1.msra.mxu0 0.0
        %5527 = vmatprep.subr.mxu0 0.0
        %5528 = vmatpush1.msra.mxu0 0.0
        %5529 = vmatprep.subr.mxu0 0.0
        %5530 = vmatpush1.msra.mxu0 0.0
        %5531 = vmatprep.subr.mxu0 0.0
        %5532 = vmatpush1.msra.mxu0 0.0
        %5533 = vmatprep.subr.mxu0 0.0
        %5534 = vmatpush1.msra.mxu0 0.0
        %5535 = vmatprep.subr.mxu0 0.0
        %5536 = vmatpush1.msra.mxu0 0.0
        %5537 = vmatprep.subr.mxu0 0.0
        %5538 = vmatpush1.msra.mxu0 0.0
        %5539 = vmatprep.subr.mxu0 0.0
        %5540 = vmatpush1.msra.mxu0 0.0
        %5541 = vmatprep.subr.mxu0 0.0
        %5542 = vmatpush1.msra.mxu0 0.0
        %5543 = vmatprep.subr.mxu0 0.0
        %5544 = vmatpush1.msra.mxu0 0.0
        %5545 = vmatprep.subr.mxu0 0.0
        %5546 = vmatpush1.msra.mxu0 0.0
        %5547 = vmatprep.subr.mxu0 0.0
        %5548 = vmatpush1.msra.mxu0 0.0
        %5549 = vmatprep.subr.mxu0 0.0
        %5550 = vmatpush1.msra.mxu0 0.0
        %5551 = vmatprep.subr.mxu0 0.0
        %5552 = vmatpush1.msra.mxu0 0.0
        %5553 = vmatprep.subr.mxu0 0.0
        %5554 = vmatpush1.msra.mxu0 0.0
        %5555 = vmatprep.subr.mxu0 0.0
        %5556 = vmatpush1.msra.mxu0 0.0
        %5557 = vmatprep.subr.mxu0 0.0
        %5558 = vmatpush1.msra.mxu0 0.0
        %5559 = vmatprep.subr.mxu0 0.0
        %5560 = vmatpush1.msra.mxu0 0.0
        %5561 = vmatprep.subr.mxu0 0.0
        %5562 = vmatpush1.msra.mxu0 0.0
        %5563 = vmatprep.subr.mxu0 0.0
        %5564 = vmatpush1.msra.mxu0 0.0
        %5565 = vmatprep.subr.mxu0 0.0
        %5566 = vmatpush1.msra.mxu0 0.0
        %5567 = vmatprep.subr.mxu0 0.0
        %5568 = vmatpush1.msra.mxu0 0.0
        %5569 = vmatprep.mubr.f32.mxu0 0.0
        %5570 = vmatmul.mubr.f32.gmra.mrb[0].mxu0 %v5503
        %v5571 = vpop.f32.mrb[0].mxu0
        %v5572 = vadd.f32 0.0, %v5571
        %v5573 = vpop.f32.mrb[0].mxu0
        %5574 = vdwg.mxu0
        %v5579 = vrot.slane %v5497, 7
        %v5580 = vsel %vm3369, %v5579, %v5496
        %v5581 = vrot.slane %v5498, 6
        %v5582 = vsel %vm3372, %v5581, %v5580
        %v5583 = vrot.slane %v5499, 5
        %v5584 = vsel %vm3375, %v5583, %v5582
        %5585 = vrot.lane.b32.xlu0 %v5584, 32
        %v5586 = vpop.permute.xlu0 %5585
        %v5587 = vsel %vm3112, %v5586, 0
        %5589 = vmatprep.subr.mxu0 0.0
        %5590 = vmatpush1.msra.mxu0 %v2948
        %5591 = vmatprep.subr.mxu0 0.0
        %5592 = vmatpush1.msra.mxu0 %v2949
        %5593 = vmatprep.subr.mxu0 0.0
        %5594 = vmatpush1.msra.mxu0 %v2950
        %5595 = vmatprep.subr.mxu0 0.0
        %5596 = vmatpush1.msra.mxu0 %v2951
        %5597 = vmatprep.subr.mxu0 0.0
        %5598 = vmatpush1.msra.mxu0 0.0
        %5599 = vmatprep.subr.mxu0 0.0
        %5600 = vmatpush1.msra.mxu0 0.0
        %5601 = vmatprep.subr.mxu0 0.0
        %5602 = vmatpush1.msra.mxu0 0.0
        %5603 = vmatprep.subr.mxu0 0.0
        %5604 = vmatpush1.msra.mxu0 0.0
        %5605 = vmatprep.subr.mxu0 0.0
        %5606 = vmatpush1.msra.mxu0 0.0
        %5607 = vmatprep.subr.mxu0 0.0
        %5608 = vmatpush1.msra.mxu0 0.0
        %5609 = vmatprep.subr.mxu0 0.0
        %5610 = vmatpush1.msra.mxu0 0.0
        %5611 = vmatprep.subr.mxu0 0.0
        %5612 = vmatpush1.msra.mxu0 0.0
        %5613 = vmatprep.subr.mxu0 0.0
        %5614 = vmatpush1.msra.mxu0 0.0
        %5615 = vmatprep.subr.mxu0 0.0
        %5616 = vmatpush1.msra.mxu0 0.0
        %5617 = vmatprep.subr.mxu0 0.0
        %5618 = vmatpush1.msra.mxu0 0.0
        %5619 = vmatprep.subr.mxu0 0.0
        %5620 = vmatpush1.msra.mxu0 0.0
        %5621 = vmatprep.subr.mxu0 0.0
        %5622 = vmatpush1.msra.mxu0 0.0
        %5623 = vmatprep.subr.mxu0 0.0
        %5624 = vmatpush1.msra.mxu0 0.0
        %5625 = vmatprep.subr.mxu0 0.0
        %5626 = vmatpush1.msra.mxu0 0.0
        %5627 = vmatprep.subr.mxu0 0.0
        %5628 = vmatpush1.msra.mxu0 0.0
        %5629 = vmatprep.subr.mxu0 0.0
        %5630 = vmatpush1.msra.mxu0 0.0
        %5631 = vmatprep.subr.mxu0 0.0
        %5632 = vmatpush1.msra.mxu0 0.0
        %5633 = vmatprep.subr.mxu0 0.0
        %5634 = vmatpush1.msra.mxu0 0.0
        %5635 = vmatprep.subr.mxu0 0.0
        %5636 = vmatpush1.msra.mxu0 0.0
        %5637 = vmatprep.subr.mxu0 0.0
        %5638 = vmatpush1.msra.mxu0 0.0
        %5639 = vmatprep.subr.mxu0 0.0
        %5640 = vmatpush1.msra.mxu0 0.0
        %5641 = vmatprep.subr.mxu0 0.0
        %5642 = vmatpush1.msra.mxu0 0.0
        %5643 = vmatprep.subr.mxu0 0.0
        %5644 = vmatpush1.msra.mxu0 0.0
        %5645 = vmatprep.subr.mxu0 0.0
        %5646 = vmatpush1.msra.mxu0 0.0
        %5647 = vmatprep.subr.mxu0 0.0
        %5648 = vmatpush1.msra.mxu0 0.0
        %5649 = vmatprep.subr.mxu0 0.0
        %5650 = vmatpush1.msra.mxu0 0.0
        %5651 = vmatprep.subr.mxu0 0.0
        %5652 = vmatpush1.msra.mxu0 0.0
        %5653 = vmatprep.mubr.f32.mxu0 0.0
        %5654 = vmatmul.mubr.f32.gmra.mrb[0].mxu0 %v5587
        %v5655 = vpop.f32.mrb[0].mxu0
        %v5656 = vadd.f32 %v5572, %v5655
        %v5657 = vpop.f32.mrb[0].mxu0
        %5658 = vdwg.mxu0
        %v5659 = vadd.f32 %v5656, %v3455
        %v5660 = vxor.u32 %v5659, 2147483648
        %v5661 = vmul.f32 %v5660, 1.442695
        %v5662 = vpow.pop %v5661
        %v5663 = vadd.f32 %v5662, 1.0
        %v5664 = vrcp.pop %v5663
        %v5665 = vmul.f32 1.0, %v5664
        %v5666 = vtanh.pop %v5659
        %v5667 = vmul.f32 %v5665, %v5310
        %5669 = vrot.lane.b32.xlu0 %v5666, 64
        %v5670 = vpop.permute.xlu0 %5669
        %v5672 = vmul.f32 %v5665, %v5670
        %5674 = vrot.lane.b32.xlu0 %v5672, 32
        %v5675 = vpop.permute.xlu0 %5674
        %v5677 = vadd.f32 %v5667, %v5675
        %v5678 = vtanh.pop %v5677
        %5680 = vrot.lane.b32.xlu0 %v5678, 64
        %v5681 = vpop.permute.xlu0 %5680
        %v5683 = vmul.f32 %v5665, %v5681
        %v5684 = vadd.f32 %v5317, %v5683
        %v5685 = vld [vmem:[#allocation3 + $0x7] sm:$0x1]
        %v5686 = vld [vmem:[#allocation3 + $0x17] sm:$0x1]
        %v5687 = vld [vmem:[#allocation3 + $0x27] sm:$0x1]
        %v5688 = vld [vmem:[#allocation3 + $0x37] sm:$0x1]
        %5689 = vmatprep.subr.mxu0 0.0
        %5690 = vmatpush1.msra.mxu0 %v2952
        %5691 = vmatprep.subr.mxu0 0.0
        %5692 = vmatpush1.msra.mxu0 %v2953
        %5693 = vmatprep.subr.mxu0 0.0
        %5694 = vmatpush1.msra.mxu0 %v2954
        %5695 = vmatprep.subr.mxu0 0.0
        %5696 = vmatpush1.msra.mxu0 %v2955
        %5697 = vmatprep.subr.mxu0 0.0
        %5698 = vmatpush1.msra.mxu0 0.0
        %5699 = vmatprep.subr.mxu0 0.0
        %5700 = vmatpush1.msra.mxu0 0.0
        %5701 = vmatprep.subr.mxu0 0.0
        %5702 = vmatpush1.msra.mxu0 0.0
        %5703 = vmatprep.subr.mxu0 0.0
        %5704 = vmatpush1.msra.mxu0 0.0
        %5705 = vmatprep.subr.mxu0 0.0
        %5706 = vmatpush1.msra.mxu0 0.0
        %5707 = vmatprep.subr.mxu0 0.0
        %5708 = vmatpush1.msra.mxu0 0.0
        %5709 = vmatprep.subr.mxu0 0.0
        %5710 = vmatpush1.msra.mxu0 0.0
        %5711 = vmatprep.subr.mxu0 0.0
        %5712 = vmatpush1.msra.mxu0 0.0
        %5713 = vmatprep.subr.mxu0 0.0
        %5714 = vmatpush1.msra.mxu0 0.0
        %5715 = vmatprep.subr.mxu0 0.0
        %5716 = vmatpush1.msra.mxu0 0.0
        %5717 = vmatprep.subr.mxu0 0.0
        %5718 = vmatpush1.msra.mxu0 0.0
        %5719 = vmatprep.subr.mxu0 0.0
        %5720 = vmatpush1.msra.mxu0 0.0
        %5721 = vmatprep.subr.mxu0 0.0
        %5722 = vmatpush1.msra.mxu0 0.0
        %5723 = vmatprep.subr.mxu0 0.0
        %5724 = vmatpush1.msra.mxu0 0.0
        %5725 = vmatprep.subr.mxu0 0.0
        %5726 = vmatpush1.msra.mxu0 0.0
        %5727 = vmatprep.subr.mxu0 0.0
        %5728 = vmatpush1.msra.mxu0 0.0
        %5729 = vmatprep.subr.mxu0 0.0
        %5730 = vmatpush1.msra.mxu0 0.0
        %5731 = vmatprep.subr.mxu0 0.0
        %5732 = vmatpush1.msra.mxu0 0.0
        %5733 = vmatprep.subr.mxu0 0.0
        %5734 = vmatpush1.msra.mxu0 0.0
        %5735 = vmatprep.subr.mxu0 0.0
        %5736 = vmatpush1.msra.mxu0 0.0
        %5737 = vmatprep.subr.mxu0 0.0
        %5738 = vmatpush1.msra.mxu0 0.0
        %5739 = vmatprep.subr.mxu0 0.0
        %5740 = vmatpush1.msra.mxu0 0.0
        %5741 = vmatprep.subr.mxu0 0.0
        %5742 = vmatpush1.msra.mxu0 0.0
        %5743 = vmatprep.subr.mxu0 0.0
        %5744 = vmatpush1.msra.mxu0 0.0
        %5745 = vmatprep.subr.mxu0 0.0
        %5746 = vmatpush1.msra.mxu0 0.0
        %5747 = vmatprep.subr.mxu0 0.0
        %5748 = vmatpush1.msra.mxu0 0.0
        %5749 = vmatprep.subr.mxu0 0.0
        %5750 = vmatpush1.msra.mxu0 0.0
        %5751 = vmatprep.subr.mxu0 0.0
        %5752 = vmatpush1.msra.mxu0 0.0
        %5753 = vmatprep.mubr.f32.mxu0 0.0
        %5754 = vmatmul.mubr.f32.gmra.mrb[0].mxu0 %v5587
        %v5755 = vpop.f32.mrb[0].mxu0
        %v5756 = vadd.f32 0.0, %v5755
        %v5757 = vpop.f32.mrb[0].mxu0
        %5758 = vdwg.mxu0
        %v5760 = vrot.slane %v5756, 1
        %v5761 = vrot.slane %v5756, 2
        %v5762 = vrot.slane %v5756, 3
        %v5767 = vadd.f32 %v5685, %v5756
        %v5768 = vadd.f32 %v5686, %v5760
        %v5769 = vadd.f32 %v5687, %v5761
        %v5770 = vadd.f32 %v5688, %v5762
        %v5771 = vxor.u32 %v5767, 2147483648
        %v5772 = vxor.u32 %v5768, 2147483648
        %v5773 = vxor.u32 %v5769, 2147483648
        %v5774 = vxor.u32 %v5770, 2147483648
        %v5775 = vmul.f32 %v5771, 1.442695
        %v5776 = vpow.pop %v5775
        %v5777 = vmul.f32 %v5772, 1.442695
        %v5778 = vpow.pop %v5777
        %v5779 = vmul.f32 %v5773, 1.442695
        %v5780 = vpow.pop %v5779
        %v5781 = vmul.f32 %v5774, 1.442695
        %v5782 = vpow.pop %v5781
        %v5783 = vadd.f32 %v5776, 1.0
        %v5784 = vadd.f32 %v5778, 1.0
        %v5785 = vadd.f32 %v5780, 1.0
        %v5786 = vadd.f32 %v5782, 1.0
        %v5787 = vrcp.pop %v5783
        %v5788 = vmul.f32 1.0, %v5787
        %v5789 = vrcp.pop %v5784
        %v5790 = vmul.f32 1.0, %v5789
        %v5791 = vrcp.pop %v5785
        %v5792 = vmul.f32 1.0, %v5791
        %v5793 = vrcp.pop %v5786
        %v5794 = vmul.f32 1.0, %v5793
        %v5795 = vtanh.pop %v5767
        %v5796 = vtanh.pop %v5768
        %v5797 = vtanh.pop %v5769
        %v5798 = vtanh.pop %v5770
        %v5799 = vmul.f32 %v5788, %v5472
        %v5800 = vmul.f32 %v5790, %v5473
        %v5801 = vmul.f32 %v5792, %v5474
        %v5802 = vmul.f32 %v5794, %v5475
        %5807 = vrot.lane.b32.xlu0 %v5795, 64
        %v5808 = vpop.permute.xlu0 %5807
        %5809 = vrot.lane.b32.xlu0 %v5796, 64
        %v5810 = vpop.permute.xlu0 %5809
        %5811 = vrot.lane.b32.xlu0 %v5797, 64
        %v5812 = vpop.permute.xlu0 %5811
        %5813 = vrot.lane.b32.xlu0 %v5798, 64
        %v5814 = vpop.permute.xlu0 %5813
        %v5819 = vmul.f32 %v5788, %v5808
        %v5820 = vmul.f32 %v5790, %v5810
        %v5821 = vmul.f32 %v5792, %v5812
        %v5822 = vmul.f32 %v5794, %v5814
        %5827 = vrot.lane.b32.xlu0 %v5819, 32
        %v5828 = vpop.permute.xlu0 %5827
        %5829 = vrot.lane.b32.xlu0 %v5820, 32
        %v5830 = vpop.permute.xlu0 %5829
        %5831 = vrot.lane.b32.xlu0 %v5821, 32
        %v5832 = vpop.permute.xlu0 %5831
        %5833 = vrot.lane.b32.xlu0 %v5822, 32
        %v5834 = vpop.permute.xlu0 %5833
        %v5839 = vadd.f32 %v5799, %v5828
        %v5840 = vadd.f32 %v5800, %v5830
        %v5841 = vadd.f32 %v5801, %v5832
        %v5842 = vadd.f32 %v5802, %v5834
        %v5843 = vtanh.pop %v5839
        %v5844 = vtanh.pop %v5840
        %v5845 = vtanh.pop %v5841
        %v5846 = vtanh.pop %v5842
        %5851 = vrot.lane.b32.xlu0 %v5843, 64
        %v5852 = vpop.permute.xlu0 %5851
        %5853 = vrot.lane.b32.xlu0 %v5844, 64
        %v5854 = vpop.permute.xlu0 %5853
        %5855 = vrot.lane.b32.xlu0 %v5845, 64
        %v5856 = vpop.permute.xlu0 %5855
        %5857 = vrot.lane.b32.xlu0 %v5846, 64
        %v5858 = vpop.permute.xlu0 %5857
        %v5863 = vmul.f32 %v5788, %v5852
        %v5864 = vmul.f32 %v5790, %v5854
        %v5865 = vmul.f32 %v5792, %v5856
        %v5866 = vmul.f32 %v5794, %v5858
        %5868 = vrot.lane.b32.xlu0 %v5683, 32
        %v5869 = vpop.permute.xlu0 %5868
        %v5870 = vsel %vm3112, %v5869, 0
        %5872 = vmatprep.subr.mxu0 0.0
        %5873 = vmatpush1.msra.mxu0 %v2956
        %5874 = vmatprep.subr.mxu0 0.0
        %5875 = vmatpush1.msra.mxu0 %v2957
        %5876 = vmatprep.subr.mxu0 0.0
        %5877 = vmatpush1.msra.mxu0 %v2958
        %5878 = vmatprep.subr.mxu0 0.0
        %5879 = vmatpush1.msra.mxu0 %v2959
        %5880 = vmatprep.subr.mxu0 0.0
        %5881 = vmatpush1.msra.mxu0 0.0
        %5882 = vmatprep.subr.mxu0 0.0
        %5883 = vmatpush1.msra.mxu0 0.0
        %5884 = vmatprep.subr.mxu0 0.0
        %5885 = vmatpush1.msra.mxu0 0.0
        %5886 = vmatprep.subr.mxu0 0.0
        %5887 = vmatpush1.msra.mxu0 0.0
        %5888 = vmatprep.subr.mxu0 0.0
        %5889 = vmatpush1.msra.mxu0 0.0
        %5890 = vmatprep.subr.mxu0 0.0
        %5891 = vmatpush1.msra.mxu0 0.0
        %5892 = vmatprep.subr.mxu0 0.0
        %5893 = vmatpush1.msra.mxu0 0.0
        %5894 = vmatprep.subr.mxu0 0.0
        %5895 = vmatpush1.msra.mxu0 0.0
        %5896 = vmatprep.subr.mxu0 0.0
        %5897 = vmatpush1.msra.mxu0 0.0
        %5898 = vmatprep.subr.mxu0 0.0
        %5899 = vmatpush1.msra.mxu0 0.0
        %5900 = vmatprep.subr.mxu0 0.0
        %5901 = vmatpush1.msra.mxu0 0.0
        %5902 = vmatprep.subr.mxu0 0.0
        %5903 = vmatpush1.msra.mxu0 0.0
        %5904 = vmatprep.subr.mxu0 0.0
        %5905 = vmatpush1.msra.mxu0 0.0
        %5906 = vmatprep.subr.mxu0 0.0
        %5907 = vmatpush1.msra.mxu0 0.0
        %5908 = vmatprep.subr.mxu0 0.0
        %5909 = vmatpush1.msra.mxu0 0.0
        %5910 = vmatprep.subr.mxu0 0.0
        %5911 = vmatpush1.msra.mxu0 0.0
        %5912 = vmatprep.subr.mxu0 0.0
        %5913 = vmatpush1.msra.mxu0 0.0
        %5914 = vmatprep.subr.mxu0 0.0
        %5915 = vmatpush1.msra.mxu0 0.0
        %5916 = vmatprep.subr.mxu0 0.0
        %5917 = vmatpush1.msra.mxu0 0.0
        %5918 = vmatprep.subr.mxu0 0.0
        %5919 = vmatpush1.msra.mxu0 0.0
        %5920 = vmatprep.subr.mxu0 0.0
        %5921 = vmatpush1.msra.mxu0 0.0
        %5922 = vmatprep.subr.mxu0 0.0
        %5923 = vmatpush1.msra.mxu0 0.0
        %5924 = vmatprep.subr.mxu0 0.0
        %5925 = vmatpush1.msra.mxu0 0.0
        %5926 = vmatprep.subr.mxu0 0.0
        %5927 = vmatpush1.msra.mxu0 0.0
        %5928 = vmatprep.subr.mxu0 0.0
        %5929 = vmatpush1.msra.mxu0 0.0
        %5930 = vmatprep.subr.mxu0 0.0
        %5931 = vmatpush1.msra.mxu0 0.0
        %5932 = vmatprep.subr.mxu0 0.0
        %5933 = vmatpush1.msra.mxu0 0.0
        %5934 = vmatprep.subr.mxu0 0.0
        %5935 = vmatpush1.msra.mxu0 0.0
        %5936 = vmatprep.mubr.f32.mxu0 0.0
        %5937 = vmatmul.mubr.f32.gmra.mrb[0].mxu0 %v5870
        %v5938 = vpop.f32.mrb[0].mxu0
        %v5939 = vadd.f32 0.0, %v5938
        %v5940 = vpop.f32.mrb[0].mxu0
        %5941 = vdwg.mxu0
        %v5946 = vrot.slane %v5864, 7
        %v5947 = vsel %vm3369, %v5946, %v5863
        %v5948 = vrot.slane %v5865, 6
        %v5949 = vsel %vm3372, %v5948, %v5947
        %v5950 = vrot.slane %v5866, 5
        %v5951 = vsel %vm3375, %v5950, %v5949
        %5952 = vrot.lane.b32.xlu0 %v5951, 32
        %v5953 = vpop.permute.xlu0 %5952
        %v5954 = vsel %vm3112, %v5953, 0
        %5956 = vmatprep.subr.mxu0 0.0
        %5957 = vmatpush1.msra.mxu0 %v2948
        %5958 = vmatprep.subr.mxu0 0.0
        %5959 = vmatpush1.msra.mxu0 %v2949
        %5960 = vmatprep.subr.mxu0 0.0
        %5961 = vmatpush1.msra.mxu0 %v2950
        %5962 = vmatprep.subr.mxu0 0.0
        %5963 = vmatpush1.msra.mxu0 %v2951
        %5964 = vmatprep.subr.mxu0 0.0
        %5965 = vmatpush1.msra.mxu0 0.0
        %5966 = vmatprep.subr.mxu0 0.0
        %5967 = vmatpush1.msra.mxu0 0.0
        %5968 = vmatprep.subr.mxu0 0.0
        %5969 = vmatpush1.msra.mxu0 0.0
        %5970 = vmatprep.subr.mxu0 0.0
        %5971 = vmatpush1.msra.mxu0 0.0
        %5972 = vmatprep.subr.mxu0 0.0
        %5973 = vmatpush1.msra.mxu0 0.0
        %5974 = vmatprep.subr.mxu0 0.0
        %5975 = vmatpush1.msra.mxu0 0.0
        %5976 = vmatprep.subr.mxu0 0.0
        %5977 = vmatpush1.msra.mxu0 0.0
        %5978 = vmatprep.subr.mxu0 0.0
        %5979 = vmatpush1.msra.mxu0 0.0
        %5980 = vmatprep.subr.mxu0 0.0
        %5981 = vmatpush1.msra.mxu0 0.0
        %5982 = vmatprep.subr.mxu0 0.0
        %5983 = vmatpush1.msra.mxu0 0.0
        %5984 = vmatprep.subr.mxu0 0.0
        %5985 = vmatpush1.msra.mxu0 0.0
        %5986 = vmatprep.subr.mxu0 0.0
        %5987 = vmatpush1.msra.mxu0 0.0
        %5988 = vmatprep.subr.mxu0 0.0
        %5989 = vmatpush1.msra.mxu0 0.0
        %5990 = vmatprep.subr.mxu0 0.0
        %5991 = vmatpush1.msra.mxu0 0.0
        %5992 = vmatprep.subr.mxu0 0.0
        %5993 = vmatpush1.msra.mxu0 0.0
        %5994 = vmatprep.subr.mxu0 0.0
        %5995 = vmatpush1.msra.mxu0 0.0
        %5996 = vmatprep.subr.mxu0 0.0
        %5997 = vmatpush1.msra.mxu0 0.0
        %5998 = vmatprep.subr.mxu0 0.0
        %5999 = vmatpush1.msra.mxu0 0.0
        %6000 = vmatprep.subr.mxu0 0.0
        %6001 = vmatpush1.msra.mxu0 0.0
        %6002 = vmatprep.subr.mxu0 0.0
        %6003 = vmatpush1.msra.mxu0 0.0
        %6004 = vmatprep.subr.mxu0 0.0
        %6005 = vmatpush1.msra.mxu0 0.0
        %6006 = vmatprep.subr.mxu0 0.0
        %6007 = vmatpush1.msra.mxu0 0.0
        %6008 = vmatprep.subr.mxu0 0.0
        %6009 = vmatpush1.msra.mxu0 0.0
        %6010 = vmatprep.subr.mxu0 0.0
        %6011 = vmatpush1.msra.mxu0 0.0
        %6012 = vmatprep.subr.mxu0 0.0
        %6013 = vmatpush1.msra.mxu0 0.0
        %6014 = vmatprep.subr.mxu0 0.0
        %6015 = vmatpush1.msra.mxu0 0.0
        %6016 = vmatprep.subr.mxu0 0.0
        %6017 = vmatpush1.msra.mxu0 0.0
        %6018 = vmatprep.subr.mxu0 0.0
        %6019 = vmatpush1.msra.mxu0 0.0
        %6020 = vmatprep.mubr.f32.mxu0 0.0
        %6021 = vmatmul.mubr.f32.gmra.mrb[0].mxu0 %v5954
        %v6022 = vpop.f32.mrb[0].mxu0
        %v6023 = vadd.f32 %v5939, %v6022
        %v6024 = vpop.f32.mrb[0].mxu0
        %6025 = vdwg.mxu0
        %v6026 = vadd.f32 %v6023, %v3455
        %v6027 = vxor.u32 %v6026, 2147483648
        %v6028 = vmul.f32 %v6027, 1.442695
        %v6029 = vpow.pop %v6028
        %v6030 = vadd.f32 %v6029, 1.0
        %v6031 = vrcp.pop %v6030
        %v6032 = vmul.f32 1.0, %v6031
        %v6033 = vtanh.pop %v6026
        %v6034 = vmul.f32 %v6032, %v5677
        %6036 = vrot.lane.b32.xlu0 %v6033, 64
        %v6037 = vpop.permute.xlu0 %6036
        %v6039 = vmul.f32 %v6032, %v6037
        %6041 = vrot.lane.b32.xlu0 %v6039, 32
        %v6042 = vpop.permute.xlu0 %6041
        %v6044 = vadd.f32 %v6034, %v6042
        %v6045 = vtanh.pop %v6044
        %6047 = vrot.lane.b32.xlu0 %v6045, 64
        %v6048 = vpop.permute.xlu0 %6047
        %v6050 = vmul.f32 %v6032, %v6048
        %v6051 = vadd.f32 %v5684, %v6050
        %v6052 = vld [vmem:[#allocation3 + $0x8] sm:$0x1]
        %v6053 = vld [vmem:[#allocation3 + $0x18] sm:$0x1]
        %v6054 = vld [vmem:[#allocation3 + $0x28] sm:$0x1]
        %v6055 = vld [vmem:[#allocation3 + $0x38] sm:$0x1]
        %6056 = vmatprep.subr.mxu0 0.0
        %6057 = vmatpush1.msra.mxu0 %v2952
        %6058 = vmatprep.subr.mxu0 0.0
        %6059 = vmatpush1.msra.mxu0 %v2953
        %6060 = vmatprep.subr.mxu0 0.0
        %6061 = vmatpush1.msra.mxu0 %v2954
        %6062 = vmatprep.subr.mxu0 0.0
        %6063 = vmatpush1.msra.mxu0 %v2955
        %6064 = vmatprep.subr.mxu0 0.0
        %6065 = vmatpush1.msra.mxu0 0.0
        %6066 = vmatprep.subr.mxu0 0.0
        %6067 = vmatpush1.msra.mxu0 0.0
        %6068 = vmatprep.subr.mxu0 0.0
        %6069 = vmatpush1.msra.mxu0 0.0
        %6070 = vmatprep.subr.mxu0 0.0
        %6071 = vmatpush1.msra.mxu0 0.0
        %6072 = vmatprep.subr.mxu0 0.0
        %6073 = vmatpush1.msra.mxu0 0.0
        %6074 = vmatprep.subr.mxu0 0.0
        %6075 = vmatpush1.msra.mxu0 0.0
        %6076 = vmatprep.subr.mxu0 0.0
        %6077 = vmatpush1.msra.mxu0 0.0
        %6078 = vmatprep.subr.mxu0 0.0
        %6079 = vmatpush1.msra.mxu0 0.0
        %6080 = vmatprep.subr.mxu0 0.0
        %6081 = vmatpush1.msra.mxu0 0.0
        %6082 = vmatprep.subr.mxu0 0.0
        %6083 = vmatpush1.msra.mxu0 0.0
        %6084 = vmatprep.subr.mxu0 0.0
        %6085 = vmatpush1.msra.mxu0 0.0
        %6086 = vmatprep.subr.mxu0 0.0
        %6087 = vmatpush1.msra.mxu0 0.0
        %6088 = vmatprep.subr.mxu0 0.0
        %6089 = vmatpush1.msra.mxu0 0.0
        %6090 = vmatprep.subr.mxu0 0.0
        %6091 = vmatpush1.msra.mxu0 0.0
        %6092 = vmatprep.subr.mxu0 0.0
        %6093 = vmatpush1.msra.mxu0 0.0
        %6094 = vmatprep.subr.mxu0 0.0
        %6095 = vmatpush1.msra.mxu0 0.0
        %6096 = vmatprep.subr.mxu0 0.0
        %6097 = vmatpush1.msra.mxu0 0.0
        %6098 = vmatprep.subr.mxu0 0.0
        %6099 = vmatpush1.msra.mxu0 0.0
        %6100 = vmatprep.subr.mxu0 0.0
        %6101 = vmatpush1.msra.mxu0 0.0
        %6102 = vmatprep.subr.mxu0 0.0
        %6103 = vmatpush1.msra.mxu0 0.0
        %6104 = vmatprep.subr.mxu0 0.0
        %6105 = vmatpush1.msra.mxu0 0.0
        %6106 = vmatprep.subr.mxu0 0.0
        %6107 = vmatpush1.msra.mxu0 0.0
        %6108 = vmatprep.subr.mxu0 0.0
        %6109 = vmatpush1.msra.mxu0 0.0
        %6110 = vmatprep.subr.mxu0 0.0
        %6111 = vmatpush1.msra.mxu0 0.0
        %6112 = vmatprep.subr.mxu0 0.0
        %6113 = vmatpush1.msra.mxu0 0.0
        %6114 = vmatprep.subr.mxu0 0.0
        %6115 = vmatpush1.msra.mxu0 0.0
        %6116 = vmatprep.subr.mxu0 0.0
        %6117 = vmatpush1.msra.mxu0 0.0
        %6118 = vmatprep.subr.mxu0 0.0
        %6119 = vmatpush1.msra.mxu0 0.0
        %6120 = vmatprep.mubr.f32.mxu0 0.0
        %6121 = vmatmul.mubr.f32.gmra.mrb[0].mxu0 %v5954
        %v6122 = vpop.f32.mrb[0].mxu0
        %v6123 = vadd.f32 0.0, %v6122
        %v6124 = vpop.f32.mrb[0].mxu0
        %6125 = vdwg.mxu0
        %v6127 = vrot.slane %v6123, 1
        %v6128 = vrot.slane %v6123, 2
        %v6129 = vrot.slane %v6123, 3
        %v6134 = vadd.f32 %v6052, %v6123
        %v6135 = vadd.f32 %v6053, %v6127
        %v6136 = vadd.f32 %v6054, %v6128
        %v6137 = vadd.f32 %v6055, %v6129
        %v6138 = vxor.u32 %v6134, 2147483648
        %v6139 = vxor.u32 %v6135, 2147483648
        %v6140 = vxor.u32 %v6136, 2147483648
        %v6141 = vxor.u32 %v6137, 2147483648
        %v6142 = vmul.f32 %v6138, 1.442695
        %v6143 = vpow.pop %v6142
        %v6144 = vmul.f32 %v6139, 1.442695
        %v6145 = vpow.pop %v6144
        %v6146 = vmul.f32 %v6140, 1.442695
        %v6147 = vpow.pop %v6146
        %v6148 = vmul.f32 %v6141, 1.442695
        %v6149 = vpow.pop %v6148
        %v6150 = vadd.f32 %v6143, 1.0
        %v6151 = vadd.f32 %v6145, 1.0
        %v6152 = vadd.f32 %v6147, 1.0
        %v6153 = vadd.f32 %v6149, 1.0
        %v6154 = vrcp.pop %v6150
        %v6155 = vmul.f32 1.0, %v6154
        %v6156 = vrcp.pop %v6151
        %v6157 = vmul.f32 1.0, %v6156
        %v6158 = vrcp.pop %v6152
        %v6159 = vmul.f32 1.0, %v6158
        %v6160 = vrcp.pop %v6153
        %v6161 = vmul.f32 1.0, %v6160
        %v6162 = vtanh.pop %v6134
        %v6163 = vtanh.pop %v6135
        %v6164 = vtanh.pop %v6136
        %v6165 = vtanh.pop %v6137
        %v6166 = vmul.f32 %v6155, %v5839
        %v6167 = vmul.f32 %v6157, %v5840
        %v6168 = vmul.f32 %v6159, %v5841
        %v6169 = vmul.f32 %v6161, %v5842
        %6174 = vrot.lane.b32.xlu0 %v6162, 64
        %v6175 = vpop.permute.xlu0 %6174
        %6176 = vrot.lane.b32.xlu0 %v6163, 64
        %v6177 = vpop.permute.xlu0 %6176
        %6178 = vrot.lane.b32.xlu0 %v6164, 64
        %v6179 = vpop.permute.xlu0 %6178
        %6180 = vrot.lane.b32.xlu0 %v6165, 64
        %v6181 = vpop.permute.xlu0 %6180
        %v6186 = vmul.f32 %v6155, %v6175
        %v6187 = vmul.f32 %v6157, %v6177
        %v6188 = vmul.f32 %v6159, %v6179
        %v6189 = vmul.f32 %v6161, %v6181
        %6194 = vrot.lane.b32.xlu0 %v6186, 32
        %v6195 = vpop.permute.xlu0 %6194
        %6196 = vrot.lane.b32.xlu0 %v6187, 32
        %v6197 = vpop.permute.xlu0 %6196
        %6198 = vrot.lane.b32.xlu0 %v6188, 32
        %v6199 = vpop.permute.xlu0 %6198
        %6200 = vrot.lane.b32.xlu0 %v6189, 32
        %v6201 = vpop.permute.xlu0 %6200
        %v6206 = vadd.f32 %v6166, %v6195
        %v6207 = vadd.f32 %v6167, %v6197
        %v6208 = vadd.f32 %v6168, %v6199
        %v6209 = vadd.f32 %v6169, %v6201
        %v6210 = vtanh.pop %v6206
        %v6211 = vtanh.pop %v6207
        %v6212 = vtanh.pop %v6208
        %v6213 = vtanh.pop %v6209
        %6218 = vrot.lane.b32.xlu0 %v6210, 64
        %v6219 = vpop.permute.xlu0 %6218
        %6220 = vrot.lane.b32.xlu0 %v6211, 64
        %v6221 = vpop.permute.xlu0 %6220
        %6222 = vrot.lane.b32.xlu0 %v6212, 64
        %v6223 = vpop.permute.xlu0 %6222
        %6224 = vrot.lane.b32.xlu0 %v6213, 64
        %v6225 = vpop.permute.xlu0 %6224
        %v6230 = vmul.f32 %v6155, %v6219
        %v6231 = vmul.f32 %v6157, %v6221
        %v6232 = vmul.f32 %v6159, %v6223
        %v6233 = vmul.f32 %v6161, %v6225
        %6235 = vrot.lane.b32.xlu0 %v6050, 32
        %v6236 = vpop.permute.xlu0 %6235
        %v6237 = vsel %vm3112, %v6236, 0
        %6239 = vmatprep.subr.mxu0 0.0
        %6240 = vmatpush1.msra.mxu0 %v2956
        %6241 = vmatprep.subr.mxu0 0.0
        %6242 = vmatpush1.msra.mxu0 %v2957
        %6243 = vmatprep.subr.mxu0 0.0
        %6244 = vmatpush1.msra.mxu0 %v2958
        %6245 = vmatprep.subr.mxu0 0.0
        %6246 = vmatpush1.msra.mxu0 %v2959
        %6247 = vmatprep.subr.mxu0 0.0
        %6248 = vmatpush1.msra.mxu0 0.0
        %6249 = vmatprep.subr.mxu0 0.0
        %6250 = vmatpush1.msra.mxu0 0.0
        %6251 = vmatprep.subr.mxu0 0.0
        %6252 = vmatpush1.msra.mxu0 0.0
        %6253 = vmatprep.subr.mxu0 0.0
        %6254 = vmatpush1.msra.mxu0 0.0
        %6255 = vmatprep.subr.mxu0 0.0
        %6256 = vmatpush1.msra.mxu0 0.0
        %6257 = vmatprep.subr.mxu0 0.0
        %6258 = vmatpush1.msra.mxu0 0.0
        %6259 = vmatprep.subr.mxu0 0.0
        %6260 = vmatpush1.msra.mxu0 0.0
        %6261 = vmatprep.subr.mxu0 0.0
        %6262 = vmatpush1.msra.mxu0 0.0
        %6263 = vmatprep.subr.mxu0 0.0
        %6264 = vmatpush1.msra.mxu0 0.0
        %6265 = vmatprep.subr.mxu0 0.0
        %6266 = vmatpush1.msra.mxu0 0.0
        %6267 = vmatprep.subr.mxu0 0.0
        %6268 = vmatpush1.msra.mxu0 0.0
        %6269 = vmatprep.subr.mxu0 0.0
        %6270 = vmatpush1.msra.mxu0 0.0
        %6271 = vmatprep.subr.mxu0 0.0
        %6272 = vmatpush1.msra.mxu0 0.0
        %6273 = vmatprep.subr.mxu0 0.0
        %6274 = vmatpush1.msra.mxu0 0.0
        %6275 = vmatprep.subr.mxu0 0.0
        %6276 = vmatpush1.msra.mxu0 0.0
        %6277 = vmatprep.subr.mxu0 0.0
        %6278 = vmatpush1.msra.mxu0 0.0
        %6279 = vmatprep.subr.mxu0 0.0
        %6280 = vmatpush1.msra.mxu0 0.0
        %6281 = vmatprep.subr.mxu0 0.0
        %6282 = vmatpush1.msra.mxu0 0.0
        %6283 = vmatprep.subr.mxu0 0.0
        %6284 = vmatpush1.msra.mxu0 0.0
        %6285 = vmatprep.subr.mxu0 0.0
        %6286 = vmatpush1.msra.mxu0 0.0
        %6287 = vmatprep.subr.mxu0 0.0
        %6288 = vmatpush1.msra.mxu0 0.0
        %6289 = vmatprep.subr.mxu0 0.0
        %6290 = vmatpush1.msra.mxu0 0.0
        %6291 = vmatprep.subr.mxu0 0.0
        %6292 = vmatpush1.msra.mxu0 0.0
        %6293 = vmatprep.subr.mxu0 0.0
        %6294 = vmatpush1.msra.mxu0 0.0
        %6295 = vmatprep.subr.mxu0 0.0
        %6296 = vmatpush1.msra.mxu0 0.0
        %6297 = vmatprep.subr.mxu0 0.0
        %6298 = vmatpush1.msra.mxu0 0.0
        %6299 = vmatprep.subr.mxu0 0.0
        %6300 = vmatpush1.msra.mxu0 0.0
        %6301 = vmatprep.subr.mxu0 0.0
        %6302 = vmatpush1.msra.mxu0 0.0
        %6303 = vmatprep.mubr.f32.mxu0 0.0
        %6304 = vmatmul.mubr.f32.gmra.mrb[0].mxu0 %v6237
        %v6305 = vpop.f32.mrb[0].mxu0
        %v6306 = vadd.f32 0.0, %v6305
        %v6307 = vpop.f32.mrb[0].mxu0
        %6308 = vdwg.mxu0
        %v6313 = vrot.slane %v6231, 7
        %v6314 = vsel %vm3369, %v6313, %v6230
        %v6315 = vrot.slane %v6232, 6
        %v6316 = vsel %vm3372, %v6315, %v6314
        %v6317 = vrot.slane %v6233, 5
        %v6318 = vsel %vm3375, %v6317, %v6316
        %6319 = vrot.lane.b32.xlu0 %v6318, 32
        %v6320 = vpop.permute.xlu0 %6319
        %v6321 = vsel %vm3112, %v6320, 0
        %6323 = vmatprep.subr.mxu0 0.0
        %6324 = vmatpush1.msra.mxu0 %v2948
        %6325 = vmatprep.subr.mxu0 0.0
        %6326 = vmatpush1.msra.mxu0 %v2949
        %6327 = vmatprep.subr.mxu0 0.0
        %6328 = vmatpush1.msra.mxu0 %v2950
        %6329 = vmatprep.subr.mxu0 0.0
        %6330 = vmatpush1.msra.mxu0 %v2951
        %6331 = vmatprep.subr.mxu0 0.0
        %6332 = vmatpush1.msra.mxu0 0.0
        %6333 = vmatprep.subr.mxu0 0.0
        %6334 = vmatpush1.msra.mxu0 0.0
        %6335 = vmatprep.subr.mxu0 0.0
        %6336 = vmatpush1.msra.mxu0 0.0
        %6337 = vmatprep.subr.mxu0 0.0
        %6338 = vmatpush1.msra.mxu0 0.0
        %6339 = vmatprep.subr.mxu0 0.0
        %6340 = vmatpush1.msra.mxu0 0.0
        %6341 = vmatprep.subr.mxu0 0.0
        %6342 = vmatpush1.msra.mxu0 0.0
        %6343 = vmatprep.subr.mxu0 0.0
        %6344 = vmatpush1.msra.mxu0 0.0
        %6345 = vmatprep.subr.mxu0 0.0
        %6346 = vmatpush1.msra.mxu0 0.0
        %6347 = vmatprep.subr.mxu0 0.0
        %6348 = vmatpush1.msra.mxu0 0.0
        %6349 = vmatprep.subr.mxu0 0.0
        %6350 = vmatpush1.msra.mxu0 0.0
        %6351 = vmatprep.subr.mxu0 0.0
        %6352 = vmatpush1.msra.mxu0 0.0
        %6353 = vmatprep.subr.mxu0 0.0
        %6354 = vmatpush1.msra.mxu0 0.0
        %6355 = vmatprep.subr.mxu0 0.0
        %6356 = vmatpush1.msra.mxu0 0.0
        %6357 = vmatprep.subr.mxu0 0.0
        %6358 = vmatpush1.msra.mxu0 0.0
        %6359 = vmatprep.subr.mxu0 0.0
        %6360 = vmatpush1.msra.mxu0 0.0
        %6361 = vmatprep.subr.mxu0 0.0
        %6362 = vmatpush1.msra.mxu0 0.0
        %6363 = vmatprep.subr.mxu0 0.0
        %6364 = vmatpush1.msra.mxu0 0.0
        %6365 = vmatprep.subr.mxu0 0.0
        %6366 = vmatpush1.msra.mxu0 0.0
        %6367 = vmatprep.subr.mxu0 0.0
        %6368 = vmatpush1.msra.mxu0 0.0
        %6369 = vmatprep.subr.mxu0 0.0
        %6370 = vmatpush1.msra.mxu0 0.0
        %6371 = vmatprep.subr.mxu0 0.0
        %6372 = vmatpush1.msra.mxu0 0.0
        %6373 = vmatprep.subr.mxu0 0.0
        %6374 = vmatpush1.msra.mxu0 0.0
        %6375 = vmatprep.subr.mxu0 0.0
        %6376 = vmatpush1.msra.mxu0 0.0
        %6377 = vmatprep.subr.mxu0 0.0
        %6378 = vmatpush1.msra.mxu0 0.0
        %6379 = vmatprep.subr.mxu0 0.0
        %6380 = vmatpush1.msra.mxu0 0.0
        %6381 = vmatprep.subr.mxu0 0.0
        %6382 = vmatpush1.msra.mxu0 0.0
        %6383 = vmatprep.subr.mxu0 0.0
        %6384 = vmatpush1.msra.mxu0 0.0
        %6385 = vmatprep.subr.mxu0 0.0
        %6386 = vmatpush1.msra.mxu0 0.0
        %6387 = vmatprep.mubr.f32.mxu0 0.0
        %6388 = vmatmul.mubr.f32.gmra.mrb[0].mxu0 %v6321
        %v6389 = vpop.f32.mrb[0].mxu0
        %v6390 = vadd.f32 %v6306, %v6389
        %v6391 = vpop.f32.mrb[0].mxu0
        %6392 = vdwg.mxu0
        %v6393 = vadd.f32 %v6390, %v3455
        %v6394 = vxor.u32 %v6393, 2147483648
        %v6395 = vmul.f32 %v6394, 1.442695
        %v6396 = vpow.pop %v6395
        %v6397 = vadd.f32 %v6396, 1.0
        %v6398 = vrcp.pop %v6397
        %v6399 = vmul.f32 1.0, %v6398
        %v6400 = vtanh.pop %v6393
        %v6401 = vmul.f32 %v6399, %v6044
        %6403 = vrot.lane.b32.xlu0 %v6400, 64
        %v6404 = vpop.permute.xlu0 %6403
        %v6406 = vmul.f32 %v6399, %v6404
        %6408 = vrot.lane.b32.xlu0 %v6406, 32
        %v6409 = vpop.permute.xlu0 %6408
        %v6411 = vadd.f32 %v6401, %v6409
        %v6412 = vtanh.pop %v6411
        %6414 = vrot.lane.b32.xlu0 %v6412, 64
        %v6415 = vpop.permute.xlu0 %6414
        %v6417 = vmul.f32 %v6399, %v6415
        %v6418 = vadd.f32 %v6051, %v6417
        %v6419 = vld [vmem:[#allocation3 + $0x9] sm:$0x1]
        %v6420 = vld [vmem:[#allocation3 + $0x19] sm:$0x1]
        %v6421 = vld [vmem:[#allocation3 + $0x29] sm:$0x1]
        %v6422 = vld [vmem:[#allocation3 + $0x39] sm:$0x1]
        %6423 = vmatprep.subr.mxu0 0.0
        %6424 = vmatpush1.msra.mxu0 %v2952
        %6425 = vmatprep.subr.mxu0 0.0
        %6426 = vmatpush1.msra.mxu0 %v2953
        %6427 = vmatprep.subr.mxu0 0.0
        %6428 = vmatpush1.msra.mxu0 %v2954
        %6429 = vmatprep.subr.mxu0 0.0
        %6430 = vmatpush1.msra.mxu0 %v2955
        %6431 = vmatprep.subr.mxu0 0.0
        %6432 = vmatpush1.msra.mxu0 0.0
        %6433 = vmatprep.subr.mxu0 0.0
        %6434 = vmatpush1.msra.mxu0 0.0
        %6435 = vmatprep.subr.mxu0 0.0
        %6436 = vmatpush1.msra.mxu0 0.0
        %6437 = vmatprep.subr.mxu0 0.0
        %6438 = vmatpush1.msra.mxu0 0.0
        %6439 = vmatprep.subr.mxu0 0.0
        %6440 = vmatpush1.msra.mxu0 0.0
        %6441 = vmatprep.subr.mxu0 0.0
        %6442 = vmatpush1.msra.mxu0 0.0
        %6443 = vmatprep.subr.mxu0 0.0
        %6444 = vmatpush1.msra.mxu0 0.0
        %6445 = vmatprep.subr.mxu0 0.0
        %6446 = vmatpush1.msra.mxu0 0.0
        %6447 = vmatprep.subr.mxu0 0.0
        %6448 = vmatpush1.msra.mxu0 0.0
        %6449 = vmatprep.subr.mxu0 0.0
        %6450 = vmatpush1.msra.mxu0 0.0
        %6451 = vmatprep.subr.mxu0 0.0
        %6452 = vmatpush1.msra.mxu0 0.0
        %6453 = vmatprep.subr.mxu0 0.0
        %6454 = vmatpush1.msra.mxu0 0.0
        %6455 = vmatprep.subr.mxu0 0.0
        %6456 = vmatpush1.msra.mxu0 0.0
        %6457 = vmatprep.subr.mxu0 0.0
        %6458 = vmatpush1.msra.mxu0 0.0
        %6459 = vmatprep.subr.mxu0 0.0
        %6460 = vmatpush1.msra.mxu0 0.0
        %6461 = vmatprep.subr.mxu0 0.0
        %6462 = vmatpush1.msra.mxu0 0.0
        %6463 = vmatprep.subr.mxu0 0.0
        %6464 = vmatpush1.msra.mxu0 0.0
        %6465 = vmatprep.subr.mxu0 0.0
        %6466 = vmatpush1.msra.mxu0 0.0
        %6467 = vmatprep.subr.mxu0 0.0
        %6468 = vmatpush1.msra.mxu0 0.0
        %6469 = vmatprep.subr.mxu0 0.0
        %6470 = vmatpush1.msra.mxu0 0.0
        %6471 = vmatprep.subr.mxu0 0.0
        %6472 = vmatpush1.msra.mxu0 0.0
        %6473 = vmatprep.subr.mxu0 0.0
        %6474 = vmatpush1.msra.mxu0 0.0
        %6475 = vmatprep.subr.mxu0 0.0
        %6476 = vmatpush1.msra.mxu0 0.0
        %6477 = vmatprep.subr.mxu0 0.0
        %6478 = vmatpush1.msra.mxu0 0.0
        %6479 = vmatprep.subr.mxu0 0.0
        %6480 = vmatpush1.msra.mxu0 0.0
        %6481 = vmatprep.subr.mxu0 0.0
        %6482 = vmatpush1.msra.mxu0 0.0
        %6483 = vmatprep.subr.mxu0 0.0
        %6484 = vmatpush1.msra.mxu0 0.0
        %6485 = vmatprep.subr.mxu0 0.0
        %6486 = vmatpush1.msra.mxu0 0.0
        %6487 = vmatprep.mubr.f32.mxu0 0.0
        %6488 = vmatmul.mubr.f32.gmra.mrb[0].mxu0 %v6321
        %v6489 = vpop.f32.mrb[0].mxu0
        %v6490 = vadd.f32 0.0, %v6489
        %v6491 = vpop.f32.mrb[0].mxu0
        %6492 = vdwg.mxu0
        %v6494 = vrot.slane %v6490, 1
        %v6495 = vrot.slane %v6490, 2
        %v6496 = vrot.slane %v6490, 3
        %v6501 = vadd.f32 %v6419, %v6490
        %v6502 = vadd.f32 %v6420, %v6494
        %v6503 = vadd.f32 %v6421, %v6495
        %v6504 = vadd.f32 %v6422, %v6496
        %v6505 = vxor.u32 %v6501, 2147483648
        %v6506 = vxor.u32 %v6502, 2147483648
        %v6507 = vxor.u32 %v6503, 2147483648
        %v6508 = vxor.u32 %v6504, 2147483648
        %v6509 = vmul.f32 %v6505, 1.442695
        %v6510 = vpow.pop %v6509
        %v6511 = vmul.f32 %v6506, 1.442695
        %v6512 = vpow.pop %v6511
        %v6513 = vmul.f32 %v6507, 1.442695
        %v6514 = vpow.pop %v6513
        %v6515 = vmul.f32 %v6508, 1.442695
        %v6516 = vpow.pop %v6515
        %v6517 = vadd.f32 %v6510, 1.0
        %v6518 = vadd.f32 %v6512, 1.0
        %v6519 = vadd.f32 %v6514, 1.0
        %v6520 = vadd.f32 %v6516, 1.0
        %v6521 = vrcp.pop %v6517
        %v6522 = vmul.f32 1.0, %v6521
        %v6523 = vrcp.pop %v6518
        %v6524 = vmul.f32 1.0, %v6523
        %v6525 = vrcp.pop %v6519
        %v6526 = vmul.f32 1.0, %v6525
        %v6527 = vrcp.pop %v6520
        %v6528 = vmul.f32 1.0, %v6527
        %v6529 = vtanh.pop %v6501
        %v6530 = vtanh.pop %v6502
        %v6531 = vtanh.pop %v6503
        %v6532 = vtanh.pop %v6504
        %v6533 = vmul.f32 %v6522, %v6206
        %v6534 = vmul.f32 %v6524, %v6207
        %v6535 = vmul.f32 %v6526, %v6208
        %v6536 = vmul.f32 %v6528, %v6209
        %6541 = vrot.lane.b32.xlu0 %v6529, 64
        %v6542 = vpop.permute.xlu0 %6541
        %6543 = vrot.lane.b32.xlu0 %v6530, 64
        %v6544 = vpop.permute.xlu0 %6543
        %6545 = vrot.lane.b32.xlu0 %v6531, 64
        %v6546 = vpop.permute.xlu0 %6545
        %6547 = vrot.lane.b32.xlu0 %v6532, 64
        %v6548 = vpop.permute.xlu0 %6547
        %v6553 = vmul.f32 %v6522, %v6542
        %v6554 = vmul.f32 %v6524, %v6544
        %v6555 = vmul.f32 %v6526, %v6546
        %v6556 = vmul.f32 %v6528, %v6548
        %6561 = vrot.lane.b32.xlu0 %v6553, 32
        %v6562 = vpop.permute.xlu0 %6561
        %6563 = vrot.lane.b32.xlu0 %v6554, 32
        %v6564 = vpop.permute.xlu0 %6563
        %6565 = vrot.lane.b32.xlu0 %v6555, 32
        %v6566 = vpop.permute.xlu0 %6565
        %6567 = vrot.lane.b32.xlu0 %v6556, 32
        %v6568 = vpop.permute.xlu0 %6567
        %v6573 = vadd.f32 %v6533, %v6562
        %v6574 = vadd.f32 %v6534, %v6564
        %v6575 = vadd.f32 %v6535, %v6566
        %v6576 = vadd.f32 %v6536, %v6568
        %v6577 = vtanh.pop %v6573
        %v6578 = vtanh.pop %v6574
        %v6579 = vtanh.pop %v6575
        %v6580 = vtanh.pop %v6576
        %6585 = vrot.lane.b32.xlu0 %v6577, 64
        %v6586 = vpop.permute.xlu0 %6585
        %6587 = vrot.lane.b32.xlu0 %v6578, 64
        %v6588 = vpop.permute.xlu0 %6587
        %6589 = vrot.lane.b32.xlu0 %v6579, 64
        %v6590 = vpop.permute.xlu0 %6589
        %6591 = vrot.lane.b32.xlu0 %v6580, 64
        %v6592 = vpop.permute.xlu0 %6591
        %v6597 = vmul.f32 %v6522, %v6586
        %v6598 = vmul.f32 %v6524, %v6588
        %v6599 = vmul.f32 %v6526, %v6590
        %v6600 = vmul.f32 %v6528, %v6592
        %6602 = vrot.lane.b32.xlu0 %v6417, 32
        %v6603 = vpop.permute.xlu0 %6602
        %v6604 = vsel %vm3112, %v6603, 0
        %6606 = vmatprep.subr.mxu0 0.0
        %6607 = vmatpush1.msra.mxu0 %v2956
        %6608 = vmatprep.subr.mxu0 0.0
        %6609 = vmatpush1.msra.mxu0 %v2957
        %6610 = vmatprep.subr.mxu0 0.0
        %6611 = vmatpush1.msra.mxu0 %v2958
        %6612 = vmatprep.subr.mxu0 0.0
        %6613 = vmatpush1.msra.mxu0 %v2959
        %6614 = vmatprep.subr.mxu0 0.0
        %6615 = vmatpush1.msra.mxu0 0.0
        %6616 = vmatprep.subr.mxu0 0.0
        %6617 = vmatpush1.msra.mxu0 0.0
        %6618 = vmatprep.subr.mxu0 0.0
        %6619 = vmatpush1.msra.mxu0 0.0
        %6620 = vmatprep.subr.mxu0 0.0
        %6621 = vmatpush1.msra.mxu0 0.0
        %6622 = vmatprep.subr.mxu0 0.0
        %6623 = vmatpush1.msra.mxu0 0.0
        %6624 = vmatprep.subr.mxu0 0.0
        %6625 = vmatpush1.msra.mxu0 0.0
        %6626 = vmatprep.subr.mxu0 0.0
        %6627 = vmatpush1.msra.mxu0 0.0
        %6628 = vmatprep.subr.mxu0 0.0
        %6629 = vmatpush1.msra.mxu0 0.0
        %6630 = vmatprep.subr.mxu0 0.0
        %6631 = vmatpush1.msra.mxu0 0.0
        %6632 = vmatprep.subr.mxu0 0.0
        %6633 = vmatpush1.msra.mxu0 0.0
        %6634 = vmatprep.subr.mxu0 0.0
        %6635 = vmatpush1.msra.mxu0 0.0
        %6636 = vmatprep.subr.mxu0 0.0
        %6637 = vmatpush1.msra.mxu0 0.0
        %6638 = vmatprep.subr.mxu0 0.0
        %6639 = vmatpush1.msra.mxu0 0.0
        %6640 = vmatprep.subr.mxu0 0.0
        %6641 = vmatpush1.msra.mxu0 0.0
        %6642 = vmatprep.subr.mxu0 0.0
        %6643 = vmatpush1.msra.mxu0 0.0
        %6644 = vmatprep.subr.mxu0 0.0
        %6645 = vmatpush1.msra.mxu0 0.0
        %6646 = vmatprep.subr.mxu0 0.0
        %6647 = vmatpush1.msra.mxu0 0.0
        %6648 = vmatprep.subr.mxu0 0.0
        %6649 = vmatpush1.msra.mxu0 0.0
        %6650 = vmatprep.subr.mxu0 0.0
        %6651 = vmatpush1.msra.mxu0 0.0
        %6652 = vmatprep.subr.mxu0 0.0
        %6653 = vmatpush1.msra.mxu0 0.0
        %6654 = vmatprep.subr.mxu0 0.0
        %6655 = vmatpush1.msra.mxu0 0.0
        %6656 = vmatprep.subr.mxu0 0.0
        %6657 = vmatpush1.msra.mxu0 0.0
        %6658 = vmatprep.subr.mxu0 0.0
        %6659 = vmatpush1.msra.mxu0 0.0
        %6660 = vmatprep.subr.mxu0 0.0
        %6661 = vmatpush1.msra.mxu0 0.0
        %6662 = vmatprep.subr.mxu0 0.0
        %6663 = vmatpush1.msra.mxu0 0.0
        %6664 = vmatprep.subr.mxu0 0.0
        %6665 = vmatpush1.msra.mxu0 0.0
        %6666 = vmatprep.subr.mxu0 0.0
        %6667 = vmatpush1.msra.mxu0 0.0
        %6668 = vmatprep.subr.mxu0 0.0
        %6669 = vmatpush1.msra.mxu0 0.0
        %6670 = vmatprep.mubr.f32.mxu0 0.0
        %6671 = vmatmul.mubr.f32.gmra.mrb[0].mxu0 %v6604
        %v6672 = vpop.f32.mrb[0].mxu0
        %v6673 = vadd.f32 0.0, %v6672
        %v6674 = vpop.f32.mrb[0].mxu0
        %6675 = vdwg.mxu0
        %v6680 = vrot.slane %v6598, 7
        %v6681 = vsel %vm3369, %v6680, %v6597
        %v6682 = vrot.slane %v6599, 6
        %v6683 = vsel %vm3372, %v6682, %v6681
        %v6684 = vrot.slane %v6600, 5
        %v6685 = vsel %vm3375, %v6684, %v6683
        %6686 = vrot.lane.b32.xlu0 %v6685, 32
        %v6687 = vpop.permute.xlu0 %6686
        %v6688 = vsel %vm3112, %v6687, 0
        %6690 = vmatprep.subr.mxu0 0.0
        %6691 = vmatpush1.msra.mxu0 %v2948
        %6692 = vmatprep.subr.mxu0 0.0
        %6693 = vmatpush1.msra.mxu0 %v2949
        %6694 = vmatprep.subr.mxu0 0.0
        %6695 = vmatpush1.msra.mxu0 %v2950
        %6696 = vmatprep.subr.mxu0 0.0
        %6697 = vmatpush1.msra.mxu0 %v2951
        %6698 = vmatprep.subr.mxu0 0.0
        %6699 = vmatpush1.msra.mxu0 0.0
        %6700 = vmatprep.subr.mxu0 0.0
        %6701 = vmatpush1.msra.mxu0 0.0
        %6702 = vmatprep.subr.mxu0 0.0
        %6703 = vmatpush1.msra.mxu0 0.0
        %6704 = vmatprep.subr.mxu0 0.0
        %6705 = vmatpush1.msra.mxu0 0.0
        %6706 = vmatprep.subr.mxu0 0.0
        %6707 = vmatpush1.msra.mxu0 0.0
        %6708 = vmatprep.subr.mxu0 0.0
        %6709 = vmatpush1.msra.mxu0 0.0
        %6710 = vmatprep.subr.mxu0 0.0
        %6711 = vmatpush1.msra.mxu0 0.0
        %6712 = vmatprep.subr.mxu0 0.0
        %6713 = vmatpush1.msra.mxu0 0.0
        %6714 = vmatprep.subr.mxu0 0.0
        %6715 = vmatpush1.msra.mxu0 0.0
        %6716 = vmatprep.subr.mxu0 0.0
        %6717 = vmatpush1.msra.mxu0 0.0
        %6718 = vmatprep.subr.mxu0 0.0
        %6719 = vmatpush1.msra.mxu0 0.0
        %6720 = vmatprep.subr.mxu0 0.0
        %6721 = vmatpush1.msra.mxu0 0.0
        %6722 = vmatprep.subr.mxu0 0.0
        %6723 = vmatpush1.msra.mxu0 0.0
        %6724 = vmatprep.subr.mxu0 0.0
        %6725 = vmatpush1.msra.mxu0 0.0
        %6726 = vmatprep.subr.mxu0 0.0
        %6727 = vmatpush1.msra.mxu0 0.0
        %6728 = vmatprep.subr.mxu0 0.0
        %6729 = vmatpush1.msra.mxu0 0.0
        %6730 = vmatprep.subr.mxu0 0.0
        %6731 = vmatpush1.msra.mxu0 0.0
        %6732 = vmatprep.subr.mxu0 0.0
        %6733 = vmatpush1.msra.mxu0 0.0
        %6734 = vmatprep.subr.mxu0 0.0
        %6735 = vmatpush1.msra.mxu0 0.0
        %6736 = vmatprep.subr.mxu0 0.0
        %6737 = vmatpush1.msra.mxu0 0.0
        %6738 = vmatprep.subr.mxu0 0.0
        %6739 = vmatpush1.msra.mxu0 0.0
        %6740 = vmatprep.subr.mxu0 0.0
        %6741 = vmatpush1.msra.mxu0 0.0
        %6742 = vmatprep.subr.mxu0 0.0
        %6743 = vmatpush1.msra.mxu0 0.0
        %6744 = vmatprep.subr.mxu0 0.0
        %6745 = vmatpush1.msra.mxu0 0.0
        %6746 = vmatprep.subr.mxu0 0.0
        %6747 = vmatpush1.msra.mxu0 0.0
        %6748 = vmatprep.subr.mxu0 0.0
        %6749 = vmatpush1.msra.mxu0 0.0
        %6750 = vmatprep.subr.mxu0 0.0
        %6751 = vmatpush1.msra.mxu0 0.0
        %6752 = vmatprep.subr.mxu0 0.0
        %6753 = vmatpush1.msra.mxu0 0.0
        %6754 = vmatprep.mubr.f32.mxu0 0.0
        %6755 = vmatmul.mubr.f32.gmra.mrb[0].mxu0 %v6688
        %v6756 = vpop.f32.mrb[0].mxu0
        %v6757 = vadd.f32 %v6673, %v6756
        %v6758 = vpop.f32.mrb[0].mxu0
        %6759 = vdwg.mxu0
        %v6760 = vadd.f32 %v6757, %v3455
        %v6761 = vxor.u32 %v6760, 2147483648
        %v6762 = vmul.f32 %v6761, 1.442695
        %v6763 = vpow.pop %v6762
        %v6764 = vadd.f32 %v6763, 1.0
        %v6765 = vrcp.pop %v6764
        %v6766 = vmul.f32 1.0, %v6765
        %v6767 = vtanh.pop %v6760
        %v6768 = vmul.f32 %v6766, %v6411
        %6770 = vrot.lane.b32.xlu0 %v6767, 64
        %v6771 = vpop.permute.xlu0 %6770
        %v6773 = vmul.f32 %v6766, %v6771
        %6775 = vrot.lane.b32.xlu0 %v6773, 32
        %v6776 = vpop.permute.xlu0 %6775
        %v6778 = vadd.f32 %v6768, %v6776
        %v6779 = vtanh.pop %v6778
        %6781 = vrot.lane.b32.xlu0 %v6779, 64
        %v6782 = vpop.permute.xlu0 %6781
        %v6784 = vmul.f32 %v6766, %v6782
        %v6785 = vadd.f32 %v6418, %v6784
        %v6786 = vld [vmem:[#allocation3 + $0xa] sm:$0x1]
        %v6787 = vld [vmem:[#allocation3 + $0x1a] sm:$0x1]
        %v6788 = vld [vmem:[#allocation3 + $0x2a] sm:$0x1]
        %v6789 = vld [vmem:[#allocation3 + $0x3a] sm:$0x1]
        %6790 = vmatprep.subr.mxu0 0.0
        %6791 = vmatpush1.msra.mxu0 %v2952
        %6792 = vmatprep.subr.mxu0 0.0
        %6793 = vmatpush1.msra.mxu0 %v2953
        %6794 = vmatprep.subr.mxu0 0.0
        %6795 = vmatpush1.msra.mxu0 %v2954
        %6796 = vmatprep.subr.mxu0 0.0
        %6797 = vmatpush1.msra.mxu0 %v2955
        %6798 = vmatprep.subr.mxu0 0.0
        %6799 = vmatpush1.msra.mxu0 0.0
        %6800 = vmatprep.subr.mxu0 0.0
        %6801 = vmatpush1.msra.mxu0 0.0
        %6802 = vmatprep.subr.mxu0 0.0
        %6803 = vmatpush1.msra.mxu0 0.0
        %6804 = vmatprep.subr.mxu0 0.0
        %6805 = vmatpush1.msra.mxu0 0.0
        %6806 = vmatprep.subr.mxu0 0.0
        %6807 = vmatpush1.msra.mxu0 0.0
        %6808 = vmatprep.subr.mxu0 0.0
        %6809 = vmatpush1.msra.mxu0 0.0
        %6810 = vmatprep.subr.mxu0 0.0
        %6811 = vmatpush1.msra.mxu0 0.0
        %6812 = vmatprep.subr.mxu0 0.0
        %6813 = vmatpush1.msra.mxu0 0.0
        %6814 = vmatprep.subr.mxu0 0.0
        %6815 = vmatpush1.msra.mxu0 0.0
        %6816 = vmatprep.subr.mxu0 0.0
        %6817 = vmatpush1.msra.mxu0 0.0
        %6818 = vmatprep.subr.mxu0 0.0
        %6819 = vmatpush1.msra.mxu0 0.0
        %6820 = vmatprep.subr.mxu0 0.0
        %6821 = vmatpush1.msra.mxu0 0.0
        %6822 = vmatprep.subr.mxu0 0.0
        %6823 = vmatpush1.msra.mxu0 0.0
        %6824 = vmatprep.subr.mxu0 0.0
        %6825 = vmatpush1.msra.mxu0 0.0
        %6826 = vmatprep.subr.mxu0 0.0
        %6827 = vmatpush1.msra.mxu0 0.0
        %6828 = vmatprep.subr.mxu0 0.0
        %6829 = vmatpush1.msra.mxu0 0.0
        %6830 = vmatprep.subr.mxu0 0.0
        %6831 = vmatpush1.msra.mxu0 0.0
        %6832 = vmatprep.subr.mxu0 0.0
        %6833 = vmatpush1.msra.mxu0 0.0
        %6834 = vmatprep.subr.mxu0 0.0
        %6835 = vmatpush1.msra.mxu0 0.0
        %6836 = vmatprep.subr.mxu0 0.0
        %6837 = vmatpush1.msra.mxu0 0.0
        %6838 = vmatprep.subr.mxu0 0.0
        %6839 = vmatpush1.msra.mxu0 0.0
        %6840 = vmatprep.subr.mxu0 0.0
        %6841 = vmatpush1.msra.mxu0 0.0
        %6842 = vmatprep.subr.mxu0 0.0
        %6843 = vmatpush1.msra.mxu0 0.0
        %6844 = vmatprep.subr.mxu0 0.0
        %6845 = vmatpush1.msra.mxu0 0.0
        %6846 = vmatprep.subr.mxu0 0.0
        %6847 = vmatpush1.msra.mxu0 0.0
        %6848 = vmatprep.subr.mxu0 0.0
        %6849 = vmatpush1.msra.mxu0 0.0
        %6850 = vmatprep.subr.mxu0 0.0
        %6851 = vmatpush1.msra.mxu0 0.0
        %6852 = vmatprep.subr.mxu0 0.0
        %6853 = vmatpush1.msra.mxu0 0.0
        %6854 = vmatprep.mubr.f32.mxu0 0.0
        %6855 = vmatmul.mubr.f32.gmra.mrb[0].mxu0 %v6688
        %v6856 = vpop.f32.mrb[0].mxu0
        %v6857 = vadd.f32 0.0, %v6856
        %v6858 = vpop.f32.mrb[0].mxu0
        %6859 = vdwg.mxu0
        %v6861 = vrot.slane %v6857, 1
        %v6862 = vrot.slane %v6857, 2
        %v6863 = vrot.slane %v6857, 3
        %v6868 = vadd.f32 %v6786, %v6857
        %v6869 = vadd.f32 %v6787, %v6861
        %v6870 = vadd.f32 %v6788, %v6862
        %v6871 = vadd.f32 %v6789, %v6863
        %v6872 = vxor.u32 %v6868, 2147483648
        %v6873 = vxor.u32 %v6869, 2147483648
        %v6874 = vxor.u32 %v6870, 2147483648
        %v6875 = vxor.u32 %v6871, 2147483648
        %v6876 = vmul.f32 %v6872, 1.442695
        %v6877 = vpow.pop %v6876
        %v6878 = vmul.f32 %v6873, 1.442695
        %v6879 = vpow.pop %v6878
        %v6880 = vmul.f32 %v6874, 1.442695
        %v6881 = vpow.pop %v6880
        %v6882 = vmul.f32 %v6875, 1.442695
        %v6883 = vpow.pop %v6882
        %v6884 = vadd.f32 %v6877, 1.0
        %v6885 = vadd.f32 %v6879, 1.0
        %v6886 = vadd.f32 %v6881, 1.0
        %v6887 = vadd.f32 %v6883, 1.0
        %v6888 = vrcp.pop %v6884
        %v6889 = vmul.f32 1.0, %v6888
        %v6890 = vrcp.pop %v6885
        %v6891 = vmul.f32 1.0, %v6890
        %v6892 = vrcp.pop %v6886
        %v6893 = vmul.f32 1.0, %v6892
        %v6894 = vrcp.pop %v6887
        %v6895 = vmul.f32 1.0, %v6894
        %v6896 = vtanh.pop %v6868
        %v6897 = vtanh.pop %v6869
        %v6898 = vtanh.pop %v6870
        %v6899 = vtanh.pop %v6871
        %v6900 = vmul.f32 %v6889, %v6573
        %v6901 = vmul.f32 %v6891, %v6574
        %v6902 = vmul.f32 %v6893, %v6575
        %v6903 = vmul.f32 %v6895, %v6576
        %6908 = vrot.lane.b32.xlu0 %v6896, 64
        %v6909 = vpop.permute.xlu0 %6908
        %6910 = vrot.lane.b32.xlu0 %v6897, 64
        %v6911 = vpop.permute.xlu0 %6910
        %6912 = vrot.lane.b32.xlu0 %v6898, 64
        %v6913 = vpop.permute.xlu0 %6912
        %6914 = vrot.lane.b32.xlu0 %v6899, 64
        %v6915 = vpop.permute.xlu0 %6914
        %v6920 = vmul.f32 %v6889, %v6909
        %v6921 = vmul.f32 %v6891, %v6911
        %v6922 = vmul.f32 %v6893, %v6913
        %v6923 = vmul.f32 %v6895, %v6915
        %6928 = vrot.lane.b32.xlu0 %v6920, 32
        %v6929 = vpop.permute.xlu0 %6928
        %6930 = vrot.lane.b32.xlu0 %v6921, 32
        %v6931 = vpop.permute.xlu0 %6930
        %6932 = vrot.lane.b32.xlu0 %v6922, 32
        %v6933 = vpop.permute.xlu0 %6932
        %6934 = vrot.lane.b32.xlu0 %v6923, 32
        %v6935 = vpop.permute.xlu0 %6934
        %v6940 = vadd.f32 %v6900, %v6929
        %v6941 = vadd.f32 %v6901, %v6931
        %v6942 = vadd.f32 %v6902, %v6933
        %v6943 = vadd.f32 %v6903, %v6935
        %v6944 = vtanh.pop %v6940
        %v6945 = vtanh.pop %v6941
        %v6946 = vtanh.pop %v6942
        %v6947 = vtanh.pop %v6943
        %6952 = vrot.lane.b32.xlu0 %v6944, 64
        %v6953 = vpop.permute.xlu0 %6952
        %6954 = vrot.lane.b32.xlu0 %v6945, 64
        %v6955 = vpop.permute.xlu0 %6954
        %6956 = vrot.lane.b32.xlu0 %v6946, 64
        %v6957 = vpop.permute.xlu0 %6956
        %6958 = vrot.lane.b32.xlu0 %v6947, 64
        %v6959 = vpop.permute.xlu0 %6958
        %v6964 = vmul.f32 %v6889, %v6953
        %v6965 = vmul.f32 %v6891, %v6955
        %v6966 = vmul.f32 %v6893, %v6957
        %v6967 = vmul.f32 %v6895, %v6959
        %6969 = vrot.lane.b32.xlu0 %v6784, 32
        %v6970 = vpop.permute.xlu0 %6969
        %v6971 = vsel %vm3112, %v6970, 0
        %6973 = vmatprep.subr.mxu0 0.0
        %6974 = vmatpush1.msra.mxu0 %v2956
        %6975 = vmatprep.subr.mxu0 0.0
        %6976 = vmatpush1.msra.mxu0 %v2957
        %6977 = vmatprep.subr.mxu0 0.0
        %6978 = vmatpush1.msra.mxu0 %v2958
        %6979 = vmatprep.subr.mxu0 0.0
        %6980 = vmatpush1.msra.mxu0 %v2959
        %6981 = vmatprep.subr.mxu0 0.0
        %6982 = vmatpush1.msra.mxu0 0.0
        %6983 = vmatprep.subr.mxu0 0.0
        %6984 = vmatpush1.msra.mxu0 0.0
        %6985 = vmatprep.subr.mxu0 0.0
        %6986 = vmatpush1.msra.mxu0 0.0
        %6987 = vmatprep.subr.mxu0 0.0
        %6988 = vmatpush1.msra.mxu0 0.0
        %6989 = vmatprep.subr.mxu0 0.0
        %6990 = vmatpush1.msra.mxu0 0.0
        %6991 = vmatprep.subr.mxu0 0.0
        %6992 = vmatpush1.msra.mxu0 0.0
        %6993 = vmatprep.subr.mxu0 0.0
        %6994 = vmatpush1.msra.mxu0 0.0
        %6995 = vmatprep.subr.mxu0 0.0
        %6996 = vmatpush1.msra.mxu0 0.0
        %6997 = vmatprep.subr.mxu0 0.0
        %6998 = vmatpush1.msra.mxu0 0.0
        %6999 = vmatprep.subr.mxu0 0.0
        %7000 = vmatpush1.msra.mxu0 0.0
        %7001 = vmatprep.subr.mxu0 0.0
        %7002 = vmatpush1.msra.mxu0 0.0
        %7003 = vmatprep.subr.mxu0 0.0
        %7004 = vmatpush1.msra.mxu0 0.0
        %7005 = vmatprep.subr.mxu0 0.0
        %7006 = vmatpush1.msra.mxu0 0.0
        %7007 = vmatprep.subr.mxu0 0.0
        %7008 = vmatpush1.msra.mxu0 0.0
        %7009 = vmatprep.subr.mxu0 0.0
        %7010 = vmatpush1.msra.mxu0 0.0
        %7011 = vmatprep.subr.mxu0 0.0
        %7012 = vmatpush1.msra.mxu0 0.0
        %7013 = vmatprep.subr.mxu0 0.0
        %7014 = vmatpush1.msra.mxu0 0.0
        %7015 = vmatprep.subr.mxu0 0.0
        %7016 = vmatpush1.msra.mxu0 0.0
        %7017 = vmatprep.subr.mxu0 0.0
        %7018 = vmatpush1.msra.mxu0 0.0
        %7019 = vmatprep.subr.mxu0 0.0
        %7020 = vmatpush1.msra.mxu0 0.0
        %7021 = vmatprep.subr.mxu0 0.0
        %7022 = vmatpush1.msra.mxu0 0.0
        %7023 = vmatprep.subr.mxu0 0.0
        %7024 = vmatpush1.msra.mxu0 0.0
        %7025 = vmatprep.subr.mxu0 0.0
        %7026 = vmatpush1.msra.mxu0 0.0
        %7027 = vmatprep.subr.mxu0 0.0
        %7028 = vmatpush1.msra.mxu0 0.0
        %7029 = vmatprep.subr.mxu0 0.0
        %7030 = vmatpush1.msra.mxu0 0.0
        %7031 = vmatprep.subr.mxu0 0.0
        %7032 = vmatpush1.msra.mxu0 0.0
        %7033 = vmatprep.subr.mxu0 0.0
        %7034 = vmatpush1.msra.mxu0 0.0
        %7035 = vmatprep.subr.mxu0 0.0
        %7036 = vmatpush1.msra.mxu0 0.0
        %7037 = vmatprep.mubr.f32.mxu0 0.0
        %7038 = vmatmul.mubr.f32.gmra.mrb[0].mxu0 %v6971
        %v7039 = vpop.f32.mrb[0].mxu0
        %v7040 = vadd.f32 0.0, %v7039
        %v7041 = vpop.f32.mrb[0].mxu0
        %7042 = vdwg.mxu0
        %v7047 = vrot.slane %v6965, 7
        %v7048 = vsel %vm3369, %v7047, %v6964
        %v7049 = vrot.slane %v6966, 6
        %v7050 = vsel %vm3372, %v7049, %v7048
        %v7051 = vrot.slane %v6967, 5
        %v7052 = vsel %vm3375, %v7051, %v7050
        %7053 = vrot.lane.b32.xlu0 %v7052, 32
        %v7054 = vpop.permute.xlu0 %7053
        %v7055 = vsel %vm3112, %v7054, 0
        %7057 = vmatprep.subr.mxu0 0.0
        %7058 = vmatpush1.msra.mxu0 %v2948
        %7059 = vmatprep.subr.mxu0 0.0
        %7060 = vmatpush1.msra.mxu0 %v2949
        %7061 = vmatprep.subr.mxu0 0.0
        %7062 = vmatpush1.msra.mxu0 %v2950
        %7063 = vmatprep.subr.mxu0 0.0
        %7064 = vmatpush1.msra.mxu0 %v2951
        %7065 = vmatprep.subr.mxu0 0.0
        %7066 = vmatpush1.msra.mxu0 0.0
        %7067 = vmatprep.subr.mxu0 0.0
        %7068 = vmatpush1.msra.mxu0 0.0
        %7069 = vmatprep.subr.mxu0 0.0
        %7070 = vmatpush1.msra.mxu0 0.0
        %7071 = vmatprep.subr.mxu0 0.0
        %7072 = vmatpush1.msra.mxu0 0.0
        %7073 = vmatprep.subr.mxu0 0.0
        %7074 = vmatpush1.msra.mxu0 0.0
        %7075 = vmatprep.subr.mxu0 0.0
        %7076 = vmatpush1.msra.mxu0 0.0
        %7077 = vmatprep.subr.mxu0 0.0
        %7078 = vmatpush1.msra.mxu0 0.0
        %7079 = vmatprep.subr.mxu0 0.0
        %7080 = vmatpush1.msra.mxu0 0.0
        %7081 = vmatprep.subr.mxu0 0.0
        %7082 = vmatpush1.msra.mxu0 0.0
        %7083 = vmatprep.subr.mxu0 0.0
        %7084 = vmatpush1.msra.mxu0 0.0
        %7085 = vmatprep.subr.mxu0 0.0
        %7086 = vmatpush1.msra.mxu0 0.0
        %7087 = vmatprep.subr.mxu0 0.0
        %7088 = vmatpush1.msra.mxu0 0.0
        %7089 = vmatprep.subr.mxu0 0.0
        %7090 = vmatpush1.msra.mxu0 0.0
        %7091 = vmatprep.subr.mxu0 0.0
        %7092 = vmatpush1.msra.mxu0 0.0
        %7093 = vmatprep.subr.mxu0 0.0
        %7094 = vmatpush1.msra.mxu0 0.0
        %7095 = vmatprep.subr.mxu0 0.0
        %7096 = vmatpush1.msra.mxu0 0.0
        %7097 = vmatprep.subr.mxu0 0.0
        %7098 = vmatpush1.msra.mxu0 0.0
        %7099 = vmatprep.subr.mxu0 0.0
        %7100 = vmatpush1.msra.mxu0 0.0
        %7101 = vmatprep.subr.mxu0 0.0
        %7102 = vmatpush1.msra.mxu0 0.0
        %7103 = vmatprep.subr.mxu0 0.0
        %7104 = vmatpush1.msra.mxu0 0.0
        %7105 = vmatprep.subr.mxu0 0.0
        %7106 = vmatpush1.msra.mxu0 0.0
        %7107 = vmatprep.subr.mxu0 0.0
        %7108 = vmatpush1.msra.mxu0 0.0
        %7109 = vmatprep.subr.mxu0 0.0
        %7110 = vmatpush1.msra.mxu0 0.0
        %7111 = vmatprep.subr.mxu0 0.0
        %7112 = vmatpush1.msra.mxu0 0.0
        %7113 = vmatprep.subr.mxu0 0.0
        %7114 = vmatpush1.msra.mxu0 0.0
        %7115 = vmatprep.subr.mxu0 0.0
        %7116 = vmatpush1.msra.mxu0 0.0
        %7117 = vmatprep.subr.mxu0 0.0
        %7118 = vmatpush1.msra.mxu0 0.0
        %7119 = vmatprep.subr.mxu0 0.0
        %7120 = vmatpush1.msra.mxu0 0.0
        %7121 = vmatprep.mubr.f32.mxu0 0.0
        %7122 = vmatmul.mubr.f32.gmra.mrb[0].mxu0 %v7055
        %v7123 = vpop.f32.mrb[0].mxu0
        %v7124 = vadd.f32 %v7040, %v7123
        %v7125 = vpop.f32.mrb[0].mxu0
        %7126 = vdwg.mxu0
        %v7127 = vadd.f32 %v7124, %v3455
        %v7128 = vxor.u32 %v7127, 2147483648
        %v7129 = vmul.f32 %v7128, 1.442695
        %v7130 = vpow.pop %v7129
        %v7131 = vadd.f32 %v7130, 1.0
        %v7132 = vrcp.pop %v7131
        %v7133 = vmul.f32 1.0, %v7132
        %v7134 = vtanh.pop %v7127
        %v7135 = vmul.f32 %v7133, %v6778
        %7137 = vrot.lane.b32.xlu0 %v7134, 64
        %v7138 = vpop.permute.xlu0 %7137
        %v7140 = vmul.f32 %v7133, %v7138
        %7142 = vrot.lane.b32.xlu0 %v7140, 32
        %v7143 = vpop.permute.xlu0 %7142
        %v7145 = vadd.f32 %v7135, %v7143
        %v7146 = vtanh.pop %v7145
        %7148 = vrot.lane.b32.xlu0 %v7146, 64
        %v7149 = vpop.permute.xlu0 %7148
        %v7151 = vmul.f32 %v7133, %v7149
        %v7152 = vadd.f32 %v6785, %v7151
        %v7153 = vld [vmem:[#allocation3 + $0xb] sm:$0x1]
        %v7154 = vld [vmem:[#allocation3 + $0x1b] sm:$0x1]
        %v7155 = vld [vmem:[#allocation3 + $0x2b] sm:$0x1]
        %v7156 = vld [vmem:[#allocation3 + $0x3b] sm:$0x1]
        %7157 = vmatprep.subr.mxu0 0.0
        %7158 = vmatpush1.msra.mxu0 %v2952
        %7159 = vmatprep.subr.mxu0 0.0
        %7160 = vmatpush1.msra.mxu0 %v2953
        %7161 = vmatprep.subr.mxu0 0.0
        %7162 = vmatpush1.msra.mxu0 %v2954
        %7163 = vmatprep.subr.mxu0 0.0
        %7164 = vmatpush1.msra.mxu0 %v2955
        %7165 = vmatprep.subr.mxu0 0.0
        %7166 = vmatpush1.msra.mxu0 0.0
        %7167 = vmatprep.subr.mxu0 0.0
        %7168 = vmatpush1.msra.mxu0 0.0
        %7169 = vmatprep.subr.mxu0 0.0
        %7170 = vmatpush1.msra.mxu0 0.0
        %7171 = vmatprep.subr.mxu0 0.0
        %7172 = vmatpush1.msra.mxu0 0.0
        %7173 = vmatprep.subr.mxu0 0.0
        %7174 = vmatpush1.msra.mxu0 0.0
        %7175 = vmatprep.subr.mxu0 0.0
        %7176 = vmatpush1.msra.mxu0 0.0
        %7177 = vmatprep.subr.mxu0 0.0
        %7178 = vmatpush1.msra.mxu0 0.0
        %7179 = vmatprep.subr.mxu0 0.0
        %7180 = vmatpush1.msra.mxu0 0.0
        %7181 = vmatprep.subr.mxu0 0.0
        %7182 = vmatpush1.msra.mxu0 0.0
        %7183 = vmatprep.subr.mxu0 0.0
        %7184 = vmatpush1.msra.mxu0 0.0
        %7185 = vmatprep.subr.mxu0 0.0
        %7186 = vmatpush1.msra.mxu0 0.0
        %7187 = vmatprep.subr.mxu0 0.0
        %7188 = vmatpush1.msra.mxu0 0.0
        %7189 = vmatprep.subr.mxu0 0.0
        %7190 = vmatpush1.msra.mxu0 0.0
        %7191 = vmatprep.subr.mxu0 0.0
        %7192 = vmatpush1.msra.mxu0 0.0
        %7193 = vmatprep.subr.mxu0 0.0
        %7194 = vmatpush1.msra.mxu0 0.0
        %7195 = vmatprep.subr.mxu0 0.0
        %7196 = vmatpush1.msra.mxu0 0.0
        %7197 = vmatprep.subr.mxu0 0.0
        %7198 = vmatpush1.msra.mxu0 0.0
        %7199 = vmatprep.subr.mxu0 0.0
        %7200 = vmatpush1.msra.mxu0 0.0
        %7201 = vmatprep.subr.mxu0 0.0
        %7202 = vmatpush1.msra.mxu0 0.0
        %7203 = vmatprep.subr.mxu0 0.0
        %7204 = vmatpush1.msra.mxu0 0.0
        %7205 = vmatprep.subr.mxu0 0.0
        %7206 = vmatpush1.msra.mxu0 0.0
        %7207 = vmatprep.subr.mxu0 0.0
        %7208 = vmatpush1.msra.mxu0 0.0
        %7209 = vmatprep.subr.mxu0 0.0
        %7210 = vmatpush1.msra.mxu0 0.0
        %7211 = vmatprep.subr.mxu0 0.0
        %7212 = vmatpush1.msra.mxu0 0.0
        %7213 = vmatprep.subr.mxu0 0.0
        %7214 = vmatpush1.msra.mxu0 0.0
        %7215 = vmatprep.subr.mxu0 0.0
        %7216 = vmatpush1.msra.mxu0 0.0
        %7217 = vmatprep.subr.mxu0 0.0
        %7218 = vmatpush1.msra.mxu0 0.0
        %7219 = vmatprep.subr.mxu0 0.0
        %7220 = vmatpush1.msra.mxu0 0.0
        %7221 = vmatprep.mubr.f32.mxu0 0.0
        %7222 = vmatmul.mubr.f32.gmra.mrb[0].mxu0 %v7055
        %v7223 = vpop.f32.mrb[0].mxu0
        %v7224 = vadd.f32 0.0, %v7223
        %v7225 = vpop.f32.mrb[0].mxu0
        %7226 = vdwg.mxu0
        %v7228 = vrot.slane %v7224, 1
        %v7229 = vrot.slane %v7224, 2
        %v7230 = vrot.slane %v7224, 3
        %v7235 = vadd.f32 %v7153, %v7224
        %v7236 = vadd.f32 %v7154, %v7228
        %v7237 = vadd.f32 %v7155, %v7229
        %v7238 = vadd.f32 %v7156, %v7230
        %v7239 = vxor.u32 %v7235, 2147483648
        %v7240 = vxor.u32 %v7236, 2147483648
        %v7241 = vxor.u32 %v7237, 2147483648
        %v7242 = vxor.u32 %v7238, 2147483648
        %v7243 = vmul.f32 %v7239, 1.442695
        %v7244 = vpow.pop %v7243
        %v7245 = vmul.f32 %v7240, 1.442695
        %v7246 = vpow.pop %v7245
        %v7247 = vmul.f32 %v7241, 1.442695
        %v7248 = vpow.pop %v7247
        %v7249 = vmul.f32 %v7242, 1.442695
        %v7250 = vpow.pop %v7249
        %v7251 = vadd.f32 %v7244, 1.0
        %v7252 = vadd.f32 %v7246, 1.0
        %v7253 = vadd.f32 %v7248, 1.0
        %v7254 = vadd.f32 %v7250, 1.0
        %v7255 = vrcp.pop %v7251
        %v7256 = vmul.f32 1.0, %v7255
        %v7257 = vrcp.pop %v7252
        %v7258 = vmul.f32 1.0, %v7257
        %v7259 = vrcp.pop %v7253
        %v7260 = vmul.f32 1.0, %v7259
        %v7261 = vrcp.pop %v7254
        %v7262 = vmul.f32 1.0, %v7261
        %v7263 = vtanh.pop %v7235
        %v7264 = vtanh.pop %v7236
        %v7265 = vtanh.pop %v7237
        %v7266 = vtanh.pop %v7238
        %v7267 = vmul.f32 %v7256, %v6940
        %v7268 = vmul.f32 %v7258, %v6941
        %v7269 = vmul.f32 %v7260, %v6942
        %v7270 = vmul.f32 %v7262, %v6943
        %7275 = vrot.lane.b32.xlu0 %v7263, 64
        %v7276 = vpop.permute.xlu0 %7275
        %7277 = vrot.lane.b32.xlu0 %v7264, 64
        %v7278 = vpop.permute.xlu0 %7277
        %7279 = vrot.lane.b32.xlu0 %v7265, 64
        %v7280 = vpop.permute.xlu0 %7279
        %7281 = vrot.lane.b32.xlu0 %v7266, 64
        %v7282 = vpop.permute.xlu0 %7281
        %v7287 = vmul.f32 %v7256, %v7276
        %v7288 = vmul.f32 %v7258, %v7278
        %v7289 = vmul.f32 %v7260, %v7280
        %v7290 = vmul.f32 %v7262, %v7282
        %7295 = vrot.lane.b32.xlu0 %v7287, 32
        %v7296 = vpop.permute.xlu0 %7295
        %7297 = vrot.lane.b32.xlu0 %v7288, 32
        %v7298 = vpop.permute.xlu0 %7297
        %7299 = vrot.lane.b32.xlu0 %v7289, 32
        %v7300 = vpop.permute.xlu0 %7299
        %7301 = vrot.lane.b32.xlu0 %v7290, 32
        %v7302 = vpop.permute.xlu0 %7301
        %v7307 = vadd.f32 %v7267, %v7296
        %v7308 = vadd.f32 %v7268, %v7298
        %v7309 = vadd.f32 %v7269, %v7300
        %v7310 = vadd.f32 %v7270, %v7302
        %v7311 = vtanh.pop %v7307
        %v7312 = vtanh.pop %v7308
        %v7313 = vtanh.pop %v7309
        %v7314 = vtanh.pop %v7310
        %7319 = vrot.lane.b32.xlu0 %v7311, 64
        %v7320 = vpop.permute.xlu0 %7319
        %7321 = vrot.lane.b32.xlu0 %v7312, 64
        %v7322 = vpop.permute.xlu0 %7321
        %7323 = vrot.lane.b32.xlu0 %v7313, 64
        %v7324 = vpop.permute.xlu0 %7323
        %7325 = vrot.lane.b32.xlu0 %v7314, 64
        %v7326 = vpop.permute.xlu0 %7325
        %v7331 = vmul.f32 %v7256, %v7320
        %v7332 = vmul.f32 %v7258, %v7322
        %v7333 = vmul.f32 %v7260, %v7324
        %v7334 = vmul.f32 %v7262, %v7326
        %7336 = vrot.lane.b32.xlu0 %v7151, 32
        %v7337 = vpop.permute.xlu0 %7336
        %v7338 = vsel %vm3112, %v7337, 0
        %7340 = vmatprep.subr.mxu0 0.0
        %7341 = vmatpush1.msra.mxu0 %v2956
        %7342 = vmatprep.subr.mxu0 0.0
        %7343 = vmatpush1.msra.mxu0 %v2957
        %7344 = vmatprep.subr.mxu0 0.0
        %7345 = vmatpush1.msra.mxu0 %v2958
        %7346 = vmatprep.subr.mxu0 0.0
        %7347 = vmatpush1.msra.mxu0 %v2959
        %7348 = vmatprep.subr.mxu0 0.0
        %7349 = vmatpush1.msra.mxu0 0.0
        %7350 = vmatprep.subr.mxu0 0.0
        %7351 = vmatpush1.msra.mxu0 0.0
        %7352 = vmatprep.subr.mxu0 0.0
        %7353 = vmatpush1.msra.mxu0 0.0
        %7354 = vmatprep.subr.mxu0 0.0
        %7355 = vmatpush1.msra.mxu0 0.0
        %7356 = vmatprep.subr.mxu0 0.0
        %7357 = vmatpush1.msra.mxu0 0.0
        %7358 = vmatprep.subr.mxu0 0.0
        %7359 = vmatpush1.msra.mxu0 0.0
        %7360 = vmatprep.subr.mxu0 0.0
        %7361 = vmatpush1.msra.mxu0 0.0
        %7362 = vmatprep.subr.mxu0 0.0
        %7363 = vmatpush1.msra.mxu0 0.0
        %7364 = vmatprep.subr.mxu0 0.0
        %7365 = vmatpush1.msra.mxu0 0.0
        %7366 = vmatprep.subr.mxu0 0.0
        %7367 = vmatpush1.msra.mxu0 0.0
        %7368 = vmatprep.subr.mxu0 0.0
        %7369 = vmatpush1.msra.mxu0 0.0
        %7370 = vmatprep.subr.mxu0 0.0
        %7371 = vmatpush1.msra.mxu0 0.0
        %7372 = vmatprep.subr.mxu0 0.0
        %7373 = vmatpush1.msra.mxu0 0.0
        %7374 = vmatprep.subr.mxu0 0.0
        %7375 = vmatpush1.msra.mxu0 0.0
        %7376 = vmatprep.subr.mxu0 0.0
        %7377 = vmatpush1.msra.mxu0 0.0
        %7378 = vmatprep.subr.mxu0 0.0
        %7379 = vmatpush1.msra.mxu0 0.0
        %7380 = vmatprep.subr.mxu0 0.0
        %7381 = vmatpush1.msra.mxu0 0.0
        %7382 = vmatprep.subr.mxu0 0.0
        %7383 = vmatpush1.msra.mxu0 0.0
        %7384 = vmatprep.subr.mxu0 0.0
        %7385 = vmatpush1.msra.mxu0 0.0
        %7386 = vmatprep.subr.mxu0 0.0
        %7387 = vmatpush1.msra.mxu0 0.0
        %7388 = vmatprep.subr.mxu0 0.0
        %7389 = vmatpush1.msra.mxu0 0.0
        %7390 = vmatprep.subr.mxu0 0.0
        %7391 = vmatpush1.msra.mxu0 0.0
        %7392 = vmatprep.subr.mxu0 0.0
        %7393 = vmatpush1.msra.mxu0 0.0
        %7394 = vmatprep.subr.mxu0 0.0
        %7395 = vmatpush1.msra.mxu0 0.0
        %7396 = vmatprep.subr.mxu0 0.0
        %7397 = vmatpush1.msra.mxu0 0.0
        %7398 = vmatprep.subr.mxu0 0.0
        %7399 = vmatpush1.msra.mxu0 0.0
        %7400 = vmatprep.subr.mxu0 0.0
        %7401 = vmatpush1.msra.mxu0 0.0
        %7402 = vmatprep.subr.mxu0 0.0
        %7403 = vmatpush1.msra.mxu0 0.0
        %7404 = vmatprep.mubr.f32.mxu0 0.0
        %7405 = vmatmul.mubr.f32.gmra.mrb[0].mxu0 %v7338
        %v7406 = vpop.f32.mrb[0].mxu0
        %v7407 = vadd.f32 0.0, %v7406
        %v7408 = vpop.f32.mrb[0].mxu0
        %7409 = vdwg.mxu0
        %v7414 = vrot.slane %v7332, 7
        %v7415 = vsel %vm3369, %v7414, %v7331
        %v7416 = vrot.slane %v7333, 6
        %v7417 = vsel %vm3372, %v7416, %v7415
        %v7418 = vrot.slane %v7334, 5
        %v7419 = vsel %vm3375, %v7418, %v7417
        %7420 = vrot.lane.b32.xlu0 %v7419, 32
        %v7421 = vpop.permute.xlu0 %7420
        %v7422 = vsel %vm3112, %v7421, 0
        %7424 = vmatprep.subr.mxu0 0.0
        %7425 = vmatpush1.msra.mxu0 %v2948
        %7426 = vmatprep.subr.mxu0 0.0
        %7427 = vmatpush1.msra.mxu0 %v2949
        %7428 = vmatprep.subr.mxu0 0.0
        %7429 = vmatpush1.msra.mxu0 %v2950
        %7430 = vmatprep.subr.mxu0 0.0
        %7431 = vmatpush1.msra.mxu0 %v2951
        %7432 = vmatprep.subr.mxu0 0.0
        %7433 = vmatpush1.msra.mxu0 0.0
        %7434 = vmatprep.subr.mxu0 0.0
        %7435 = vmatpush1.msra.mxu0 0.0
        %7436 = vmatprep.subr.mxu0 0.0
        %7437 = vmatpush1.msra.mxu0 0.0
        %7438 = vmatprep.subr.mxu0 0.0
        %7439 = vmatpush1.msra.mxu0 0.0
        %7440 = vmatprep.subr.mxu0 0.0
        %7441 = vmatpush1.msra.mxu0 0.0
        %7442 = vmatprep.subr.mxu0 0.0
        %7443 = vmatpush1.msra.mxu0 0.0
        %7444 = vmatprep.subr.mxu0 0.0
        %7445 = vmatpush1.msra.mxu0 0.0
        %7446 = vmatprep.subr.mxu0 0.0
        %7447 = vmatpush1.msra.mxu0 0.0
        %7448 = vmatprep.subr.mxu0 0.0
        %7449 = vmatpush1.msra.mxu0 0.0
        %7450 = vmatprep.subr.mxu0 0.0
        %7451 = vmatpush1.msra.mxu0 0.0
        %7452 = vmatprep.subr.mxu0 0.0
        %7453 = vmatpush1.msra.mxu0 0.0
        %7454 = vmatprep.subr.mxu0 0.0
        %7455 = vmatpush1.msra.mxu0 0.0
        %7456 = vmatprep.subr.mxu0 0.0
        %7457 = vmatpush1.msra.mxu0 0.0
        %7458 = vmatprep.subr.mxu0 0.0
        %7459 = vmatpush1.msra.mxu0 0.0
        %7460 = vmatprep.subr.mxu0 0.0
        %7461 = vmatpush1.msra.mxu0 0.0
        %7462 = vmatprep.subr.mxu0 0.0
        %7463 = vmatpush1.msra.mxu0 0.0
        %7464 = vmatprep.subr.mxu0 0.0
        %7465 = vmatpush1.msra.mxu0 0.0
        %7466 = vmatprep.subr.mxu0 0.0
        %7467 = vmatpush1.msra.mxu0 0.0
        %7468 = vmatprep.subr.mxu0 0.0
        %7469 = vmatpush1.msra.mxu0 0.0
        %7470 = vmatprep.subr.mxu0 0.0
        %7471 = vmatpush1.msra.mxu0 0.0
        %7472 = vmatprep.subr.mxu0 0.0
        %7473 = vmatpush1.msra.mxu0 0.0
        %7474 = vmatprep.subr.mxu0 0.0
        %7475 = vmatpush1.msra.mxu0 0.0
        %7476 = vmatprep.subr.mxu0 0.0
        %7477 = vmatpush1.msra.mxu0 0.0
        %7478 = vmatprep.subr.mxu0 0.0
        %7479 = vmatpush1.msra.mxu0 0.0
        %7480 = vmatprep.subr.mxu0 0.0
        %7481 = vmatpush1.msra.mxu0 0.0
        %7482 = vmatprep.subr.mxu0 0.0
        %7483 = vmatpush1.msra.mxu0 0.0
        %7484 = vmatprep.subr.mxu0 0.0
        %7485 = vmatpush1.msra.mxu0 0.0
        %7486 = vmatprep.subr.mxu0 0.0
        %7487 = vmatpush1.msra.mxu0 0.0
        %7488 = vmatprep.mubr.f32.mxu0 0.0
        %7489 = vmatmul.mubr.f32.gmra.mrb[0].mxu0 %v7422
        %v7490 = vpop.f32.mrb[0].mxu0
        %v7491 = vadd.f32 %v7407, %v7490
        %v7492 = vpop.f32.mrb[0].mxu0
        %7493 = vdwg.mxu0
        %v7494 = vadd.f32 %v7491, %v3455
        %v7495 = vxor.u32 %v7494, 2147483648
        %v7496 = vmul.f32 %v7495, 1.442695
        %v7497 = vpow.pop %v7496
        %v7498 = vadd.f32 %v7497, 1.0
        %v7499 = vrcp.pop %v7498
        %v7500 = vmul.f32 1.0, %v7499
        %v7501 = vtanh.pop %v7494
        %v7502 = vmul.f32 %v7500, %v7145
        %7504 = vrot.lane.b32.xlu0 %v7501, 64
        %v7505 = vpop.permute.xlu0 %7504
        %v7507 = vmul.f32 %v7500, %v7505
        %7509 = vrot.lane.b32.xlu0 %v7507, 32
        %v7510 = vpop.permute.xlu0 %7509
        %v7512 = vadd.f32 %v7502, %v7510
        %v7513 = vtanh.pop %v7512
        %7515 = vrot.lane.b32.xlu0 %v7513, 64
        %v7516 = vpop.permute.xlu0 %7515
        %v7518 = vmul.f32 %v7500, %v7516
        %v7519 = vadd.f32 %v7152, %v7518
        %v7520 = vld [vmem:[#allocation3 + $0xc] sm:$0x1]
        %v7521 = vld [vmem:[#allocation3 + $0x1c] sm:$0x1]
        %v7522 = vld [vmem:[#allocation3 + $0x2c] sm:$0x1]
        %v7523 = vld [vmem:[#allocation3 + $0x3c] sm:$0x1]
        %7524 = vmatprep.subr.mxu0 0.0
        %7525 = vmatpush1.msra.mxu0 %v2952
        %7526 = vmatprep.subr.mxu0 0.0
        %7527 = vmatpush1.msra.mxu0 %v2953
        %7528 = vmatprep.subr.mxu0 0.0
        %7529 = vmatpush1.msra.mxu0 %v2954
        %7530 = vmatprep.subr.mxu0 0.0
        %7531 = vmatpush1.msra.mxu0 %v2955
        %7532 = vmatprep.subr.mxu0 0.0
        %7533 = vmatpush1.msra.mxu0 0.0
        %7534 = vmatprep.subr.mxu0 0.0
        %7535 = vmatpush1.msra.mxu0 0.0
        %7536 = vmatprep.subr.mxu0 0.0
        %7537 = vmatpush1.msra.mxu0 0.0
        %7538 = vmatprep.subr.mxu0 0.0
        %7539 = vmatpush1.msra.mxu0 0.0
        %7540 = vmatprep.subr.mxu0 0.0
        %7541 = vmatpush1.msra.mxu0 0.0
        %7542 = vmatprep.subr.mxu0 0.0
        %7543 = vmatpush1.msra.mxu0 0.0
        %7544 = vmatprep.subr.mxu0 0.0
        %7545 = vmatpush1.msra.mxu0 0.0
        %7546 = vmatprep.subr.mxu0 0.0
        %7547 = vmatpush1.msra.mxu0 0.0
        %7548 = vmatprep.subr.mxu0 0.0
        %7549 = vmatpush1.msra.mxu0 0.0
        %7550 = vmatprep.subr.mxu0 0.0
        %7551 = vmatpush1.msra.mxu0 0.0
        %7552 = vmatprep.subr.mxu0 0.0
        %7553 = vmatpush1.msra.mxu0 0.0
        %7554 = vmatprep.subr.mxu0 0.0
        %7555 = vmatpush1.msra.mxu0 0.0
        %7556 = vmatprep.subr.mxu0 0.0
        %7557 = vmatpush1.msra.mxu0 0.0
        %7558 = vmatprep.subr.mxu0 0.0
        %7559 = vmatpush1.msra.mxu0 0.0
        %7560 = vmatprep.subr.mxu0 0.0
        %7561 = vmatpush1.msra.mxu0 0.0
        %7562 = vmatprep.subr.mxu0 0.0
        %7563 = vmatpush1.msra.mxu0 0.0
        %7564 = vmatprep.subr.mxu0 0.0
        %7565 = vmatpush1.msra.mxu0 0.0
        %7566 = vmatprep.subr.mxu0 0.0
        %7567 = vmatpush1.msra.mxu0 0.0
        %7568 = vmatprep.subr.mxu0 0.0
        %7569 = vmatpush1.msra.mxu0 0.0
        %7570 = vmatprep.subr.mxu0 0.0
        %7571 = vmatpush1.msra.mxu0 0.0
        %7572 = vmatprep.subr.mxu0 0.0
        %7573 = vmatpush1.msra.mxu0 0.0
        %7574 = vmatprep.subr.mxu0 0.0
        %7575 = vmatpush1.msra.mxu0 0.0
        %7576 = vmatprep.subr.mxu0 0.0
        %7577 = vmatpush1.msra.mxu0 0.0
        %7578 = vmatprep.subr.mxu0 0.0
        %7579 = vmatpush1.msra.mxu0 0.0
        %7580 = vmatprep.subr.mxu0 0.0
        %7581 = vmatpush1.msra.mxu0 0.0
        %7582 = vmatprep.subr.mxu0 0.0
        %7583 = vmatpush1.msra.mxu0 0.0
        %7584 = vmatprep.subr.mxu0 0.0
        %7585 = vmatpush1.msra.mxu0 0.0
        %7586 = vmatprep.subr.mxu0 0.0
        %7587 = vmatpush1.msra.mxu0 0.0
        %7588 = vmatprep.mubr.f32.mxu0 0.0
        %7589 = vmatmul.mubr.f32.gmra.mrb[0].mxu0 %v7422
        %v7590 = vpop.f32.mrb[0].mxu0
        %v7591 = vadd.f32 0.0, %v7590
        %v7592 = vpop.f32.mrb[0].mxu0
        %7593 = vdwg.mxu0
        %v7595 = vrot.slane %v7591, 1
        %v7596 = vrot.slane %v7591, 2
        %v7597 = vrot.slane %v7591, 3
        %v7602 = vadd.f32 %v7520, %v7591
        %v7603 = vadd.f32 %v7521, %v7595
        %v7604 = vadd.f32 %v7522, %v7596
        %v7605 = vadd.f32 %v7523, %v7597
        %v7606 = vxor.u32 %v7602, 2147483648
        %v7607 = vxor.u32 %v7603, 2147483648
        %v7608 = vxor.u32 %v7604, 2147483648
        %v7609 = vxor.u32 %v7605, 2147483648
        %v7610 = vmul.f32 %v7606, 1.442695
        %v7611 = vpow.pop %v7610
        %v7612 = vmul.f32 %v7607, 1.442695
        %v7613 = vpow.pop %v7612
        %v7614 = vmul.f32 %v7608, 1.442695
        %v7615 = vpow.pop %v7614
        %v7616 = vmul.f32 %v7609, 1.442695
        %v7617 = vpow.pop %v7616
        %v7618 = vadd.f32 %v7611, 1.0
        %v7619 = vadd.f32 %v7613, 1.0
        %v7620 = vadd.f32 %v7615, 1.0
        %v7621 = vadd.f32 %v7617, 1.0
        %v7622 = vrcp.pop %v7618
        %v7623 = vmul.f32 1.0, %v7622
        %v7624 = vrcp.pop %v7619
        %v7625 = vmul.f32 1.0, %v7624
        %v7626 = vrcp.pop %v7620
        %v7627 = vmul.f32 1.0, %v7626
        %v7628 = vrcp.pop %v7621
        %v7629 = vmul.f32 1.0, %v7628
        %v7630 = vtanh.pop %v7602
        %v7631 = vtanh.pop %v7603
        %v7632 = vtanh.pop %v7604
        %v7633 = vtanh.pop %v7605
        %v7634 = vmul.f32 %v7623, %v7307
        %v7635 = vmul.f32 %v7625, %v7308
        %v7636 = vmul.f32 %v7627, %v7309
        %v7637 = vmul.f32 %v7629, %v7310
        %7642 = vrot.lane.b32.xlu0 %v7630, 64
        %v7643 = vpop.permute.xlu0 %7642
        %7644 = vrot.lane.b32.xlu0 %v7631, 64
        %v7645 = vpop.permute.xlu0 %7644
        %7646 = vrot.lane.b32.xlu0 %v7632, 64
        %v7647 = vpop.permute.xlu0 %7646
        %7648 = vrot.lane.b32.xlu0 %v7633, 64
        %v7649 = vpop.permute.xlu0 %7648
        %v7654 = vmul.f32 %v7623, %v7643
        %v7655 = vmul.f32 %v7625, %v7645
        %v7656 = vmul.f32 %v7627, %v7647
        %v7657 = vmul.f32 %v7629, %v7649
        %7662 = vrot.lane.b32.xlu0 %v7654, 32
        %v7663 = vpop.permute.xlu0 %7662
        %7664 = vrot.lane.b32.xlu0 %v7655, 32
        %v7665 = vpop.permute.xlu0 %7664
        %7666 = vrot.lane.b32.xlu0 %v7656, 32
        %v7667 = vpop.permute.xlu0 %7666
        %7668 = vrot.lane.b32.xlu0 %v7657, 32
        %v7669 = vpop.permute.xlu0 %7668
        %v7674 = vadd.f32 %v7634, %v7663
        %v7675 = vadd.f32 %v7635, %v7665
        %v7676 = vadd.f32 %v7636, %v7667
        %v7677 = vadd.f32 %v7637, %v7669
        %v7678 = vtanh.pop %v7674
        %v7679 = vtanh.pop %v7675
        %v7680 = vtanh.pop %v7676
        %v7681 = vtanh.pop %v7677
        %7686 = vrot.lane.b32.xlu0 %v7678, 64
        %v7687 = vpop.permute.xlu0 %7686
        %7688 = vrot.lane.b32.xlu0 %v7679, 64
        %v7689 = vpop.permute.xlu0 %7688
        %7690 = vrot.lane.b32.xlu0 %v7680, 64
        %v7691 = vpop.permute.xlu0 %7690
        %7692 = vrot.lane.b32.xlu0 %v7681, 64
        %v7693 = vpop.permute.xlu0 %7692
        %v7698 = vmul.f32 %v7623, %v7687
        %v7699 = vmul.f32 %v7625, %v7689
        %v7700 = vmul.f32 %v7627, %v7691
        %v7701 = vmul.f32 %v7629, %v7693
        %7703 = vrot.lane.b32.xlu0 %v7518, 32
        %v7704 = vpop.permute.xlu0 %7703
        %v7705 = vsel %vm3112, %v7704, 0
        %7707 = vmatprep.subr.mxu0 0.0
        %7708 = vmatpush1.msra.mxu0 %v2956
        %7709 = vmatprep.subr.mxu0 0.0
        %7710 = vmatpush1.msra.mxu0 %v2957
        %7711 = vmatprep.subr.mxu0 0.0
        %7712 = vmatpush1.msra.mxu0 %v2958
        %7713 = vmatprep.subr.mxu0 0.0
        %7714 = vmatpush1.msra.mxu0 %v2959
        %7715 = vmatprep.subr.mxu0 0.0
        %7716 = vmatpush1.msra.mxu0 0.0
        %7717 = vmatprep.subr.mxu0 0.0
        %7718 = vmatpush1.msra.mxu0 0.0
        %7719 = vmatprep.subr.mxu0 0.0
        %7720 = vmatpush1.msra.mxu0 0.0
        %7721 = vmatprep.subr.mxu0 0.0
        %7722 = vmatpush1.msra.mxu0 0.0
        %7723 = vmatprep.subr.mxu0 0.0
        %7724 = vmatpush1.msra.mxu0 0.0
        %7725 = vmatprep.subr.mxu0 0.0
        %7726 = vmatpush1.msra.mxu0 0.0
        %7727 = vmatprep.subr.mxu0 0.0
        %7728 = vmatpush1.msra.mxu0 0.0
        %7729 = vmatprep.subr.mxu0 0.0
        %7730 = vmatpush1.msra.mxu0 0.0
        %7731 = vmatprep.subr.mxu0 0.0
        %7732 = vmatpush1.msra.mxu0 0.0
        %7733 = vmatprep.subr.mxu0 0.0
        %7734 = vmatpush1.msra.mxu0 0.0
        %7735 = vmatprep.subr.mxu0 0.0
        %7736 = vmatpush1.msra.mxu0 0.0
        %7737 = vmatprep.subr.mxu0 0.0
        %7738 = vmatpush1.msra.mxu0 0.0
        %7739 = vmatprep.subr.mxu0 0.0
        %7740 = vmatpush1.msra.mxu0 0.0
        %7741 = vmatprep.subr.mxu0 0.0
        %7742 = vmatpush1.msra.mxu0 0.0
        %7743 = vmatprep.subr.mxu0 0.0
        %7744 = vmatpush1.msra.mxu0 0.0
        %7745 = vmatprep.subr.mxu0 0.0
        %7746 = vmatpush1.msra.mxu0 0.0
        %7747 = vmatprep.subr.mxu0 0.0
        %7748 = vmatpush1.msra.mxu0 0.0
        %7749 = vmatprep.subr.mxu0 0.0
        %7750 = vmatpush1.msra.mxu0 0.0
        %7751 = vmatprep.subr.mxu0 0.0
        %7752 = vmatpush1.msra.mxu0 0.0
        %7753 = vmatprep.subr.mxu0 0.0
        %7754 = vmatpush1.msra.mxu0 0.0
        %7755 = vmatprep.subr.mxu0 0.0
        %7756 = vmatpush1.msra.mxu0 0.0
        %7757 = vmatprep.subr.mxu0 0.0
        %7758 = vmatpush1.msra.mxu0 0.0
        %7759 = vmatprep.subr.mxu0 0.0
        %7760 = vmatpush1.msra.mxu0 0.0
        %7761 = vmatprep.subr.mxu0 0.0
        %7762 = vmatpush1.msra.mxu0 0.0
        %7763 = vmatprep.subr.mxu0 0.0
        %7764 = vmatpush1.msra.mxu0 0.0
        %7765 = vmatprep.subr.mxu0 0.0
        %7766 = vmatpush1.msra.mxu0 0.0
        %7767 = vmatprep.subr.mxu0 0.0
        %7768 = vmatpush1.msra.mxu0 0.0
        %7769 = vmatprep.subr.mxu0 0.0
        %7770 = vmatpush1.msra.mxu0 0.0
        %7771 = vmatprep.mubr.f32.mxu0 0.0
        %7772 = vmatmul.mubr.f32.gmra.mrb[0].mxu0 %v7705
        %v7773 = vpop.f32.mrb[0].mxu0
        %v7774 = vadd.f32 0.0, %v7773
        %v7775 = vpop.f32.mrb[0].mxu0
        %7776 = vdwg.mxu0
        %v7781 = vrot.slane %v7699, 7
        %v7782 = vsel %vm3369, %v7781, %v7698
        %v7783 = vrot.slane %v7700, 6
        %v7784 = vsel %vm3372, %v7783, %v7782
        %v7785 = vrot.slane %v7701, 5
        %v7786 = vsel %vm3375, %v7785, %v7784
        %7787 = vrot.lane.b32.xlu0 %v7786, 32
        %v7788 = vpop.permute.xlu0 %7787
        %v7789 = vsel %vm3112, %v7788, 0
        %7791 = vmatprep.subr.mxu0 0.0
        %7792 = vmatpush1.msra.mxu0 %v2948
        %7793 = vmatprep.subr.mxu0 0.0
        %7794 = vmatpush1.msra.mxu0 %v2949
        %7795 = vmatprep.subr.mxu0 0.0
        %7796 = vmatpush1.msra.mxu0 %v2950
        %7797 = vmatprep.subr.mxu0 0.0
        %7798 = vmatpush1.msra.mxu0 %v2951
        %7799 = vmatprep.subr.mxu0 0.0
        %7800 = vmatpush1.msra.mxu0 0.0
        %7801 = vmatprep.subr.mxu0 0.0
        %7802 = vmatpush1.msra.mxu0 0.0
        %7803 = vmatprep.subr.mxu0 0.0
        %7804 = vmatpush1.msra.mxu0 0.0
        %7805 = vmatprep.subr.mxu0 0.0
        %7806 = vmatpush1.msra.mxu0 0.0
        %7807 = vmatprep.subr.mxu0 0.0
        %7808 = vmatpush1.msra.mxu0 0.0
        %7809 = vmatprep.subr.mxu0 0.0
        %7810 = vmatpush1.msra.mxu0 0.0
        %7811 = vmatprep.subr.mxu0 0.0
        %7812 = vmatpush1.msra.mxu0 0.0
        %7813 = vmatprep.subr.mxu0 0.0
        %7814 = vmatpush1.msra.mxu0 0.0
        %7815 = vmatprep.subr.mxu0 0.0
        %7816 = vmatpush1.msra.mxu0 0.0
        %7817 = vmatprep.subr.mxu0 0.0
        %7818 = vmatpush1.msra.mxu0 0.0
        %7819 = vmatprep.subr.mxu0 0.0
        %7820 = vmatpush1.msra.mxu0 0.0
        %7821 = vmatprep.subr.mxu0 0.0
        %7822 = vmatpush1.msra.mxu0 0.0
        %7823 = vmatprep.subr.mxu0 0.0
        %7824 = vmatpush1.msra.mxu0 0.0
        %7825 = vmatprep.subr.mxu0 0.0
        %7826 = vmatpush1.msra.mxu0 0.0
        %7827 = vmatprep.subr.mxu0 0.0
        %7828 = vmatpush1.msra.mxu0 0.0
        %7829 = vmatprep.subr.mxu0 0.0
        %7830 = vmatpush1.msra.mxu0 0.0
        %7831 = vmatprep.subr.mxu0 0.0
        %7832 = vmatpush1.msra.mxu0 0.0
        %7833 = vmatprep.subr.mxu0 0.0
        %7834 = vmatpush1.msra.mxu0 0.0
        %7835 = vmatprep.subr.mxu0 0.0
        %7836 = vmatpush1.msra.mxu0 0.0
        %7837 = vmatprep.subr.mxu0 0.0
        %7838 = vmatpush1.msra.mxu0 0.0
        %7839 = vmatprep.subr.mxu0 0.0
        %7840 = vmatpush1.msra.mxu0 0.0
        %7841 = vmatprep.subr.mxu0 0.0
        %7842 = vmatpush1.msra.mxu0 0.0
        %7843 = vmatprep.subr.mxu0 0.0
        %7844 = vmatpush1.msra.mxu0 0.0
        %7845 = vmatprep.subr.mxu0 0.0
        %7846 = vmatpush1.msra.mxu0 0.0
        %7847 = vmatprep.subr.mxu0 0.0
        %7848 = vmatpush1.msra.mxu0 0.0
        %7849 = vmatprep.subr.mxu0 0.0
        %7850 = vmatpush1.msra.mxu0 0.0
        %7851 = vmatprep.subr.mxu0 0.0
        %7852 = vmatpush1.msra.mxu0 0.0
        %7853 = vmatprep.subr.mxu0 0.0
        %7854 = vmatpush1.msra.mxu0 0.0
        %7855 = vmatprep.mubr.f32.mxu0 0.0
        %7856 = vmatmul.mubr.f32.gmra.mrb[0].mxu0 %v7789
        %v7857 = vpop.f32.mrb[0].mxu0
        %v7858 = vadd.f32 %v7774, %v7857
        %v7859 = vpop.f32.mrb[0].mxu0
        %7860 = vdwg.mxu0
        %v7861 = vadd.f32 %v7858, %v3455
        %v7862 = vxor.u32 %v7861, 2147483648
        %v7863 = vmul.f32 %v7862, 1.442695
        %v7864 = vpow.pop %v7863
        %v7865 = vadd.f32 %v7864, 1.0
        %v7866 = vrcp.pop %v7865
        %v7867 = vmul.f32 1.0, %v7866
        %v7868 = vtanh.pop %v7861
        %v7869 = vmul.f32 %v7867, %v7512
        %7871 = vrot.lane.b32.xlu0 %v7868, 64
        %v7872 = vpop.permute.xlu0 %7871
        %v7874 = vmul.f32 %v7867, %v7872
        %7876 = vrot.lane.b32.xlu0 %v7874, 32
        %v7877 = vpop.permute.xlu0 %7876
        %v7879 = vadd.f32 %v7869, %v7877
        %v7880 = vtanh.pop %v7879
        %7882 = vrot.lane.b32.xlu0 %v7880, 64
        %v7883 = vpop.permute.xlu0 %7882
        %v7885 = vmul.f32 %v7867, %v7883
        %v7886 = vadd.f32 %v7519, %v7885
        %v7887 = vld [vmem:[#allocation3 + $0xd] sm:$0x1]
        %v7888 = vld [vmem:[#allocation3 + $0x1d] sm:$0x1]
        %v7889 = vld [vmem:[#allocation3 + $0x2d] sm:$0x1]
        %v7890 = vld [vmem:[#allocation3 + $0x3d] sm:$0x1]
        %7891 = vmatprep.subr.mxu0 0.0
        %7892 = vmatpush1.msra.mxu0 %v2952
        %7893 = vmatprep.subr.mxu0 0.0
        %7894 = vmatpush1.msra.mxu0 %v2953
        %7895 = vmatprep.subr.mxu0 0.0
        %7896 = vmatpush1.msra.mxu0 %v2954
        %7897 = vmatprep.subr.mxu0 0.0
        %7898 = vmatpush1.msra.mxu0 %v2955
        %7899 = vmatprep.subr.mxu0 0.0
        %7900 = vmatpush1.msra.mxu0 0.0
        %7901 = vmatprep.subr.mxu0 0.0
        %7902 = vmatpush1.msra.mxu0 0.0
        %7903 = vmatprep.subr.mxu0 0.0
        %7904 = vmatpush1.msra.mxu0 0.0
        %7905 = vmatprep.subr.mxu0 0.0
        %7906 = vmatpush1.msra.mxu0 0.0
        %7907 = vmatprep.subr.mxu0 0.0
        %7908 = vmatpush1.msra.mxu0 0.0
        %7909 = vmatprep.subr.mxu0 0.0
        %7910 = vmatpush1.msra.mxu0 0.0
        %7911 = vmatprep.subr.mxu0 0.0
        %7912 = vmatpush1.msra.mxu0 0.0
        %7913 = vmatprep.subr.mxu0 0.0
        %7914 = vmatpush1.msra.mxu0 0.0
        %7915 = vmatprep.subr.mxu0 0.0
        %7916 = vmatpush1.msra.mxu0 0.0
        %7917 = vmatprep.subr.mxu0 0.0
        %7918 = vmatpush1.msra.mxu0 0.0
        %7919 = vmatprep.subr.mxu0 0.0
        %7920 = vmatpush1.msra.mxu0 0.0
        %7921 = vmatprep.subr.mxu0 0.0
        %7922 = vmatpush1.msra.mxu0 0.0
        %7923 = vmatprep.subr.mxu0 0.0
        %7924 = vmatpush1.msra.mxu0 0.0
        %7925 = vmatprep.subr.mxu0 0.0
        %7926 = vmatpush1.msra.mxu0 0.0
        %7927 = vmatprep.subr.mxu0 0.0
        %7928 = vmatpush1.msra.mxu0 0.0
        %7929 = vmatprep.subr.mxu0 0.0
        %7930 = vmatpush1.msra.mxu0 0.0
        %7931 = vmatprep.subr.mxu0 0.0
        %7932 = vmatpush1.msra.mxu0 0.0
        %7933 = vmatprep.subr.mxu0 0.0
        %7934 = vmatpush1.msra.mxu0 0.0
        %7935 = vmatprep.subr.mxu0 0.0
        %7936 = vmatpush1.msra.mxu0 0.0
        %7937 = vmatprep.subr.mxu0 0.0
        %7938 = vmatpush1.msra.mxu0 0.0
        %7939 = vmatprep.subr.mxu0 0.0
        %7940 = vmatpush1.msra.mxu0 0.0
        %7941 = vmatprep.subr.mxu0 0.0
        %7942 = vmatpush1.msra.mxu0 0.0
        %7943 = vmatprep.subr.mxu0 0.0
        %7944 = vmatpush1.msra.mxu0 0.0
        %7945 = vmatprep.subr.mxu0 0.0
        %7946 = vmatpush1.msra.mxu0 0.0
        %7947 = vmatprep.subr.mxu0 0.0
        %7948 = vmatpush1.msra.mxu0 0.0
        %7949 = vmatprep.subr.mxu0 0.0
        %7950 = vmatpush1.msra.mxu0 0.0
        %7951 = vmatprep.subr.mxu0 0.0
        %7952 = vmatpush1.msra.mxu0 0.0
        %7953 = vmatprep.subr.mxu0 0.0
        %7954 = vmatpush1.msra.mxu0 0.0
        %7955 = vmatprep.mubr.f32.mxu0 0.0
        %7956 = vmatmul.mubr.f32.gmra.mrb[0].mxu0 %v7789
        %v7957 = vpop.f32.mrb[0].mxu0
        %v7958 = vadd.f32 0.0, %v7957
        %v7959 = vpop.f32.mrb[0].mxu0
        %7960 = vdwg.mxu0
        %v7962 = vrot.slane %v7958, 1
        %v7963 = vrot.slane %v7958, 2
        %v7964 = vrot.slane %v7958, 3
        %v7969 = vadd.f32 %v7887, %v7958
        %v7970 = vadd.f32 %v7888, %v7962
        %v7971 = vadd.f32 %v7889, %v7963
        %v7972 = vadd.f32 %v7890, %v7964
        %v7973 = vxor.u32 %v7969, 2147483648
        %v7974 = vxor.u32 %v7970, 2147483648
        %v7975 = vxor.u32 %v7971, 2147483648
        %v7976 = vxor.u32 %v7972, 2147483648
        %v7977 = vmul.f32 %v7973, 1.442695
        %v7978 = vpow.pop %v7977
        %v7979 = vmul.f32 %v7974, 1.442695
        %v7980 = vpow.pop %v7979
        %v7981 = vmul.f32 %v7975, 1.442695
        %v7982 = vpow.pop %v7981
        %v7983 = vmul.f32 %v7976, 1.442695
        %v7984 = vpow.pop %v7983
        %v7985 = vadd.f32 %v7978, 1.0
        %v7986 = vadd.f32 %v7980, 1.0
        %v7987 = vadd.f32 %v7982, 1.0
        %v7988 = vadd.f32 %v7984, 1.0
        %v7989 = vrcp.pop %v7985
        %v7990 = vmul.f32 1.0, %v7989
        %v7991 = vrcp.pop %v7986
        %v7992 = vmul.f32 1.0, %v7991
        %v7993 = vrcp.pop %v7987
        %v7994 = vmul.f32 1.0, %v7993
        %v7995 = vrcp.pop %v7988
        %v7996 = vmul.f32 1.0, %v7995
        %v7997 = vtanh.pop %v7969
        %v7998 = vtanh.pop %v7970
        %v7999 = vtanh.pop %v7971
        %v8000 = vtanh.pop %v7972
        %v8001 = vmul.f32 %v7990, %v7674
        %v8002 = vmul.f32 %v7992, %v7675
        %v8003 = vmul.f32 %v7994, %v7676
        %v8004 = vmul.f32 %v7996, %v7677
        %8009 = vrot.lane.b32.xlu0 %v7997, 64
        %v8010 = vpop.permute.xlu0 %8009
        %8011 = vrot.lane.b32.xlu0 %v7998, 64
        %v8012 = vpop.permute.xlu0 %8011
        %8013 = vrot.lane.b32.xlu0 %v7999, 64
        %v8014 = vpop.permute.xlu0 %8013
        %8015 = vrot.lane.b32.xlu0 %v8000, 64
        %v8016 = vpop.permute.xlu0 %8015
        %v8021 = vmul.f32 %v7990, %v8010
        %v8022 = vmul.f32 %v7992, %v8012
        %v8023 = vmul.f32 %v7994, %v8014
        %v8024 = vmul.f32 %v7996, %v8016
        %8029 = vrot.lane.b32.xlu0 %v8021, 32
        %v8030 = vpop.permute.xlu0 %8029
        %8031 = vrot.lane.b32.xlu0 %v8022, 32
        %v8032 = vpop.permute.xlu0 %8031
        %8033 = vrot.lane.b32.xlu0 %v8023, 32
        %v8034 = vpop.permute.xlu0 %8033
        %8035 = vrot.lane.b32.xlu0 %v8024, 32
        %v8036 = vpop.permute.xlu0 %8035
        %v8041 = vadd.f32 %v8001, %v8030
        %v8042 = vadd.f32 %v8002, %v8032
        %v8043 = vadd.f32 %v8003, %v8034
        %v8044 = vadd.f32 %v8004, %v8036
        %v8045 = vtanh.pop %v8041
        %v8046 = vtanh.pop %v8042
        %v8047 = vtanh.pop %v8043
        %v8048 = vtanh.pop %v8044
        %8053 = vrot.lane.b32.xlu0 %v8045, 64
        %v8054 = vpop.permute.xlu0 %8053
        %8055 = vrot.lane.b32.xlu0 %v8046, 64
        %v8056 = vpop.permute.xlu0 %8055
        %8057 = vrot.lane.b32.xlu0 %v8047, 64
        %v8058 = vpop.permute.xlu0 %8057
        %8059 = vrot.lane.b32.xlu0 %v8048, 64
        %v8060 = vpop.permute.xlu0 %8059
        %v8065 = vmul.f32 %v7990, %v8054
        %v8066 = vmul.f32 %v7992, %v8056
        %v8067 = vmul.f32 %v7994, %v8058
        %v8068 = vmul.f32 %v7996, %v8060
        %8070 = vrot.lane.b32.xlu0 %v7885, 32
        %v8071 = vpop.permute.xlu0 %8070
        %v8072 = vsel %vm3112, %v8071, 0
        %8074 = vmatprep.subr.mxu0 0.0
        %8075 = vmatpush1.msra.mxu0 %v2956
        %8076 = vmatprep.subr.mxu0 0.0
        %8077 = vmatpush1.msra.mxu0 %v2957
        %8078 = vmatprep.subr.mxu0 0.0
        %8079 = vmatpush1.msra.mxu0 %v2958
        %8080 = vmatprep.subr.mxu0 0.0
        %8081 = vmatpush1.msra.mxu0 %v2959
        %8082 = vmatprep.subr.mxu0 0.0
        %8083 = vmatpush1.msra.mxu0 0.0
        %8084 = vmatprep.subr.mxu0 0.0
        %8085 = vmatpush1.msra.mxu0 0.0
        %8086 = vmatprep.subr.mxu0 0.0
        %8087 = vmatpush1.msra.mxu0 0.0
        %8088 = vmatprep.subr.mxu0 0.0
        %8089 = vmatpush1.msra.mxu0 0.0
        %8090 = vmatprep.subr.mxu0 0.0
        %8091 = vmatpush1.msra.mxu0 0.0
        %8092 = vmatprep.subr.mxu0 0.0
        %8093 = vmatpush1.msra.mxu0 0.0
        %8094 = vmatprep.subr.mxu0 0.0
        %8095 = vmatpush1.msra.mxu0 0.0
        %8096 = vmatprep.subr.mxu0 0.0
        %8097 = vmatpush1.msra.mxu0 0.0
        %8098 = vmatprep.subr.mxu0 0.0
        %8099 = vmatpush1.msra.mxu0 0.0
        %8100 = vmatprep.subr.mxu0 0.0
        %8101 = vmatpush1.msra.mxu0 0.0
        %8102 = vmatprep.subr.mxu0 0.0
        %8103 = vmatpush1.msra.mxu0 0.0
        %8104 = vmatprep.subr.mxu0 0.0
        %8105 = vmatpush1.msra.mxu0 0.0
        %8106 = vmatprep.subr.mxu0 0.0
        %8107 = vmatpush1.msra.mxu0 0.0
        %8108 = vmatprep.subr.mxu0 0.0
        %8109 = vmatpush1.msra.mxu0 0.0
        %8110 = vmatprep.subr.mxu0 0.0
        %8111 = vmatpush1.msra.mxu0 0.0
        %8112 = vmatprep.subr.mxu0 0.0
        %8113 = vmatpush1.msra.mxu0 0.0
        %8114 = vmatprep.subr.mxu0 0.0
        %8115 = vmatpush1.msra.mxu0 0.0
        %8116 = vmatprep.subr.mxu0 0.0
        %8117 = vmatpush1.msra.mxu0 0.0
        %8118 = vmatprep.subr.mxu0 0.0
        %8119 = vmatpush1.msra.mxu0 0.0
        %8120 = vmatprep.subr.mxu0 0.0
        %8121 = vmatpush1.msra.mxu0 0.0
        %8122 = vmatprep.subr.mxu0 0.0
        %8123 = vmatpush1.msra.mxu0 0.0
        %8124 = vmatprep.subr.mxu0 0.0
        %8125 = vmatpush1.msra.mxu0 0.0
        %8126 = vmatprep.subr.mxu0 0.0
        %8127 = vmatpush1.msra.mxu0 0.0
        %8128 = vmatprep.subr.mxu0 0.0
        %8129 = vmatpush1.msra.mxu0 0.0
        %8130 = vmatprep.subr.mxu0 0.0
        %8131 = vmatpush1.msra.mxu0 0.0
        %8132 = vmatprep.subr.mxu0 0.0
        %8133 = vmatpush1.msra.mxu0 0.0
        %8134 = vmatprep.subr.mxu0 0.0
        %8135 = vmatpush1.msra.mxu0 0.0
        %8136 = vmatprep.subr.mxu0 0.0
        %8137 = vmatpush1.msra.mxu0 0.0
        %8138 = vmatprep.mubr.f32.mxu0 0.0
        %8139 = vmatmul.mubr.f32.gmra.mrb[0].mxu0 %v8072
        %v8140 = vpop.f32.mrb[0].mxu0
        %v8141 = vadd.f32 0.0, %v8140
        %v8142 = vpop.f32.mrb[0].mxu0
        %8143 = vdwg.mxu0
        %v8148 = vrot.slane %v8066, 7
        %v8149 = vsel %vm3369, %v8148, %v8065
        %v8150 = vrot.slane %v8067, 6
        %v8151 = vsel %vm3372, %v8150, %v8149
        %v8152 = vrot.slane %v8068, 5
        %v8153 = vsel %vm3375, %v8152, %v8151
        %8154 = vrot.lane.b32.xlu0 %v8153, 32
        %v8155 = vpop.permute.xlu0 %8154
        %v8156 = vsel %vm3112, %v8155, 0
        %8158 = vmatprep.subr.mxu0 0.0
        %8159 = vmatpush1.msra.mxu0 %v2948
        %8160 = vmatprep.subr.mxu0 0.0
        %8161 = vmatpush1.msra.mxu0 %v2949
        %8162 = vmatprep.subr.mxu0 0.0
        %8163 = vmatpush1.msra.mxu0 %v2950
        %8164 = vmatprep.subr.mxu0 0.0
        %8165 = vmatpush1.msra.mxu0 %v2951
        %8166 = vmatprep.subr.mxu0 0.0
        %8167 = vmatpush1.msra.mxu0 0.0
        %8168 = vmatprep.subr.mxu0 0.0
        %8169 = vmatpush1.msra.mxu0 0.0
        %8170 = vmatprep.subr.mxu0 0.0
        %8171 = vmatpush1.msra.mxu0 0.0
        %8172 = vmatprep.subr.mxu0 0.0
        %8173 = vmatpush1.msra.mxu0 0.0
        %8174 = vmatprep.subr.mxu0 0.0
        %8175 = vmatpush1.msra.mxu0 0.0
        %8176 = vmatprep.subr.mxu0 0.0
        %8177 = vmatpush1.msra.mxu0 0.0
        %8178 = vmatprep.subr.mxu0 0.0
        %8179 = vmatpush1.msra.mxu0 0.0
        %8180 = vmatprep.subr.mxu0 0.0
        %8181 = vmatpush1.msra.mxu0 0.0
        %8182 = vmatprep.subr.mxu0 0.0
        %8183 = vmatpush1.msra.mxu0 0.0
        %8184 = vmatprep.subr.mxu0 0.0
        %8185 = vmatpush1.msra.mxu0 0.0
        %8186 = vmatprep.subr.mxu0 0.0
        %8187 = vmatpush1.msra.mxu0 0.0
        %8188 = vmatprep.subr.mxu0 0.0
        %8189 = vmatpush1.msra.mxu0 0.0
        %8190 = vmatprep.subr.mxu0 0.0
        %8191 = vmatpush1.msra.mxu0 0.0
        %8192 = vmatprep.subr.mxu0 0.0
        %8193 = vmatpush1.msra.mxu0 0.0
        %8194 = vmatprep.subr.mxu0 0.0
        %8195 = vmatpush1.msra.mxu0 0.0
        %8196 = vmatprep.subr.mxu0 0.0
        %8197 = vmatpush1.msra.mxu0 0.0
        %8198 = vmatprep.subr.mxu0 0.0
        %8199 = vmatpush1.msra.mxu0 0.0
        %8200 = vmatprep.subr.mxu0 0.0
        %8201 = vmatpush1.msra.mxu0 0.0
        %8202 = vmatprep.subr.mxu0 0.0
        %8203 = vmatpush1.msra.mxu0 0.0
        %8204 = vmatprep.subr.mxu0 0.0
        %8205 = vmatpush1.msra.mxu0 0.0
        %8206 = vmatprep.subr.mxu0 0.0
        %8207 = vmatpush1.msra.mxu0 0.0
        %8208 = vmatprep.subr.mxu0 0.0
        %8209 = vmatpush1.msra.mxu0 0.0
        %8210 = vmatprep.subr.mxu0 0.0
        %8211 = vmatpush1.msra.mxu0 0.0
        %8212 = vmatprep.subr.mxu0 0.0
        %8213 = vmatpush1.msra.mxu0 0.0
        %8214 = vmatprep.subr.mxu0 0.0
        %8215 = vmatpush1.msra.mxu0 0.0
        %8216 = vmatprep.subr.mxu0 0.0
        %8217 = vmatpush1.msra.mxu0 0.0
        %8218 = vmatprep.subr.mxu0 0.0
        %8219 = vmatpush1.msra.mxu0 0.0
        %8220 = vmatprep.subr.mxu0 0.0
        %8221 = vmatpush1.msra.mxu0 0.0
        %8222 = vmatprep.mubr.f32.mxu0 0.0
        %8223 = vmatmul.mubr.f32.gmra.mrb[0].mxu0 %v8156
        %v8224 = vpop.f32.mrb[0].mxu0
        %v8225 = vadd.f32 %v8141, %v8224
        %v8226 = vpop.f32.mrb[0].mxu0
        %8227 = vdwg.mxu0
        %v8228 = vadd.f32 %v8225, %v3455
        %v8229 = vxor.u32 %v8228, 2147483648
        %v8230 = vmul.f32 %v8229, 1.442695
        %v8231 = vpow.pop %v8230
        %v8232 = vadd.f32 %v8231, 1.0
        %v8233 = vrcp.pop %v8232
        %v8234 = vmul.f32 1.0, %v8233
        %v8235 = vtanh.pop %v8228
        %v8236 = vmul.f32 %v8234, %v7879
        %8238 = vrot.lane.b32.xlu0 %v8235, 64
        %v8239 = vpop.permute.xlu0 %8238
        %v8241 = vmul.f32 %v8234, %v8239
        %8243 = vrot.lane.b32.xlu0 %v8241, 32
        %v8244 = vpop.permute.xlu0 %8243
        %v8246 = vadd.f32 %v8236, %v8244
        %v8247 = vtanh.pop %v8246
        %8249 = vrot.lane.b32.xlu0 %v8247, 64
        %v8250 = vpop.permute.xlu0 %8249
        %v8252 = vmul.f32 %v8234, %v8250
        %v8253 = vadd.f32 %v7886, %v8252
        %v8254 = vld [vmem:[#allocation3 + $0xe] sm:$0x1]
        %v8255 = vld [vmem:[#allocation3 + $0x1e] sm:$0x1]
        %v8256 = vld [vmem:[#allocation3 + $0x2e] sm:$0x1]
        %v8257 = vld [vmem:[#allocation3 + $0x3e] sm:$0x1]
        %8258 = vmatprep.subr.mxu0 0.0
        %8259 = vmatpush1.msra.mxu0 %v2952
        %8260 = vmatprep.subr.mxu0 0.0
        %8261 = vmatpush1.msra.mxu0 %v2953
        %8262 = vmatprep.subr.mxu0 0.0
        %8263 = vmatpush1.msra.mxu0 %v2954
        %8264 = vmatprep.subr.mxu0 0.0
        %8265 = vmatpush1.msra.mxu0 %v2955
        %8266 = vmatprep.subr.mxu0 0.0
        %8267 = vmatpush1.msra.mxu0 0.0
        %8268 = vmatprep.subr.mxu0 0.0
        %8269 = vmatpush1.msra.mxu0 0.0
        %8270 = vmatprep.subr.mxu0 0.0
        %8271 = vmatpush1.msra.mxu0 0.0
        %8272 = vmatprep.subr.mxu0 0.0
        %8273 = vmatpush1.msra.mxu0 0.0
        %8274 = vmatprep.subr.mxu0 0.0
        %8275 = vmatpush1.msra.mxu0 0.0
        %8276 = vmatprep.subr.mxu0 0.0
        %8277 = vmatpush1.msra.mxu0 0.0
        %8278 = vmatprep.subr.mxu0 0.0
        %8279 = vmatpush1.msra.mxu0 0.0
        %8280 = vmatprep.subr.mxu0 0.0
        %8281 = vmatpush1.msra.mxu0 0.0
        %8282 = vmatprep.subr.mxu0 0.0
        %8283 = vmatpush1.msra.mxu0 0.0
        %8284 = vmatprep.subr.mxu0 0.0
        %8285 = vmatpush1.msra.mxu0 0.0
        %8286 = vmatprep.subr.mxu0 0.0
        %8287 = vmatpush1.msra.mxu0 0.0
        %8288 = vmatprep.subr.mxu0 0.0
        %8289 = vmatpush1.msra.mxu0 0.0
        %8290 = vmatprep.subr.mxu0 0.0
        %8291 = vmatpush1.msra.mxu0 0.0
        %8292 = vmatprep.subr.mxu0 0.0
        %8293 = vmatpush1.msra.mxu0 0.0
        %8294 = vmatprep.subr.mxu0 0.0
        %8295 = vmatpush1.msra.mxu0 0.0
        %8296 = vmatprep.subr.mxu0 0.0
        %8297 = vmatpush1.msra.mxu0 0.0
        %8298 = vmatprep.subr.mxu0 0.0
        %8299 = vmatpush1.msra.mxu0 0.0
        %8300 = vmatprep.subr.mxu0 0.0
        %8301 = vmatpush1.msra.mxu0 0.0
        %8302 = vmatprep.subr.mxu0 0.0
        %8303 = vmatpush1.msra.mxu0 0.0
        %8304 = vmatprep.subr.mxu0 0.0
        %8305 = vmatpush1.msra.mxu0 0.0
        %8306 = vmatprep.subr.mxu0 0.0
        %8307 = vmatpush1.msra.mxu0 0.0
        %8308 = vmatprep.subr.mxu0 0.0
        %8309 = vmatpush1.msra.mxu0 0.0
        %8310 = vmatprep.subr.mxu0 0.0
        %8311 = vmatpush1.msra.mxu0 0.0
        %8312 = vmatprep.subr.mxu0 0.0
        %8313 = vmatpush1.msra.mxu0 0.0
        %8314 = vmatprep.subr.mxu0 0.0
        %8315 = vmatpush1.msra.mxu0 0.0
        %8316 = vmatprep.subr.mxu0 0.0
        %8317 = vmatpush1.msra.mxu0 0.0
        %8318 = vmatprep.subr.mxu0 0.0
        %8319 = vmatpush1.msra.mxu0 0.0
        %8320 = vmatprep.subr.mxu0 0.0
        %8321 = vmatpush1.msra.mxu0 0.0
        %8322 = vmatprep.mubr.f32.mxu0 0.0
        %8323 = vmatmul.mubr.f32.gmra.mrb[0].mxu0 %v8156
        %v8324 = vpop.f32.mrb[0].mxu0
        %v8325 = vadd.f32 0.0, %v8324
        %v8326 = vpop.f32.mrb[0].mxu0
        %8327 = vdwg.mxu0
        %v8329 = vrot.slane %v8325, 1
        %v8330 = vrot.slane %v8325, 2
        %v8331 = vrot.slane %v8325, 3
        %v8336 = vadd.f32 %v8254, %v8325
        %v8337 = vadd.f32 %v8255, %v8329
        %v8338 = vadd.f32 %v8256, %v8330
        %v8339 = vadd.f32 %v8257, %v8331
        %v8340 = vxor.u32 %v8336, 2147483648
        %v8341 = vxor.u32 %v8337, 2147483648
        %v8342 = vxor.u32 %v8338, 2147483648
        %v8343 = vxor.u32 %v8339, 2147483648
        %v8344 = vmul.f32 %v8340, 1.442695
        %v8345 = vpow.pop %v8344
        %v8346 = vmul.f32 %v8341, 1.442695
        %v8347 = vpow.pop %v8346
        %v8348 = vmul.f32 %v8342, 1.442695
        %v8349 = vpow.pop %v8348
        %v8350 = vmul.f32 %v8343, 1.442695
        %v8351 = vpow.pop %v8350
        %v8352 = vadd.f32 %v8345, 1.0
        %v8353 = vadd.f32 %v8347, 1.0
        %v8354 = vadd.f32 %v8349, 1.0
        %v8355 = vadd.f32 %v8351, 1.0
        %v8356 = vrcp.pop %v8352
        %v8357 = vmul.f32 1.0, %v8356
        %v8358 = vrcp.pop %v8353
        %v8359 = vmul.f32 1.0, %v8358
        %v8360 = vrcp.pop %v8354
        %v8361 = vmul.f32 1.0, %v8360
        %v8362 = vrcp.pop %v8355
        %v8363 = vmul.f32 1.0, %v8362
        %v8364 = vtanh.pop %v8336
        %v8365 = vtanh.pop %v8337
        %v8366 = vtanh.pop %v8338
        %v8367 = vtanh.pop %v8339
        %v8368 = vmul.f32 %v8357, %v8041
        %v8369 = vmul.f32 %v8359, %v8042
        %v8370 = vmul.f32 %v8361, %v8043
        %v8371 = vmul.f32 %v8363, %v8044
        %8376 = vrot.lane.b32.xlu0 %v8364, 64
        %v8377 = vpop.permute.xlu0 %8376
        %8378 = vrot.lane.b32.xlu0 %v8365, 64
        %v8379 = vpop.permute.xlu0 %8378
        %8380 = vrot.lane.b32.xlu0 %v8366, 64
        %v8381 = vpop.permute.xlu0 %8380
        %8382 = vrot.lane.b32.xlu0 %v8367, 64
        %v8383 = vpop.permute.xlu0 %8382
        %v8388 = vmul.f32 %v8357, %v8377
        %v8389 = vmul.f32 %v8359, %v8379
        %v8390 = vmul.f32 %v8361, %v8381
        %v8391 = vmul.f32 %v8363, %v8383
        %8396 = vrot.lane.b32.xlu0 %v8388, 32
        %v8397 = vpop.permute.xlu0 %8396
        %8398 = vrot.lane.b32.xlu0 %v8389, 32
        %v8399 = vpop.permute.xlu0 %8398
        %8400 = vrot.lane.b32.xlu0 %v8390, 32
        %v8401 = vpop.permute.xlu0 %8400
        %8402 = vrot.lane.b32.xlu0 %v8391, 32
        %v8403 = vpop.permute.xlu0 %8402
        %v8408 = vadd.f32 %v8368, %v8397
        %v8409 = vadd.f32 %v8369, %v8399
        %v8410 = vadd.f32 %v8370, %v8401
        %v8411 = vadd.f32 %v8371, %v8403
        %v8412 = vtanh.pop %v8408
        %v8413 = vtanh.pop %v8409
        %v8414 = vtanh.pop %v8410
        %v8415 = vtanh.pop %v8411
        %8420 = vrot.lane.b32.xlu0 %v8412, 64
        %v8421 = vpop.permute.xlu0 %8420
        %8422 = vrot.lane.b32.xlu0 %v8413, 64
        %v8423 = vpop.permute.xlu0 %8422
        %8424 = vrot.lane.b32.xlu0 %v8414, 64
        %v8425 = vpop.permute.xlu0 %8424
        %8426 = vrot.lane.b32.xlu0 %v8415, 64
        %v8427 = vpop.permute.xlu0 %8426
        %v8432 = vmul.f32 %v8357, %v8421
        %v8433 = vmul.f32 %v8359, %v8423
        %v8434 = vmul.f32 %v8361, %v8425
        %v8435 = vmul.f32 %v8363, %v8427
        %8437 = vrot.lane.b32.xlu0 %v8252, 32
        %v8438 = vpop.permute.xlu0 %8437
        %v8439 = vsel %vm3112, %v8438, 0
        %8441 = vmatprep.subr.mxu0 0.0
        %8442 = vmatpush1.msra.mxu0 %v2956
        %8443 = vmatprep.subr.mxu0 0.0
        %8444 = vmatpush1.msra.mxu0 %v2957
        %8445 = vmatprep.subr.mxu0 0.0
        %8446 = vmatpush1.msra.mxu0 %v2958
        %8447 = vmatprep.subr.mxu0 0.0
        %8448 = vmatpush1.msra.mxu0 %v2959
        %8449 = vmatprep.subr.mxu0 0.0
        %8450 = vmatpush1.msra.mxu0 0.0
        %8451 = vmatprep.subr.mxu0 0.0
        %8452 = vmatpush1.msra.mxu0 0.0
        %8453 = vmatprep.subr.mxu0 0.0
        %8454 = vmatpush1.msra.mxu0 0.0
        %8455 = vmatprep.subr.mxu0 0.0
        %8456 = vmatpush1.msra.mxu0 0.0
        %8457 = vmatprep.subr.mxu0 0.0
        %8458 = vmatpush1.msra.mxu0 0.0
        %8459 = vmatprep.subr.mxu0 0.0
        %8460 = vmatpush1.msra.mxu0 0.0
        %8461 = vmatprep.subr.mxu0 0.0
        %8462 = vmatpush1.msra.mxu0 0.0
        %8463 = vmatprep.subr.mxu0 0.0
        %8464 = vmatpush1.msra.mxu0 0.0
        %8465 = vmatprep.subr.mxu0 0.0
        %8466 = vmatpush1.msra.mxu0 0.0
        %8467 = vmatprep.subr.mxu0 0.0
        %8468 = vmatpush1.msra.mxu0 0.0
        %8469 = vmatprep.subr.mxu0 0.0
        %8470 = vmatpush1.msra.mxu0 0.0
        %8471 = vmatprep.subr.mxu0 0.0
        %8472 = vmatpush1.msra.mxu0 0.0
        %8473 = vmatprep.subr.mxu0 0.0
        %8474 = vmatpush1.msra.mxu0 0.0
        %8475 = vmatprep.subr.mxu0 0.0
        %8476 = vmatpush1.msra.mxu0 0.0
        %8477 = vmatprep.subr.mxu0 0.0
        %8478 = vmatpush1.msra.mxu0 0.0
        %8479 = vmatprep.subr.mxu0 0.0
        %8480 = vmatpush1.msra.mxu0 0.0
        %8481 = vmatprep.subr.mxu0 0.0
        %8482 = vmatpush1.msra.mxu0 0.0
        %8483 = vmatprep.subr.mxu0 0.0
        %8484 = vmatpush1.msra.mxu0 0.0
        %8485 = vmatprep.subr.mxu0 0.0
        %8486 = vmatpush1.msra.mxu0 0.0
        %8487 = vmatprep.subr.mxu0 0.0
        %8488 = vmatpush1.msra.mxu0 0.0
        %8489 = vmatprep.subr.mxu0 0.0
        %8490 = vmatpush1.msra.mxu0 0.0
        %8491 = vmatprep.subr.mxu0 0.0
        %8492 = vmatpush1.msra.mxu0 0.0
        %8493 = vmatprep.subr.mxu0 0.0
        %8494 = vmatpush1.msra.mxu0 0.0
        %8495 = vmatprep.subr.mxu0 0.0
        %8496 = vmatpush1.msra.mxu0 0.0
        %8497 = vmatprep.subr.mxu0 0.0
        %8498 = vmatpush1.msra.mxu0 0.0
        %8499 = vmatprep.subr.mxu0 0.0
        %8500 = vmatpush1.msra.mxu0 0.0
        %8501 = vmatprep.subr.mxu0 0.0
        %8502 = vmatpush1.msra.mxu0 0.0
        %8503 = vmatprep.subr.mxu0 0.0
        %8504 = vmatpush1.msra.mxu0 0.0
        %8505 = vmatprep.mubr.f32.mxu0 0.0
        %8506 = vmatmul.mubr.f32.gmra.mrb[0].mxu0 %v8439
        %v8507 = vpop.f32.mrb[0].mxu0
        %v8508 = vadd.f32 0.0, %v8507
        %v8509 = vpop.f32.mrb[0].mxu0
        %8510 = vdwg.mxu0
        %v8515 = vrot.slane %v8433, 7
        %v8516 = vsel %vm3369, %v8515, %v8432
        %v8517 = vrot.slane %v8434, 6
        %v8518 = vsel %vm3372, %v8517, %v8516
        %v8519 = vrot.slane %v8435, 5
        %v8520 = vsel %vm3375, %v8519, %v8518
        %8521 = vrot.lane.b32.xlu0 %v8520, 32
        %v8522 = vpop.permute.xlu0 %8521
        %v8523 = vsel %vm3112, %v8522, 0
        %8525 = vmatprep.subr.mxu0 0.0
        %8526 = vmatpush1.msra.mxu0 %v2948
        %8527 = vmatprep.subr.mxu0 0.0
        %8528 = vmatpush1.msra.mxu0 %v2949
        %8529 = vmatprep.subr.mxu0 0.0
        %8530 = vmatpush1.msra.mxu0 %v2950
        %8531 = vmatprep.subr.mxu0 0.0
        %8532 = vmatpush1.msra.mxu0 %v2951
        %8533 = vmatprep.subr.mxu0 0.0
        %8534 = vmatpush1.msra.mxu0 0.0
        %8535 = vmatprep.subr.mxu0 0.0
        %8536 = vmatpush1.msra.mxu0 0.0
        %8537 = vmatprep.subr.mxu0 0.0
        %8538 = vmatpush1.msra.mxu0 0.0
        %8539 = vmatprep.subr.mxu0 0.0
        %8540 = vmatpush1.msra.mxu0 0.0
        %8541 = vmatprep.subr.mxu0 0.0
        %8542 = vmatpush1.msra.mxu0 0.0
        %8543 = vmatprep.subr.mxu0 0.0
        %8544 = vmatpush1.msra.mxu0 0.0
        %8545 = vmatprep.subr.mxu0 0.0
        %8546 = vmatpush1.msra.mxu0 0.0
        %8547 = vmatprep.subr.mxu0 0.0
        %8548 = vmatpush1.msra.mxu0 0.0
        %8549 = vmatprep.subr.mxu0 0.0
        %8550 = vmatpush1.msra.mxu0 0.0
        %8551 = vmatprep.subr.mxu0 0.0
        %8552 = vmatpush1.msra.mxu0 0.0
        %8553 = vmatprep.subr.mxu0 0.0
        %8554 = vmatpush1.msra.mxu0 0.0
        %8555 = vmatprep.subr.mxu0 0.0
        %8556 = vmatpush1.msra.mxu0 0.0
        %8557 = vmatprep.subr.mxu0 0.0
        %8558 = vmatpush1.msra.mxu0 0.0
        %8559 = vmatprep.subr.mxu0 0.0
        %8560 = vmatpush1.msra.mxu0 0.0
        %8561 = vmatprep.subr.mxu0 0.0
        %8562 = vmatpush1.msra.mxu0 0.0
        %8563 = vmatprep.subr.mxu0 0.0
        %8564 = vmatpush1.msra.mxu0 0.0
        %8565 = vmatprep.subr.mxu0 0.0
        %8566 = vmatpush1.msra.mxu0 0.0
        %8567 = vmatprep.subr.mxu0 0.0
        %8568 = vmatpush1.msra.mxu0 0.0
        %8569 = vmatprep.subr.mxu0 0.0
        %8570 = vmatpush1.msra.mxu0 0.0
        %8571 = vmatprep.subr.mxu0 0.0
        %8572 = vmatpush1.msra.mxu0 0.0
        %8573 = vmatprep.subr.mxu0 0.0
        %8574 = vmatpush1.msra.mxu0 0.0
        %8575 = vmatprep.subr.mxu0 0.0
        %8576 = vmatpush1.msra.mxu0 0.0
        %8577 = vmatprep.subr.mxu0 0.0
        %8578 = vmatpush1.msra.mxu0 0.0
        %8579 = vmatprep.subr.mxu0 0.0
        %8580 = vmatpush1.msra.mxu0 0.0
        %8581 = vmatprep.subr.mxu0 0.0
        %8582 = vmatpush1.msra.mxu0 0.0
        %8583 = vmatprep.subr.mxu0 0.0
        %8584 = vmatpush1.msra.mxu0 0.0
        %8585 = vmatprep.subr.mxu0 0.0
        %8586 = vmatpush1.msra.mxu0 0.0
        %8587 = vmatprep.subr.mxu0 0.0
        %8588 = vmatpush1.msra.mxu0 0.0
        %8589 = vmatprep.mubr.f32.mxu0 0.0
        %8590 = vmatmul.mubr.f32.gmra.mrb[0].mxu0 %v8523
        %v8591 = vpop.f32.mrb[0].mxu0
        %v8592 = vadd.f32 %v8508, %v8591
        %v8593 = vpop.f32.mrb[0].mxu0
        %8594 = vdwg.mxu0
        %v8595 = vadd.f32 %v8592, %v3455
        %v8596 = vxor.u32 %v8595, 2147483648
        %v8597 = vmul.f32 %v8596, 1.442695
        %v8598 = vpow.pop %v8597
        %v8599 = vadd.f32 %v8598, 1.0
        %v8600 = vrcp.pop %v8599
        %v8601 = vmul.f32 1.0, %v8600
        %v8602 = vtanh.pop %v8595
        %v8603 = vmul.f32 %v8601, %v8246
        %8605 = vrot.lane.b32.xlu0 %v8602, 64
        %v8606 = vpop.permute.xlu0 %8605
        %v8608 = vmul.f32 %v8601, %v8606
        %8610 = vrot.lane.b32.xlu0 %v8608, 32
        %v8611 = vpop.permute.xlu0 %8610
        %v8613 = vadd.f32 %v8603, %v8611
        %v8614 = vtanh.pop %v8613
        %8616 = vrot.lane.b32.xlu0 %v8614, 64
        %v8617 = vpop.permute.xlu0 %8616
        %v8619 = vmul.f32 %v8601, %v8617
        %v8620 = vadd.f32 %v8253, %v8619
        %v8621 = vld [vmem:[#allocation3 + $0xf] sm:$0x1]
        %v8622 = vld [vmem:[#allocation3 + $0x1f] sm:$0x1]
        %v8623 = vld [vmem:[#allocation3 + $0x2f] sm:$0x1]
        %v8624 = vld [vmem:[#allocation3 + $0x3f] sm:$0x1]
        %8625 = vmatprep.subr.mxu0 0.0
        %8626 = vmatpush1.msra.mxu0 %v2952
        %8627 = vmatprep.subr.mxu0 0.0
        %8628 = vmatpush1.msra.mxu0 %v2953
        %8629 = vmatprep.subr.mxu0 0.0
        %8630 = vmatpush1.msra.mxu0 %v2954
        %8631 = vmatprep.subr.mxu0 0.0
        %8632 = vmatpush1.msra.mxu0 %v2955
        %8633 = vmatprep.subr.mxu0 0.0
        %8634 = vmatpush1.msra.mxu0 0.0
        %8635 = vmatprep.subr.mxu0 0.0
        %8636 = vmatpush1.msra.mxu0 0.0
        %8637 = vmatprep.subr.mxu0 0.0
        %8638 = vmatpush1.msra.mxu0 0.0
        %8639 = vmatprep.subr.mxu0 0.0
        %8640 = vmatpush1.msra.mxu0 0.0
        %8641 = vmatprep.subr.mxu0 0.0
        %8642 = vmatpush1.msra.mxu0 0.0
        %8643 = vmatprep.subr.mxu0 0.0
        %8644 = vmatpush1.msra.mxu0 0.0
        %8645 = vmatprep.subr.mxu0 0.0
        %8646 = vmatpush1.msra.mxu0 0.0
        %8647 = vmatprep.subr.mxu0 0.0
        %8648 = vmatpush1.msra.mxu0 0.0
        %8649 = vmatprep.subr.mxu0 0.0
        %8650 = vmatpush1.msra.mxu0 0.0
        %8651 = vmatprep.subr.mxu0 0.0
        %8652 = vmatpush1.msra.mxu0 0.0
        %8653 = vmatprep.subr.mxu0 0.0
        %8654 = vmatpush1.msra.mxu0 0.0
        %8655 = vmatprep.subr.mxu0 0.0
        %8656 = vmatpush1.msra.mxu0 0.0
        %8657 = vmatprep.subr.mxu0 0.0
        %8658 = vmatpush1.msra.mxu0 0.0
        %8659 = vmatprep.subr.mxu0 0.0
        %8660 = vmatpush1.msra.mxu0 0.0
        %8661 = vmatprep.subr.mxu0 0.0
        %8662 = vmatpush1.msra.mxu0 0.0
        %8663 = vmatprep.subr.mxu0 0.0
        %8664 = vmatpush1.msra.mxu0 0.0
        %8665 = vmatprep.subr.mxu0 0.0
        %8666 = vmatpush1.msra.mxu0 0.0
        %8667 = vmatprep.subr.mxu0 0.0
        %8668 = vmatpush1.msra.mxu0 0.0
        %8669 = vmatprep.subr.mxu0 0.0
        %8670 = vmatpush1.msra.mxu0 0.0
        %8671 = vmatprep.subr.mxu0 0.0
        %8672 = vmatpush1.msra.mxu0 0.0
        %8673 = vmatprep.subr.mxu0 0.0
        %8674 = vmatpush1.msra.mxu0 0.0
        %8675 = vmatprep.subr.mxu0 0.0
        %8676 = vmatpush1.msra.mxu0 0.0
        %8677 = vmatprep.subr.mxu0 0.0
        %8678 = vmatpush1.msra.mxu0 0.0
        %8679 = vmatprep.subr.mxu0 0.0
        %8680 = vmatpush1.msra.mxu0 0.0
        %8681 = vmatprep.subr.mxu0 0.0
        %8682 = vmatpush1.msra.mxu0 0.0
        %8683 = vmatprep.subr.mxu0 0.0
        %8684 = vmatpush1.msra.mxu0 0.0
        %8685 = vmatprep.subr.mxu0 0.0
        %8686 = vmatpush1.msra.mxu0 0.0
        %8687 = vmatprep.subr.mxu0 0.0
        %8688 = vmatpush1.msra.mxu0 0.0
        %8689 = vmatprep.mubr.f32.mxu0 0.0
        %8690 = vmatmul.mubr.f32.gmra.mrb[0].mxu0 %v8523
        %v8691 = vpop.f32.mrb[0].mxu0
        %v8692 = vadd.f32 0.0, %v8691
        %v8693 = vpop.f32.mrb[0].mxu0
        %8694 = vdwg.mxu0
        %v8696 = vrot.slane %v8692, 1
        %v8697 = vrot.slane %v8692, 2
        %v8698 = vrot.slane %v8692, 3
        %v8703 = vadd.f32 %v8621, %v8692
        %v8704 = vadd.f32 %v8622, %v8696
        %v8705 = vadd.f32 %v8623, %v8697
        %v8706 = vadd.f32 %v8624, %v8698
        %v8707 = vxor.u32 %v8703, 2147483648
        %v8708 = vxor.u32 %v8704, 2147483648
        %v8709 = vxor.u32 %v8705, 2147483648
        %v8710 = vxor.u32 %v8706, 2147483648
        %v8711 = vmul.f32 %v8707, 1.442695
        %v8712 = vpow.pop %v8711
        %v8713 = vmul.f32 %v8708, 1.442695
        %v8714 = vpow.pop %v8713
        %v8715 = vmul.f32 %v8709, 1.442695
        %v8716 = vpow.pop %v8715
        %v8717 = vmul.f32 %v8710, 1.442695
        %v8718 = vpow.pop %v8717
        %v8719 = vadd.f32 %v8712, 1.0
        %v8720 = vadd.f32 %v8714, 1.0
        %v8721 = vadd.f32 %v8716, 1.0
        %v8722 = vadd.f32 %v8718, 1.0
        %v8723 = vrcp.pop %v8719
        %v8724 = vmul.f32 1.0, %v8723
        %v8725 = vrcp.pop %v8720
        %v8726 = vmul.f32 1.0, %v8725
        %v8727 = vrcp.pop %v8721
        %v8728 = vmul.f32 1.0, %v8727
        %v8729 = vrcp.pop %v8722
        %v8730 = vmul.f32 1.0, %v8729
        %v8731 = vtanh.pop %v8703
        %v8732 = vtanh.pop %v8704
        %v8733 = vtanh.pop %v8705
        %v8734 = vtanh.pop %v8706
        %v8735 = vmul.f32 %v8724, %v8408
        %v8736 = vmul.f32 %v8726, %v8409
        %v8737 = vmul.f32 %v8728, %v8410
        %v8738 = vmul.f32 %v8730, %v8411
        %8743 = vrot.lane.b32.xlu0 %v8731, 64
        %v8744 = vpop.permute.xlu0 %8743
        %8745 = vrot.lane.b32.xlu0 %v8732, 64
        %v8746 = vpop.permute.xlu0 %8745
        %8747 = vrot.lane.b32.xlu0 %v8733, 64
        %v8748 = vpop.permute.xlu0 %8747
        %8749 = vrot.lane.b32.xlu0 %v8734, 64
        %v8750 = vpop.permute.xlu0 %8749
        %v8755 = vmul.f32 %v8724, %v8744
        %v8756 = vmul.f32 %v8726, %v8746
        %v8757 = vmul.f32 %v8728, %v8748
        %v8758 = vmul.f32 %v8730, %v8750
        %8763 = vrot.lane.b32.xlu0 %v8755, 32
        %v8764 = vpop.permute.xlu0 %8763
        %8765 = vrot.lane.b32.xlu0 %v8756, 32
        %v8766 = vpop.permute.xlu0 %8765
        %8767 = vrot.lane.b32.xlu0 %v8757, 32
        %v8768 = vpop.permute.xlu0 %8767
        %8769 = vrot.lane.b32.xlu0 %v8758, 32
        %v8770 = vpop.permute.xlu0 %8769
        %v8775 = vadd.f32 %v8735, %v8764
        %v8776 = vadd.f32 %v8736, %v8766
        %v8777 = vadd.f32 %v8737, %v8768
        %v8778 = vadd.f32 %v8738, %v8770
        %v8779 = vtanh.pop %v8775
        %v8780 = vtanh.pop %v8776
        %v8781 = vtanh.pop %v8777
        %v8782 = vtanh.pop %v8778
        %8787 = vrot.lane.b32.xlu0 %v8779, 64
        %v8788 = vpop.permute.xlu0 %8787
        %8789 = vrot.lane.b32.xlu0 %v8780, 64
        %v8790 = vpop.permute.xlu0 %8789
        %8791 = vrot.lane.b32.xlu0 %v8781, 64
        %v8792 = vpop.permute.xlu0 %8791
        %8793 = vrot.lane.b32.xlu0 %v8782, 64
        %v8794 = vpop.permute.xlu0 %8793
        %v8799 = vmul.f32 %v8724, %v8788
        %v8800 = vmul.f32 %v8726, %v8790
        %v8801 = vmul.f32 %v8728, %v8792
        %v8802 = vmul.f32 %v8730, %v8794
        %8804 = vrot.lane.b32.xlu0 %v8619, 32
        %v8805 = vpop.permute.xlu0 %8804
        %v8806 = vsel %vm3112, %v8805, 0
        %8808 = vmatprep.subr.mxu0 0.0
        %8809 = vmatpush1.msra.mxu0 %v2956
        %8810 = vmatprep.subr.mxu0 0.0
        %8811 = vmatpush1.msra.mxu0 %v2957
        %8812 = vmatprep.subr.mxu0 0.0
        %8813 = vmatpush1.msra.mxu0 %v2958
        %8814 = vmatprep.subr.mxu0 0.0
        %8815 = vmatpush1.msra.mxu0 %v2959
        %8816 = vmatprep.subr.mxu0 0.0
        %8817 = vmatpush1.msra.mxu0 0.0
        %8818 = vmatprep.subr.mxu0 0.0
        %8819 = vmatpush1.msra.mxu0 0.0
        %8820 = vmatprep.subr.mxu0 0.0
        %8821 = vmatpush1.msra.mxu0 0.0
        %8822 = vmatprep.subr.mxu0 0.0
        %8823 = vmatpush1.msra.mxu0 0.0
        %8824 = vmatprep.subr.mxu0 0.0
        %8825 = vmatpush1.msra.mxu0 0.0
        %8826 = vmatprep.subr.mxu0 0.0
        %8827 = vmatpush1.msra.mxu0 0.0
        %8828 = vmatprep.subr.mxu0 0.0
        %8829 = vmatpush1.msra.mxu0 0.0
        %8830 = vmatprep.subr.mxu0 0.0
        %8831 = vmatpush1.msra.mxu0 0.0
        %8832 = vmatprep.subr.mxu0 0.0
        %8833 = vmatpush1.msra.mxu0 0.0
        %8834 = vmatprep.subr.mxu0 0.0
        %8835 = vmatpush1.msra.mxu0 0.0
        %8836 = vmatprep.subr.mxu0 0.0
        %8837 = vmatpush1.msra.mxu0 0.0
        %8838 = vmatprep.subr.mxu0 0.0
        %8839 = vmatpush1.msra.mxu0 0.0
        %8840 = vmatprep.subr.mxu0 0.0
        %8841 = vmatpush1.msra.mxu0 0.0
        %8842 = vmatprep.subr.mxu0 0.0
        %8843 = vmatpush1.msra.mxu0 0.0
        %8844 = vmatprep.subr.mxu0 0.0
        %8845 = vmatpush1.msra.mxu0 0.0
        %8846 = vmatprep.subr.mxu0 0.0
        %8847 = vmatpush1.msra.mxu0 0.0
        %8848 = vmatprep.subr.mxu0 0.0
        %8849 = vmatpush1.msra.mxu0 0.0
        %8850 = vmatprep.subr.mxu0 0.0
        %8851 = vmatpush1.msra.mxu0 0.0
        %8852 = vmatprep.subr.mxu0 0.0
        %8853 = vmatpush1.msra.mxu0 0.0
        %8854 = vmatprep.subr.mxu0 0.0
        %8855 = vmatpush1.msra.mxu0 0.0
        %8856 = vmatprep.subr.mxu0 0.0
        %8857 = vmatpush1.msra.mxu0 0.0
        %8858 = vmatprep.subr.mxu0 0.0
        %8859 = vmatpush1.msra.mxu0 0.0
        %8860 = vmatprep.subr.mxu0 0.0
        %8861 = vmatpush1.msra.mxu0 0.0
        %8862 = vmatprep.subr.mxu0 0.0
        %8863 = vmatpush1.msra.mxu0 0.0
        %8864 = vmatprep.subr.mxu0 0.0
        %8865 = vmatpush1.msra.mxu0 0.0
        %8866 = vmatprep.subr.mxu0 0.0
        %8867 = vmatpush1.msra.mxu0 0.0
        %8868 = vmatprep.subr.mxu0 0.0
        %8869 = vmatpush1.msra.mxu0 0.0
        %8870 = vmatprep.subr.mxu0 0.0
        %8871 = vmatpush1.msra.mxu0 0.0
        %8872 = vmatprep.mubr.f32.mxu0 0.0
        %8873 = vmatmul.mubr.f32.gmra.mrb[0].mxu0 %v8806
        %v8874 = vpop.f32.mrb[0].mxu0
        %v8875 = vadd.f32 0.0, %v8874
        %v8876 = vpop.f32.mrb[0].mxu0
        %8877 = vdwg.mxu0
        %v8882 = vrot.slane %v8800, 7
        %v8883 = vsel %vm3369, %v8882, %v8799
        %v8884 = vrot.slane %v8801, 6
        %v8885 = vsel %vm3372, %v8884, %v8883
        %v8886 = vrot.slane %v8802, 5
        %v8887 = vsel %vm3375, %v8886, %v8885
        %8888 = vrot.lane.b32.xlu0 %v8887, 32
        %v8889 = vpop.permute.xlu0 %8888
        %v8890 = vsel %vm3112, %v8889, 0
        %8892 = vmatprep.subr.mxu0 0.0
        %8893 = vmatpush1.msra.mxu0 %v2948
        %8894 = vmatprep.subr.mxu0 0.0
        %8895 = vmatpush1.msra.mxu0 %v2949
        %8896 = vmatprep.subr.mxu0 0.0
        %8897 = vmatpush1.msra.mxu0 %v2950
        %8898 = vmatprep.subr.mxu0 0.0
        %8899 = vmatpush1.msra.mxu0 %v2951
        %8900 = vmatprep.subr.mxu0 0.0
        %8901 = vmatpush1.msra.mxu0 0.0
        %8902 = vmatprep.subr.mxu0 0.0
        %8903 = vmatpush1.msra.mxu0 0.0
        %8904 = vmatprep.subr.mxu0 0.0
        %8905 = vmatpush1.msra.mxu0 0.0
        %8906 = vmatprep.subr.mxu0 0.0
        %8907 = vmatpush1.msra.mxu0 0.0
        %8908 = vmatprep.subr.mxu0 0.0
        %8909 = vmatpush1.msra.mxu0 0.0
        %8910 = vmatprep.subr.mxu0 0.0
        %8911 = vmatpush1.msra.mxu0 0.0
        %8912 = vmatprep.subr.mxu0 0.0
        %8913 = vmatpush1.msra.mxu0 0.0
        %8914 = vmatprep.subr.mxu0 0.0
        %8915 = vmatpush1.msra.mxu0 0.0
        %8916 = vmatprep.subr.mxu0 0.0
        %8917 = vmatpush1.msra.mxu0 0.0
        %8918 = vmatprep.subr.mxu0 0.0
        %8919 = vmatpush1.msra.mxu0 0.0
        %8920 = vmatprep.subr.mxu0 0.0
        %8921 = vmatpush1.msra.mxu0 0.0
        %8922 = vmatprep.subr.mxu0 0.0
        %8923 = vmatpush1.msra.mxu0 0.0
        %8924 = vmatprep.subr.mxu0 0.0
        %8925 = vmatpush1.msra.mxu0 0.0
        %8926 = vmatprep.subr.mxu0 0.0
        %8927 = vmatpush1.msra.mxu0 0.0
        %8928 = vmatprep.subr.mxu0 0.0
        %8929 = vmatpush1.msra.mxu0 0.0
        %8930 = vmatprep.subr.mxu0 0.0
        %8931 = vmatpush1.msra.mxu0 0.0
        %8932 = vmatprep.subr.mxu0 0.0
        %8933 = vmatpush1.msra.mxu0 0.0
        %8934 = vmatprep.subr.mxu0 0.0
        %8935 = vmatpush1.msra.mxu0 0.0
        %8936 = vmatprep.subr.mxu0 0.0
        %8937 = vmatpush1.msra.mxu0 0.0
        %8938 = vmatprep.subr.mxu0 0.0
        %8939 = vmatpush1.msra.mxu0 0.0
        %8940 = vmatprep.subr.mxu0 0.0
        %8941 = vmatpush1.msra.mxu0 0.0
        %8942 = vmatprep.subr.mxu0 0.0
        %8943 = vmatpush1.msra.mxu0 0.0
        %8944 = vmatprep.subr.mxu0 0.0
        %8945 = vmatpush1.msra.mxu0 0.0
        %8946 = vmatprep.subr.mxu0 0.0
        %8947 = vmatpush1.msra.mxu0 0.0
        %8948 = vmatprep.subr.mxu0 0.0
        %8949 = vmatpush1.msra.mxu0 0.0
        %8950 = vmatprep.subr.mxu0 0.0
        %8951 = vmatpush1.msra.mxu0 0.0
        %8952 = vmatprep.subr.mxu0 0.0
        %8953 = vmatpush1.msra.mxu0 0.0
        %8954 = vmatprep.subr.mxu0 0.0
        %8955 = vmatpush1.msra.mxu0 0.0
        %8956 = vmatprep.mubr.f32.mxu0 0.0
        %8957 = vmatmul.mubr.f32.gmra.mrb[0].mxu0 %v8890
        %v8958 = vpop.f32.mrb[0].mxu0
        %v8959 = vadd.f32 %v8875, %v8958
        %v8960 = vpop.f32.mrb[0].mxu0
        %8961 = vdwg.mxu0
        %v8962 = vadd.f32 %v8959, %v3455
        %v8963 = vxor.u32 %v8962, 2147483648
        %v8964 = vmul.f32 %v8963, 1.442695
        %v8965 = vpow.pop %v8964
        %v8966 = vadd.f32 %v8965, 1.0
        %v8967 = vrcp.pop %v8966
        %v8968 = vmul.f32 1.0, %v8967
        %v8969 = vtanh.pop %v8962
        %v8970 = vmul.f32 %v8968, %v8613
        %8972 = vrot.lane.b32.xlu0 %v8969, 64
        %v8973 = vpop.permute.xlu0 %8972
        %v8975 = vmul.f32 %v8968, %v8973
        %8977 = vrot.lane.b32.xlu0 %v8975, 32
        %v8978 = vpop.permute.xlu0 %8977
        %v8980 = vadd.f32 %v8970, %v8978
        %v8981 = vtanh.pop %v8980
        %8983 = vrot.lane.b32.xlu0 %v8981, 64
        %v8984 = vpop.permute.xlu0 %8983
        %v8986 = vmul.f32 %v8968, %v8984
        %v8987 = vadd.f32 %v8620, %v8986
        %v8988 = vmul.f32 %v8987, 0.0625
        %v8989 = vld [vmem:[%s11] sm:$0xff]
        %v8990 = vld [vmem:[%s11 + $0x8] sm:$0xff]
        %v8991 = vld [vmem:[%s11 + $0x10] sm:$0xff]
        %v8992 = vld [vmem:[%s11 + $0x18] sm:$0xff]
        %v8993 = vld [vmem:[#allocation10] sm:$0x1]
        %v8995 = vlaneseq
        %v8996 = vshrl.u32 %v8995, 7
        %v8997 = vsub.s32 0, %v8996
        %v8998 = vrot.slane %v8993, %v8997
        %9001 = vrot.lane.b32.xlu0 %v8988, 32
        %v9002 = vpop.permute.xlu0 %9001
        %v9003 = vsel %vm3112, %v9002, 0
        %9005 = vmatprep.subr.mxu0 0.0
        %9006 = vmatpush1.msra.mxu0 %v8989
        %9007 = vmatprep.subr.mxu0 0.0
        %9008 = vmatpush1.msra.mxu0 %v8990
        %9009 = vmatprep.subr.mxu0 0.0
        %9010 = vmatpush1.msra.mxu0 %v8991
        %9011 = vmatprep.subr.mxu0 0.0
        %9012 = vmatpush1.msra.mxu0 %v8992
        %9013 = vmatprep.subr.mxu0 0.0
        %9014 = vmatpush1.msra.mxu0 0.0
        %9015 = vmatprep.subr.mxu0 0.0
        %9016 = vmatpush1.msra.mxu0 0.0
        %9017 = vmatprep.subr.mxu0 0.0
        %9018 = vmatpush1.msra.mxu0 0.0
        %9019 = vmatprep.subr.mxu0 0.0
        %9020 = vmatpush1.msra.mxu0 0.0
        %9021 = vmatprep.subr.mxu0 0.0
        %9022 = vmatpush1.msra.mxu0 0.0
        %9023 = vmatprep.subr.mxu0 0.0
        %9024 = vmatpush1.msra.mxu0 0.0
        %9025 = vmatprep.subr.mxu0 0.0
        %9026 = vmatpush1.msra.mxu0 0.0
        %9027 = vmatprep.subr.mxu0 0.0
        %9028 = vmatpush1.msra.mxu0 0.0
        %9029 = vmatprep.subr.mxu0 0.0
        %9030 = vmatpush1.msra.mxu0 0.0
        %9031 = vmatprep.subr.mxu0 0.0
        %9032 = vmatpush1.msra.mxu0 0.0
        %9033 = vmatprep.subr.mxu0 0.0
        %9034 = vmatpush1.msra.mxu0 0.0
        %9035 = vmatprep.subr.mxu0 0.0
        %9036 = vmatpush1.msra.mxu0 0.0
        %9037 = vmatprep.subr.mxu0 0.0
        %9038 = vmatpush1.msra.mxu0 0.0
        %9039 = vmatprep.subr.mxu0 0.0
        %9040 = vmatpush1.msra.mxu0 0.0
        %9041 = vmatprep.subr.mxu0 0.0
        %9042 = vmatpush1.msra.mxu0 0.0
        %9043 = vmatprep.subr.mxu0 0.0
        %9044 = vmatpush1.msra.mxu0 0.0
        %9045 = vmatprep.subr.mxu0 0.0
        %9046 = vmatpush1.msra.mxu0 0.0
        %9047 = vmatprep.subr.mxu0 0.0
        %9048 = vmatpush1.msra.mxu0 0.0
        %9049 = vmatprep.subr.mxu0 0.0
        %9050 = vmatpush1.msra.mxu0 0.0
        %9051 = vmatprep.subr.mxu0 0.0
        %9052 = vmatpush1.msra.mxu0 0.0
        %9053 = vmatprep.subr.mxu0 0.0
        %9054 = vmatpush1.msra.mxu0 0.0
        %9055 = vmatprep.subr.mxu0 0.0
        %9056 = vmatpush1.msra.mxu0 0.0
        %9057 = vmatprep.subr.mxu0 0.0
        %9058 = vmatpush1.msra.mxu0 0.0
        %9059 = vmatprep.subr.mxu0 0.0
        %9060 = vmatpush1.msra.mxu0 0.0
        %9061 = vmatprep.subr.mxu0 0.0
        %9062 = vmatpush1.msra.mxu0 0.0
        %9063 = vmatprep.subr.mxu0 0.0
        %9064 = vmatpush1.msra.mxu0 0.0
        %9065 = vmatprep.subr.mxu0 0.0
        %9066 = vmatpush1.msra.mxu0 0.0
        %9067 = vmatprep.subr.mxu0 0.0
        %9068 = vmatpush1.msra.mxu0 0.0
        %9069 = vmatprep.mubr.f32.mxu0 0.0
        %9070 = vmatmul.mubr.f32.gmra.mrb[0].mxu0 %v9003
        %v9071 = vpop.f32.mrb[0].mxu0
        %v9072 = vadd.f32 %v8998, %v9071
        %v9073 = vpop.f32.mrb[0].mxu0
        %9074 = vdwg.mxu0
        %v9075 = vmax.f32 %v9072, 0.0
        %v9076 = vld [vmem:[%s13] sm:$0xff]
        %v9077 = vld [vmem:[%s13 + $0x8] sm:$0xff]
        %v9078 = vld [vmem:[#allocation12] sm:$0x1]
        %v9080 = vlaneseq
        %v9081 = vshrl.u32 %v9080, 7
        %v9082 = vsub.s32 0, %v9081
        %v9083 = vrot.slane %v9078, %v9082
        %vm9085 = vcmask 130048
        %v9087 = vsel %vm9085, %v9075, 0
        %9089 = vmatprep.subr.mxu0 0.0
        %9090 = vmatpush1.msra.mxu0 %v9076
        %9091 = vmatprep.subr.mxu0 0.0
        %9092 = vmatpush1.msra.mxu0 %v9077
        %9093 = vmatprep.subr.mxu0 0.0
        %9094 = vmatpush1.msra.mxu0 0.0
        %9095 = vmatprep.subr.mxu0 0.0
        %9096 = vmatpush1.msra.mxu0 0.0
        %9097 = vmatprep.subr.mxu0 0.0
        %9098 = vmatpush1.msra.mxu0 0.0
        %9099 = vmatprep.subr.mxu0 0.0
        %9100 = vmatpush1.msra.mxu0 0.0
        %9101 = vmatprep.subr.mxu0 0.0
        %9102 = vmatpush1.msra.mxu0 0.0
        %9103 = vmatprep.subr.mxu0 0.0
        %9104 = vmatpush1.msra.mxu0 0.0
        %9105 = vmatprep.subr.mxu0 0.0
        %9106 = vmatpush1.msra.mxu0 0.0
        %9107 = vmatprep.subr.mxu0 0.0
        %9108 = vmatpush1.msra.mxu0 0.0
        %9109 = vmatprep.subr.mxu0 0.0
        %9110 = vmatpush1.msra.mxu0 0.0
        %9111 = vmatprep.subr.mxu0 0.0
        %9112 = vmatpush1.msra.mxu0 0.0
        %9113 = vmatprep.subr.mxu0 0.0
        %9114 = vmatpush1.msra.mxu0 0.0
        %9115 = vmatprep.subr.mxu0 0.0
        %9116 = vmatpush1.msra.mxu0 0.0
        %9117 = vmatprep.subr.mxu0 0.0
        %9118 = vmatpush1.msra.mxu0 0.0
        %9119 = vmatprep.subr.mxu0 0.0
        %9120 = vmatpush1.msra.mxu0 0.0
        %9121 = vmatprep.subr.mxu0 0.0
        %9122 = vmatpush1.msra.mxu0 0.0
        %9123 = vmatprep.subr.mxu0 0.0
        %9124 = vmatpush1.msra.mxu0 0.0
        %9125 = vmatprep.subr.mxu0 0.0
        %9126 = vmatpush1.msra.mxu0 0.0
        %9127 = vmatprep.subr.mxu0 0.0
        %9128 = vmatpush1.msra.mxu0 0.0
        %9129 = vmatprep.subr.mxu0 0.0
        %9130 = vmatpush1.msra.mxu0 0.0
        %9131 = vmatprep.subr.mxu0 0.0
        %9132 = vmatpush1.msra.mxu0 0.0
        %9133 = vmatprep.subr.mxu0 0.0
        %9134 = vmatpush1.msra.mxu0 0.0
        %9135 = vmatprep.subr.mxu0 0.0
        %9136 = vmatpush1.msra.mxu0 0.0
        %9137 = vmatprep.subr.mxu0 0.0
        %9138 = vmatpush1.msra.mxu0 0.0
        %9139 = vmatprep.subr.mxu0 0.0
        %9140 = vmatpush1.msra.mxu0 0.0
        %9141 = vmatprep.subr.mxu0 0.0
        %9142 = vmatpush1.msra.mxu0 0.0
        %9143 = vmatprep.subr.mxu0 0.0
        %9144 = vmatpush1.msra.mxu0 0.0
        %9145 = vmatprep.subr.mxu0 0.0
        %9146 = vmatpush1.msra.mxu0 0.0
        %9147 = vmatprep.subr.mxu0 0.0
        %9148 = vmatpush1.msra.mxu0 0.0
        %9149 = vmatprep.subr.mxu0 0.0
        %9150 = vmatpush1.msra.mxu0 0.0
        %9151 = vmatprep.subr.mxu0 0.0
        %9152 = vmatpush1.msra.mxu0 0.0
        %9153 = vmatprep.mubr.f32.mxu0 0.0
        %9154 = vmatmul.mubr.f32.gmra.mrb[0].mxu0 %v9087
        %v9155 = vpop.f32.mrb[0].mxu0
        %v9156 = vadd.f32 %v9083, %v9155
        %v9157 = vpop.f32.mrb[0].mxu0
        %9158 = vdwg.mxu0
        %vm9159 = vcmask 35840
        %9160 = vst.msk [vmem:[%s559] sm:$0xf] %vm9159, %v9156
        %s9161 = sand.u32 %s360, 1
        %s9162 = scalar_lea.sflag [#allocation6], %s9161
        %s9163 = sand.u32 %s360, 1
        %s9164 = smul.addr %s9163, 4
        %s9165 = scalar_lea.vmem [#allocation13], %s9164
        // Predicated region
        $region101: #{cnn_lstm_forward.1} parent=79 // pred_check
          %p9166 = pneg %p370
        $region102: #{cnn_lstm_forward.1} parent=79 // pred_check_branch
          %9168 = sbr.rel (%p9166) target = $region104
        $region103: #{cnn_lstm_forward.1} parent=79 // pred_region
          %s9170 = ssub.s32 64, 64
          %9171 = vsyncadd %s9162, %s9170
          %s9172 = smul.addr %s32, 64
          %s9173 = scalar_lea.hbm %s15, %s9172
          %s9175 = sshll.u32 %s9165, 4
          %s9176 = int_to_ptr.vmem [resolvable:$true] %s9175
          %9178 = dma.vmem_to_hbm [thread:$0]  %s9176, 64, %s9173, %s9162
        $region104: #{cnn_lstm_forward.1} parent=79 // pred_fallthru
          _
      $region80: #{cnn_lstm_forward.1} parent=5 // pred_fallthru
        _
      %p9179 = scmp.le.s32.totalorder 2, %s27
      // Predicated region
      $region105: #{cnn_lstm_forward.1} parent=5 // pred_check
        %p9180 = pneg %p9179
      $region106: #{cnn_lstm_forward.1} parent=5 // pred_check_branch
        %9182 = sbr.rel (%p9180) target = $region108
      $region107: #{cnn_lstm_forward.1} parent=5 // pred_region
        %s9183 = ssub.s32 %s27, 2
        // Predicated region
        $region109: #{cnn_lstm_forward.1} parent=107 // pred_check
          %p9184 = pneg %p376
        $region110: #{cnn_lstm_forward.1} parent=107 // pred_check_branch
          %9186 = sbr.rel (%p9184) target = $region112
        $region111: #{cnn_lstm_forward.1} parent=107 // pred_region
          %s9187 = sand.u32 %s361, 1
          %s9188 = scalar_lea.sflag [#allocation6], %s9187
          %s9189 = sand.u32 %s361, 1
          %s9190 = smul.addr %s9189, 4
          %s9191 = scalar_lea.vmem [#allocation13], %s9190
          %9192 = dma.done %s9188, 64
        $region112: #{cnn_lstm_forward.1} parent=107 // pred_fallthru
          _
      $region108: #{cnn_lstm_forward.1} parent=5 // pred_fallthru
        _
    $region6: #{cnn_lstm_forward.1} parent=1 // loop_footer
      %s31 = sadd.s32 1, %s27
    $region7: #{cnn_lstm_forward.1} parent=1 // loop_footer_branch
      %26 = sbr.rel target = $region3
    $region8: #{cnn_lstm_forward.1} parent=1 // loop_exit
      _
    %9193 = vsyncpa [#allocation5], 1
    %s9194 = scalar_lea.sflag [#allocation5], 1
    %9195 = vsyncpa %s9194, 1
    %9196 = vsyncpa [#allocation8], 1
    %9197 = vsyncpa [#allocation11], 1
    %9198 = vsyncpa [#allocation6], 1
    %s9199 = scalar_lea.sflag [#allocation6], 1
    %9200 = vsyncpa %s9199, 1

</llo_original>
